<compile_context>
chip_gen: v7x
topology: tpu7x:2x2x1
jax: 0.10.0
libtpu: 0.0.40
codegen_flags: <defaults>
</compile_context>

<pallas_src>
import functools

import jax
import jax.numpy as jnp
from jax.experimental import pallas as pl
from jax.experimental.pallas import tpu as pltpu


# ----------------------------------------------------------------------------
# Model dims
# ----------------------------------------------------------------------------

INPUT_DIM = 3
DIM = 16
CONTENT_DIM = 32
STYLE_DIM = 8
MLP_DIM = 32

CPAD = 128          # lane-dense channel padding for all conv outputs
_EPS = 1e-5


def _round_up(x, m):
    return (x + m - 1) // m * m


# ----------------------------------------------------------------------------
# Fused conv(matmul) + bias + norm + activation + residual Pallas kernel
# ----------------------------------------------------------------------------

def _fused_conv_kernel(norm, act, has_skip, c_valid, eps, *refs):
    """refs: patches(1,M,KP) bf16, w(KP,CPAD) bf16, b(1,CPAD) f32,
             [gamma(1,1,CPAD), beta(1,1,CPAD)], [skip(1,M,CPAD)], out(1,M,CPAD)."""
    p_ref, w_ref, b_ref = refs[0], refs[1], refs[2]
    pos = 3
    g_ref = be_ref = s_ref = None
    if norm != "none":
        g_ref, be_ref = refs[pos], refs[pos + 1]
        pos += 2
    if has_skip:
        s_ref = refs[pos]
        pos += 1
    o_ref = refs[pos]

    # MXU: bf16 x bf16, f32 accumulation; output tile is lane-dense (M, 128).
    acc = jnp.dot(p_ref[0], w_ref[...], preferred_element_type=jnp.float32)
    acc = acc + b_ref[...]                       # (1, CPAD) broadcast over M

    if norm in ("in", "adain"):
        # per-(sample, channel) statistics over the spatial axis (block = 1 sample)
        mean = jnp.mean(acc, axis=0, keepdims=True)
        var = jnp.mean(jnp.square(acc - mean), axis=0, keepdims=True)
        acc = (acc - mean) * jax.lax.rsqrt(var + eps)
        acc = acc * g_ref[0] + be_ref[0]
    elif norm == "ln":
        # MUNIT LayerNorm: per-sample over (H*W, C).  Padded channels are exactly
        # zero, so plain sums divided by the *valid* count give exact statistics.
        cnt = float(acc.shape[0] * c_valid)
        s1 = jnp.sum(acc)
        s2 = jnp.sum(acc * acc)
        mean = s1 / cnt
        var = jnp.maximum(s2 / cnt - mean * mean, 0.0)
        acc = (acc - mean) * jax.lax.rsqrt(var + eps)
        acc = acc * g_ref[0] + be_ref[0]

    if act == "relu":
        acc = jnp.maximum(acc, 0.0)
    elif act == "tanh":
        acc = jnp.tanh(acc)

    if has_skip:
        acc = acc + s_ref[0]

    o_ref[0] = acc


def _im2col(x, kh, kw, stride, pad):
    """x: (N, H, W, C) -> patches (N, OH*OW, KH*KW*C) with reflection padding."""
    if pad:
        x = jnp.pad(x, ((0, 0), (pad, pad), (pad, pad), (0, 0)), mode="reflect")
    N, H, W, C = x.shape
    oh = (H - kh) // stride + 1
    ow = (W - kw) // stride + 1
    pieces = []
    for i in range(kh):
        for j in range(kw):
            pieces.append(x[:, i:i + stride * oh:stride, j:j + stride * ow:stride, :])
    p = jnp.stack(pieces, axis=3)            # (N, OH, OW, KH*KW, C)
    return p.reshape(N, oh * ow, kh * kw * C), oh, ow


def conv_block(x, w, b, *, stride, pad, cin, norm="none", act="none",
               gamma=None, beta=None, skip=None, eps=_EPS):
    """Fused conv + bias + norm + act (+ residual).

    x: (N, H, W, >=cin) f32 (only the first `cin` channels are real).
    w: (KH, KW, cin, cout); b: (cout,).
    gamma/beta: per-channel (cout,) or per-sample (N, cout) affine for the norm.
    skip: optional (N, OH, OW, CPAD) residual added after norm+act.
    Returns (N, OH, OW, CPAD) f32 with channels [cout:] exactly zero.
    """
    N = x.shape[0]
    kh, kw, cin_w, cout = w.shape
    assert cin_w == cin and cout <= CPAD

    patches, oh, ow = _im2col(x[..., :cin], kh, kw, stride, pad)
    M = oh * ow
    K = kh * kw * cin
    KP = _round_up(K, 128)

    patches = jnp.pad(patches, ((0, 0), (0, 0), (0, KP - K))).astype(jnp.bfloat16)
    wf = jnp.pad(w.reshape(K, cout), ((0, KP - K), (0, CPAD - cout))).astype(jnp.bfloat16)
    bf = jnp.pad(b, (0, CPAD - cout)).astype(jnp.float32).reshape(1, CPAD)

    args = [patches, wf, bf]
    in_specs = [
        pl.BlockSpec((1, M, KP), lambda i: (i, 0, 0)),
        pl.BlockSpec((KP, CPAD), lambda i: (0, 0)),
        pl.BlockSpec((1, CPAD), lambda i: (0, 0)),
    ]

    if norm != "none":
        if gamma is None:
            gamma = jnp.ones((cout,), jnp.float32)
        if beta is None:
            beta = jnp.zeros((cout,), jnp.float32)
        if gamma.ndim == 1:
            gamma = jnp.broadcast_to(gamma, (N, cout))
            beta = jnp.broadcast_to(beta, (N, cout))
        g = jnp.pad(gamma, ((0, 0), (0, CPAD - cout))).astype(jnp.float32).reshape(N, 1, CPAD)
        be = jnp.pad(beta, ((0, 0), (0, CPAD - cout))).astype(jnp.float32).reshape(N, 1, CPAD)
        args += [g, be]
        in_specs += [pl.BlockSpec((1, 1, CPAD), lambda i: (i, 0, 0)),
                     pl.BlockSpec((1, 1, CPAD), lambda i: (i, 0, 0))]

    if skip is not None:
        args.append(skip.reshape(N, M, CPAD).astype(jnp.float32))
        in_specs.append(pl.BlockSpec((1, M, CPAD), lambda i: (i, 0, 0)))

    kernel = functools.partial(_fused_conv_kernel, norm, act, skip is not None, cout, eps)

    out = pl.pallas_call(
        kernel,
        out_shape=jax.ShapeDtypeStruct((N, M, CPAD), jnp.float32),
        grid=(N,),
        in_specs=in_specs,
        out_specs=pl.BlockSpec((1, M, CPAD), lambda i: (i, 0, 0)),
        compiler_params=pltpu.CompilerParams(
            dimension_semantics=("parallel",),
            vmem_limit_bytes=48 * 1024 * 1024,
        ),
    )(*args)
    return out.reshape(N, oh, ow, CPAD)


def upsample_nearest2x(x):
    return jnp.repeat(jnp.repeat(x, 2, axis=1), 2, axis=2)


# ----------------------------------------------------------------------------
# AdaINGen parameters / encode / decode
# ----------------------------------------------------------------------------

def init_gen_params(key):
    shapes = {
        "ce_conv1_w": (7, 7, INPUT_DIM, DIM), "ce_conv1_b": (DIM,),
        "ce_conv2_w": (4, 4, DIM, CONTENT_DIM), "ce_conv2_b": (CONTENT_DIM,),
        "ce_res1_w": (3, 3, CONTENT_DIM, CONTENT_DIM), "ce_res1_b": (CONTENT_DIM,),
        "ce_res2_w": (3, 3, CONTENT_DIM, CONTENT_DIM), "ce_res2_b": (CONTENT_DIM,),
        "se_conv1_w": (7, 7, INPUT_DIM, DIM), "se_conv1_b": (DIM,),
        "se_conv2_w": (4, 4, DIM, CONTENT_DIM), "se_conv2_b": (CONTENT_DIM,),
        "se_fc_w": (CONTENT_DIM, STYLE_DIM), "se_fc_b": (STYLE_DIM,),
        "mlp_fc1_w": (STYLE_DIM, MLP_DIM), "mlp_fc1_b": (MLP_DIM,),
        "mlp_fc2_w": (MLP_DIM, 4 * CONTENT_DIM), "mlp_fc2_b": (4 * CONTENT_DIM,),
        "dec_res1_w": (3, 3, CONTENT_DIM, CONTENT_DIM), "dec_res1_b": (CONTENT_DIM,),
        "dec_res2_w": (3, 3, CONTENT_DIM, CONTENT_DIM), "dec_res2_b": (CONTENT_DIM,),
        "dec_up_w": (5, 5, CONTENT_DIM, DIM), "dec_up_b": (DIM,),
        "dec_ln_g": (DIM,), "dec_ln_b": (DIM,),
        "dec_out_w": (7, 7, DIM, INPUT_DIM), "dec_out_b": (INPUT_DIM,),
    }
    names = sorted(shapes)
    keys = jax.random.split(key, len(names))
    params = {}
    for name, k in zip(names, keys):
        shp = shapes[name]
        if name == "dec_ln_g":
            params[name] = jnp.ones(shp, jnp.float32)
        elif name.endswith("_b"):
            params[name] = jnp.zeros(shp, jnp.float32)
        else:
            params[name] = 0.02 * jax.random.normal(k, shp, jnp.float32)
    return params


def gen_encode(p, x):
    """x: (N, H, W, 3) NHWC -> content (N, H/2, W/2, CPAD) [32 valid], style (N, 8)."""
    # content encoder (fused conv+IN+ReLU kernels, residual add fused into res2)
    h = conv_block(x, p["ce_conv1_w"], p["ce_conv1_b"], stride=1, pad=3,
                   cin=INPUT_DIM, norm="in", act="relu")
    h = conv_block(h, p["ce_conv2_w"], p["ce_conv2_b"], stride=2, pad=1,
                   cin=DIM, norm="in", act="relu")
    r = conv_block(h, p["ce_res1_w"], p["ce_res1_b"], stride=1, pad=1,
                   cin=CONTENT_DIM, norm="in", act="relu")
    c = conv_block(r, p["ce_res2_w"], p["ce_res2_b"], stride=1, pad=1,
                   cin=CONTENT_DIM, norm="in", act="none", skip=h)
    # style encoder (unused by forward(): dead code, DCE'd under jit)
    s = conv_block(x, p["se_conv1_w"], p["se_conv1_b"], stride=1, pad=3,
                   cin=INPUT_DIM, act="relu")
    s = conv_block(s, p["se_conv2_w"], p["se_conv2_b"], stride=2, pad=1,
                   cin=DIM, act="relu")
    s = jnp.mean(s[..., :CONTENT_DIM], axis=(1, 2))        # global avg pool (plain JAX)
    s = s @ p["se_fc_w"] + p["se_fc_b"]                    # tiny fc (plain JAX)
    return c, s


def gen_decode(p, c, s):
    """c: (N, h, w, CPAD) [32 valid]; s: (N, 8) -> image (N, 2h, 2w, 3) in [-1, 1]."""
    # style MLP -> AdaIN params (tiny; plain JAX — launch overhead would dominate)
    h = jnp.maximum(s @ p["mlp_fc1_w"] + p["mlp_fc1_b"], 0.0)
    ada = h @ p["mlp_fc2_w"] + p["mlp_fc2_b"]              # (N, 4*CONTENT_DIM)
    cd = CONTENT_DIM
    # MUNIT assign_adain_params order: per AdaIN layer, mean (beta) then std (gamma).
    b1, g1 = ada[:, 0 * cd:1 * cd], ada[:, 1 * cd:2 * cd]
    b2, g2 = ada[:, 2 * cd:3 * cd], ada[:, 3 * cd:4 * cd]
    # AdaIN residual block (residual add fused into the second kernel)
    r = conv_block(c, p["dec_res1_w"], p["dec_res1_b"], stride=1, pad=1,
                   cin=cd, norm="adain", act="relu", gamma=g1, beta=b1)
    hc = conv_block(r, p["dec_res2_w"], p["dec_res2_b"], stride=1, pad=1,
                    cin=cd, norm="adain", act="none", gamma=g2, beta=b2, skip=c)
    # upsample block: nearest x2 + conv5x5 + LayerNorm + ReLU (fused kernel)
    up = upsample_nearest2x(hc[..., :cd])
    hc = conv_block(up, p["dec_up_w"], p["dec_up_b"], stride=1, pad=2,
                    cin=cd, norm="ln", act="relu",
                    gamma=p["dec_ln_g"], beta=p["dec_ln_b"])
    # output conv + tanh (fused kernel), then drop the channel padding
    out = conv_block(hc, p["dec_out_w"], p["dec_out_b"], stride=1, pad=3,
                     cin=DIM, act="tanh")
    return out[..., :INPUT_DIM]


# ----------------------------------------------------------------------------
# MUNIT_Trainer.forward
# ----------------------------------------------------------------------------

@jax.jit
def munit_trainer_forward(params_a, params_b, s_a, s_b, x_a, x_b):
    """x_a, x_b: NCHW (N, 3, H, W).  Returns (x_ab, x_ba) in NCHW."""
    xa = jnp.transpose(x_a, (0, 2, 3, 1)).astype(jnp.float32)   # NHWC
    xb = jnp.transpose(x_b, (0, 2, 3, 1)).astype(jnp.float32)
    c_a, _s_a_fake = gen_encode(params_a, xa)
    c_b, _s_b_fake = gen_encode(params_b, xb)
    x_ba = gen_decode(params_a, c_b, s_a)
    x_ab = gen_decode(params_b, c_a, s_b)
    return (jnp.transpose(x_ab, (0, 3, 1, 2)),
            jnp.transpose(x_ba, (0, 3, 1, 2)))


if __name__ == "__main__":
    key = jax.random.PRNGKey(0)
    k_pa, k_pb, k_sa, k_sb, k_xa, k_xb = jax.random.split(key, 6)

    params_a = init_gen_params(k_pa)
    params_b = init_gen_params(k_pb)

    batch, H, W = 2, 16, 16          # display_size == batch so fixed styles broadcast
    # fixed styles, analog of torch.randn(display_size, style_dim, 1, 1)
    s_a = jax.random.normal(k_sa, (batch, STYLE_DIM), jnp.float32)
    s_b = jax.random.normal(k_sb, (batch, STYLE_DIM), jnp.float32)

    x_a = jax.random.normal(k_xa, (batch, INPUT_DIM, H, W), jnp.float32)
    x_b = jax.random.normal(k_xb, (batch, INPUT_DIM, H, W), jnp.float32)

    x_ab, x_ba = munit_trainer_forward(params_a, params_b, s_a, s_b, x_a, x_b)
    jax.block_until_ready((x_ab, x_ba))

    assert x_ab.shape == (batch, INPUT_DIM, H, W)
    assert x_ba.shape == (batch, INPUT_DIM, H, W)
    assert bool(jnp.all(jnp.isfinite(x_ab))) and bool(jnp.all(jnp.isfinite(x_ba)))
    print("KERNEL_OK")
</pallas_src>

<mosaic_0001>
module attributes {stable_mosaic.version = 11 : i64} {
  func.func @_fused_conv_kernel(%arg0: i32, %arg1: memref<1x256x256xbf16, #tpu.memory_space<vmem>>, %arg2: memref<256x128xbf16, #tpu.memory_space<vmem>>, %arg3: memref<1x128xf32, #tpu.memory_space<vmem>>, %arg4: memref<1x1x128xf32, #tpu.memory_space<vmem>>, %arg5: memref<1x1x128xf32, #tpu.memory_space<vmem>>, %arg6: memref<1x256x128xf32, #tpu.memory_space<vmem>>) attributes {dimension_semantics = [#tpu.dimension_semantics<parallel>], iteration_bounds = array<i64: 2>, scalar_prefetch = 0 : i64, scratch_operands = 0 : i64, tpu.core_type = #tpu.core_type<tc>, window_params = [{transform_indices = @transform_0, window_bounds = array<i64: 1, 256, 256>}, {pipeline_mode = #tpu.pipeline_mode<synchronous>, transform_indices = @transform_1, window_bounds = array<i64: 256, 128>}, {pipeline_mode = #tpu.pipeline_mode<synchronous>, transform_indices = @transform_2, window_bounds = array<i64: 1, 128>}, {transform_indices = @transform_3, window_bounds = array<i64: 1, 1, 128>}, {transform_indices = @transform_4, window_bounds = array<i64: 1, 1, 128>}, {transform_indices = @transform_5, window_bounds = array<i64: 1, 256, 128>}]} {
    %c0 = arith.constant 0 : index
    %c0_0 = arith.constant 0 : index
    %c0_1 = arith.constant 0 : index
    %0 = vector.load %arg1[%c0, %c0_0, %c0_1] : memref<1x256x256xbf16, #tpu.memory_space<vmem>>, vector<1x256x256xbf16>
    %1 = vector.shape_cast %0 : vector<1x256x256xbf16> to vector<256x256xbf16>
    %c0_2 = arith.constant 0 : index
    %c0_3 = arith.constant 0 : index
    %2 = vector.load %arg2[%c0_2, %c0_3] : memref<256x128xbf16, #tpu.memory_space<vmem>>, vector<256x128xbf16>
    %cst = arith.constant dense<0.000000e+00> : vector<256x128xf32>
    %3 = tpu.matmul %1, %2, %cst {dimension_numbers = #tpu.dot_dimension_numbers<[1], [0], [0], [1], [0, 0, 1, 1], [], []>} : vector<256x256xbf16>, vector<256x128xbf16>, vector<256x128xf32> -> vector<256x128xf32>
    %c0_4 = arith.constant 0 : index
    %c0_5 = arith.constant 0 : index
    %4 = vector.load %arg3[%c0_4, %c0_5] : memref<1x128xf32, #tpu.memory_space<vmem>>, vector<1x128xf32>
    %5 = vector.broadcast %4 : vector<1x128xf32> to vector<256x128xf32>
    %6 = arith.addf %3, %5 : vector<256x128xf32>
    %cst_6 = arith.constant dense<0.000000e+00> : vector<128xf32>
    %7 = vector.multi_reduction <add>, %6, %cst_6 [0] : vector<256x128xf32> to vector<128xf32>
    %8 = vector.shape_cast %7 : vector<128xf32> to vector<1x128xf32>
    %cst_7 = arith.constant 2.560000e+02 : f32
    %9 = vector.broadcast %cst_7 : f32 to vector<1x128xf32>
    %10 = arith.divf %8, %9 : vector<1x128xf32>
    %11 = vector.broadcast %10 : vector<1x128xf32> to vector<256x128xf32>
    %12 = arith.subf %6, %11 : vector<256x128xf32>
    %13 = arith.mulf %12, %12 : vector<256x128xf32>
    %cst_8 = arith.constant dense<0.000000e+00> : vector<128xf32>
    %14 = vector.multi_reduction <add>, %13, %cst_8 [0] : vector<256x128xf32> to vector<128xf32>
    %15 = vector.shape_cast %14 : vector<128xf32> to vector<1x128xf32>
    %cst_9 = arith.constant 2.560000e+02 : f32
    %16 = vector.broadcast %cst_9 : f32 to vector<1x128xf32>
    %17 = arith.divf %15, %16 : vector<1x128xf32>
    %18 = vector.broadcast %10 : vector<1x128xf32> to vector<256x128xf32>
    %19 = arith.subf %6, %18 : vector<256x128xf32>
    %cst_10 = arith.constant 9.99999974E-6 : f32
    %20 = vector.broadcast %cst_10 : f32 to vector<1x128xf32>
    %21 = arith.addf %17, %20 : vector<1x128xf32>
    %22 = math.rsqrt %21 : vector<1x128xf32>
    %23 = vector.broadcast %22 : vector<1x128xf32> to vector<256x128xf32>
    %24 = arith.mulf %19, %23 : vector<256x128xf32>
    %c0_11 = arith.constant 0 : index
    %c0_12 = arith.constant 0 : index
    %c0_13 = arith.constant 0 : index
    %25 = vector.load %arg4[%c0_11, %c0_12, %c0_13] : memref<1x1x128xf32, #tpu.memory_space<vmem>>, vector<1x1x128xf32>
    %26 = vector.shape_cast %25 : vector<1x1x128xf32> to vector<1x128xf32>
    %27 = vector.broadcast %26 : vector<1x128xf32> to vector<256x128xf32>
    %28 = arith.mulf %24, %27 : vector<256x128xf32>
    %c0_14 = arith.constant 0 : index
    %c0_15 = arith.constant 0 : index
    %c0_16 = arith.constant 0 : index
    %29 = vector.load %arg5[%c0_14, %c0_15, %c0_16] : memref<1x1x128xf32, #tpu.memory_space<vmem>>, vector<1x1x128xf32>
    %30 = vector.shape_cast %29 : vector<1x1x128xf32> to vector<1x128xf32>
    %31 = vector.broadcast %30 : vector<1x128xf32> to vector<256x128xf32>
    %32 = arith.addf %28, %31 : vector<256x128xf32>
    %cst_17 = arith.constant 0.000000e+00 : f32
    %33 = vector.broadcast %cst_17 : f32 to vector<256x128xf32>
    %34 = arith.maximumf %32, %33 : vector<256x128xf32>
    %c0_18 = arith.constant 0 : index
    %c0_19 = arith.constant 0 : index
    %c0_20 = arith.constant 0 : index
    %35 = vector.load %arg6[%c0_18, %c0_19, %c0_20] : memref<1x256x128xf32, #tpu.memory_space<vmem>>, vector<1x256x128xf32>
    %36 = vector.shape_cast %35 : vector<1x256x128xf32> to vector<256x128xf32>
    %37 = vector.shape_cast %34 : vector<256x128xf32> to vector<1x256x128xf32>
    tpu.vector_store %arg6[%c0_18, %c0_19, %c0_20], %37 {strides = array<i32>} : memref<1x256x128xf32, #tpu.memory_space<vmem>>, vector<1x256x128xf32>,
    return
  }
  func.func @transform_0(%arg0: i32) -> (i32, i32, i32) {
    %c0_i32 = arith.constant 0 : i32
    %c0_i32_0 = arith.constant 0 : i32
    %c0_i32_1 = arith.constant 0 : i32
    return %arg0, %c0_i32, %c0_i32_0 : i32, i32, i32
  }
  func.func @transform_1(%arg0: i32) -> (i32, i32) {
    %c0_i32 = arith.constant 0 : i32
    %c0_i32_0 = arith.constant 0 : i32
    %c0_i32_1 = arith.constant 0 : i32
    return %c0_i32, %c0_i32_0 : i32, i32
  }
  func.func @transform_2(%arg0: i32) -> (i32, i32) {
    %c0_i32 = arith.constant 0 : i32
    %c0_i32_0 = arith.constant 0 : i32
    %c0_i32_1 = arith.constant 0 : i32
    return %c0_i32, %c0_i32_0 : i32, i32
  }
  func.func @transform_3(%arg0: i32) -> (i32, i32, i32) {
    %c0_i32 = arith.constant 0 : i32
    %c0_i32_0 = arith.constant 0 : i32
    %c0_i32_1 = arith.constant 0 : i32
    return %arg0, %c0_i32, %c0_i32_0 : i32, i32, i32
  }
  func.func @transform_4(%arg0: i32) -> (i32, i32, i32) {
    %c0_i32 = arith.constant 0 : i32
    %c0_i32_0 = arith.constant 0 : i32
    %c0_i32_1 = arith.constant 0 : i32
    return %arg0, %c0_i32, %c0_i32_0 : i32, i32, i32
  }
  func.func @transform_5(%arg0: i32) -> (i32, i32, i32) {
    %c0_i32 = arith.constant 0 : i32
    %c0_i32_0 = arith.constant 0 : i32
    %c0_i32_1 = arith.constant 0 : i32
    return %arg0, %c0_i32, %c0_i32_0 : i32, i32, i32
  }
}

module attributes {stable_mosaic.version = 11 : i64} {
  func.func @_fused_conv_kernel(%arg0: i32, %arg1: memref<1x64x256xbf16, #tpu.memory_space<vmem>>, %arg2: memref<256x128xbf16, #tpu.memory_space<vmem>>, %arg3: memref<1x128xf32, #tpu.memory_space<vmem>>, %arg4: memref<1x1x128xf32, #tpu.memory_space<vmem>>, %arg5: memref<1x1x128xf32, #tpu.memory_space<vmem>>, %arg6: memref<1x64x128xf32, #tpu.memory_space<vmem>>) attributes {dimension_semantics = [#tpu.dimension_semantics<parallel>], iteration_bounds = array<i64: 2>, scalar_prefetch = 0 : i64, scratch_operands = 0 : i64, tpu.core_type = #tpu.core_type<tc>, window_params = [{transform_indices = @transform_0, window_bounds = array<i64: 1, 64, 256>}, {pipeline_mode = #tpu.pipeline_mode<synchronous>, transform_indices = @transform_1, window_bounds = array<i64: 256, 128>}, {pipeline_mode = #tpu.pipeline_mode<synchronous>, transform_indices = @transform_2, window_bounds = array<i64: 1, 128>}, {transform_indices = @transform_3, window_bounds = array<i64: 1, 1, 128>}, {transform_indices = @transform_4, window_bounds = array<i64: 1, 1, 128>}, {transform_indices = @transform_5, window_bounds = array<i64: 1, 64, 128>}]} {
    %c0 = arith.constant 0 : index
    %c0_0 = arith.constant 0 : index
    %c0_1 = arith.constant 0 : index
    %0 = vector.load %arg1[%c0, %c0_0, %c0_1] : memref<1x64x256xbf16, #tpu.memory_space<vmem>>, vector<1x64x256xbf16>
    %1 = vector.shape_cast %0 : vector<1x64x256xbf16> to vector<64x256xbf16>
    %c0_2 = arith.constant 0 : index
    %c0_3 = arith.constant 0 : index
    %2 = vector.load %arg2[%c0_2, %c0_3] : memref<256x128xbf16, #tpu.memory_space<vmem>>, vector<256x128xbf16>
    %cst = arith.constant dense<0.000000e+00> : vector<64x128xf32>
    %3 = tpu.matmul %1, %2, %cst {dimension_numbers = #tpu.dot_dimension_numbers<[1], [0], [0], [1], [0, 0, 1, 1], [], []>} : vector<64x256xbf16>, vector<256x128xbf16>, vector<64x128xf32> -> vector<64x128xf32>
    %c0_4 = arith.constant 0 : index
    %c0_5 = arith.constant 0 : index
    %4 = vector.load %arg3[%c0_4, %c0_5] : memref<1x128xf32, #tpu.memory_space<vmem>>, vector<1x128xf32>
    %5 = vector.broadcast %4 : vector<1x128xf32> to vector<64x128xf32>
    %6 = arith.addf %3, %5 : vector<64x128xf32>
    %cst_6 = arith.constant dense<0.000000e+00> : vector<128xf32>
    %7 = vector.multi_reduction <add>, %6, %cst_6 [0] : vector<64x128xf32> to vector<128xf32>
    %8 = vector.shape_cast %7 : vector<128xf32> to vector<1x128xf32>
    %cst_7 = arith.constant 6.400000e+01 : f32
    %9 = vector.broadcast %cst_7 : f32 to vector<1x128xf32>
    %10 = arith.divf %8, %9 : vector<1x128xf32>
    %11 = vector.broadcast %10 : vector<1x128xf32> to vector<64x128xf32>
    %12 = arith.subf %6, %11 : vector<64x128xf32>
    %13 = arith.mulf %12, %12 : vector<64x128xf32>
    %cst_8 = arith.constant dense<0.000000e+00> : vector<128xf32>
    %14 = vector.multi_reduction <add>, %13, %cst_8 [0] : vector<64x128xf32> to vector<128xf32>
    %15 = vector.shape_cast %14 : vector<128xf32> to vector<1x128xf32>
    %cst_9 = arith.constant 6.400000e+01 : f32
    %16 = vector.broadcast %cst_9 : f32 to vector<1x128xf32>
    %17 = arith.divf %15, %16 : vector<1x128xf32>
    %18 = vector.broadcast %10 : vector<1x128xf32> to vector<64x128xf32>
    %19 = arith.subf %6, %18 : vector<64x128xf32>
    %cst_10 = arith.constant 9.99999974E-6 : f32
    %20 = vector.broadcast %cst_10 : f32 to vector<1x128xf32>
    %21 = arith.addf %17, %20 : vector<1x128xf32>
    %22 = math.rsqrt %21 : vector<1x128xf32>
    %23 = vector.broadcast %22 : vector<1x128xf32> to vector<64x128xf32>
    %24 = arith.mulf %19, %23 : vector<64x128xf32>
    %c0_11 = arith.constant 0 : index
    %c0_12 = arith.constant 0 : index
    %c0_13 = arith.constant 0 : index
    %25 = vector.load %arg4[%c0_11, %c0_12, %c0_13] : memref<1x1x128xf32, #tpu.memory_space<vmem>>, vector<1x1x128xf32>
    %26 = vector.shape_cast %25 : vector<1x1x128xf32> to vector<1x128xf32>
    %27 = vector.broadcast %26 : vector<1x128xf32> to vector<64x128xf32>
    %28 = arith.mulf %24, %27 : vector<64x128xf32>
    %c0_14 = arith.constant 0 : index
    %c0_15 = arith.constant 0 : index
    %c0_16 = arith.constant 0 : index
    %29 = vector.load %arg5[%c0_14, %c0_15, %c0_16] : memref<1x1x128xf32, #tpu.memory_space<vmem>>, vector<1x1x128xf32>
    %30 = vector.shape_cast %29 : vector<1x1x128xf32> to vector<1x128xf32>
    %31 = vector.broadcast %30 : vector<1x128xf32> to vector<64x128xf32>
    %32 = arith.addf %28, %31 : vector<64x128xf32>
    %cst_17 = arith.constant 0.000000e+00 : f32
    %33 = vector.broadcast %cst_17 : f32 to vector<64x128xf32>
    %34 = arith.maximumf %32, %33 : vector<64x128xf32>
    %c0_18 = arith.constant 0 : index
    %c0_19 = arith.constant 0 : index
    %c0_20 = arith.constant 0 : index
    %35 = vector.load %arg6[%c0_18, %c0_19, %c0_20] : memref<1x64x128xf32, #tpu.memory_space<vmem>>, vector<1x64x128xf32>
    %36 = vector.shape_cast %35 : vector<1x64x128xf32> to vector<64x128xf32>
    %37 = vector.shape_cast %34 : vector<64x128xf32> to vector<1x64x128xf32>
    tpu.vector_store %arg6[%c0_18, %c0_19, %c0_20], %37 {strides = array<i32>} : memref<1x64x128xf32, #tpu.memory_space<vmem>>, vector<1x64x128xf32>,
    return
  }
  func.func @transform_0(%arg0: i32) -> (i32, i32, i32) {
    %c0_i32 = arith.constant 0 : i32
    %c0_i32_0 = arith.constant 0 : i32
    %c0_i32_1 = arith.constant 0 : i32
    return %arg0, %c0_i32, %c0_i32_0 : i32, i32, i32
  }
  func.func @transform_1(%arg0: i32) -> (i32, i32) {
    %c0_i32 = arith.constant 0 : i32
    %c0_i32_0 = arith.constant 0 : i32
    %c0_i32_1 = arith.constant 0 : i32
    return %c0_i32, %c0_i32_0 : i32, i32
  }
  func.func @transform_2(%arg0: i32) -> (i32, i32) {
    %c0_i32 = arith.constant 0 : i32
    %c0_i32_0 = arith.constant 0 : i32
    %c0_i32_1 = arith.constant 0 : i32
    return %c0_i32, %c0_i32_0 : i32, i32
  }
  func.func @transform_3(%arg0: i32) -> (i32, i32, i32) {
    %c0_i32 = arith.constant 0 : i32
    %c0_i32_0 = arith.constant 0 : i32
    %c0_i32_1 = arith.constant 0 : i32
    return %arg0, %c0_i32, %c0_i32_0 : i32, i32, i32
  }
  func.func @transform_4(%arg0: i32) -> (i32, i32, i32) {
    %c0_i32 = arith.constant 0 : i32
    %c0_i32_0 = arith.constant 0 : i32
    %c0_i32_1 = arith.constant 0 : i32
    return %arg0, %c0_i32, %c0_i32_0 : i32, i32, i32
  }
  func.func @transform_5(%arg0: i32) -> (i32, i32, i32) {
    %c0_i32 = arith.constant 0 : i32
    %c0_i32_0 = arith.constant 0 : i32
    %c0_i32_1 = arith.constant 0 : i32
    return %arg0, %c0_i32, %c0_i32_0 : i32, i32, i32
  }
}

module attributes {stable_mosaic.version = 11 : i64} {
  func.func @_fused_conv_kernel(%arg0: i32, %arg1: memref<1x64x384xbf16, #tpu.memory_space<vmem>>, %arg2: memref<384x128xbf16, #tpu.memory_space<vmem>>, %arg3: memref<1x128xf32, #tpu.memory_space<vmem>>, %arg4: memref<1x1x128xf32, #tpu.memory_space<vmem>>, %arg5: memref<1x1x128xf32, #tpu.memory_space<vmem>>, %arg6: memref<1x64x128xf32, #tpu.memory_space<vmem>>) attributes {dimension_semantics = [#tpu.dimension_semantics<parallel>], iteration_bounds = array<i64: 2>, scalar_prefetch = 0 : i64, scratch_operands = 0 : i64, tpu.core_type = #tpu.core_type<tc>, window_params = [{transform_indices = @transform_0, window_bounds = array<i64: 1, 64, 384>}, {pipeline_mode = #tpu.pipeline_mode<synchronous>, transform_indices = @transform_1, window_bounds = array<i64: 384, 128>}, {pipeline_mode = #tpu.pipeline_mode<synchronous>, transform_indices = @transform_2, window_bounds = array<i64: 1, 128>}, {transform_indices = @transform_3, window_bounds = array<i64: 1, 1, 128>}, {transform_indices = @transform_4, window_bounds = array<i64: 1, 1, 128>}, {transform_indices = @transform_5, window_bounds = array<i64: 1, 64, 128>}]} {
    %c0 = arith.constant 0 : index
    %c0_0 = arith.constant 0 : index
    %c0_1 = arith.constant 0 : index
    %0 = vector.load %arg1[%c0, %c0_0, %c0_1] : memref<1x64x384xbf16, #tpu.memory_space<vmem>>, vector<1x64x384xbf16>
    %1 = vector.shape_cast %0 : vector<1x64x384xbf16> to vector<64x384xbf16>
    %c0_2 = arith.constant 0 : index
    %c0_3 = arith.constant 0 : index
    %2 = vector.load %arg2[%c0_2, %c0_3] : memref<384x128xbf16, #tpu.memory_space<vmem>>, vector<384x128xbf16>
    %cst = arith.constant dense<0.000000e+00> : vector<64x128xf32>
    %3 = tpu.matmul %1, %2, %cst {dimension_numbers = #tpu.dot_dimension_numbers<[1], [0], [0], [1], [0, 0, 1, 1], [], []>} : vector<64x384xbf16>, vector<384x128xbf16>, vector<64x128xf32> -> vector<64x128xf32>
    %c0_4 = arith.constant 0 : index
    %c0_5 = arith.constant 0 : index
    %4 = vector.load %arg3[%c0_4, %c0_5] : memref<1x128xf32, #tpu.memory_space<vmem>>, vector<1x128xf32>
    %5 = vector.broadcast %4 : vector<1x128xf32> to vector<64x128xf32>
    %6 = arith.addf %3, %5 : vector<64x128xf32>
    %cst_6 = arith.constant dense<0.000000e+00> : vector<128xf32>
    %7 = vector.multi_reduction <add>, %6, %cst_6 [0] : vector<64x128xf32> to vector<128xf32>
    %8 = vector.shape_cast %7 : vector<128xf32> to vector<1x128xf32>
    %cst_7 = arith.constant 6.400000e+01 : f32
    %9 = vector.broadcast %cst_7 : f32 to vector<1x128xf32>
    %10 = arith.divf %8, %9 : vector<1x128xf32>
    %11 = vector.broadcast %10 : vector<1x128xf32> to vector<64x128xf32>
    %12 = arith.subf %6, %11 : vector<64x128xf32>
    %13 = arith.mulf %12, %12 : vector<64x128xf32>
    %cst_8 = arith.constant dense<0.000000e+00> : vector<128xf32>
    %14 = vector.multi_reduction <add>, %13, %cst_8 [0] : vector<64x128xf32> to vector<128xf32>
    %15 = vector.shape_cast %14 : vector<128xf32> to vector<1x128xf32>
    %cst_9 = arith.constant 6.400000e+01 : f32
    %16 = vector.broadcast %cst_9 : f32 to vector<1x128xf32>
    %17 = arith.divf %15, %16 : vector<1x128xf32>
    %18 = vector.broadcast %10 : vector<1x128xf32> to vector<64x128xf32>
    %19 = arith.subf %6, %18 : vector<64x128xf32>
    %cst_10 = arith.constant 9.99999974E-6 : f32
    %20 = vector.broadcast %cst_10 : f32 to vector<1x128xf32>
    %21 = arith.addf %17, %20 : vector<1x128xf32>
    %22 = math.rsqrt %21 : vector<1x128xf32>
    %23 = vector.broadcast %22 : vector<1x128xf32> to vector<64x128xf32>
    %24 = arith.mulf %19, %23 : vector<64x128xf32>
    %c0_11 = arith.constant 0 : index
    %c0_12 = arith.constant 0 : index
    %c0_13 = arith.constant 0 : index
    %25 = vector.load %arg4[%c0_11, %c0_12, %c0_13] : memref<1x1x128xf32, #tpu.memory_space<vmem>>, vector<1x1x128xf32>
    %26 = vector.shape_cast %25 : vector<1x1x128xf32> to vector<1x128xf32>
    %27 = vector.broadcast %26 : vector<1x128xf32> to vector<64x128xf32>
    %28 = arith.mulf %24, %27 : vector<64x128xf32>
    %c0_14 = arith.constant 0 : index
    %c0_15 = arith.constant 0 : index
    %c0_16 = arith.constant 0 : index
    %29 = vector.load %arg5[%c0_14, %c0_15, %c0_16] : memref<1x1x128xf32, #tpu.memory_space<vmem>>, vector<1x1x128xf32>
    %30 = vector.shape_cast %29 : vector<1x1x128xf32> to vector<1x128xf32>
    %31 = vector.broadcast %30 : vector<1x128xf32> to vector<64x128xf32>
    %32 = arith.addf %28, %31 : vector<64x128xf32>
    %cst_17 = arith.constant 0.000000e+00 : f32
    %33 = vector.broadcast %cst_17 : f32 to vector<64x128xf32>
    %34 = arith.maximumf %32, %33 : vector<64x128xf32>
    %c0_18 = arith.constant 0 : index
    %c0_19 = arith.constant 0 : index
    %c0_20 = arith.constant 0 : index
    %35 = vector.load %arg6[%c0_18, %c0_19, %c0_20] : memref<1x64x128xf32, #tpu.memory_space<vmem>>, vector<1x64x128xf32>
    %36 = vector.shape_cast %35 : vector<1x64x128xf32> to vector<64x128xf32>
    %37 = vector.shape_cast %34 : vector<64x128xf32> to vector<1x64x128xf32>
    tpu.vector_store %arg6[%c0_18, %c0_19, %c0_20], %37 {strides = array<i32>} : memref<1x64x128xf32, #tpu.memory_space<vmem>>, vector<1x64x128xf32>,
    return
  }
  func.func @transform_0(%arg0: i32) -> (i32, i32, i32) {
    %c0_i32 = arith.constant 0 : i32
    %c0_i32_0 = arith.constant 0 : i32
    %c0_i32_1 = arith.constant 0 : i32
    return %arg0, %c0_i32, %c0_i32_0 : i32, i32, i32
  }
  func.func @transform_1(%arg0: i32) -> (i32, i32) {
    %c0_i32 = arith.constant 0 : i32
    %c0_i32_0 = arith.constant 0 : i32
    %c0_i32_1 = arith.constant 0 : i32
    return %c0_i32, %c0_i32_0 : i32, i32
  }
  func.func @transform_2(%arg0: i32) -> (i32, i32) {
    %c0_i32 = arith.constant 0 : i32
    %c0_i32_0 = arith.constant 0 : i32
    %c0_i32_1 = arith.constant 0 : i32
    return %c0_i32, %c0_i32_0 : i32, i32
  }
  func.func @transform_3(%arg0: i32) -> (i32, i32, i32) {
    %c0_i32 = arith.constant 0 : i32
    %c0_i32_0 = arith.constant 0 : i32
    %c0_i32_1 = arith.constant 0 : i32
    return %arg0, %c0_i32, %c0_i32_0 : i32, i32, i32
  }
  func.func @transform_4(%arg0: i32) -> (i32, i32, i32) {
    %c0_i32 = arith.constant 0 : i32
    %c0_i32_0 = arith.constant 0 : i32
    %c0_i32_1 = arith.constant 0 : i32
    return %arg0, %c0_i32, %c0_i32_0 : i32, i32, i32
  }
  func.func @transform_5(%arg0: i32) -> (i32, i32, i32) {
    %c0_i32 = arith.constant 0 : i32
    %c0_i32_0 = arith.constant 0 : i32
    %c0_i32_1 = arith.constant 0 : i32
    return %arg0, %c0_i32, %c0_i32_0 : i32, i32, i32
  }
}

module attributes {stable_mosaic.version = 11 : i64} {
  func.func @_fused_conv_kernel(%arg0: i32, %arg1: memref<1x64x384xbf16, #tpu.memory_space<vmem>>, %arg2: memref<384x128xbf16, #tpu.memory_space<vmem>>, %arg3: memref<1x128xf32, #tpu.memory_space<vmem>>, %arg4: memref<1x1x128xf32, #tpu.memory_space<vmem>>, %arg5: memref<1x1x128xf32, #tpu.memory_space<vmem>>, %arg6: memref<1x64x128xf32, #tpu.memory_space<vmem>>, %arg7: memref<1x64x128xf32, #tpu.memory_space<vmem>>) attributes {dimension_semantics = [#tpu.dimension_semantics<parallel>], iteration_bounds = array<i64: 2>, scalar_prefetch = 0 : i64, scratch_operands = 0 : i64, tpu.core_type = #tpu.core_type<tc>, window_params = [{transform_indices = @transform_0, window_bounds = array<i64: 1, 64, 384>}, {pipeline_mode = #tpu.pipeline_mode<synchronous>, transform_indices = @transform_1, window_bounds = array<i64: 384, 128>}, {pipeline_mode = #tpu.pipeline_mode<synchronous>, transform_indices = @transform_2, window_bounds = array<i64: 1, 128>}, {transform_indices = @transform_3, window_bounds = array<i64: 1, 1, 128>}, {transform_indices = @transform_4, window_bounds = array<i64: 1, 1, 128>}, {transform_indices = @transform_5, window_bounds = array<i64: 1, 64, 128>}, {transform_indices = @transform_6, window_bounds = array<i64: 1, 64, 128>}]} {
    %c0 = arith.constant 0 : index
    %c0_0 = arith.constant 0 : index
    %c0_1 = arith.constant 0 : index
    %0 = vector.load %arg1[%c0, %c0_0, %c0_1] : memref<1x64x384xbf16, #tpu.memory_space<vmem>>, vector<1x64x384xbf16>
    %1 = vector.shape_cast %0 : vector<1x64x384xbf16> to vector<64x384xbf16>
    %c0_2 = arith.constant 0 : index
    %c0_3 = arith.constant 0 : index
    %2 = vector.load %arg2[%c0_2, %c0_3] : memref<384x128xbf16, #tpu.memory_space<vmem>>, vector<384x128xbf16>
    %cst = arith.constant dense<0.000000e+00> : vector<64x128xf32>
    %3 = tpu.matmul %1, %2, %cst {dimension_numbers = #tpu.dot_dimension_numbers<[1], [0], [0], [1], [0, 0, 1, 1], [], []>} : vector<64x384xbf16>, vector<384x128xbf16>, vector<64x128xf32> -> vector<64x128xf32>
    %c0_4 = arith.constant 0 : index
    %c0_5 = arith.constant 0 : index
    %4 = vector.load %arg3[%c0_4, %c0_5] : memref<1x128xf32, #tpu.memory_space<vmem>>, vector<1x128xf32>
    %5 = vector.broadcast %4 : vector<1x128xf32> to vector<64x128xf32>
    %6 = arith.addf %3, %5 : vector<64x128xf32>
    %cst_6 = arith.constant dense<0.000000e+00> : vector<128xf32>
    %7 = vector.multi_reduction <add>, %6, %cst_6 [0] : vector<64x128xf32> to vector<128xf32>
    %8 = vector.shape_cast %7 : vector<128xf32> to vector<1x128xf32>
    %cst_7 = arith.constant 6.400000e+01 : f32
    %9 = vector.broadcast %cst_7 : f32 to vector<1x128xf32>
    %10 = arith.divf %8, %9 : vector<1x128xf32>
    %11 = vector.broadcast %10 : vector<1x128xf32> to vector<64x128xf32>
    %12 = arith.subf %6, %11 : vector<64x128xf32>
    %13 = arith.mulf %12, %12 : vector<64x128xf32>
    %cst_8 = arith.constant dense<0.000000e+00> : vector<128xf32>
    %14 = vector.multi_reduction <add>, %13, %cst_8 [0] : vector<64x128xf32> to vector<128xf32>
    %15 = vector.shape_cast %14 : vector<128xf32> to vector<1x128xf32>
    %cst_9 = arith.constant 6.400000e+01 : f32
    %16 = vector.broadcast %cst_9 : f32 to vector<1x128xf32>
    %17 = arith.divf %15, %16 : vector<1x128xf32>
    %18 = vector.broadcast %10 : vector<1x128xf32> to vector<64x128xf32>
    %19 = arith.subf %6, %18 : vector<64x128xf32>
    %cst_10 = arith.constant 9.99999974E-6 : f32
    %20 = vector.broadcast %cst_10 : f32 to vector<1x128xf32>
    %21 = arith.addf %17, %20 : vector<1x128xf32>
    %22 = math.rsqrt %21 : vector<1x128xf32>
    %23 = vector.broadcast %22 : vector<1x128xf32> to vector<64x128xf32>
    %24 = arith.mulf %19, %23 : vector<64x128xf32>
    %c0_11 = arith.constant 0 : index
    %c0_12 = arith.constant 0 : index
    %c0_13 = arith.constant 0 : index
    %25 = vector.load %arg4[%c0_11, %c0_12, %c0_13] : memref<1x1x128xf32, #tpu.memory_space<vmem>>, vector<1x1x128xf32>
    %26 = vector.shape_cast %25 : vector<1x1x128xf32> to vector<1x128xf32>
    %27 = vector.broadcast %26 : vector<1x128xf32> to vector<64x128xf32>
    %28 = arith.mulf %24, %27 : vector<64x128xf32>
    %c0_14 = arith.constant 0 : index
    %c0_15 = arith.constant 0 : index
    %c0_16 = arith.constant 0 : index
    %29 = vector.load %arg5[%c0_14, %c0_15, %c0_16] : memref<1x1x128xf32, #tpu.memory_space<vmem>>, vector<1x1x128xf32>
    %30 = vector.shape_cast %29 : vector<1x1x128xf32> to vector<1x128xf32>
    %31 = vector.broadcast %30 : vector<1x128xf32> to vector<64x128xf32>
    %32 = arith.addf %28, %31 : vector<64x128xf32>
    %c0_17 = arith.constant 0 : index
    %c0_18 = arith.constant 0 : index
    %c0_19 = arith.constant 0 : index
    %33 = vector.load %arg6[%c0_17, %c0_18, %c0_19] : memref<1x64x128xf32, #tpu.memory_space<vmem>>, vector<1x64x128xf32>
    %34 = vector.shape_cast %33 : vector<1x64x128xf32> to vector<64x128xf32>
    %35 = arith.addf %32, %34 : vector<64x128xf32>
    %c0_20 = arith.constant 0 : index
    %c0_21 = arith.constant 0 : index
    %c0_22 = arith.constant 0 : index
    %36 = vector.load %arg7[%c0_20, %c0_21, %c0_22] : memref<1x64x128xf32, #tpu.memory_space<vmem>>, vector<1x64x128xf32>
    %37 = vector.shape_cast %36 : vector<1x64x128xf32> to vector<64x128xf32>
    %38 = vector.shape_cast %35 : vector<64x128xf32> to vector<1x64x128xf32>
    tpu.vector_store %arg7[%c0_20, %c0_21, %c0_22], %38 {strides = array<i32>} : memref<1x64x128xf32, #tpu.memory_space<vmem>>, vector<1x64x128xf32>,
    return
  }
  func.func @transform_0(%arg0: i32) -> (i32, i32, i32) {
    %c0_i32 = arith.constant 0 : i32
    %c0_i32_0 = arith.constant 0 : i32
    %c0_i32_1 = arith.constant 0 : i32
    return %arg0, %c0_i32, %c0_i32_0 : i32, i32, i32
  }
  func.func @transform_1(%arg0: i32) -> (i32, i32) {
    %c0_i32 = arith.constant 0 : i32
    %c0_i32_0 = arith.constant 0 : i32
    %c0_i32_1 = arith.constant 0 : i32
    return %c0_i32, %c0_i32_0 : i32, i32
  }
  func.func @transform_2(%arg0: i32) -> (i32, i32) {
    %c0_i32 = arith.constant 0 : i32
    %c0_i32_0 = arith.constant 0 : i32
    %c0_i32_1 = arith.constant 0 : i32
    return %c0_i32, %c0_i32_0 : i32, i32
  }
  func.func @transform_3(%arg0: i32) -> (i32, i32, i32) {
    %c0_i32 = arith.constant 0 : i32
    %c0_i32_0 = arith.constant 0 : i32
    %c0_i32_1 = arith.constant 0 : i32
    return %arg0, %c0_i32, %c0_i32_0 : i32, i32, i32
  }
  func.func @transform_4(%arg0: i32) -> (i32, i32, i32) {
    %c0_i32 = arith.constant 0 : i32
    %c0_i32_0 = arith.constant 0 : i32
    %c0_i32_1 = arith.constant 0 : i32
    return %arg0, %c0_i32, %c0_i32_0 : i32, i32, i32
  }
  func.func @transform_5(%arg0: i32) -> (i32, i32, i32) {
    %c0_i32 = arith.constant 0 : i32
    %c0_i32_0 = arith.constant 0 : i32
    %c0_i32_1 = arith.constant 0 : i32
    return %arg0, %c0_i32, %c0_i32_0 : i32, i32, i32
  }
  func.func @transform_6(%arg0: i32) -> (i32, i32, i32) {
    %c0_i32 = arith.constant 0 : i32
    %c0_i32_0 = arith.constant 0 : i32
    %c0_i32_1 = arith.constant 0 : i32
    return %arg0, %c0_i32, %c0_i32_0 : i32, i32, i32
  }
}

module attributes {stable_mosaic.version = 11 : i64} {
  func.func @_fused_conv_kernel(%arg0: i32, %arg1: memref<1x256x896xbf16, #tpu.memory_space<vmem>>, %arg2: memref<896x128xbf16, #tpu.memory_space<vmem>>, %arg3: memref<1x128xf32, #tpu.memory_space<vmem>>, %arg4: memref<1x1x128xf32, #tpu.memory_space<vmem>>, %arg5: memref<1x1x128xf32, #tpu.memory_space<vmem>>, %arg6: memref<1x256x128xf32, #tpu.memory_space<vmem>>) attributes {dimension_semantics = [#tpu.dimension_semantics<parallel>], iteration_bounds = array<i64: 2>, scalar_prefetch = 0 : i64, scratch_operands = 0 : i64, tpu.core_type = #tpu.core_type<tc>, window_params = [{transform_indices = @transform_0, window_bounds = array<i64: 1, 256, 896>}, {pipeline_mode = #tpu.pipeline_mode<synchronous>, transform_indices = @transform_1, window_bounds = array<i64: 896, 128>}, {pipeline_mode = #tpu.pipeline_mode<synchronous>, transform_indices = @transform_2, window_bounds = array<i64: 1, 128>}, {transform_indices = @transform_3, window_bounds = array<i64: 1, 1, 128>}, {transform_indices = @transform_4, window_bounds = array<i64: 1, 1, 128>}, {transform_indices = @transform_5, window_bounds = array<i64: 1, 256, 128>}]} {
    %c0 = arith.constant 0 : index
    %c0_0 = arith.constant 0 : index
    %c0_1 = arith.constant 0 : index
    %0 = vector.load %arg1[%c0, %c0_0, %c0_1] : memref<1x256x896xbf16, #tpu.memory_space<vmem>>, vector<1x256x896xbf16>
    %1 = vector.shape_cast %0 : vector<1x256x896xbf16> to vector<256x896xbf16>
    %c0_2 = arith.constant 0 : index
    %c0_3 = arith.constant 0 : index
    %2 = vector.load %arg2[%c0_2, %c0_3] : memref<896x128xbf16, #tpu.memory_space<vmem>>, vector<896x128xbf16>
    %cst = arith.constant dense<0.000000e+00> : vector<256x128xf32>
    %3 = tpu.matmul %1, %2, %cst {dimension_numbers = #tpu.dot_dimension_numbers<[1], [0], [0], [1], [0, 0, 1, 1], [], []>} : vector<256x896xbf16>, vector<896x128xbf16>, vector<256x128xf32> -> vector<256x128xf32>
    %c0_4 = arith.constant 0 : index
    %c0_5 = arith.constant 0 : index
    %4 = vector.load %arg3[%c0_4, %c0_5] : memref<1x128xf32, #tpu.memory_space<vmem>>, vector<1x128xf32>
    %5 = vector.broadcast %4 : vector<1x128xf32> to vector<256x128xf32>
    %6 = arith.addf %3, %5 : vector<256x128xf32>
    %7 = vector.shape_cast %6 : vector<256x128xf32> to vector<1x256x128xf32>
    %cst_6 = arith.constant dense<0.000000e+00> : vector<1xf32>
    %8 = vector.multi_reduction <add>, %7, %cst_6 [1, 2] : vector<1x256x128xf32> to vector<1xf32>
    %9 = vector.shape_cast %8 : vector<1xf32> to vector<1x1x1xf32>
    %10 = vector.extract %9[0, 0, 0] : f32 from vector<1x1x1xf32>
    %11 = arith.mulf %6, %6 : vector<256x128xf32>
    %12 = vector.shape_cast %11 : vector<256x128xf32> to vector<1x256x128xf32>
    %cst_7 = arith.constant dense<0.000000e+00> : vector<1xf32>
    %13 = vector.multi_reduction <add>, %12, %cst_7 [1, 2] : vector<1x256x128xf32> to vector<1xf32>
    %14 = vector.shape_cast %13 : vector<1xf32> to vector<1x1x1xf32>
    %15 = vector.extract %14[0, 0, 0] : f32 from vector<1x1x1xf32>
    %cst_8 = arith.constant 4.096000e+03 : f32
    %16 = arith.divf %10, %cst_8 : f32
    %cst_9 = arith.constant 4.096000e+03 : f32
    %17 = arith.divf %15, %cst_9 : f32
    %18 = arith.mulf %16, %16 : f32
    %19 = arith.subf %17, %18 : f32
    %cst_10 = arith.constant 0.000000e+00 : f32
    %20 = arith.maximumf %19, %cst_10 : f32
    %21 = vector.broadcast %16 : f32 to vector<256x128xf32>
    %22 = arith.subf %6, %21 : vector<256x128xf32>
    %cst_11 = arith.constant 9.99999974E-6 : f32
    %23 = arith.addf %20, %cst_11 : f32
    %24 = math.rsqrt %23 : f32
    %25 = vector.broadcast %24 : f32 to vector<256x128xf32>
    %26 = arith.mulf %22, %25 : vector<256x128xf32>
    %c0_12 = arith.constant 0 : index
    %c0_13 = arith.constant 0 : index
    %c0_14 = arith.constant 0 : index
    %27 = vector.load %arg4[%c0_12, %c0_13, %c0_14] : memref<1x1x128xf32, #tpu.memory_space<vmem>>, vector<1x1x128xf32>
    %28 = vector.shape_cast %27 : vector<1x1x128xf32> to vector<1x128xf32>
    %29 = vector.broadcast %28 : vector<1x128xf32> to vector<256x128xf32>
    %30 = arith.mulf %26, %29 : vector<256x128xf32>
    %c0_15 = arith.constant 0 : index
    %c0_16 = arith.constant 0 : index
    %c0_17 = arith.constant 0 : index
    %31 = vector.load %arg5[%c0_15, %c0_16, %c0_17] : memref<1x1x128xf32, #tpu.memory_space<vmem>>, vector<1x1x128xf32>
    %32 = vector.shape_cast %31 : vector<1x1x128xf32> to vector<1x128xf32>
    %33 = vector.broadcast %32 : vector<1x128xf32> to vector<256x128xf32>
    %34 = arith.addf %30, %33 : vector<256x128xf32>
    %cst_18 = arith.constant 0.000000e+00 : f32
    %35 = vector.broadcast %cst_18 : f32 to vector<256x128xf32>
    %36 = arith.maximumf %34, %35 : vector<256x128xf32>
    %c0_19 = arith.constant 0 : index
    %c0_20 = arith.constant 0 : index
    %c0_21 = arith.constant 0 : index
    %37 = vector.load %arg6[%c0_19, %c0_20, %c0_21] : memref<1x256x128xf32, #tpu.memory_space<vmem>>, vector<1x256x128xf32>
    %38 = vector.shape_cast %37 : vector<1x256x128xf32> to vector<256x128xf32>
    %39 = vector.shape_cast %36 : vector<256x128xf32> to vector<1x256x128xf32>
    tpu.vector_store %arg6[%c0_19, %c0_20, %c0_21], %39 {strides = array<i32>} : memref<1x256x128xf32, #tpu.memory_space<vmem>>, vector<1x256x128xf32>,
    return
  }
  func.func @transform_0(%arg0: i32) -> (i32, i32, i32) {
    %c0_i32 = arith.constant 0 : i32
    %c0_i32_0 = arith.constant 0 : i32
    %c0_i32_1 = arith.constant 0 : i32
    return %arg0, %c0_i32, %c0_i32_0 : i32, i32, i32
  }
  func.func @transform_1(%arg0: i32) -> (i32, i32) {
    %c0_i32 = arith.constant 0 : i32
    %c0_i32_0 = arith.constant 0 : i32
    %c0_i32_1 = arith.constant 0 : i32
    return %c0_i32, %c0_i32_0 : i32, i32
  }
  func.func @transform_2(%arg0: i32) -> (i32, i32) {
    %c0_i32 = arith.constant 0 : i32
    %c0_i32_0 = arith.constant 0 : i32
    %c0_i32_1 = arith.constant 0 : i32
    return %c0_i32, %c0_i32_0 : i32, i32
  }
  func.func @transform_3(%arg0: i32) -> (i32, i32, i32) {
    %c0_i32 = arith.constant 0 : i32
    %c0_i32_0 = arith.constant 0 : i32
    %c0_i32_1 = arith.constant 0 : i32
    return %arg0, %c0_i32, %c0_i32_0 : i32, i32, i32
  }
  func.func @transform_4(%arg0: i32) -> (i32, i32, i32) {
    %c0_i32 = arith.constant 0 : i32
    %c0_i32_0 = arith.constant 0 : i32
    %c0_i32_1 = arith.constant 0 : i32
    return %arg0, %c0_i32, %c0_i32_0 : i32, i32, i32
  }
  func.func @transform_5(%arg0: i32) -> (i32, i32, i32) {
    %c0_i32 = arith.constant 0 : i32
    %c0_i32_0 = arith.constant 0 : i32
    %c0_i32_1 = arith.constant 0 : i32
    return %arg0, %c0_i32, %c0_i32_0 : i32, i32, i32
  }
}

module attributes {stable_mosaic.version = 11 : i64} {
  func.func @_fused_conv_kernel(%arg0: i32, %arg1: memref<1x256x896xbf16, #tpu.memory_space<vmem>>, %arg2: memref<896x128xbf16, #tpu.memory_space<vmem>>, %arg3: memref<1x128xf32, #tpu.memory_space<vmem>>, %arg4: memref<1x256x128xf32, #tpu.memory_space<vmem>>) attributes {dimension_semantics = [#tpu.dimension_semantics<parallel>], iteration_bounds = array<i64: 2>, scalar_prefetch = 0 : i64, scratch_operands = 0 : i64, tpu.core_type = #tpu.core_type<tc>, window_params = [{transform_indices = @transform_0, window_bounds = array<i64: 1, 256, 896>}, {pipeline_mode = #tpu.pipeline_mode<synchronous>, transform_indices = @transform_1, window_bounds = array<i64: 896, 128>}, {pipeline_mode = #tpu.pipeline_mode<synchronous>, transform_indices = @transform_2, window_bounds = array<i64: 1, 128>}, {transform_indices = @transform_3, window_bounds = array<i64: 1, 256, 128>}]} {
    %c0 = arith.constant 0 : index
    %c0_0 = arith.constant 0 : index
    %c0_1 = arith.constant 0 : index
    %0 = vector.load %arg1[%c0, %c0_0, %c0_1] : memref<1x256x896xbf16, #tpu.memory_space<vmem>>, vector<1x256x896xbf16>
    %1 = vector.shape_cast %0 : vector<1x256x896xbf16> to vector<256x896xbf16>
    %c0_2 = arith.constant 0 : index
    %c0_3 = arith.constant 0 : index
    %2 = vector.load %arg2[%c0_2, %c0_3] : memref<896x128xbf16, #tpu.memory_space<vmem>>, vector<896x128xbf16>
    %cst = arith.constant dense<0.000000e+00> : vector<256x128xf32>
    %3 = tpu.matmul %1, %2, %cst {dimension_numbers = #tpu.dot_dimension_numbers<[1], [0], [0], [1], [0, 0, 1, 1], [], []>} : vector<256x896xbf16>, vector<896x128xbf16>, vector<256x128xf32> -> vector<256x128xf32>
    %c0_4 = arith.constant 0 : index
    %c0_5 = arith.constant 0 : index
    %4 = vector.load %arg3[%c0_4, %c0_5] : memref<1x128xf32, #tpu.memory_space<vmem>>, vector<1x128xf32>
    %5 = vector.broadcast %4 : vector<1x128xf32> to vector<256x128xf32>
    %6 = arith.addf %3, %5 : vector<256x128xf32>
    %7 = math.tanh %6 : vector<256x128xf32>
    %c0_6 = arith.constant 0 : index
    %c0_7 = arith.constant 0 : index
    %c0_8 = arith.constant 0 : index
    %8 = vector.load %arg4[%c0_6, %c0_7, %c0_8] : memref<1x256x128xf32, #tpu.memory_space<vmem>>, vector<1x256x128xf32>
    %9 = vector.shape_cast %8 : vector<1x256x128xf32> to vector<256x128xf32>
    %10 = vector.shape_cast %7 : vector<256x128xf32> to vector<1x256x128xf32>
    tpu.vector_store %arg4[%c0_6, %c0_7, %c0_8], %10 {strides = array<i32>} : memref<1x256x128xf32, #tpu.memory_space<vmem>>, vector<1x256x128xf32>,
    return
  }
  func.func @transform_0(%arg0: i32) -> (i32, i32, i32) {
    %c0_i32 = arith.constant 0 : i32
    %c0_i32_0 = arith.constant 0 : i32
    %c0_i32_1 = arith.constant 0 : i32
    return %arg0, %c0_i32, %c0_i32_0 : i32, i32, i32
  }
  func.func @transform_1(%arg0: i32) -> (i32, i32) {
    %c0_i32 = arith.constant 0 : i32
    %c0_i32_0 = arith.constant 0 : i32
    %c0_i32_1 = arith.constant 0 : i32
    return %c0_i32, %c0_i32_0 : i32, i32
  }
  func.func @transform_2(%arg0: i32) -> (i32, i32) {
    %c0_i32 = arith.constant 0 : i32
    %c0_i32_0 = arith.constant 0 : i32
    %c0_i32_1 = arith.constant 0 : i32
    return %c0_i32, %c0_i32_0 : i32, i32
  }
  func.func @transform_3(%arg0: i32) -> (i32, i32, i32) {
    %c0_i32 = arith.constant 0 : i32
    %c0_i32_0 = arith.constant 0 : i32
    %c0_i32_1 = arith.constant 0 : i32
    return %arg0, %c0_i32, %c0_i32_0 : i32, i32, i32
  }
}

</mosaic_0001>

<llo_original>
// kernel: munit_trainer_forward.20
$region0: #{munit_trainer_forward.20}
  #allocation0 [shape = 'u32[]', space=smem, size = 0x4, offset = 0x4, fixed_abs, tag = 'smem constant byte address 0x4 - core index']
  #allocation1 [shape = 'u32[144,128]{1,0:T(1,128)}', space=vmem, size = 0x12000, scoped, tag = 'internal scratch']
  %s0 = inlined_call_operand.vmem [shape: bf16[2,256,256], index: 0, kind: input, shape index: {}]
  %s1 = inlined_call_operand.vmem [shape: bf16[256,128], index: 1, kind: input, shape index: {}]
  %s2 = inlined_call_operand.vmem [shape: f32[1,128], index: 2, kind: input, shape index: {}]
  %s3 = inlined_call_operand.vmem [shape: f32[2,1,128], index: 3, kind: input, shape index: {}]
  %s4 = inlined_call_operand.vmem [shape: f32[2,1,128], index: 4, kind: input, shape index: {}]
  %s5 = inlined_call_operand.vmem [shape: f32[2,256,128], index: 5, kind: output, shape index: {}]
  %s6 = sld [smem:[#allocation0]]
  $region53: #{munit_trainer_forward.20} parent=0
    _
  %s8 = ssub.s32 1, %s6
  %s9 = scalar_select 0, %s8, %s6
  loop: start=0, step=1, limit=4
  $region2: #{munit_trainer_forward.20} parent=0 // loop_pre_header
    _
  $region3: #{munit_trainer_forward.20} parent=0 // loop_header
    %s11 = sphi 0, %s15
    %p12 = scmp.ge.s32.totalorder %s11, 4
    %s21 = sphi 0, %s23
    %s24 = sphi 0, %s21
    %s25 = sphi 0, %s24
    %s41 = sphi 0, %s25
    %s45 = sphi 0, %s45
    %s47 = sphi 0, %s45
    %s48 = sphi 0, %s47
    %s62 = sphi 0, %s48
    %s66 = sphi 0, %s66
    %s68 = sphi 0, %s66
    %s69 = sphi 0, %s68
    %s83 = sphi 0, %s69
    %s89 = sphi 0, %s91
    %s92 = sphi 0, %s89
    %s93 = sphi 0, %s92
    %s109 = sphi 0, %s93
    %s115 = sphi 0, %s117
    %s118 = sphi 0, %s115
    %s119 = sphi 0, %s118
    %s135 = sphi 0, %s119
    %s141 = sphi 0, %s143
    %s144 = sphi 0, %s141
    %s145 = sphi 0, %s144
    %s161 = sphi 0, %s145
  $region4: #{munit_trainer_forward.20} parent=0 // loop_header_branch
    %14 = sbr.rel (%p12) target = $region8
  $region5: #{munit_trainer_forward.20} parent=0 // loop_body
    %s16 = ssub.s32 %s11, 1
    %s17 = ssub.s32 %s11, 2
    %s18 = sadd.s32 %s11, 1
    %s19 = ssub.s32 %s11, %s18
    %p20 = scmp.eq.s32.totalorder %s19, 0
    %s22 = sadd.s32 %s21, 1
    %s23 = scalar_select %p20, %s21, %s22
    %p26 = pneg %p20
    %p27 = scmp.eq.s32.totalorder %s11, 1
    %p28 = por %p26, %p27
    %p29 = scmp.ne.s32.totalorder %s21, %s24
    %p30 = scmp.eq.s32.totalorder %s11, 0
    %p31 = por %p29, %p30
    %p32 = scmp.ne.s32.totalorder %s21, %s24
    %p33 = scmp.eq.s32.totalorder %s16, 1
    %p34 = por %p32, %p33
    %p35 = scmp.ne.s32.totalorder %s24, %s25
    %p36 = scmp.eq.s32.totalorder %s16, 0
    %p37 = por %p35, %p36
    %p38 = scmp.ne.s32.totalorder %s24, %s25
    %p39 = scmp.eq.s32.totalorder %s17, 1
    %p40 = por %p38, %p39
    %p42 = scmp.ne.s32.totalorder %s25, %s41
    %p43 = scmp.eq.s32.totalorder %s17, 0
    %p44 = por %p42, %p43
    %s46 = sadd.s32 %s45, 1
    %p49 = scmp.eq.s32.totalorder %s11, 1
    %p50 = scmp.ne.s32.totalorder %s45, %s47
    %p51 = scmp.eq.s32.totalorder %s11, 0
    %p52 = por %p50, %p51
    %p53 = scmp.ne.s32.totalorder %s45, %s47
    %p54 = scmp.eq.s32.totalorder %s16, 1
    %p55 = por %p53, %p54
    %p56 = scmp.ne.s32.totalorder %s47, %s48
    %p57 = scmp.eq.s32.totalorder %s16, 0
    %p58 = por %p56, %p57
    %p59 = scmp.ne.s32.totalorder %s47, %s48
    %p60 = scmp.eq.s32.totalorder %s17, 1
    %p61 = por %p59, %p60
    %p63 = scmp.ne.s32.totalorder %s48, %s62
    %p64 = scmp.eq.s32.totalorder %s17, 0
    %p65 = por %p63, %p64
    %s67 = sadd.s32 %s66, 1
    %p70 = scmp.eq.s32.totalorder %s11, 1
    %p71 = scmp.ne.s32.totalorder %s66, %s68
    %p72 = scmp.eq.s32.totalorder %s11, 0
    %p73 = por %p71, %p72
    %p74 = scmp.ne.s32.totalorder %s66, %s68
    %p75 = scmp.eq.s32.totalorder %s16, 1
    %p76 = por %p74, %p75
    %p77 = scmp.ne.s32.totalorder %s68, %s69
    %p78 = scmp.eq.s32.totalorder %s16, 0
    %p79 = por %p77, %p78
    %p80 = scmp.ne.s32.totalorder %s68, %s69
    %p81 = scmp.eq.s32.totalorder %s17, 1
    %p82 = por %p80, %p81
    %p84 = scmp.ne.s32.totalorder %s69, %s83
    %p85 = scmp.eq.s32.totalorder %s17, 0
    %p86 = por %p84, %p85
    %s87 = ssub.s32 %s11, %s18
    %p88 = scmp.eq.s32.totalorder %s87, 0
    %s90 = sadd.s32 %s89, 1
    %s91 = scalar_select %p88, %s89, %s90
    %p94 = pneg %p88
    %p95 = scmp.eq.s32.totalorder %s11, 1
    %p96 = por %p94, %p95
    %p97 = scmp.ne.s32.totalorder %s89, %s92
    %p98 = scmp.eq.s32.totalorder %s11, 0
    %p99 = por %p97, %p98
    %p100 = scmp.ne.s32.totalorder %s89, %s92
    %p101 = scmp.eq.s32.totalorder %s16, 1
    %p102 = por %p100, %p101
    %p103 = scmp.ne.s32.totalorder %s92, %s93
    %p104 = scmp.eq.s32.totalorder %s16, 0
    %p105 = por %p103, %p104
    %p106 = scmp.ne.s32.totalorder %s92, %s93
    %p107 = scmp.eq.s32.totalorder %s17, 1
    %p108 = por %p106, %p107
    %p110 = scmp.ne.s32.totalorder %s93, %s109
    %p111 = scmp.eq.s32.totalorder %s17, 0
    %p112 = por %p110, %p111
    %s113 = ssub.s32 %s11, %s18
    %p114 = scmp.eq.s32.totalorder %s113, 0
    %s116 = sadd.s32 %s115, 1
    %s117 = scalar_select %p114, %s115, %s116
    %p120 = pneg %p114
    %p121 = scmp.eq.s32.totalorder %s11, 1
    %p122 = por %p120, %p121
    %p123 = scmp.ne.s32.totalorder %s115, %s118
    %p124 = scmp.eq.s32.totalorder %s11, 0
    %p125 = por %p123, %p124
    %p126 = scmp.ne.s32.totalorder %s115, %s118
    %p127 = scmp.eq.s32.totalorder %s16, 1
    %p128 = por %p126, %p127
    %p129 = scmp.ne.s32.totalorder %s118, %s119
    %p130 = scmp.eq.s32.totalorder %s16, 0
    %p131 = por %p129, %p130
    %p132 = scmp.ne.s32.totalorder %s118, %s119
    %p133 = scmp.eq.s32.totalorder %s17, 1
    %p134 = por %p132, %p133
    %p136 = scmp.ne.s32.totalorder %s119, %s135
    %p137 = scmp.eq.s32.totalorder %s17, 0
    %p138 = por %p136, %p137
    %s139 = ssub.s32 %s11, %s18
    %p140 = scmp.eq.s32.totalorder %s139, 0
    %s142 = sadd.s32 %s141, 1
    %s143 = scalar_select %p140, %s141, %s142
    %p146 = pneg %p140
    %p147 = scmp.eq.s32.totalorder %s11, 1
    %p148 = por %p146, %p147
    %p149 = scmp.ne.s32.totalorder %s141, %s144
    %p150 = scmp.eq.s32.totalorder %s11, 0
    %p151 = por %p149, %p150
    %p152 = scmp.ne.s32.totalorder %s141, %s144
    %p153 = scmp.eq.s32.totalorder %s16, 1
    %p154 = por %p152, %p153
    %p155 = scmp.ne.s32.totalorder %s144, %s145
    %p156 = scmp.eq.s32.totalorder %s16, 0
    %p157 = por %p155, %p156
    %p158 = scmp.ne.s32.totalorder %s144, %s145
    %p159 = scmp.eq.s32.totalorder %s17, 1
    %p160 = por %p158, %p159
    %p162 = scmp.ne.s32.totalorder %s145, %s161
    %p163 = scmp.eq.s32.totalorder %s17, 0
    %p164 = por %p162, %p163
    %p165 = scmp.le.s32.totalorder 1, %s11
    %p166 = scmp.lt.s32.totalorder %s11, 3
    %p167 = pnand %p165, %p166
    %p168 = pneg %p167
    // Predicated region
    $region9: #{munit_trainer_forward.20} parent=5 // pred_check
      _
    $region10: #{munit_trainer_forward.20} parent=5 // pred_check_branch
      %170 = sbr.rel (%p167) target = $region12
    $region11: #{munit_trainer_forward.20} parent=5 // pred_region
      %s171 = ssub.s32 %s11, 1
      // Predicated region
      $region13: #{munit_trainer_forward.20} parent=11 // pred_check
        %p172 = pneg %p58
      $region14: #{munit_trainer_forward.20} parent=11 // pred_check_branch
        %174 = sbr.rel (%p172) target = $region16
      $region15: #{munit_trainer_forward.20} parent=11 // pred_region
        _
      $region16: #{munit_trainer_forward.20} parent=11 // pred_fallthru
        _
      // Predicated region
      $region17: #{munit_trainer_forward.20} parent=11 // pred_check
        %p175 = pneg %p79
      $region18: #{munit_trainer_forward.20} parent=11 // pred_check_branch
        %177 = sbr.rel (%p175) target = $region20
      $region19: #{munit_trainer_forward.20} parent=11 // pred_region
        _
      $region20: #{munit_trainer_forward.20} parent=11 // pred_fallthru
        _
    $region12: #{munit_trainer_forward.20} parent=5 // pred_fallthru
      _
    %p178 = scmp.lt.s32.totalorder %s11, 2
    // Predicated region
    $region21: #{munit_trainer_forward.20} parent=5 // pred_check
      %p179 = pneg %p178
    $region22: #{munit_trainer_forward.20} parent=5 // pred_check_branch
      %181 = sbr.rel (%p179) target = $region24
    $region23: #{munit_trainer_forward.20} parent=5 // pred_region
      // Predicated region
      $region25: #{munit_trainer_forward.20} parent=23 // pred_check
        %p182 = pneg %p31
      $region26: #{munit_trainer_forward.20} parent=23 // pred_check_branch
        %184 = sbr.rel (%p182) target = $region28
      $region27: #{munit_trainer_forward.20} parent=23 // pred_region
        %p185 = scmp.lt.s32.totalorder %s11, 1
        %s186 = scalar_select %p185, %s11, 1
        %s187 = smul.addr %s186, 64
        %s188 = smul.addr %s187, 4
        %s189 = scalar_lea.vmem %s0, %s188
      $region28: #{munit_trainer_forward.20} parent=23 // pred_fallthru
        _
      // Predicated region
      $region29: #{munit_trainer_forward.20} parent=23 // pred_check
        %p190 = pneg %p99
      $region30: #{munit_trainer_forward.20} parent=23 // pred_check_branch
        %192 = sbr.rel (%p190) target = $region32
      $region31: #{munit_trainer_forward.20} parent=23 // pred_region
        %p193 = scmp.lt.s32.totalorder %s11, 1
        %s194 = scalar_select %p193, %s11, 1
        %s195 = scalar_lea.vmem %s3, %s194
      $region32: #{munit_trainer_forward.20} parent=23 // pred_fallthru
        _
      // Predicated region
      $region33: #{munit_trainer_forward.20} parent=23 // pred_check
        %p196 = pneg %p125
      $region34: #{munit_trainer_forward.20} parent=23 // pred_check_branch
        %198 = sbr.rel (%p196) target = $region36
      $region35: #{munit_trainer_forward.20} parent=23 // pred_region
        %p199 = scmp.lt.s32.totalorder %s11, 1
        %s200 = scalar_select %p199, %s11, 1
        %s201 = scalar_lea.vmem %s4, %s200
      $region36: #{munit_trainer_forward.20} parent=23 // pred_fallthru
        _
    $region24: #{munit_trainer_forward.20} parent=5 // pred_fallthru
      _
    %p202 = scmp.le.s32.totalorder 1, %s11
    %p203 = scmp.lt.s32.totalorder %s11, 3
    %p204 = pnand %p202, %p203
    %p205 = pneg %p204
    // Predicated region
    $region37: #{munit_trainer_forward.20} parent=5 // pred_check
      _
    $region38: #{munit_trainer_forward.20} parent=5 // pred_check_branch
      %207 = sbr.rel (%p204) target = $region40
    $region39: #{munit_trainer_forward.20} parent=5 // pred_region
      %s208 = ssub.s32 %s11, 1
      %p209 = scmp.lt.s32.totalorder %s16, 1
      %s210 = scalar_select %p209, %s16, 1
      %s211 = smul.addr %s210, 64
      %s212 = smul.addr %s211, 4
      %s213 = scalar_lea.vmem %s0, %s212
      %p214 = pneg %p37
      %p215 = pneg %p34
      %p216 = pneg %p58
      %p217 = pneg %p55
      %p218 = pneg %p79
      %p219 = pneg %p76
      %p220 = scmp.lt.s32.totalorder %s16, 1
      %s221 = scalar_select %p220, %s16, 1
      %s222 = scalar_lea.vmem %s3, %s221
      %p223 = pneg %p105
      %p224 = pneg %p102
      %p225 = scmp.lt.s32.totalorder %s16, 1
      %s226 = scalar_select %p225, %s16, 1
      %s227 = scalar_lea.vmem %s4, %s226
      %p228 = pneg %p131
      %p229 = pneg %p128
      %p230 = pneg %p157
      %p231 = pneg %p154
      %p232 = scmp.lt.s32.totalorder %s16, 1
      %s233 = scalar_select %p232, %s16, 1
      %s234 = smul.addr %s233, 32
      %s235 = smul.addr %s234, 8
      %s236 = scalar_lea.vmem %s5, %s235
      %p237 = scmp.lt.s32.totalorder %s16, 1
      %s238 = scalar_select %p237, %s16, 1
      %s239 = smul.addr %s238, 64
      %s240 = smul.addr %s239, 4
      %s241 = scalar_lea.vmem %s0, %s240
      %p242 = scmp.lt.s32.totalorder %s16, 1
      %s243 = scalar_select %p242, %s16, 1
      %s244 = scalar_lea.vmem %s3, %s243
      %p245 = scmp.lt.s32.totalorder %s16, 1
      %s246 = scalar_select %p245, %s16, 1
      %s247 = scalar_lea.vmem %s4, %s246
      %p248 = scmp.lt.s32.totalorder %s16, 1
      %s249 = scalar_select %p248, %s16, 1
      %s250 = smul.addr %s249, 32
      %s251 = smul.addr %s250, 8
      %s252 = scalar_lea.vmem %s5, %s251
      %v254 = vld [vmem:[%s241] sm:$0xff]
      %v255 = vld [vmem:[%s241 + $0x8] sm:$0xff]
      %v256 = vld [vmem:[%s241 + $0x10] sm:$0xff]
      %v257 = vld [vmem:[%s241 + $0x18] sm:$0xff]
      %v258 = vld [vmem:[%s241 + $0x20] sm:$0xff]
      %v259 = vld [vmem:[%s241 + $0x28] sm:$0xff]
      %v260 = vld [vmem:[%s241 + $0x30] sm:$0xff]
      %v261 = vld [vmem:[%s241 + $0x38] sm:$0xff]
      %v262 = vld [vmem:[%s241 + $0x40] sm:$0xff]
      %v263 = vld [vmem:[%s241 + $0x48] sm:$0xff]
      %v264 = vld [vmem:[%s241 + $0x50] sm:$0xff]
      %v265 = vld [vmem:[%s241 + $0x58] sm:$0xff]
      %v266 = vld [vmem:[%s241 + $0x60] sm:$0xff]
      %v267 = vld [vmem:[%s241 + $0x68] sm:$0xff]
      %v268 = vld [vmem:[%s241 + $0x70] sm:$0xff]
      %v269 = vld [vmem:[%s241 + $0x78] sm:$0xff]
      %v270 = vld [vmem:[%s241 + $0x80] sm:$0xff]
      %v271 = vld [vmem:[%s241 + $0x88] sm:$0xff]
      %v272 = vld [vmem:[%s241 + $0x90] sm:$0xff]
      %v273 = vld [vmem:[%s241 + $0x98] sm:$0xff]
      %v274 = vld [vmem:[%s241 + $0xa0] sm:$0xff]
      %v275 = vld [vmem:[%s241 + $0xa8] sm:$0xff]
      %v276 = vld [vmem:[%s241 + $0xb0] sm:$0xff]
      %v277 = vld [vmem:[%s241 + $0xb8] sm:$0xff]
      %v278 = vld [vmem:[%s241 + $0xc0] sm:$0xff]
      %v279 = vld [vmem:[%s241 + $0xc8] sm:$0xff]
      %v280 = vld [vmem:[%s241 + $0xd0] sm:$0xff]
      %v281 = vld [vmem:[%s241 + $0xd8] sm:$0xff]
      %v282 = vld [vmem:[%s241 + $0xe0] sm:$0xff]
      %v283 = vld [vmem:[%s241 + $0xe8] sm:$0xff]
      %v284 = vld [vmem:[%s241 + $0xf0] sm:$0xff]
      %v285 = vld [vmem:[%s241 + $0xf8] sm:$0xff]
      %v286 = vld [vmem:[%s1] sm:$0xf]
      %v287 = vld [vmem:[%s1 + $0x4] sm:$0xf]
      %v288 = vld [vmem:[%s1 + $0x8] sm:$0xf]
      %v289 = vld [vmem:[%s1 + $0xc] sm:$0xf]
      %v290 = vld [vmem:[%s1 + $0x10] sm:$0xf]
      %v291 = vld [vmem:[%s1 + $0x14] sm:$0xf]
      %v292 = vld [vmem:[%s1 + $0x18] sm:$0xf]
      %v293 = vld [vmem:[%s1 + $0x1c] sm:$0xf]
      %v294 = vld [vmem:[%s1 + $0x20] sm:$0xf]
      %v295 = vld [vmem:[%s1 + $0x24] sm:$0xf]
      %v296 = vld [vmem:[%s1 + $0x28] sm:$0xf]
      %v297 = vld [vmem:[%s1 + $0x2c] sm:$0xf]
      %v298 = vld [vmem:[%s1 + $0x30] sm:$0xf]
      %v299 = vld [vmem:[%s1 + $0x34] sm:$0xf]
      %v300 = vld [vmem:[%s1 + $0x38] sm:$0xf]
      %v301 = vld [vmem:[%s1 + $0x3c] sm:$0xf]
      %v302 = vld [vmem:[%s1 + $0x40] sm:$0xf]
      %v303 = vld [vmem:[%s1 + $0x44] sm:$0xf]
      %v304 = vld [vmem:[%s1 + $0x48] sm:$0xf]
      %v305 = vld [vmem:[%s1 + $0x4c] sm:$0xf]
      %v306 = vld [vmem:[%s1 + $0x50] sm:$0xf]
      %v307 = vld [vmem:[%s1 + $0x54] sm:$0xf]
      %v308 = vld [vmem:[%s1 + $0x58] sm:$0xf]
      %v309 = vld [vmem:[%s1 + $0x5c] sm:$0xf]
      %v310 = vld [vmem:[%s1 + $0x60] sm:$0xf]
      %v311 = vld [vmem:[%s1 + $0x64] sm:$0xf]
      %v312 = vld [vmem:[%s1 + $0x68] sm:$0xf]
      %v313 = vld [vmem:[%s1 + $0x6c] sm:$0xf]
      %v314 = vld [vmem:[%s1 + $0x70] sm:$0xf]
      %v315 = vld [vmem:[%s1 + $0x74] sm:$0xf]
      %v316 = vld [vmem:[%s1 + $0x78] sm:$0xf]
      %v317 = vld [vmem:[%s1 + $0x7c] sm:$0xf]
      %v318 = vld [vmem:[%s2] sm:$0x1]
      %v320 = vlaneseq
      %v321 = vshrl.u32 %v320, 7
      %v322 = vsub.s32 0, %v321
      %v323 = vrot.slane %v318, %v322
      %v357 = vunpack.c.l.b16 %v254
      %v358 = vunpack.c.h.b16 %v254
      %v359 = vunpack.c.l.b16 %v255
      %v360 = vunpack.c.h.b16 %v255
      %v361 = vunpack.c.l.b16 %v256
      %v362 = vunpack.c.h.b16 %v256
      %v363 = vunpack.c.l.b16 %v257
      %v364 = vunpack.c.h.b16 %v257
      %v365 = vunpack.c.l.b16 %v258
      %v366 = vunpack.c.h.b16 %v258
      %v367 = vunpack.c.l.b16 %v259
      %v368 = vunpack.c.h.b16 %v259
      %v369 = vunpack.c.l.b16 %v260
      %v370 = vunpack.c.h.b16 %v260
      %v371 = vunpack.c.l.b16 %v261
      %v372 = vunpack.c.h.b16 %v261
      %v373 = vunpack.c.l.b16 %v262
      %v374 = vunpack.c.h.b16 %v262
      %v375 = vunpack.c.l.b16 %v263
      %v376 = vunpack.c.h.b16 %v263
      %v377 = vunpack.c.l.b16 %v264
      %v378 = vunpack.c.h.b16 %v264
      %v379 = vunpack.c.l.b16 %v265
      %v380 = vunpack.c.h.b16 %v265
      %v381 = vunpack.c.l.b16 %v266
      %v382 = vunpack.c.h.b16 %v266
      %v383 = vunpack.c.l.b16 %v267
      %v384 = vunpack.c.h.b16 %v267
      %v385 = vunpack.c.l.b16 %v268
      %v386 = vunpack.c.h.b16 %v268
      %v387 = vunpack.c.l.b16 %v269
      %v388 = vunpack.c.h.b16 %v269
      %v389 = vunpack.c.l.b16 %v270
      %v390 = vunpack.c.h.b16 %v270
      %v391 = vunpack.c.l.b16 %v271
      %v392 = vunpack.c.h.b16 %v271
      %v393 = vunpack.c.l.b16 %v272
      %v394 = vunpack.c.h.b16 %v272
      %v395 = vunpack.c.l.b16 %v273
      %v396 = vunpack.c.h.b16 %v273
      %v397 = vunpack.c.l.b16 %v274
      %v398 = vunpack.c.h.b16 %v274
      %v399 = vunpack.c.l.b16 %v275
      %v400 = vunpack.c.h.b16 %v275
      %v401 = vunpack.c.l.b16 %v276
      %v402 = vunpack.c.h.b16 %v276
      %v403 = vunpack.c.l.b16 %v277
      %v404 = vunpack.c.h.b16 %v277
      %v405 = vunpack.c.l.b16 %v278
      %v406 = vunpack.c.h.b16 %v278
      %v407 = vunpack.c.l.b16 %v279
      %v408 = vunpack.c.h.b16 %v279
      %v409 = vunpack.c.l.b16 %v280
      %v410 = vunpack.c.h.b16 %v280
      %v411 = vunpack.c.l.b16 %v281
      %v412 = vunpack.c.h.b16 %v281
      %v413 = vunpack.c.l.b16 %v282
      %v414 = vunpack.c.h.b16 %v282
      %v415 = vunpack.c.l.b16 %v283
      %v416 = vunpack.c.h.b16 %v283
      %v417 = vunpack.c.l.b16 %v284
      %v418 = vunpack.c.h.b16 %v284
      %v419 = vunpack.c.l.b16 %v285
      %v420 = vunpack.c.h.b16 %v285
      %v421 = vpack.c.b16 %v359, %v357
      %v422 = vpack.c.b16 %v360, %v358
      %v423 = vpack.c.b16 %v363, %v361
      %v424 = vpack.c.b16 %v364, %v362
      %v425 = vpack.c.b16 %v367, %v365
      %v426 = vpack.c.b16 %v368, %v366
      %v427 = vpack.c.b16 %v371, %v369
      %v428 = vpack.c.b16 %v372, %v370
      %v429 = vpack.c.b16 %v375, %v373
      %v430 = vpack.c.b16 %v376, %v374
      %v431 = vpack.c.b16 %v379, %v377
      %v432 = vpack.c.b16 %v380, %v378
      %v433 = vpack.c.b16 %v383, %v381
      %v434 = vpack.c.b16 %v384, %v382
      %v435 = vpack.c.b16 %v387, %v385
      %v436 = vpack.c.b16 %v388, %v386
      %v437 = vpack.c.b16 %v391, %v389
      %v438 = vpack.c.b16 %v392, %v390
      %v439 = vpack.c.b16 %v395, %v393
      %v440 = vpack.c.b16 %v396, %v394
      %v441 = vpack.c.b16 %v399, %v397
      %v442 = vpack.c.b16 %v400, %v398
      %v443 = vpack.c.b16 %v403, %v401
      %v444 = vpack.c.b16 %v404, %v402
      %v445 = vpack.c.b16 %v407, %v405
      %v446 = vpack.c.b16 %v408, %v406
      %v447 = vpack.c.b16 %v411, %v409
      %v448 = vpack.c.b16 %v412, %v410
      %v449 = vpack.c.b16 %v415, %v413
      %v450 = vpack.c.b16 %v416, %v414
      %v451 = vpack.c.b16 %v419, %v417
      %v452 = vpack.c.b16 %v420, %v418
      %v517 = vunpack.c.l.b16 %v286
      %v518 = vunpack.c.l.b16 %v287
      %v519 = vunpack.c.l.b16 %v288
      %v520 = vunpack.c.l.b16 %v289
      %v521 = vunpack.c.l.b16 %v290
      %v522 = vunpack.c.l.b16 %v291
      %v523 = vunpack.c.l.b16 %v292
      %v524 = vunpack.c.l.b16 %v293
      %v525 = vunpack.c.l.b16 %v294
      %v526 = vunpack.c.l.b16 %v295
      %v527 = vunpack.c.l.b16 %v296
      %v528 = vunpack.c.l.b16 %v297
      %v529 = vunpack.c.l.b16 %v298
      %v530 = vunpack.c.l.b16 %v299
      %v531 = vunpack.c.l.b16 %v300
      %v532 = vunpack.c.l.b16 %v301
      %v533 = vunpack.c.l.b16 %v302
      %v534 = vunpack.c.l.b16 %v303
      %v535 = vunpack.c.l.b16 %v304
      %v536 = vunpack.c.l.b16 %v305
      %v537 = vunpack.c.l.b16 %v306
      %v538 = vunpack.c.l.b16 %v307
      %v539 = vunpack.c.l.b16 %v308
      %v540 = vunpack.c.l.b16 %v309
      %v541 = vunpack.c.l.b16 %v310
      %v542 = vunpack.c.l.b16 %v311
      %v543 = vunpack.c.l.b16 %v312
      %v544 = vunpack.c.l.b16 %v313
      %v545 = vunpack.c.l.b16 %v314
      %v546 = vunpack.c.l.b16 %v315
      %v547 = vunpack.c.l.b16 %v316
      %v548 = vunpack.c.l.b16 %v317
      %v549 = vpack.c.b16 %v518, %v517
      %v550 = vpack.c.b16 %v520, %v519
      %v551 = vpack.c.b16 %v522, %v521
      %v552 = vpack.c.b16 %v524, %v523
      %v553 = vpack.c.b16 %v526, %v525
      %v554 = vpack.c.b16 %v528, %v527
      %v555 = vpack.c.b16 %v530, %v529
      %v556 = vpack.c.b16 %v532, %v531
      %v557 = vpack.c.b16 %v534, %v533
      %v558 = vpack.c.b16 %v536, %v535
      %v559 = vpack.c.b16 %v538, %v537
      %v560 = vpack.c.b16 %v540, %v539
      %v561 = vpack.c.b16 %v542, %v541
      %v562 = vpack.c.b16 %v544, %v543
      %v563 = vpack.c.b16 %v546, %v545
      %v564 = vpack.c.b16 %v548, %v547
      %581 = vmatprep.subr.bf16.mxu0 0
      %582 = vmatpush1.bf16.msra.mxu0 %v549
      %583 = vmatprep.subr.bf16.mxu0 0
      %584 = vmatpush1.bf16.msra.mxu0 %v550
      %585 = vmatprep.subr.bf16.mxu0 0
      %586 = vmatpush1.bf16.msra.mxu0 %v551
      %587 = vmatprep.subr.bf16.mxu0 0
      %588 = vmatpush1.bf16.msra.mxu0 %v552
      %589 = vmatprep.subr.bf16.mxu0 0
      %590 = vmatpush1.bf16.msra.mxu0 %v553
      %591 = vmatprep.subr.bf16.mxu0 0
      %592 = vmatpush1.bf16.msra.mxu0 %v554
      %593 = vmatprep.subr.bf16.mxu0 0
      %594 = vmatpush1.bf16.msra.mxu0 %v555
      %595 = vmatprep.subr.bf16.mxu0 0
      %596 = vmatpush1.bf16.msra.mxu0 %v556
      %597 = vmatprep.subr.bf16.mxu0 0
      %598 = vmatpush1.bf16.msra.mxu0 %v557
      %599 = vmatprep.subr.bf16.mxu0 0
      %600 = vmatpush1.bf16.msra.mxu0 %v558
      %601 = vmatprep.subr.bf16.mxu0 0
      %602 = vmatpush1.bf16.msra.mxu0 %v559
      %603 = vmatprep.subr.bf16.mxu0 0
      %604 = vmatpush1.bf16.msra.mxu0 %v560
      %605 = vmatprep.subr.bf16.mxu0 0
      %606 = vmatpush1.bf16.msra.mxu0 %v561
      %607 = vmatprep.subr.bf16.mxu0 0
      %608 = vmatpush1.bf16.msra.mxu0 %v562
      %609 = vmatprep.subr.bf16.mxu0 0
      %610 = vmatpush1.bf16.msra.mxu0 %v563
      %611 = vmatprep.subr.bf16.mxu0 0
      %612 = vmatpush1.bf16.msra.mxu0 %v564
      %613 = vmatprep.mubr.bf16.mxu0 %v422
      %614 = vmatmul.mubr.bf16.gmra.mrb[0].mxu0 %v421
      %v615 = vpop.f32.mrb[0].mxu0
      %v616 = vadd.f32 %v323, %v615
      %v617 = vpop.f32.mrb[0].mxu0
      %v618 = vpop.f32.mrb[0].mxu0
      %v619 = vadd.f32 %v323, %v618
      %v620 = vpop.f32.mrb[0].mxu0
      %621 = vmatprep.mubr.bf16.mxu0 %v424
      %622 = vmatmul.mubr.bf16.gmra.mrb[0].mxu0 %v423
      %v623 = vpop.f32.mrb[0].mxu0
      %v624 = vadd.f32 %v323, %v623
      %v625 = vpop.f32.mrb[0].mxu0
      %v626 = vpop.f32.mrb[0].mxu0
      %v627 = vadd.f32 %v323, %v626
      %v628 = vpop.f32.mrb[0].mxu0
      %629 = vmatprep.mubr.bf16.mxu0 %v426
      %630 = vmatmul.mubr.bf16.gmra.mrb[0].mxu0 %v425
      %v631 = vpop.f32.mrb[0].mxu0
      %v632 = vadd.f32 %v323, %v631
      %v633 = vpop.f32.mrb[0].mxu0
      %v634 = vpop.f32.mrb[0].mxu0
      %v635 = vadd.f32 %v323, %v634
      %v636 = vpop.f32.mrb[0].mxu0
      %637 = vmatprep.mubr.bf16.mxu0 %v428
      %638 = vmatmul.mubr.bf16.gmra.mrb[0].mxu0 %v427
      %v639 = vpop.f32.mrb[0].mxu0
      %v640 = vadd.f32 %v323, %v639
      %v641 = vpop.f32.mrb[0].mxu0
      %v642 = vpop.f32.mrb[0].mxu0
      %v643 = vadd.f32 %v323, %v642
      %v644 = vpop.f32.mrb[0].mxu0
      %645 = vmatprep.mubr.bf16.mxu0 %v430
      %646 = vmatmul.mubr.bf16.gmra.mrb[0].mxu0 %v429
      %v647 = vpop.f32.mrb[0].mxu0
      %v648 = vadd.f32 %v323, %v647
      %v649 = vpop.f32.mrb[0].mxu0
      %v650 = vpop.f32.mrb[0].mxu0
      %v651 = vadd.f32 %v323, %v650
      %v652 = vpop.f32.mrb[0].mxu0
      %653 = vmatprep.mubr.bf16.mxu0 %v432
      %654 = vmatmul.mubr.bf16.gmra.mrb[0].mxu0 %v431
      %v655 = vpop.f32.mrb[0].mxu0
      %v656 = vadd.f32 %v323, %v655
      %v657 = vpop.f32.mrb[0].mxu0
      %v658 = vpop.f32.mrb[0].mxu0
      %v659 = vadd.f32 %v323, %v658
      %v660 = vpop.f32.mrb[0].mxu0
      %661 = vmatprep.mubr.bf16.mxu0 %v434
      %662 = vmatmul.mubr.bf16.gmra.mrb[0].mxu0 %v433
      %v663 = vpop.f32.mrb[0].mxu0
      %v664 = vadd.f32 %v323, %v663
      %v665 = vpop.f32.mrb[0].mxu0
      %v666 = vpop.f32.mrb[0].mxu0
      %v667 = vadd.f32 %v323, %v666
      %v668 = vpop.f32.mrb[0].mxu0
      %669 = vmatprep.mubr.bf16.mxu0 %v436
      %670 = vmatmul.mubr.bf16.gmra.mrb[0].mxu0 %v435
      %v671 = vpop.f32.mrb[0].mxu0
      %v672 = vadd.f32 %v323, %v671
      %v673 = vpop.f32.mrb[0].mxu0
      %v674 = vpop.f32.mrb[0].mxu0
      %v675 = vadd.f32 %v323, %v674
      %v676 = vpop.f32.mrb[0].mxu0
      %677 = vmatprep.mubr.bf16.mxu0 %v438
      %678 = vmatmul.mubr.bf16.gmra.mrb[0].mxu0 %v437
      %v679 = vpop.f32.mrb[0].mxu0
      %v680 = vadd.f32 %v323, %v679
      %v681 = vpop.f32.mrb[0].mxu0
      %v682 = vpop.f32.mrb[0].mxu0
      %v683 = vadd.f32 %v323, %v682
      %v684 = vpop.f32.mrb[0].mxu0
      %685 = vmatprep.mubr.bf16.mxu0 %v440
      %686 = vmatmul.mubr.bf16.gmra.mrb[0].mxu0 %v439
      %v687 = vpop.f32.mrb[0].mxu0
      %v688 = vadd.f32 %v323, %v687
      %v689 = vpop.f32.mrb[0].mxu0
      %v690 = vpop.f32.mrb[0].mxu0
      %v691 = vadd.f32 %v323, %v690
      %v692 = vpop.f32.mrb[0].mxu0
      %693 = vmatprep.mubr.bf16.mxu0 %v442
      %694 = vmatmul.mubr.bf16.gmra.mrb[0].mxu0 %v441
      %v695 = vpop.f32.mrb[0].mxu0
      %v696 = vadd.f32 %v323, %v695
      %v697 = vpop.f32.mrb[0].mxu0
      %v698 = vpop.f32.mrb[0].mxu0
      %v699 = vadd.f32 %v323, %v698
      %v700 = vpop.f32.mrb[0].mxu0
      %701 = vmatprep.mubr.bf16.mxu0 %v444
      %702 = vmatmul.mubr.bf16.gmra.mrb[0].mxu0 %v443
      %v703 = vpop.f32.mrb[0].mxu0
      %v704 = vadd.f32 %v323, %v703
      %v705 = vpop.f32.mrb[0].mxu0
      %v706 = vpop.f32.mrb[0].mxu0
      %v707 = vadd.f32 %v323, %v706
      %v708 = vpop.f32.mrb[0].mxu0
      %709 = vmatprep.mubr.bf16.mxu0 %v446
      %710 = vmatmul.mubr.bf16.gmra.mrb[0].mxu0 %v445
      %v711 = vpop.f32.mrb[0].mxu0
      %v712 = vadd.f32 %v323, %v711
      %v713 = vpop.f32.mrb[0].mxu0
      %v714 = vpop.f32.mrb[0].mxu0
      %v715 = vadd.f32 %v323, %v714
      %v716 = vpop.f32.mrb[0].mxu0
      %717 = vmatprep.mubr.bf16.mxu0 %v448
      %718 = vmatmul.mubr.bf16.gmra.mrb[0].mxu0 %v447
      %v719 = vpop.f32.mrb[0].mxu0
      %v720 = vadd.f32 %v323, %v719
      %v721 = vpop.f32.mrb[0].mxu0
      %v722 = vpop.f32.mrb[0].mxu0
      %v723 = vadd.f32 %v323, %v722
      %v724 = vpop.f32.mrb[0].mxu0
      %725 = vmatprep.mubr.bf16.mxu0 %v450
      %726 = vmatmul.mubr.bf16.gmra.mrb[0].mxu0 %v449
      %v727 = vpop.f32.mrb[0].mxu0
      %v728 = vadd.f32 %v323, %v727
      %v729 = vpop.f32.mrb[0].mxu0
      %v730 = vpop.f32.mrb[0].mxu0
      %v731 = vadd.f32 %v323, %v730
      %v732 = vpop.f32.mrb[0].mxu0
      %733 = vmatprep.mubr.bf16.mxu0 %v452
      %734 = vmatmul.mubr.bf16.gmra.mrb[0].mxu0 %v451
      %v735 = vpop.f32.mrb[0].mxu0
      %v736 = vadd.f32 %v323, %v735
      %v737 = vpop.f32.mrb[0].mxu0
      %v738 = vpop.f32.mrb[0].mxu0
      %v739 = vadd.f32 %v323, %v738
      %v740 = vpop.f32.mrb[0].mxu0
      %741 = vdwg.mxu0
      %v742 = vadd.f32 %v616, %v619
      %v743 = vadd.f32 %v742, %v624
      %v744 = vadd.f32 %v743, %v627
      %v745 = vadd.f32 %v744, %v632
      %v746 = vadd.f32 %v745, %v635
      %v747 = vadd.f32 %v746, %v640
      %v748 = vadd.f32 %v747, %v643
      %v749 = vadd.f32 %v748, %v648
      %v750 = vadd.f32 %v749, %v651
      %v751 = vadd.f32 %v750, %v656
      %v752 = vadd.f32 %v751, %v659
      %v753 = vadd.f32 %v752, %v664
      %v754 = vadd.f32 %v753, %v667
      %v755 = vadd.f32 %v754, %v672
      %v756 = vadd.f32 %v755, %v675
      %v757 = vadd.f32 %v756, %v680
      %v758 = vadd.f32 %v757, %v683
      %v759 = vadd.f32 %v758, %v688
      %v760 = vadd.f32 %v759, %v691
      %v761 = vadd.f32 %v760, %v696
      %v762 = vadd.f32 %v761, %v699
      %v763 = vadd.f32 %v762, %v704
      %v764 = vadd.f32 %v763, %v707
      %v765 = vadd.f32 %v764, %v712
      %v766 = vadd.f32 %v765, %v715
      %v767 = vadd.f32 %v766, %v720
      %v768 = vadd.f32 %v767, %v723
      %v769 = vadd.f32 %v768, %v728
      %v770 = vadd.f32 %v769, %v731
      %v771 = vadd.f32 %v770, %v736
      %v772 = vadd.f32 %v771, %v739
      %v773 = vrot.slane %v772, 4
      %v774 = vadd.f32 %v772, %v773
      %v775 = vrot.slane %v774, 2
      %v776 = vadd.f32 %v774, %v775
      %v777 = vrot.slane %v776, 1
      %v778 = vadd.f32 %v776, %v777
      %v779 = vrcp.pop 256.0
      %v780 = vmul.f32 %v778, %v779
      %v781 = vsub.f32 %v616, %v780
      %v782 = vsub.f32 %v619, %v780
      %v783 = vsub.f32 %v624, %v780
      %v784 = vsub.f32 %v627, %v780
      %v785 = vsub.f32 %v632, %v780
      %v786 = vsub.f32 %v635, %v780
      %v787 = vsub.f32 %v640, %v780
      %v788 = vsub.f32 %v643, %v780
      %v789 = vsub.f32 %v648, %v780
      %v790 = vsub.f32 %v651, %v780
      %v791 = vsub.f32 %v656, %v780
      %v792 = vsub.f32 %v659, %v780
      %v793 = vsub.f32 %v664, %v780
      %v794 = vsub.f32 %v667, %v780
      %v795 = vsub.f32 %v672, %v780
      %v796 = vsub.f32 %v675, %v780
      %v797 = vsub.f32 %v680, %v780
      %v798 = vsub.f32 %v683, %v780
      %v799 = vsub.f32 %v688, %v780
      %v800 = vsub.f32 %v691, %v780
      %v801 = vsub.f32 %v696, %v780
      %v802 = vsub.f32 %v699, %v780
      %v803 = vsub.f32 %v704, %v780
      %v804 = vsub.f32 %v707, %v780
      %v805 = vsub.f32 %v712, %v780
      %v806 = vsub.f32 %v715, %v780
      %v807 = vsub.f32 %v720, %v780
      %v808 = vsub.f32 %v723, %v780
      %v809 = vsub.f32 %v728, %v780
      %v810 = vsub.f32 %v731, %v780
      %v811 = vsub.f32 %v736, %v780
      %v812 = vsub.f32 %v739, %v780
      %v813 = vmul.f32 %v781, %v781
      %v814 = vmul.f32 %v782, %v782
      %v815 = vmul.f32 %v783, %v783
      %v816 = vmul.f32 %v784, %v784
      %v817 = vmul.f32 %v785, %v785
      %v818 = vmul.f32 %v786, %v786
      %v819 = vmul.f32 %v787, %v787
      %v820 = vmul.f32 %v788, %v788
      %v821 = vmul.f32 %v789, %v789
      %v822 = vmul.f32 %v790, %v790
      %v823 = vmul.f32 %v791, %v791
      %v824 = vmul.f32 %v792, %v792
      %v825 = vmul.f32 %v793, %v793
      %v826 = vmul.f32 %v794, %v794
      %v827 = vmul.f32 %v795, %v795
      %v828 = vmul.f32 %v796, %v796
      %v829 = vmul.f32 %v797, %v797
      %v830 = vmul.f32 %v798, %v798
      %v831 = vmul.f32 %v799, %v799
      %v832 = vmul.f32 %v800, %v800
      %v833 = vmul.f32 %v801, %v801
      %v834 = vmul.f32 %v802, %v802
      %v835 = vmul.f32 %v803, %v803
      %v836 = vmul.f32 %v804, %v804
      %v837 = vmul.f32 %v805, %v805
      %v838 = vmul.f32 %v806, %v806
      %v839 = vmul.f32 %v807, %v807
      %v840 = vmul.f32 %v808, %v808
      %v841 = vmul.f32 %v809, %v809
      %v842 = vmul.f32 %v810, %v810
      %v843 = vmul.f32 %v811, %v811
      %v844 = vmul.f32 %v812, %v812
      %v845 = vadd.f32 %v813, %v814
      %v846 = vadd.f32 %v845, %v815
      %v847 = vadd.f32 %v846, %v816
      %v848 = vadd.f32 %v847, %v817
      %v849 = vadd.f32 %v848, %v818
      %v850 = vadd.f32 %v849, %v819
      %v851 = vadd.f32 %v850, %v820
      %v852 = vadd.f32 %v851, %v821
      %v853 = vadd.f32 %v852, %v822
      %v854 = vadd.f32 %v853, %v823
      %v855 = vadd.f32 %v854, %v824
      %v856 = vadd.f32 %v855, %v825
      %v857 = vadd.f32 %v856, %v826
      %v858 = vadd.f32 %v857, %v827
      %v859 = vadd.f32 %v858, %v828
      %v860 = vadd.f32 %v859, %v829
      %v861 = vadd.f32 %v860, %v830
      %v862 = vadd.f32 %v861, %v831
      %v863 = vadd.f32 %v862, %v832
      %v864 = vadd.f32 %v863, %v833
      %v865 = vadd.f32 %v864, %v834
      %v866 = vadd.f32 %v865, %v835
      %v867 = vadd.f32 %v866, %v836
      %v868 = vadd.f32 %v867, %v837
      %v869 = vadd.f32 %v868, %v838
      %v870 = vadd.f32 %v869, %v839
      %v871 = vadd.f32 %v870, %v840
      %v872 = vadd.f32 %v871, %v841
      %v873 = vadd.f32 %v872, %v842
      %v874 = vadd.f32 %v873, %v843
      %v875 = vadd.f32 %v874, %v844
      %v876 = vrot.slane %v875, 4
      %v877 = vadd.f32 %v875, %v876
      %v878 = vrot.slane %v877, 2
      %v879 = vadd.f32 %v877, %v878
      %v880 = vrot.slane %v879, 1
      %v881 = vadd.f32 %v879, %v880
      %v882 = vmul.f32 %v881, %v779
      %v883 = vadd.f32 %v882, 1e-05
      %v884 = vrsqrt.pop %v883
      %v885 = vmul.f32 %v781, %v884
      %v886 = vmul.f32 %v782, %v884
      %v887 = vmul.f32 %v783, %v884
      %v888 = vmul.f32 %v784, %v884
      %v889 = vmul.f32 %v785, %v884
      %v890 = vmul.f32 %v786, %v884
      %v891 = vmul.f32 %v787, %v884
      %v892 = vmul.f32 %v788, %v884
      %v893 = vmul.f32 %v789, %v884
      %v894 = vmul.f32 %v790, %v884
      %v895 = vmul.f32 %v791, %v884
      %v896 = vmul.f32 %v792, %v884
      %v897 = vmul.f32 %v793, %v884
      %v898 = vmul.f32 %v794, %v884
      %v899 = vmul.f32 %v795, %v884
      %v900 = vmul.f32 %v796, %v884
      %v901 = vmul.f32 %v797, %v884
      %v902 = vmul.f32 %v798, %v884
      %v903 = vmul.f32 %v799, %v884
      %v904 = vmul.f32 %v800, %v884
      %v905 = vmul.f32 %v801, %v884
      %v906 = vmul.f32 %v802, %v884
      %v907 = vmul.f32 %v803, %v884
      %v908 = vmul.f32 %v804, %v884
      %v909 = vmul.f32 %v805, %v884
      %v910 = vmul.f32 %v806, %v884
      %v911 = vmul.f32 %v807, %v884
      %v912 = vmul.f32 %v808, %v884
      %v913 = vmul.f32 %v809, %v884
      %v914 = vmul.f32 %v810, %v884
      %v915 = vmul.f32 %v811, %v884
      %v916 = vmul.f32 %v812, %v884
      %v917 = vld [vmem:[%s244] sm:$0x1]
      %v919 = vlaneseq
      %v920 = vshrl.u32 %v919, 7
      %v921 = vsub.s32 0, %v920
      %v922 = vrot.slane %v917, %v921
      %v924 = vmul.f32 %v885, %v922
      %v925 = vmul.f32 %v886, %v922
      %v926 = vmul.f32 %v887, %v922
      %v927 = vmul.f32 %v888, %v922
      %v928 = vmul.f32 %v889, %v922
      %v929 = vmul.f32 %v890, %v922
      %v930 = vmul.f32 %v891, %v922
      %v931 = vmul.f32 %v892, %v922
      %v932 = vmul.f32 %v893, %v922
      %v933 = vmul.f32 %v894, %v922
      %v934 = vmul.f32 %v895, %v922
      %v935 = vmul.f32 %v896, %v922
      %v936 = vmul.f32 %v897, %v922
      %v937 = vmul.f32 %v898, %v922
      %v938 = vmul.f32 %v899, %v922
      %v939 = vmul.f32 %v900, %v922
      %v940 = vmul.f32 %v901, %v922
      %v941 = vmul.f32 %v902, %v922
      %v942 = vmul.f32 %v903, %v922
      %v943 = vmul.f32 %v904, %v922
      %v944 = vmul.f32 %v905, %v922
      %v945 = vmul.f32 %v906, %v922
      %v946 = vmul.f32 %v907, %v922
      %v947 = vmul.f32 %v908, %v922
      %v948 = vmul.f32 %v909, %v922
      %v949 = vmul.f32 %v910, %v922
      %v950 = vmul.f32 %v911, %v922
      %v951 = vmul.f32 %v912, %v922
      %v952 = vmul.f32 %v913, %v922
      %v953 = vmul.f32 %v914, %v922
      %v954 = vmul.f32 %v915, %v922
      %v955 = vmul.f32 %v916, %v922
      %v956 = vld [vmem:[%s247] sm:$0x1]
      %v958 = vlaneseq
      %v959 = vshrl.u32 %v958, 7
      %v960 = vsub.s32 0, %v959
      %v961 = vrot.slane %v956, %v960
      %v963 = vadd.f32 %v924, %v961
      %v964 = vadd.f32 %v925, %v961
      %v965 = vadd.f32 %v926, %v961
      %v966 = vadd.f32 %v927, %v961
      %v967 = vadd.f32 %v928, %v961
      %v968 = vadd.f32 %v929, %v961
      %v969 = vadd.f32 %v930, %v961
      %v970 = vadd.f32 %v931, %v961
      %v971 = vadd.f32 %v932, %v961
      %v972 = vadd.f32 %v933, %v961
      %v973 = vadd.f32 %v934, %v961
      %v974 = vadd.f32 %v935, %v961
      %v975 = vadd.f32 %v936, %v961
      %v976 = vadd.f32 %v937, %v961
      %v977 = vadd.f32 %v938, %v961
      %v978 = vadd.f32 %v939, %v961
      %v979 = vadd.f32 %v940, %v961
      %v980 = vadd.f32 %v941, %v961
      %v981 = vadd.f32 %v942, %v961
      %v982 = vadd.f32 %v943, %v961
      %v983 = vadd.f32 %v944, %v961
      %v984 = vadd.f32 %v945, %v961
      %v985 = vadd.f32 %v946, %v961
      %v986 = vadd.f32 %v947, %v961
      %v987 = vadd.f32 %v948, %v961
      %v988 = vadd.f32 %v949, %v961
      %v989 = vadd.f32 %v950, %v961
      %v990 = vadd.f32 %v951, %v961
      %v991 = vadd.f32 %v952, %v961
      %v992 = vadd.f32 %v953, %v961
      %v993 = vadd.f32 %v954, %v961
      %v994 = vadd.f32 %v955, %v961
      %v995 = vmax.f32 %v963, 0.0
      %v996 = vmax.f32 %v964, 0.0
      %v997 = vmax.f32 %v965, 0.0
      %v998 = vmax.f32 %v966, 0.0
      %v999 = vmax.f32 %v967, 0.0
      %v1000 = vmax.f32 %v968, 0.0
      %v1001 = vmax.f32 %v969, 0.0
      %v1002 = vmax.f32 %v970, 0.0
      %v1003 = vmax.f32 %v971, 0.0
      %v1004 = vmax.f32 %v972, 0.0
      %v1005 = vmax.f32 %v973, 0.0
      %v1006 = vmax.f32 %v974, 0.0
      %v1007 = vmax.f32 %v975, 0.0
      %v1008 = vmax.f32 %v976, 0.0
      %v1009 = vmax.f32 %v977, 0.0
      %v1010 = vmax.f32 %v978, 0.0
      %v1011 = vmax.f32 %v979, 0.0
      %v1012 = vmax.f32 %v980, 0.0
      %v1013 = vmax.f32 %v981, 0.0
      %v1014 = vmax.f32 %v982, 0.0
      %v1015 = vmax.f32 %v983, 0.0
      %v1016 = vmax.f32 %v984, 0.0
      %v1017 = vmax.f32 %v985, 0.0
      %v1018 = vmax.f32 %v986, 0.0
      %v1019 = vmax.f32 %v987, 0.0
      %v1020 = vmax.f32 %v988, 0.0
      %v1021 = vmax.f32 %v989, 0.0
      %v1022 = vmax.f32 %v990, 0.0
      %v1023 = vmax.f32 %v991, 0.0
      %v1024 = vmax.f32 %v992, 0.0
      %v1025 = vmax.f32 %v993, 0.0
      %v1026 = vmax.f32 %v994, 0.0
      %1027 = vst [vmem:[%s252] sm:$0xff] %v995
      %1028 = vst [vmem:[%s252 + $0x8] sm:$0xff] %v996
      %1029 = vst [vmem:[%s252 + $0x10] sm:$0xff] %v997
      %1030 = vst [vmem:[%s252 + $0x18] sm:$0xff] %v998
      %1031 = vst [vmem:[%s252 + $0x20] sm:$0xff] %v999
      %1032 = vst [vmem:[%s252 + $0x28] sm:$0xff] %v1000
      %1033 = vst [vmem:[%s252 + $0x30] sm:$0xff] %v1001
      %1034 = vst [vmem:[%s252 + $0x38] sm:$0xff] %v1002
      %1035 = vst [vmem:[%s252 + $0x40] sm:$0xff] %v1003
      %1036 = vst [vmem:[%s252 + $0x48] sm:$0xff] %v1004
      %1037 = vst [vmem:[%s252 + $0x50] sm:$0xff] %v1005
      %1038 = vst [vmem:[%s252 + $0x58] sm:$0xff] %v1006
      %1039 = vst [vmem:[%s252 + $0x60] sm:$0xff] %v1007
      %1040 = vst [vmem:[%s252 + $0x68] sm:$0xff] %v1008
      %1041 = vst [vmem:[%s252 + $0x70] sm:$0xff] %v1009
      %1042 = vst [vmem:[%s252 + $0x78] sm:$0xff] %v1010
      %1043 = vst [vmem:[%s252 + $0x80] sm:$0xff] %v1011
      %1044 = vst [vmem:[%s252 + $0x88] sm:$0xff] %v1012
      %1045 = vst [vmem:[%s252 + $0x90] sm:$0xff] %v1013
      %1046 = vst [vmem:[%s252 + $0x98] sm:$0xff] %v1014
      %1047 = vst [vmem:[%s252 + $0xa0] sm:$0xff] %v1015
      %1048 = vst [vmem:[%s252 + $0xa8] sm:$0xff] %v1016
      %1049 = vst [vmem:[%s252 + $0xb0] sm:$0xff] %v1017
      %1050 = vst [vmem:[%s252 + $0xb8] sm:$0xff] %v1018
      %1051 = vst [vmem:[%s252 + $0xc0] sm:$0xff] %v1019
      %1052 = vst [vmem:[%s252 + $0xc8] sm:$0xff] %v1020
      %1053 = vst [vmem:[%s252 + $0xd0] sm:$0xff] %v1021
      %1054 = vst [vmem:[%s252 + $0xd8] sm:$0xff] %v1022
      %1055 = vst [vmem:[%s252 + $0xe0] sm:$0xff] %v1023
      %1056 = vst [vmem:[%s252 + $0xe8] sm:$0xff] %v1024
      %1057 = vst [vmem:[%s252 + $0xf0] sm:$0xff] %v1025
      %1058 = vst [vmem:[%s252 + $0xf8] sm:$0xff] %v1026
      %p1059 = scmp.lt.s32.totalorder %s16, 1
      %s1060 = scalar_select %p1059, %s16, 1
      %s1061 = smul.addr %s1060, 32
      %s1062 = smul.addr %s1061, 8
      %s1063 = scalar_lea.vmem %s5, %s1062
      // Predicated region
      $region41: #{munit_trainer_forward.20} parent=39 // pred_check
        %p1064 = pneg %p154
      $region42: #{munit_trainer_forward.20} parent=39 // pred_check_branch
        %1066 = sbr.rel (%p1064) target = $region44
      $region43: #{munit_trainer_forward.20} parent=39 // pred_region
        _
      $region44: #{munit_trainer_forward.20} parent=39 // pred_fallthru
        _
    $region40: #{munit_trainer_forward.20} parent=5 // pred_fallthru
      _
    %p1067 = scmp.le.s32.totalorder 2, %s11
    // Predicated region
    $region45: #{munit_trainer_forward.20} parent=5 // pred_check
      %p1068 = pneg %p1067
    $region46: #{munit_trainer_forward.20} parent=5 // pred_check_branch
      %1070 = sbr.rel (%p1068) target = $region48
    $region47: #{munit_trainer_forward.20} parent=5 // pred_region
      %s1071 = ssub.s32 %s11, 2
      // Predicated region
      $region49: #{munit_trainer_forward.20} parent=47 // pred_check
        %p1072 = pneg %p160
      $region50: #{munit_trainer_forward.20} parent=47 // pred_check_branch
        %1074 = sbr.rel (%p1072) target = $region52
      $region51: #{munit_trainer_forward.20} parent=47 // pred_region
        %p1075 = scmp.lt.s32.totalorder %s17, 1
        %s1076 = scalar_select %p1075, %s17, 1
        %s1077 = smul.addr %s1076, 32
        %s1078 = smul.addr %s1077, 8
        %s1079 = scalar_lea.vmem %s5, %s1078
      $region52: #{munit_trainer_forward.20} parent=47 // pred_fallthru
        _
    $region48: #{munit_trainer_forward.20} parent=5 // pred_fallthru
      _
  $region6: #{munit_trainer_forward.20} parent=0 // loop_footer
    %s15 = sadd.s32 1, %s11
  $region7: #{munit_trainer_forward.20} parent=0 // loop_footer_branch
    %10 = sbr.rel target = $region3
  $region8: #{munit_trainer_forward.20} parent=0 // loop_exit
    _

// kernel: munit_trainer_forward.21
$region0: #{munit_trainer_forward.21}
  #allocation0 [shape = 'u32[]', space=smem, size = 0x4, offset = 0x4, fixed_abs, tag = 'smem constant byte address 0x4 - core index']
  #allocation1 [shape = 'u32[144,128]{1,0:T(1,128)}', space=vmem, size = 0x12000, scoped, tag = 'internal scratch']
  %s0 = inlined_call_operand.vmem [shape: bf16[2,64,256], index: 0, kind: input, shape index: {}]
  %s1 = inlined_call_operand.vmem [shape: bf16[256,128], index: 1, kind: input, shape index: {}]
  %s2 = inlined_call_operand.vmem [shape: f32[1,128], index: 2, kind: input, shape index: {}]
  %s3 = inlined_call_operand.vmem [shape: f32[2,1,128], index: 3, kind: input, shape index: {}]
  %s4 = inlined_call_operand.vmem [shape: f32[2,1,128], index: 4, kind: input, shape index: {}]
  %s5 = inlined_call_operand.vmem [shape: f32[2,64,128], index: 5, kind: output, shape index: {}]
  %s6 = sld [smem:[#allocation0]]
  $region53: #{munit_trainer_forward.21} parent=0
    _
  %s8 = ssub.s32 1, %s6
  %s9 = scalar_select 0, %s8, %s6
  loop: start=0, step=1, limit=4
  $region2: #{munit_trainer_forward.21} parent=0 // loop_pre_header
    _
  $region3: #{munit_trainer_forward.21} parent=0 // loop_header
    %s11 = sphi 0, %s15
    %p12 = scmp.ge.s32.totalorder %s11, 4
    %s21 = sphi 0, %s23
    %s24 = sphi 0, %s21
    %s25 = sphi 0, %s24
    %s41 = sphi 0, %s25
    %s45 = sphi 0, %s45
    %s47 = sphi 0, %s45
    %s48 = sphi 0, %s47
    %s62 = sphi 0, %s48
    %s66 = sphi 0, %s66
    %s68 = sphi 0, %s66
    %s69 = sphi 0, %s68
    %s83 = sphi 0, %s69
    %s89 = sphi 0, %s91
    %s92 = sphi 0, %s89
    %s93 = sphi 0, %s92
    %s109 = sphi 0, %s93
    %s115 = sphi 0, %s117
    %s118 = sphi 0, %s115
    %s119 = sphi 0, %s118
    %s135 = sphi 0, %s119
    %s141 = sphi 0, %s143
    %s144 = sphi 0, %s141
    %s145 = sphi 0, %s144
    %s161 = sphi 0, %s145
  $region4: #{munit_trainer_forward.21} parent=0 // loop_header_branch
    %14 = sbr.rel (%p12) target = $region8
  $region5: #{munit_trainer_forward.21} parent=0 // loop_body
    %s16 = ssub.s32 %s11, 1
    %s17 = ssub.s32 %s11, 2
    %s18 = sadd.s32 %s11, 1
    %s19 = ssub.s32 %s11, %s18
    %p20 = scmp.eq.s32.totalorder %s19, 0
    %s22 = sadd.s32 %s21, 1
    %s23 = scalar_select %p20, %s21, %s22
    %p26 = pneg %p20
    %p27 = scmp.eq.s32.totalorder %s11, 1
    %p28 = por %p26, %p27
    %p29 = scmp.ne.s32.totalorder %s21, %s24
    %p30 = scmp.eq.s32.totalorder %s11, 0
    %p31 = por %p29, %p30
    %p32 = scmp.ne.s32.totalorder %s21, %s24
    %p33 = scmp.eq.s32.totalorder %s16, 1
    %p34 = por %p32, %p33
    %p35 = scmp.ne.s32.totalorder %s24, %s25
    %p36 = scmp.eq.s32.totalorder %s16, 0
    %p37 = por %p35, %p36
    %p38 = scmp.ne.s32.totalorder %s24, %s25
    %p39 = scmp.eq.s32.totalorder %s17, 1
    %p40 = por %p38, %p39
    %p42 = scmp.ne.s32.totalorder %s25, %s41
    %p43 = scmp.eq.s32.totalorder %s17, 0
    %p44 = por %p42, %p43
    %s46 = sadd.s32 %s45, 1
    %p49 = scmp.eq.s32.totalorder %s11, 1
    %p50 = scmp.ne.s32.totalorder %s45, %s47
    %p51 = scmp.eq.s32.totalorder %s11, 0
    %p52 = por %p50, %p51
    %p53 = scmp.ne.s32.totalorder %s45, %s47
    %p54 = scmp.eq.s32.totalorder %s16, 1
    %p55 = por %p53, %p54
    %p56 = scmp.ne.s32.totalorder %s47, %s48
    %p57 = scmp.eq.s32.totalorder %s16, 0
    %p58 = por %p56, %p57
    %p59 = scmp.ne.s32.totalorder %s47, %s48
    %p60 = scmp.eq.s32.totalorder %s17, 1
    %p61 = por %p59, %p60
    %p63 = scmp.ne.s32.totalorder %s48, %s62
    %p64 = scmp.eq.s32.totalorder %s17, 0
    %p65 = por %p63, %p64
    %s67 = sadd.s32 %s66, 1
    %p70 = scmp.eq.s32.totalorder %s11, 1
    %p71 = scmp.ne.s32.totalorder %s66, %s68
    %p72 = scmp.eq.s32.totalorder %s11, 0
    %p73 = por %p71, %p72
    %p74 = scmp.ne.s32.totalorder %s66, %s68
    %p75 = scmp.eq.s32.totalorder %s16, 1
    %p76 = por %p74, %p75
    %p77 = scmp.ne.s32.totalorder %s68, %s69
    %p78 = scmp.eq.s32.totalorder %s16, 0
    %p79 = por %p77, %p78
    %p80 = scmp.ne.s32.totalorder %s68, %s69
    %p81 = scmp.eq.s32.totalorder %s17, 1
    %p82 = por %p80, %p81
    %p84 = scmp.ne.s32.totalorder %s69, %s83
    %p85 = scmp.eq.s32.totalorder %s17, 0
    %p86 = por %p84, %p85
    %s87 = ssub.s32 %s11, %s18
    %p88 = scmp.eq.s32.totalorder %s87, 0
    %s90 = sadd.s32 %s89, 1
    %s91 = scalar_select %p88, %s89, %s90
    %p94 = pneg %p88
    %p95 = scmp.eq.s32.totalorder %s11, 1
    %p96 = por %p94, %p95
    %p97 = scmp.ne.s32.totalorder %s89, %s92
    %p98 = scmp.eq.s32.totalorder %s11, 0
    %p99 = por %p97, %p98
    %p100 = scmp.ne.s32.totalorder %s89, %s92
    %p101 = scmp.eq.s32.totalorder %s16, 1
    %p102 = por %p100, %p101
    %p103 = scmp.ne.s32.totalorder %s92, %s93
    %p104 = scmp.eq.s32.totalorder %s16, 0
    %p105 = por %p103, %p104
    %p106 = scmp.ne.s32.totalorder %s92, %s93
    %p107 = scmp.eq.s32.totalorder %s17, 1
    %p108 = por %p106, %p107
    %p110 = scmp.ne.s32.totalorder %s93, %s109
    %p111 = scmp.eq.s32.totalorder %s17, 0
    %p112 = por %p110, %p111
    %s113 = ssub.s32 %s11, %s18
    %p114 = scmp.eq.s32.totalorder %s113, 0
    %s116 = sadd.s32 %s115, 1
    %s117 = scalar_select %p114, %s115, %s116
    %p120 = pneg %p114
    %p121 = scmp.eq.s32.totalorder %s11, 1
    %p122 = por %p120, %p121
    %p123 = scmp.ne.s32.totalorder %s115, %s118
    %p124 = scmp.eq.s32.totalorder %s11, 0
    %p125 = por %p123, %p124
    %p126 = scmp.ne.s32.totalorder %s115, %s118
    %p127 = scmp.eq.s32.totalorder %s16, 1
    %p128 = por %p126, %p127
    %p129 = scmp.ne.s32.totalorder %s118, %s119
    %p130 = scmp.eq.s32.totalorder %s16, 0
    %p131 = por %p129, %p130
    %p132 = scmp.ne.s32.totalorder %s118, %s119
    %p133 = scmp.eq.s32.totalorder %s17, 1
    %p134 = por %p132, %p133
    %p136 = scmp.ne.s32.totalorder %s119, %s135
    %p137 = scmp.eq.s32.totalorder %s17, 0
    %p138 = por %p136, %p137
    %s139 = ssub.s32 %s11, %s18
    %p140 = scmp.eq.s32.totalorder %s139, 0
    %s142 = sadd.s32 %s141, 1
    %s143 = scalar_select %p140, %s141, %s142
    %p146 = pneg %p140
    %p147 = scmp.eq.s32.totalorder %s11, 1
    %p148 = por %p146, %p147
    %p149 = scmp.ne.s32.totalorder %s141, %s144
    %p150 = scmp.eq.s32.totalorder %s11, 0
    %p151 = por %p149, %p150
    %p152 = scmp.ne.s32.totalorder %s141, %s144
    %p153 = scmp.eq.s32.totalorder %s16, 1
    %p154 = por %p152, %p153
    %p155 = scmp.ne.s32.totalorder %s144, %s145
    %p156 = scmp.eq.s32.totalorder %s16, 0
    %p157 = por %p155, %p156
    %p158 = scmp.ne.s32.totalorder %s144, %s145
    %p159 = scmp.eq.s32.totalorder %s17, 1
    %p160 = por %p158, %p159
    %p162 = scmp.ne.s32.totalorder %s145, %s161
    %p163 = scmp.eq.s32.totalorder %s17, 0
    %p164 = por %p162, %p163
    %p165 = scmp.le.s32.totalorder 1, %s11
    %p166 = scmp.lt.s32.totalorder %s11, 3
    %p167 = pnand %p165, %p166
    %p168 = pneg %p167
    // Predicated region
    $region9: #{munit_trainer_forward.21} parent=5 // pred_check
      _
    $region10: #{munit_trainer_forward.21} parent=5 // pred_check_branch
      %170 = sbr.rel (%p167) target = $region12
    $region11: #{munit_trainer_forward.21} parent=5 // pred_region
      %s171 = ssub.s32 %s11, 1
      // Predicated region
      $region13: #{munit_trainer_forward.21} parent=11 // pred_check
        %p172 = pneg %p58
      $region14: #{munit_trainer_forward.21} parent=11 // pred_check_branch
        %174 = sbr.rel (%p172) target = $region16
      $region15: #{munit_trainer_forward.21} parent=11 // pred_region
        _
      $region16: #{munit_trainer_forward.21} parent=11 // pred_fallthru
        _
      // Predicated region
      $region17: #{munit_trainer_forward.21} parent=11 // pred_check
        %p175 = pneg %p79
      $region18: #{munit_trainer_forward.21} parent=11 // pred_check_branch
        %177 = sbr.rel (%p175) target = $region20
      $region19: #{munit_trainer_forward.21} parent=11 // pred_region
        _
      $region20: #{munit_trainer_forward.21} parent=11 // pred_fallthru
        _
    $region12: #{munit_trainer_forward.21} parent=5 // pred_fallthru
      _
    %p178 = scmp.lt.s32.totalorder %s11, 2
    // Predicated region
    $region21: #{munit_trainer_forward.21} parent=5 // pred_check
      %p179 = pneg %p178
    $region22: #{munit_trainer_forward.21} parent=5 // pred_check_branch
      %181 = sbr.rel (%p179) target = $region24
    $region23: #{munit_trainer_forward.21} parent=5 // pred_region
      // Predicated region
      $region25: #{munit_trainer_forward.21} parent=23 // pred_check
        %p182 = pneg %p31
      $region26: #{munit_trainer_forward.21} parent=23 // pred_check_branch
        %184 = sbr.rel (%p182) target = $region28
      $region27: #{munit_trainer_forward.21} parent=23 // pred_region
        %p185 = scmp.lt.s32.totalorder %s11, 1
        %s186 = scalar_select %p185, %s11, 1
        %s187 = smul.addr %s186, 16
        %s188 = smul.addr %s187, 4
        %s189 = scalar_lea.vmem %s0, %s188
      $region28: #{munit_trainer_forward.21} parent=23 // pred_fallthru
        _
      // Predicated region
      $region29: #{munit_trainer_forward.21} parent=23 // pred_check
        %p190 = pneg %p99
      $region30: #{munit_trainer_forward.21} parent=23 // pred_check_branch
        %192 = sbr.rel (%p190) target = $region32
      $region31: #{munit_trainer_forward.21} parent=23 // pred_region
        %p193 = scmp.lt.s32.totalorder %s11, 1
        %s194 = scalar_select %p193, %s11, 1
        %s195 = scalar_lea.vmem %s3, %s194
      $region32: #{munit_trainer_forward.21} parent=23 // pred_fallthru
        _
      // Predicated region
      $region33: #{munit_trainer_forward.21} parent=23 // pred_check
        %p196 = pneg %p125
      $region34: #{munit_trainer_forward.21} parent=23 // pred_check_branch
        %198 = sbr.rel (%p196) target = $region36
      $region35: #{munit_trainer_forward.21} parent=23 // pred_region
        %p199 = scmp.lt.s32.totalorder %s11, 1
        %s200 = scalar_select %p199, %s11, 1
        %s201 = scalar_lea.vmem %s4, %s200
      $region36: #{munit_trainer_forward.21} parent=23 // pred_fallthru
        _
    $region24: #{munit_trainer_forward.21} parent=5 // pred_fallthru
      _
    %p202 = scmp.le.s32.totalorder 1, %s11
    %p203 = scmp.lt.s32.totalorder %s11, 3
    %p204 = pnand %p202, %p203
    %p205 = pneg %p204
    // Predicated region
    $region37: #{munit_trainer_forward.21} parent=5 // pred_check
      _
    $region38: #{munit_trainer_forward.21} parent=5 // pred_check_branch
      %207 = sbr.rel (%p204) target = $region40
    $region39: #{munit_trainer_forward.21} parent=5 // pred_region
      %s208 = ssub.s32 %s11, 1
      %p209 = scmp.lt.s32.totalorder %s16, 1
      %s210 = scalar_select %p209, %s16, 1
      %s211 = smul.addr %s210, 16
      %s212 = smul.addr %s211, 4
      %s213 = scalar_lea.vmem %s0, %s212
      %p214 = pneg %p37
      %p215 = pneg %p34
      %p216 = pneg %p58
      %p217 = pneg %p55
      %p218 = pneg %p79
      %p219 = pneg %p76
      %p220 = scmp.lt.s32.totalorder %s16, 1
      %s221 = scalar_select %p220, %s16, 1
      %s222 = scalar_lea.vmem %s3, %s221
      %p223 = pneg %p105
      %p224 = pneg %p102
      %p225 = scmp.lt.s32.totalorder %s16, 1
      %s226 = scalar_select %p225, %s16, 1
      %s227 = scalar_lea.vmem %s4, %s226
      %p228 = pneg %p131
      %p229 = pneg %p128
      %p230 = pneg %p157
      %p231 = pneg %p154
      %p232 = scmp.lt.s32.totalorder %s16, 1
      %s233 = scalar_select %p232, %s16, 1
      %s234 = smul.addr %s233, 8
      %s235 = smul.addr %s234, 8
      %s236 = scalar_lea.vmem %s5, %s235
      %p237 = scmp.lt.s32.totalorder %s16, 1
      %s238 = scalar_select %p237, %s16, 1
      %s239 = smul.addr %s238, 16
      %s240 = smul.addr %s239, 4
      %s241 = scalar_lea.vmem %s0, %s240
      %p242 = scmp.lt.s32.totalorder %s16, 1
      %s243 = scalar_select %p242, %s16, 1
      %s244 = scalar_lea.vmem %s3, %s243
      %p245 = scmp.lt.s32.totalorder %s16, 1
      %s246 = scalar_select %p245, %s16, 1
      %s247 = scalar_lea.vmem %s4, %s246
      %p248 = scmp.lt.s32.totalorder %s16, 1
      %s249 = scalar_select %p248, %s16, 1
      %s250 = smul.addr %s249, 8
      %s251 = smul.addr %s250, 8
      %s252 = scalar_lea.vmem %s5, %s251
      %v254 = vld [vmem:[%s241] sm:$0xff]
      %v255 = vld [vmem:[%s241 + $0x8] sm:$0xff]
      %v256 = vld [vmem:[%s241 + $0x10] sm:$0xff]
      %v257 = vld [vmem:[%s241 + $0x18] sm:$0xff]
      %v258 = vld [vmem:[%s241 + $0x20] sm:$0xff]
      %v259 = vld [vmem:[%s241 + $0x28] sm:$0xff]
      %v260 = vld [vmem:[%s241 + $0x30] sm:$0xff]
      %v261 = vld [vmem:[%s241 + $0x38] sm:$0xff]
      %v262 = vld [vmem:[%s1] sm:$0xf]
      %v263 = vld [vmem:[%s1 + $0x4] sm:$0xf]
      %v264 = vld [vmem:[%s1 + $0x8] sm:$0xf]
      %v265 = vld [vmem:[%s1 + $0xc] sm:$0xf]
      %v266 = vld [vmem:[%s1 + $0x10] sm:$0xf]
      %v267 = vld [vmem:[%s1 + $0x14] sm:$0xf]
      %v268 = vld [vmem:[%s1 + $0x18] sm:$0xf]
      %v269 = vld [vmem:[%s1 + $0x1c] sm:$0xf]
      %v270 = vld [vmem:[%s1 + $0x20] sm:$0xf]
      %v271 = vld [vmem:[%s1 + $0x24] sm:$0xf]
      %v272 = vld [vmem:[%s1 + $0x28] sm:$0xf]
      %v273 = vld [vmem:[%s1 + $0x2c] sm:$0xf]
      %v274 = vld [vmem:[%s1 + $0x30] sm:$0xf]
      %v275 = vld [vmem:[%s1 + $0x34] sm:$0xf]
      %v276 = vld [vmem:[%s1 + $0x38] sm:$0xf]
      %v277 = vld [vmem:[%s1 + $0x3c] sm:$0xf]
      %v278 = vld [vmem:[%s1 + $0x40] sm:$0xf]
      %v279 = vld [vmem:[%s1 + $0x44] sm:$0xf]
      %v280 = vld [vmem:[%s1 + $0x48] sm:$0xf]
      %v281 = vld [vmem:[%s1 + $0x4c] sm:$0xf]
      %v282 = vld [vmem:[%s1 + $0x50] sm:$0xf]
      %v283 = vld [vmem:[%s1 + $0x54] sm:$0xf]
      %v284 = vld [vmem:[%s1 + $0x58] sm:$0xf]
      %v285 = vld [vmem:[%s1 + $0x5c] sm:$0xf]
      %v286 = vld [vmem:[%s1 + $0x60] sm:$0xf]
      %v287 = vld [vmem:[%s1 + $0x64] sm:$0xf]
      %v288 = vld [vmem:[%s1 + $0x68] sm:$0xf]
      %v289 = vld [vmem:[%s1 + $0x6c] sm:$0xf]
      %v290 = vld [vmem:[%s1 + $0x70] sm:$0xf]
      %v291 = vld [vmem:[%s1 + $0x74] sm:$0xf]
      %v292 = vld [vmem:[%s1 + $0x78] sm:$0xf]
      %v293 = vld [vmem:[%s1 + $0x7c] sm:$0xf]
      %v294 = vld [vmem:[%s2] sm:$0x1]
      %v296 = vlaneseq
      %v297 = vshrl.u32 %v296, 7
      %v298 = vsub.s32 0, %v297
      %v299 = vrot.slane %v294, %v298
      %v309 = vunpack.c.l.b16 %v254
      %v310 = vunpack.c.h.b16 %v254
      %v311 = vunpack.c.l.b16 %v255
      %v312 = vunpack.c.h.b16 %v255
      %v313 = vunpack.c.l.b16 %v256
      %v314 = vunpack.c.h.b16 %v256
      %v315 = vunpack.c.l.b16 %v257
      %v316 = vunpack.c.h.b16 %v257
      %v317 = vunpack.c.l.b16 %v258
      %v318 = vunpack.c.h.b16 %v258
      %v319 = vunpack.c.l.b16 %v259
      %v320 = vunpack.c.h.b16 %v259
      %v321 = vunpack.c.l.b16 %v260
      %v322 = vunpack.c.h.b16 %v260
      %v323 = vunpack.c.l.b16 %v261
      %v324 = vunpack.c.h.b16 %v261
      %v325 = vpack.c.b16 %v311, %v309
      %v326 = vpack.c.b16 %v312, %v310
      %v327 = vpack.c.b16 %v315, %v313
      %v328 = vpack.c.b16 %v316, %v314
      %v329 = vpack.c.b16 %v319, %v317
      %v330 = vpack.c.b16 %v320, %v318
      %v331 = vpack.c.b16 %v323, %v321
      %v332 = vpack.c.b16 %v324, %v322
      %v373 = vunpack.c.l.b16 %v262
      %v374 = vunpack.c.l.b16 %v263
      %v375 = vunpack.c.l.b16 %v264
      %v376 = vunpack.c.l.b16 %v265
      %v377 = vunpack.c.l.b16 %v266
      %v378 = vunpack.c.l.b16 %v267
      %v379 = vunpack.c.l.b16 %v268
      %v380 = vunpack.c.l.b16 %v269
      %v381 = vunpack.c.l.b16 %v270
      %v382 = vunpack.c.l.b16 %v271
      %v383 = vunpack.c.l.b16 %v272
      %v384 = vunpack.c.l.b16 %v273
      %v385 = vunpack.c.l.b16 %v274
      %v386 = vunpack.c.l.b16 %v275
      %v387 = vunpack.c.l.b16 %v276
      %v388 = vunpack.c.l.b16 %v277
      %v389 = vunpack.c.l.b16 %v278
      %v390 = vunpack.c.l.b16 %v279
      %v391 = vunpack.c.l.b16 %v280
      %v392 = vunpack.c.l.b16 %v281
      %v393 = vunpack.c.l.b16 %v282
      %v394 = vunpack.c.l.b16 %v283
      %v395 = vunpack.c.l.b16 %v284
      %v396 = vunpack.c.l.b16 %v285
      %v397 = vunpack.c.l.b16 %v286
      %v398 = vunpack.c.l.b16 %v287
      %v399 = vunpack.c.l.b16 %v288
      %v400 = vunpack.c.l.b16 %v289
      %v401 = vunpack.c.l.b16 %v290
      %v402 = vunpack.c.l.b16 %v291
      %v403 = vunpack.c.l.b16 %v292
      %v404 = vunpack.c.l.b16 %v293
      %v405 = vpack.c.b16 %v374, %v373
      %v406 = vpack.c.b16 %v376, %v375
      %v407 = vpack.c.b16 %v378, %v377
      %v408 = vpack.c.b16 %v380, %v379
      %v409 = vpack.c.b16 %v382, %v381
      %v410 = vpack.c.b16 %v384, %v383
      %v411 = vpack.c.b16 %v386, %v385
      %v412 = vpack.c.b16 %v388, %v387
      %v413 = vpack.c.b16 %v390, %v389
      %v414 = vpack.c.b16 %v392, %v391
      %v415 = vpack.c.b16 %v394, %v393
      %v416 = vpack.c.b16 %v396, %v395
      %v417 = vpack.c.b16 %v398, %v397
      %v418 = vpack.c.b16 %v400, %v399
      %v419 = vpack.c.b16 %v402, %v401
      %v420 = vpack.c.b16 %v404, %v403
      %437 = vmatprep.subr.bf16.mxu0 0
      %438 = vmatpush1.bf16.msra.mxu0 %v405
      %439 = vmatprep.subr.bf16.mxu0 0
      %440 = vmatpush1.bf16.msra.mxu0 %v406
      %441 = vmatprep.subr.bf16.mxu0 0
      %442 = vmatpush1.bf16.msra.mxu0 %v407
      %443 = vmatprep.subr.bf16.mxu0 0
      %444 = vmatpush1.bf16.msra.mxu0 %v408
      %445 = vmatprep.subr.bf16.mxu0 0
      %446 = vmatpush1.bf16.msra.mxu0 %v409
      %447 = vmatprep.subr.bf16.mxu0 0
      %448 = vmatpush1.bf16.msra.mxu0 %v410
      %449 = vmatprep.subr.bf16.mxu0 0
      %450 = vmatpush1.bf16.msra.mxu0 %v411
      %451 = vmatprep.subr.bf16.mxu0 0
      %452 = vmatpush1.bf16.msra.mxu0 %v412
      %453 = vmatprep.subr.bf16.mxu0 0
      %454 = vmatpush1.bf16.msra.mxu0 %v413
      %455 = vmatprep.subr.bf16.mxu0 0
      %456 = vmatpush1.bf16.msra.mxu0 %v414
      %457 = vmatprep.subr.bf16.mxu0 0
      %458 = vmatpush1.bf16.msra.mxu0 %v415
      %459 = vmatprep.subr.bf16.mxu0 0
      %460 = vmatpush1.bf16.msra.mxu0 %v416
      %461 = vmatprep.subr.bf16.mxu0 0
      %462 = vmatpush1.bf16.msra.mxu0 %v417
      %463 = vmatprep.subr.bf16.mxu0 0
      %464 = vmatpush1.bf16.msra.mxu0 %v418
      %465 = vmatprep.subr.bf16.mxu0 0
      %466 = vmatpush1.bf16.msra.mxu0 %v419
      %467 = vmatprep.subr.bf16.mxu0 0
      %468 = vmatpush1.bf16.msra.mxu0 %v420
      %469 = vmatprep.mubr.bf16.mxu0 %v326
      %470 = vmatmul.mubr.bf16.gmra.mrb[0].mxu0 %v325
      %v471 = vpop.f32.mrb[0].mxu0
      %v472 = vadd.f32 %v299, %v471
      %v473 = vpop.f32.mrb[0].mxu0
      %v474 = vpop.f32.mrb[0].mxu0
      %v475 = vadd.f32 %v299, %v474
      %v476 = vpop.f32.mrb[0].mxu0
      %477 = vmatprep.mubr.bf16.mxu0 %v328
      %478 = vmatmul.mubr.bf16.gmra.mrb[0].mxu0 %v327
      %v479 = vpop.f32.mrb[0].mxu0
      %v480 = vadd.f32 %v299, %v479
      %v481 = vpop.f32.mrb[0].mxu0
      %v482 = vpop.f32.mrb[0].mxu0
      %v483 = vadd.f32 %v299, %v482
      %v484 = vpop.f32.mrb[0].mxu0
      %485 = vmatprep.mubr.bf16.mxu0 %v330
      %486 = vmatmul.mubr.bf16.gmra.mrb[0].mxu0 %v329
      %v487 = vpop.f32.mrb[0].mxu0
      %v488 = vadd.f32 %v299, %v487
      %v489 = vpop.f32.mrb[0].mxu0
      %v490 = vpop.f32.mrb[0].mxu0
      %v491 = vadd.f32 %v299, %v490
      %v492 = vpop.f32.mrb[0].mxu0
      %493 = vmatprep.mubr.bf16.mxu0 %v332
      %494 = vmatmul.mubr.bf16.gmra.mrb[0].mxu0 %v331
      %v495 = vpop.f32.mrb[0].mxu0
      %v496 = vadd.f32 %v299, %v495
      %v497 = vpop.f32.mrb[0].mxu0
      %v498 = vpop.f32.mrb[0].mxu0
      %v499 = vadd.f32 %v299, %v498
      %v500 = vpop.f32.mrb[0].mxu0
      %501 = vdwg.mxu0
      %v502 = vadd.f32 %v472, %v475
      %v503 = vadd.f32 %v502, %v480
      %v504 = vadd.f32 %v503, %v483
      %v505 = vadd.f32 %v504, %v488
      %v506 = vadd.f32 %v505, %v491
      %v507 = vadd.f32 %v506, %v496
      %v508 = vadd.f32 %v507, %v499
      %v509 = vrot.slane %v508, 4
      %v510 = vadd.f32 %v508, %v509
      %v511 = vrot.slane %v510, 2
      %v512 = vadd.f32 %v510, %v511
      %v513 = vrot.slane %v512, 1
      %v514 = vadd.f32 %v512, %v513
      %v515 = vrcp.pop 64.0
      %v516 = vmul.f32 %v514, %v515
      %v517 = vsub.f32 %v472, %v516
      %v518 = vsub.f32 %v475, %v516
      %v519 = vsub.f32 %v480, %v516
      %v520 = vsub.f32 %v483, %v516
      %v521 = vsub.f32 %v488, %v516
      %v522 = vsub.f32 %v491, %v516
      %v523 = vsub.f32 %v496, %v516
      %v524 = vsub.f32 %v499, %v516
      %v525 = vmul.f32 %v517, %v517
      %v526 = vmul.f32 %v518, %v518
      %v527 = vmul.f32 %v519, %v519
      %v528 = vmul.f32 %v520, %v520
      %v529 = vmul.f32 %v521, %v521
      %v530 = vmul.f32 %v522, %v522
      %v531 = vmul.f32 %v523, %v523
      %v532 = vmul.f32 %v524, %v524
      %v533 = vadd.f32 %v525, %v526
      %v534 = vadd.f32 %v533, %v527
      %v535 = vadd.f32 %v534, %v528
      %v536 = vadd.f32 %v535, %v529
      %v537 = vadd.f32 %v536, %v530
      %v538 = vadd.f32 %v537, %v531
      %v539 = vadd.f32 %v538, %v532
      %v540 = vrot.slane %v539, 4
      %v541 = vadd.f32 %v539, %v540
      %v542 = vrot.slane %v541, 2
      %v543 = vadd.f32 %v541, %v542
      %v544 = vrot.slane %v543, 1
      %v545 = vadd.f32 %v543, %v544
      %v546 = vmul.f32 %v545, %v515
      %v547 = vadd.f32 %v546, 1e-05
      %v548 = vrsqrt.pop %v547
      %v549 = vmul.f32 %v517, %v548
      %v550 = vmul.f32 %v518, %v548
      %v551 = vmul.f32 %v519, %v548
      %v552 = vmul.f32 %v520, %v548
      %v553 = vmul.f32 %v521, %v548
      %v554 = vmul.f32 %v522, %v548
      %v555 = vmul.f32 %v523, %v548
      %v556 = vmul.f32 %v524, %v548
      %v557 = vld [vmem:[%s244] sm:$0x1]
      %v559 = vlaneseq
      %v560 = vshrl.u32 %v559, 7
      %v561 = vsub.s32 0, %v560
      %v562 = vrot.slane %v557, %v561
      %v564 = vmul.f32 %v549, %v562
      %v565 = vmul.f32 %v550, %v562
      %v566 = vmul.f32 %v551, %v562
      %v567 = vmul.f32 %v552, %v562
      %v568 = vmul.f32 %v553, %v562
      %v569 = vmul.f32 %v554, %v562
      %v570 = vmul.f32 %v555, %v562
      %v571 = vmul.f32 %v556, %v562
      %v572 = vld [vmem:[%s247] sm:$0x1]
      %v574 = vlaneseq
      %v575 = vshrl.u32 %v574, 7
      %v576 = vsub.s32 0, %v575
      %v577 = vrot.slane %v572, %v576
      %v579 = vadd.f32 %v564, %v577
      %v580 = vadd.f32 %v565, %v577
      %v581 = vadd.f32 %v566, %v577
      %v582 = vadd.f32 %v567, %v577
      %v583 = vadd.f32 %v568, %v577
      %v584 = vadd.f32 %v569, %v577
      %v585 = vadd.f32 %v570, %v577
      %v586 = vadd.f32 %v571, %v577
      %v587 = vmax.f32 %v579, 0.0
      %v588 = vmax.f32 %v580, 0.0
      %v589 = vmax.f32 %v581, 0.0
      %v590 = vmax.f32 %v582, 0.0
      %v591 = vmax.f32 %v583, 0.0
      %v592 = vmax.f32 %v584, 0.0
      %v593 = vmax.f32 %v585, 0.0
      %v594 = vmax.f32 %v586, 0.0
      %595 = vst [vmem:[%s252] sm:$0xff] %v587
      %596 = vst [vmem:[%s252 + $0x8] sm:$0xff] %v588
      %597 = vst [vmem:[%s252 + $0x10] sm:$0xff] %v589
      %598 = vst [vmem:[%s252 + $0x18] sm:$0xff] %v590
      %599 = vst [vmem:[%s252 + $0x20] sm:$0xff] %v591
      %600 = vst [vmem:[%s252 + $0x28] sm:$0xff] %v592
      %601 = vst [vmem:[%s252 + $0x30] sm:$0xff] %v593
      %602 = vst [vmem:[%s252 + $0x38] sm:$0xff] %v594
      %p603 = scmp.lt.s32.totalorder %s16, 1
      %s604 = scalar_select %p603, %s16, 1
      %s605 = smul.addr %s604, 8
      %s606 = smul.addr %s605, 8
      %s607 = scalar_lea.vmem %s5, %s606
      // Predicated region
      $region41: #{munit_trainer_forward.21} parent=39 // pred_check
        %p608 = pneg %p154
      $region42: #{munit_trainer_forward.21} parent=39 // pred_check_branch
        %610 = sbr.rel (%p608) target = $region44
      $region43: #{munit_trainer_forward.21} parent=39 // pred_region
        _
      $region44: #{munit_trainer_forward.21} parent=39 // pred_fallthru
        _
    $region40: #{munit_trainer_forward.21} parent=5 // pred_fallthru
      _
    %p611 = scmp.le.s32.totalorder 2, %s11
    // Predicated region
    $region45: #{munit_trainer_forward.21} parent=5 // pred_check
      %p612 = pneg %p611
    $region46: #{munit_trainer_forward.21} parent=5 // pred_check_branch
      %614 = sbr.rel (%p612) target = $region48
    $region47: #{munit_trainer_forward.21} parent=5 // pred_region
      %s615 = ssub.s32 %s11, 2
      // Predicated region
      $region49: #{munit_trainer_forward.21} parent=47 // pred_check
        %p616 = pneg %p160
      $region50: #{munit_trainer_forward.21} parent=47 // pred_check_branch
        %618 = sbr.rel (%p616) target = $region52
      $region51: #{munit_trainer_forward.21} parent=47 // pred_region
        %p619 = scmp.lt.s32.totalorder %s17, 1
        %s620 = scalar_select %p619, %s17, 1
        %s621 = smul.addr %s620, 8
        %s622 = smul.addr %s621, 8
        %s623 = scalar_lea.vmem %s5, %s622
      $region52: #{munit_trainer_forward.21} parent=47 // pred_fallthru
        _
    $region48: #{munit_trainer_forward.21} parent=5 // pred_fallthru
      _
  $region6: #{munit_trainer_forward.21} parent=0 // loop_footer
    %s15 = sadd.s32 1, %s11
  $region7: #{munit_trainer_forward.21} parent=0 // loop_footer_branch
    %10 = sbr.rel target = $region3
  $region8: #{munit_trainer_forward.21} parent=0 // loop_exit
    _

// kernel: munit_trainer_forward.22
$region0: #{munit_trainer_forward.22}
  #allocation0 [shape = 'u32[]', space=smem, size = 0x4, offset = 0x4, fixed_abs, tag = 'smem constant byte address 0x4 - core index']
  #allocation1 [shape = 'u32[144,128]{1,0:T(1,128)}', space=vmem, size = 0x12000, scoped, tag = 'internal scratch']
  %s0 = inlined_call_operand.vmem [shape: bf16[2,64,384], index: 0, kind: input, shape index: {}]
  %s1 = inlined_call_operand.vmem [shape: bf16[384,128], index: 1, kind: input, shape index: {}]
  %s2 = inlined_call_operand.vmem [shape: f32[1,128], index: 2, kind: input, shape index: {}]
  %s3 = inlined_call_operand.vmem [shape: f32[2,1,128], index: 3, kind: input, shape index: {}]
  %s4 = inlined_call_operand.vmem [shape: f32[2,1,128], index: 4, kind: input, shape index: {}]
  %s5 = inlined_call_operand.vmem [shape: f32[2,64,128], index: 5, kind: output, shape index: {}]
  %s6 = sld [smem:[#allocation0]]
  $region53: #{munit_trainer_forward.22} parent=0
    _
  %s8 = ssub.s32 1, %s6
  %s9 = scalar_select 0, %s8, %s6
  loop: start=0, step=1, limit=4
  $region2: #{munit_trainer_forward.22} parent=0 // loop_pre_header
    _
  $region3: #{munit_trainer_forward.22} parent=0 // loop_header
    %s11 = sphi 0, %s15
    %p12 = scmp.ge.s32.totalorder %s11, 4
    %s21 = sphi 0, %s23
    %s24 = sphi 0, %s21
    %s25 = sphi 0, %s24
    %s41 = sphi 0, %s25
    %s45 = sphi 0, %s45
    %s47 = sphi 0, %s45
    %s48 = sphi 0, %s47
    %s62 = sphi 0, %s48
    %s66 = sphi 0, %s66
    %s68 = sphi 0, %s66
    %s69 = sphi 0, %s68
    %s83 = sphi 0, %s69
    %s89 = sphi 0, %s91
    %s92 = sphi 0, %s89
    %s93 = sphi 0, %s92
    %s109 = sphi 0, %s93
    %s115 = sphi 0, %s117
    %s118 = sphi 0, %s115
    %s119 = sphi 0, %s118
    %s135 = sphi 0, %s119
    %s141 = sphi 0, %s143
    %s144 = sphi 0, %s141
    %s145 = sphi 0, %s144
    %s161 = sphi 0, %s145
  $region4: #{munit_trainer_forward.22} parent=0 // loop_header_branch
    %14 = sbr.rel (%p12) target = $region8
  $region5: #{munit_trainer_forward.22} parent=0 // loop_body
    %s16 = ssub.s32 %s11, 1
    %s17 = ssub.s32 %s11, 2
    %s18 = sadd.s32 %s11, 1
    %s19 = ssub.s32 %s11, %s18
    %p20 = scmp.eq.s32.totalorder %s19, 0
    %s22 = sadd.s32 %s21, 1
    %s23 = scalar_select %p20, %s21, %s22
    %p26 = pneg %p20
    %p27 = scmp.eq.s32.totalorder %s11, 1
    %p28 = por %p26, %p27
    %p29 = scmp.ne.s32.totalorder %s21, %s24
    %p30 = scmp.eq.s32.totalorder %s11, 0
    %p31 = por %p29, %p30
    %p32 = scmp.ne.s32.totalorder %s21, %s24
    %p33 = scmp.eq.s32.totalorder %s16, 1
    %p34 = por %p32, %p33
    %p35 = scmp.ne.s32.totalorder %s24, %s25
    %p36 = scmp.eq.s32.totalorder %s16, 0
    %p37 = por %p35, %p36
    %p38 = scmp.ne.s32.totalorder %s24, %s25
    %p39 = scmp.eq.s32.totalorder %s17, 1
    %p40 = por %p38, %p39
    %p42 = scmp.ne.s32.totalorder %s25, %s41
    %p43 = scmp.eq.s32.totalorder %s17, 0
    %p44 = por %p42, %p43
    %s46 = sadd.s32 %s45, 1
    %p49 = scmp.eq.s32.totalorder %s11, 1
    %p50 = scmp.ne.s32.totalorder %s45, %s47
    %p51 = scmp.eq.s32.totalorder %s11, 0
    %p52 = por %p50, %p51
    %p53 = scmp.ne.s32.totalorder %s45, %s47
    %p54 = scmp.eq.s32.totalorder %s16, 1
    %p55 = por %p53, %p54
    %p56 = scmp.ne.s32.totalorder %s47, %s48
    %p57 = scmp.eq.s32.totalorder %s16, 0
    %p58 = por %p56, %p57
    %p59 = scmp.ne.s32.totalorder %s47, %s48
    %p60 = scmp.eq.s32.totalorder %s17, 1
    %p61 = por %p59, %p60
    %p63 = scmp.ne.s32.totalorder %s48, %s62
    %p64 = scmp.eq.s32.totalorder %s17, 0
    %p65 = por %p63, %p64
    %s67 = sadd.s32 %s66, 1
    %p70 = scmp.eq.s32.totalorder %s11, 1
    %p71 = scmp.ne.s32.totalorder %s66, %s68
    %p72 = scmp.eq.s32.totalorder %s11, 0
    %p73 = por %p71, %p72
    %p74 = scmp.ne.s32.totalorder %s66, %s68
    %p75 = scmp.eq.s32.totalorder %s16, 1
    %p76 = por %p74, %p75
    %p77 = scmp.ne.s32.totalorder %s68, %s69
    %p78 = scmp.eq.s32.totalorder %s16, 0
    %p79 = por %p77, %p78
    %p80 = scmp.ne.s32.totalorder %s68, %s69
    %p81 = scmp.eq.s32.totalorder %s17, 1
    %p82 = por %p80, %p81
    %p84 = scmp.ne.s32.totalorder %s69, %s83
    %p85 = scmp.eq.s32.totalorder %s17, 0
    %p86 = por %p84, %p85
    %s87 = ssub.s32 %s11, %s18
    %p88 = scmp.eq.s32.totalorder %s87, 0
    %s90 = sadd.s32 %s89, 1
    %s91 = scalar_select %p88, %s89, %s90
    %p94 = pneg %p88
    %p95 = scmp.eq.s32.totalorder %s11, 1
    %p96 = por %p94, %p95
    %p97 = scmp.ne.s32.totalorder %s89, %s92
    %p98 = scmp.eq.s32.totalorder %s11, 0
    %p99 = por %p97, %p98
    %p100 = scmp.ne.s32.totalorder %s89, %s92
    %p101 = scmp.eq.s32.totalorder %s16, 1
    %p102 = por %p100, %p101
    %p103 = scmp.ne.s32.totalorder %s92, %s93
    %p104 = scmp.eq.s32.totalorder %s16, 0
    %p105 = por %p103, %p104
    %p106 = scmp.ne.s32.totalorder %s92, %s93
    %p107 = scmp.eq.s32.totalorder %s17, 1
    %p108 = por %p106, %p107
    %p110 = scmp.ne.s32.totalorder %s93, %s109
    %p111 = scmp.eq.s32.totalorder %s17, 0
    %p112 = por %p110, %p111
    %s113 = ssub.s32 %s11, %s18
    %p114 = scmp.eq.s32.totalorder %s113, 0
    %s116 = sadd.s32 %s115, 1
    %s117 = scalar_select %p114, %s115, %s116
    %p120 = pneg %p114
    %p121 = scmp.eq.s32.totalorder %s11, 1
    %p122 = por %p120, %p121
    %p123 = scmp.ne.s32.totalorder %s115, %s118
    %p124 = scmp.eq.s32.totalorder %s11, 0
    %p125 = por %p123, %p124
    %p126 = scmp.ne.s32.totalorder %s115, %s118
    %p127 = scmp.eq.s32.totalorder %s16, 1
    %p128 = por %p126, %p127
    %p129 = scmp.ne.s32.totalorder %s118, %s119
    %p130 = scmp.eq.s32.totalorder %s16, 0
    %p131 = por %p129, %p130
    %p132 = scmp.ne.s32.totalorder %s118, %s119
    %p133 = scmp.eq.s32.totalorder %s17, 1
    %p134 = por %p132, %p133
    %p136 = scmp.ne.s32.totalorder %s119, %s135
    %p137 = scmp.eq.s32.totalorder %s17, 0
    %p138 = por %p136, %p137
    %s139 = ssub.s32 %s11, %s18
    %p140 = scmp.eq.s32.totalorder %s139, 0
    %s142 = sadd.s32 %s141, 1
    %s143 = scalar_select %p140, %s141, %s142
    %p146 = pneg %p140
    %p147 = scmp.eq.s32.totalorder %s11, 1
    %p148 = por %p146, %p147
    %p149 = scmp.ne.s32.totalorder %s141, %s144
    %p150 = scmp.eq.s32.totalorder %s11, 0
    %p151 = por %p149, %p150
    %p152 = scmp.ne.s32.totalorder %s141, %s144
    %p153 = scmp.eq.s32.totalorder %s16, 1
    %p154 = por %p152, %p153
    %p155 = scmp.ne.s32.totalorder %s144, %s145
    %p156 = scmp.eq.s32.totalorder %s16, 0
    %p157 = por %p155, %p156
    %p158 = scmp.ne.s32.totalorder %s144, %s145
    %p159 = scmp.eq.s32.totalorder %s17, 1
    %p160 = por %p158, %p159
    %p162 = scmp.ne.s32.totalorder %s145, %s161
    %p163 = scmp.eq.s32.totalorder %s17, 0
    %p164 = por %p162, %p163
    %p165 = scmp.le.s32.totalorder 1, %s11
    %p166 = scmp.lt.s32.totalorder %s11, 3
    %p167 = pnand %p165, %p166
    %p168 = pneg %p167
    // Predicated region
    $region9: #{munit_trainer_forward.22} parent=5 // pred_check
      _
    $region10: #{munit_trainer_forward.22} parent=5 // pred_check_branch
      %170 = sbr.rel (%p167) target = $region12
    $region11: #{munit_trainer_forward.22} parent=5 // pred_region
      %s171 = ssub.s32 %s11, 1
      // Predicated region
      $region13: #{munit_trainer_forward.22} parent=11 // pred_check
        %p172 = pneg %p58
      $region14: #{munit_trainer_forward.22} parent=11 // pred_check_branch
        %174 = sbr.rel (%p172) target = $region16
      $region15: #{munit_trainer_forward.22} parent=11 // pred_region
        _
      $region16: #{munit_trainer_forward.22} parent=11 // pred_fallthru
        _
      // Predicated region
      $region17: #{munit_trainer_forward.22} parent=11 // pred_check
        %p175 = pneg %p79
      $region18: #{munit_trainer_forward.22} parent=11 // pred_check_branch
        %177 = sbr.rel (%p175) target = $region20
      $region19: #{munit_trainer_forward.22} parent=11 // pred_region
        _
      $region20: #{munit_trainer_forward.22} parent=11 // pred_fallthru
        _
    $region12: #{munit_trainer_forward.22} parent=5 // pred_fallthru
      _
    %p178 = scmp.lt.s32.totalorder %s11, 2
    // Predicated region
    $region21: #{munit_trainer_forward.22} parent=5 // pred_check
      %p179 = pneg %p178
    $region22: #{munit_trainer_forward.22} parent=5 // pred_check_branch
      %181 = sbr.rel (%p179) target = $region24
    $region23: #{munit_trainer_forward.22} parent=5 // pred_region
      // Predicated region
      $region25: #{munit_trainer_forward.22} parent=23 // pred_check
        %p182 = pneg %p31
      $region26: #{munit_trainer_forward.22} parent=23 // pred_check_branch
        %184 = sbr.rel (%p182) target = $region28
      $region27: #{munit_trainer_forward.22} parent=23 // pred_region
        %p185 = scmp.lt.s32.totalorder %s11, 1
        %s186 = scalar_select %p185, %s11, 1
        %s187 = smul.addr %s186, 24
        %s188 = smul.addr %s187, 4
        %s189 = scalar_lea.vmem %s0, %s188
      $region28: #{munit_trainer_forward.22} parent=23 // pred_fallthru
        _
      // Predicated region
      $region29: #{munit_trainer_forward.22} parent=23 // pred_check
        %p190 = pneg %p99
      $region30: #{munit_trainer_forward.22} parent=23 // pred_check_branch
        %192 = sbr.rel (%p190) target = $region32
      $region31: #{munit_trainer_forward.22} parent=23 // pred_region
        %p193 = scmp.lt.s32.totalorder %s11, 1
        %s194 = scalar_select %p193, %s11, 1
        %s195 = scalar_lea.vmem %s3, %s194
      $region32: #{munit_trainer_forward.22} parent=23 // pred_fallthru
        _
      // Predicated region
      $region33: #{munit_trainer_forward.22} parent=23 // pred_check
        %p196 = pneg %p125
      $region34: #{munit_trainer_forward.22} parent=23 // pred_check_branch
        %198 = sbr.rel (%p196) target = $region36
      $region35: #{munit_trainer_forward.22} parent=23 // pred_region
        %p199 = scmp.lt.s32.totalorder %s11, 1
        %s200 = scalar_select %p199, %s11, 1
        %s201 = scalar_lea.vmem %s4, %s200
      $region36: #{munit_trainer_forward.22} parent=23 // pred_fallthru
        _
    $region24: #{munit_trainer_forward.22} parent=5 // pred_fallthru
      _
    %p202 = scmp.le.s32.totalorder 1, %s11
    %p203 = scmp.lt.s32.totalorder %s11, 3
    %p204 = pnand %p202, %p203
    %p205 = pneg %p204
    // Predicated region
    $region37: #{munit_trainer_forward.22} parent=5 // pred_check
      _
    $region38: #{munit_trainer_forward.22} parent=5 // pred_check_branch
      %207 = sbr.rel (%p204) target = $region40
    $region39: #{munit_trainer_forward.22} parent=5 // pred_region
      %s208 = ssub.s32 %s11, 1
      %p209 = scmp.lt.s32.totalorder %s16, 1
      %s210 = scalar_select %p209, %s16, 1
      %s211 = smul.addr %s210, 24
      %s212 = smul.addr %s211, 4
      %s213 = scalar_lea.vmem %s0, %s212
      %p214 = pneg %p37
      %p215 = pneg %p34
      %p216 = pneg %p58
      %p217 = pneg %p55
      %p218 = pneg %p79
      %p219 = pneg %p76
      %p220 = scmp.lt.s32.totalorder %s16, 1
      %s221 = scalar_select %p220, %s16, 1
      %s222 = scalar_lea.vmem %s3, %s221
      %p223 = pneg %p105
      %p224 = pneg %p102
      %p225 = scmp.lt.s32.totalorder %s16, 1
      %s226 = scalar_select %p225, %s16, 1
      %s227 = scalar_lea.vmem %s4, %s226
      %p228 = pneg %p131
      %p229 = pneg %p128
      %p230 = pneg %p157
      %p231 = pneg %p154
      %p232 = scmp.lt.s32.totalorder %s16, 1
      %s233 = scalar_select %p232, %s16, 1
      %s234 = smul.addr %s233, 8
      %s235 = smul.addr %s234, 8
      %s236 = scalar_lea.vmem %s5, %s235
      %p237 = scmp.lt.s32.totalorder %s16, 1
      %s238 = scalar_select %p237, %s16, 1
      %s239 = smul.addr %s238, 24
      %s240 = smul.addr %s239, 4
      %s241 = scalar_lea.vmem %s0, %s240
      %p242 = scmp.lt.s32.totalorder %s16, 1
      %s243 = scalar_select %p242, %s16, 1
      %s244 = scalar_lea.vmem %s3, %s243
      %p245 = scmp.lt.s32.totalorder %s16, 1
      %s246 = scalar_select %p245, %s16, 1
      %s247 = scalar_lea.vmem %s4, %s246
      %p248 = scmp.lt.s32.totalorder %s16, 1
      %s249 = scalar_select %p248, %s16, 1
      %s250 = smul.addr %s249, 8
      %s251 = smul.addr %s250, 8
      %s252 = scalar_lea.vmem %s5, %s251
      %v254 = vld [vmem:[%s241] sm:$0xff]
      %v255 = vld [vmem:[%s241 + $0x8] sm:$0xf]
      %v256 = vld [vmem:[%s241 + $0xc] sm:$0xff]
      %v257 = vld [vmem:[%s241 + $0x14] sm:$0xf]
      %v258 = vld [vmem:[%s241 + $0x18] sm:$0xff]
      %v259 = vld [vmem:[%s241 + $0x20] sm:$0xf]
      %v260 = vld [vmem:[%s241 + $0x24] sm:$0xff]
      %v261 = vld [vmem:[%s241 + $0x2c] sm:$0xf]
      %v262 = vld [vmem:[%s241 + $0x30] sm:$0xff]
      %v263 = vld [vmem:[%s241 + $0x38] sm:$0xf]
      %v264 = vld [vmem:[%s241 + $0x3c] sm:$0xff]
      %v265 = vld [vmem:[%s241 + $0x44] sm:$0xf]
      %v266 = vld [vmem:[%s241 + $0x48] sm:$0xff]
      %v267 = vld [vmem:[%s241 + $0x50] sm:$0xf]
      %v268 = vld [vmem:[%s241 + $0x54] sm:$0xff]
      %v269 = vld [vmem:[%s241 + $0x5c] sm:$0xf]
      %v270 = vld [vmem:[%s1] sm:$0xf]
      %v271 = vld [vmem:[%s1 + $0x4] sm:$0xf]
      %v272 = vld [vmem:[%s1 + $0x8] sm:$0xf]
      %v273 = vld [vmem:[%s1 + $0xc] sm:$0xf]
      %v274 = vld [vmem:[%s1 + $0x10] sm:$0xf]
      %v275 = vld [vmem:[%s1 + $0x14] sm:$0xf]
      %v276 = vld [vmem:[%s1 + $0x18] sm:$0xf]
      %v277 = vld [vmem:[%s1 + $0x1c] sm:$0xf]
      %v278 = vld [vmem:[%s1 + $0x20] sm:$0xf]
      %v279 = vld [vmem:[%s1 + $0x24] sm:$0xf]
      %v280 = vld [vmem:[%s1 + $0x28] sm:$0xf]
      %v281 = vld [vmem:[%s1 + $0x2c] sm:$0xf]
      %v282 = vld [vmem:[%s1 + $0x30] sm:$0xf]
      %v283 = vld [vmem:[%s1 + $0x34] sm:$0xf]
      %v284 = vld [vmem:[%s1 + $0x38] sm:$0xf]
      %v285 = vld [vmem:[%s1 + $0x3c] sm:$0xf]
      %v286 = vld [vmem:[%s1 + $0x40] sm:$0xf]
      %v287 = vld [vmem:[%s1 + $0x44] sm:$0xf]
      %v288 = vld [vmem:[%s1 + $0x48] sm:$0xf]
      %v289 = vld [vmem:[%s1 + $0x4c] sm:$0xf]
      %v290 = vld [vmem:[%s1 + $0x50] sm:$0xf]
      %v291 = vld [vmem:[%s1 + $0x54] sm:$0xf]
      %v292 = vld [vmem:[%s1 + $0x58] sm:$0xf]
      %v293 = vld [vmem:[%s1 + $0x5c] sm:$0xf]
      %v294 = vld [vmem:[%s1 + $0x60] sm:$0xf]
      %v295 = vld [vmem:[%s1 + $0x64] sm:$0xf]
      %v296 = vld [vmem:[%s1 + $0x68] sm:$0xf]
      %v297 = vld [vmem:[%s1 + $0x6c] sm:$0xf]
      %v298 = vld [vmem:[%s1 + $0x70] sm:$0xf]
      %v299 = vld [vmem:[%s1 + $0x74] sm:$0xf]
      %v300 = vld [vmem:[%s1 + $0x78] sm:$0xf]
      %v301 = vld [vmem:[%s1 + $0x7c] sm:$0xf]
      %v302 = vld [vmem:[%s1 + $0x80] sm:$0xf]
      %v303 = vld [vmem:[%s1 + $0x84] sm:$0xf]
      %v304 = vld [vmem:[%s1 + $0x88] sm:$0xf]
      %v305 = vld [vmem:[%s1 + $0x8c] sm:$0xf]
      %v306 = vld [vmem:[%s1 + $0x90] sm:$0xf]
      %v307 = vld [vmem:[%s1 + $0x94] sm:$0xf]
      %v308 = vld [vmem:[%s1 + $0x98] sm:$0xf]
      %v309 = vld [vmem:[%s1 + $0x9c] sm:$0xf]
      %v310 = vld [vmem:[%s1 + $0xa0] sm:$0xf]
      %v311 = vld [vmem:[%s1 + $0xa4] sm:$0xf]
      %v312 = vld [vmem:[%s1 + $0xa8] sm:$0xf]
      %v313 = vld [vmem:[%s1 + $0xac] sm:$0xf]
      %v314 = vld [vmem:[%s1 + $0xb0] sm:$0xf]
      %v315 = vld [vmem:[%s1 + $0xb4] sm:$0xf]
      %v316 = vld [vmem:[%s1 + $0xb8] sm:$0xf]
      %v317 = vld [vmem:[%s1 + $0xbc] sm:$0xf]
      %v318 = vld [vmem:[%s2] sm:$0x1]
      %v320 = vlaneseq
      %v321 = vshrl.u32 %v320, 7
      %v322 = vsub.s32 0, %v321
      %v323 = vrot.slane %v318, %v322
      %v341 = vunpack.c.l.b16 %v254
      %v342 = vunpack.c.h.b16 %v254
      %v343 = vunpack.c.l.b16 %v255
      %v344 = vunpack.c.l.b16 %v256
      %v345 = vunpack.c.h.b16 %v256
      %v346 = vunpack.c.l.b16 %v257
      %v347 = vunpack.c.l.b16 %v258
      %v348 = vunpack.c.h.b16 %v258
      %v349 = vunpack.c.l.b16 %v259
      %v350 = vunpack.c.l.b16 %v260
      %v351 = vunpack.c.h.b16 %v260
      %v352 = vunpack.c.l.b16 %v261
      %v353 = vunpack.c.l.b16 %v262
      %v354 = vunpack.c.h.b16 %v262
      %v355 = vunpack.c.l.b16 %v263
      %v356 = vunpack.c.l.b16 %v264
      %v357 = vunpack.c.h.b16 %v264
      %v358 = vunpack.c.l.b16 %v265
      %v359 = vunpack.c.l.b16 %v266
      %v360 = vunpack.c.h.b16 %v266
      %v361 = vunpack.c.l.b16 %v267
      %v362 = vunpack.c.l.b16 %v268
      %v363 = vunpack.c.h.b16 %v268
      %v364 = vunpack.c.l.b16 %v269
      %v365 = vpack.c.b16 %v344, %v341
      %v366 = vpack.c.b16 %v345, %v342
      %v367 = vpack.c.b16 %v346, %v343
      %v368 = vpack.c.b16 %v350, %v347
      %v369 = vpack.c.b16 %v351, %v348
      %v370 = vpack.c.b16 %v352, %v349
      %v371 = vpack.c.b16 %v356, %v353
      %v372 = vpack.c.b16 %v357, %v354
      %v373 = vpack.c.b16 %v358, %v355
      %v374 = vpack.c.b16 %v362, %v359
      %v375 = vpack.c.b16 %v363, %v360
      %v376 = vpack.c.b16 %v364, %v361
      %v437 = vunpack.c.l.b16 %v270
      %v438 = vunpack.c.l.b16 %v271
      %v439 = vunpack.c.l.b16 %v272
      %v440 = vunpack.c.l.b16 %v273
      %v441 = vunpack.c.l.b16 %v274
      %v442 = vunpack.c.l.b16 %v275
      %v443 = vunpack.c.l.b16 %v276
      %v444 = vunpack.c.l.b16 %v277
      %v445 = vunpack.c.l.b16 %v278
      %v446 = vunpack.c.l.b16 %v279
      %v447 = vunpack.c.l.b16 %v280
      %v448 = vunpack.c.l.b16 %v281
      %v449 = vunpack.c.l.b16 %v282
      %v450 = vunpack.c.l.b16 %v283
      %v451 = vunpack.c.l.b16 %v284
      %v452 = vunpack.c.l.b16 %v285
      %v453 = vunpack.c.l.b16 %v286
      %v454 = vunpack.c.l.b16 %v287
      %v455 = vunpack.c.l.b16 %v288
      %v456 = vunpack.c.l.b16 %v289
      %v457 = vunpack.c.l.b16 %v290
      %v458 = vunpack.c.l.b16 %v291
      %v459 = vunpack.c.l.b16 %v292
      %v460 = vunpack.c.l.b16 %v293
      %v461 = vunpack.c.l.b16 %v294
      %v462 = vunpack.c.l.b16 %v295
      %v463 = vunpack.c.l.b16 %v296
      %v464 = vunpack.c.l.b16 %v297
      %v465 = vunpack.c.l.b16 %v298
      %v466 = vunpack.c.l.b16 %v299
      %v467 = vunpack.c.l.b16 %v300
      %v468 = vunpack.c.l.b16 %v301
      %v469 = vunpack.c.l.b16 %v302
      %v470 = vunpack.c.l.b16 %v303
      %v471 = vunpack.c.l.b16 %v304
      %v472 = vunpack.c.l.b16 %v305
      %v473 = vunpack.c.l.b16 %v306
      %v474 = vunpack.c.l.b16 %v307
      %v475 = vunpack.c.l.b16 %v308
      %v476 = vunpack.c.l.b16 %v309
      %v477 = vunpack.c.l.b16 %v310
      %v478 = vunpack.c.l.b16 %v311
      %v479 = vunpack.c.l.b16 %v312
      %v480 = vunpack.c.l.b16 %v313
      %v481 = vunpack.c.l.b16 %v314
      %v482 = vunpack.c.l.b16 %v315
      %v483 = vunpack.c.l.b16 %v316
      %v484 = vunpack.c.l.b16 %v317
      %v485 = vpack.c.b16 %v438, %v437
      %v486 = vpack.c.b16 %v440, %v439
      %v487 = vpack.c.b16 %v442, %v441
      %v488 = vpack.c.b16 %v444, %v443
      %v489 = vpack.c.b16 %v446, %v445
      %v490 = vpack.c.b16 %v448, %v447
      %v491 = vpack.c.b16 %v450, %v449
      %v492 = vpack.c.b16 %v452, %v451
      %v493 = vpack.c.b16 %v454, %v453
      %v494 = vpack.c.b16 %v456, %v455
      %v495 = vpack.c.b16 %v458, %v457
      %v496 = vpack.c.b16 %v460, %v459
      %v497 = vpack.c.b16 %v462, %v461
      %v498 = vpack.c.b16 %v464, %v463
      %v499 = vpack.c.b16 %v466, %v465
      %v500 = vpack.c.b16 %v468, %v467
      %v501 = vpack.c.b16 %v470, %v469
      %v502 = vpack.c.b16 %v472, %v471
      %v503 = vpack.c.b16 %v474, %v473
      %v504 = vpack.c.b16 %v476, %v475
      %v505 = vpack.c.b16 %v478, %v477
      %v506 = vpack.c.b16 %v480, %v479
      %v507 = vpack.c.b16 %v482, %v481
      %v508 = vpack.c.b16 %v484, %v483
      %533 = vmatprep.subr.bf16.mxu0 0
      %534 = vmatpush1.bf16.msra.mxu0 %v485
      %535 = vmatprep.subr.bf16.mxu0 0
      %536 = vmatpush1.bf16.msra.mxu0 %v486
      %537 = vmatprep.subr.bf16.mxu0 0
      %538 = vmatpush1.bf16.msra.mxu0 %v487
      %539 = vmatprep.subr.bf16.mxu0 0
      %540 = vmatpush1.bf16.msra.mxu0 %v488
      %541 = vmatprep.subr.bf16.mxu0 0
      %542 = vmatpush1.bf16.msra.mxu0 %v489
      %543 = vmatprep.subr.bf16.mxu0 0
      %544 = vmatpush1.bf16.msra.mxu0 %v490
      %545 = vmatprep.subr.bf16.mxu0 0
      %546 = vmatpush1.bf16.msra.mxu0 %v491
      %547 = vmatprep.subr.bf16.mxu0 0
      %548 = vmatpush1.bf16.msra.mxu0 %v492
      %549 = vmatprep.subr.bf16.mxu0 0
      %550 = vmatpush1.bf16.msra.mxu0 %v493
      %551 = vmatprep.subr.bf16.mxu0 0
      %552 = vmatpush1.bf16.msra.mxu0 %v494
      %553 = vmatprep.subr.bf16.mxu0 0
      %554 = vmatpush1.bf16.msra.mxu0 %v495
      %555 = vmatprep.subr.bf16.mxu0 0
      %556 = vmatpush1.bf16.msra.mxu0 %v496
      %557 = vmatprep.subr.bf16.mxu0 0
      %558 = vmatpush1.bf16.msra.mxu0 %v497
      %559 = vmatprep.subr.bf16.mxu0 0
      %560 = vmatpush1.bf16.msra.mxu0 %v498
      %561 = vmatprep.subr.bf16.mxu0 0
      %562 = vmatpush1.bf16.msra.mxu0 %v499
      %563 = vmatprep.subr.bf16.mxu0 0
      %564 = vmatpush1.bf16.msra.mxu0 %v500
      %565 = vmatprep.mubr.bf16.mxu0 %v366
      %566 = vmatmul.mubr.bf16.gmra.mrb[0].mxu0 %v365
      %v567 = vpop.f32.mrb[0].mxu0
      %v568 = vadd.f32 %v323, %v567
      %v569 = vpop.f32.mrb[0].mxu0
      %v570 = vpop.f32.mrb[0].mxu0
      %v571 = vadd.f32 %v323, %v570
      %v572 = vpop.f32.mrb[0].mxu0
      %573 = vmatprep.mubr.bf16.mxu0 %v369
      %574 = vmatmul.mubr.bf16.gmra.mrb[0].mxu0 %v368
      %v575 = vpop.f32.mrb[0].mxu0
      %v576 = vadd.f32 %v323, %v575
      %v577 = vpop.f32.mrb[0].mxu0
      %v578 = vpop.f32.mrb[0].mxu0
      %v579 = vadd.f32 %v323, %v578
      %v580 = vpop.f32.mrb[0].mxu0
      %581 = vmatprep.mubr.bf16.mxu0 %v372
      %582 = vmatmul.mubr.bf16.gmra.mrb[0].mxu0 %v371
      %v583 = vpop.f32.mrb[0].mxu0
      %v584 = vadd.f32 %v323, %v583
      %v585 = vpop.f32.mrb[0].mxu0
      %v586 = vpop.f32.mrb[0].mxu0
      %v587 = vadd.f32 %v323, %v586
      %v588 = vpop.f32.mrb[0].mxu0
      %589 = vmatprep.mubr.bf16.mxu0 %v375
      %590 = vmatmul.mubr.bf16.gmra.mrb[0].mxu0 %v374
      %v591 = vpop.f32.mrb[0].mxu0
      %v592 = vadd.f32 %v323, %v591
      %v593 = vpop.f32.mrb[0].mxu0
      %v594 = vpop.f32.mrb[0].mxu0
      %v595 = vadd.f32 %v323, %v594
      %v596 = vpop.f32.mrb[0].mxu0
      %597 = vdwg.mxu0
      %598 = vmatprep.subr.bf16.mxu0 0
      %599 = vmatpush1.bf16.msra.mxu0 %v501
      %600 = vmatprep.subr.bf16.mxu0 0
      %601 = vmatpush1.bf16.msra.mxu0 %v502
      %602 = vmatprep.subr.bf16.mxu0 0
      %603 = vmatpush1.bf16.msra.mxu0 %v503
      %604 = vmatprep.subr.bf16.mxu0 0
      %605 = vmatpush1.bf16.msra.mxu0 %v504
      %606 = vmatprep.subr.bf16.mxu0 0
      %607 = vmatpush1.bf16.msra.mxu0 %v505
      %608 = vmatprep.subr.bf16.mxu0 0
      %609 = vmatpush1.bf16.msra.mxu0 %v506
      %610 = vmatprep.subr.bf16.mxu0 0
      %611 = vmatpush1.bf16.msra.mxu0 %v507
      %612 = vmatprep.subr.bf16.mxu0 0
      %613 = vmatpush1.bf16.msra.mxu0 %v508
      %614 = vmatprep.subr.bf16.mxu0 0
      %615 = vmatpush1.bf16.msra.mxu0 0
      %616 = vmatprep.subr.bf16.mxu0 0
      %617 = vmatpush1.bf16.msra.mxu0 0
      %618 = vmatprep.subr.bf16.mxu0 0
      %619 = vmatpush1.bf16.msra.mxu0 0
      %620 = vmatprep.subr.bf16.mxu0 0
      %621 = vmatpush1.bf16.msra.mxu0 0
      %622 = vmatprep.subr.bf16.mxu0 0
      %623 = vmatpush1.bf16.msra.mxu0 0
      %624 = vmatprep.subr.bf16.mxu0 0
      %625 = vmatpush1.bf16.msra.mxu0 0
      %626 = vmatprep.subr.bf16.mxu0 0
      %627 = vmatpush1.bf16.msra.mxu0 0
      %628 = vmatprep.subr.bf16.mxu0 0
      %629 = vmatpush1.bf16.msra.mxu0 0
      %630 = vmatprep.mubr.bf16.mxu0 0
      %631 = vmatmul.mubr.bf16.gmra.mrb[0].mxu0 %v367
      %v632 = vpop.f32.mrb[0].mxu0
      %v633 = vadd.f32 %v568, %v632
      %v634 = vpop.f32.mrb[0].mxu0
      %v635 = vpop.f32.mrb[0].mxu0
      %v636 = vadd.f32 %v571, %v635
      %v637 = vpop.f32.mrb[0].mxu0
      %638 = vmatprep.mubr.bf16.mxu0 0
      %639 = vmatmul.mubr.bf16.gmra.mrb[0].mxu0 %v370
      %v640 = vpop.f32.mrb[0].mxu0
      %v641 = vadd.f32 %v576, %v640
      %v642 = vpop.f32.mrb[0].mxu0
      %v643 = vpop.f32.mrb[0].mxu0
      %v644 = vadd.f32 %v579, %v643
      %v645 = vpop.f32.mrb[0].mxu0
      %646 = vmatprep.mubr.bf16.mxu0 0
      %647 = vmatmul.mubr.bf16.gmra.mrb[0].mxu0 %v373
      %v648 = vpop.f32.mrb[0].mxu0
      %v649 = vadd.f32 %v584, %v648
      %v650 = vpop.f32.mrb[0].mxu0
      %v651 = vpop.f32.mrb[0].mxu0
      %v652 = vadd.f32 %v587, %v651
      %v653 = vpop.f32.mrb[0].mxu0
      %654 = vmatprep.mubr.bf16.mxu0 0
      %655 = vmatmul.mubr.bf16.gmra.mrb[0].mxu0 %v376
      %v656 = vpop.f32.mrb[0].mxu0
      %v657 = vadd.f32 %v592, %v656
      %v658 = vpop.f32.mrb[0].mxu0
      %v659 = vpop.f32.mrb[0].mxu0
      %v660 = vadd.f32 %v595, %v659
      %v661 = vpop.f32.mrb[0].mxu0
      %662 = vdwg.mxu0
      %v663 = vadd.f32 %v633, %v636
      %v664 = vadd.f32 %v663, %v641
      %v665 = vadd.f32 %v664, %v644
      %v666 = vadd.f32 %v665, %v649
      %v667 = vadd.f32 %v666, %v652
      %v668 = vadd.f32 %v667, %v657
      %v669 = vadd.f32 %v668, %v660
      %v670 = vrot.slane %v669, 4
      %v671 = vadd.f32 %v669, %v670
      %v672 = vrot.slane %v671, 2
      %v673 = vadd.f32 %v671, %v672
      %v674 = vrot.slane %v673, 1
      %v675 = vadd.f32 %v673, %v674
      %v676 = vrcp.pop 64.0
      %v677 = vmul.f32 %v675, %v676
      %v678 = vsub.f32 %v633, %v677
      %v679 = vsub.f32 %v636, %v677
      %v680 = vsub.f32 %v641, %v677
      %v681 = vsub.f32 %v644, %v677
      %v682 = vsub.f32 %v649, %v677
      %v683 = vsub.f32 %v652, %v677
      %v684 = vsub.f32 %v657, %v677
      %v685 = vsub.f32 %v660, %v677
      %v686 = vmul.f32 %v678, %v678
      %v687 = vmul.f32 %v679, %v679
      %v688 = vmul.f32 %v680, %v680
      %v689 = vmul.f32 %v681, %v681
      %v690 = vmul.f32 %v682, %v682
      %v691 = vmul.f32 %v683, %v683
      %v692 = vmul.f32 %v684, %v684
      %v693 = vmul.f32 %v685, %v685
      %v694 = vadd.f32 %v686, %v687
      %v695 = vadd.f32 %v694, %v688
      %v696 = vadd.f32 %v695, %v689
      %v697 = vadd.f32 %v696, %v690
      %v698 = vadd.f32 %v697, %v691
      %v699 = vadd.f32 %v698, %v692
      %v700 = vadd.f32 %v699, %v693
      %v701 = vrot.slane %v700, 4
      %v702 = vadd.f32 %v700, %v701
      %v703 = vrot.slane %v702, 2
      %v704 = vadd.f32 %v702, %v703
      %v705 = vrot.slane %v704, 1
      %v706 = vadd.f32 %v704, %v705
      %v707 = vmul.f32 %v706, %v676
      %v708 = vadd.f32 %v707, 1e-05
      %v709 = vrsqrt.pop %v708
      %v710 = vmul.f32 %v678, %v709
      %v711 = vmul.f32 %v679, %v709
      %v712 = vmul.f32 %v680, %v709
      %v713 = vmul.f32 %v681, %v709
      %v714 = vmul.f32 %v682, %v709
      %v715 = vmul.f32 %v683, %v709
      %v716 = vmul.f32 %v684, %v709
      %v717 = vmul.f32 %v685, %v709
      %v718 = vld [vmem:[%s244] sm:$0x1]
      %v720 = vlaneseq
      %v721 = vshrl.u32 %v720, 7
      %v722 = vsub.s32 0, %v721
      %v723 = vrot.slane %v718, %v722
      %v725 = vmul.f32 %v710, %v723
      %v726 = vmul.f32 %v711, %v723
      %v727 = vmul.f32 %v712, %v723
      %v728 = vmul.f32 %v713, %v723
      %v729 = vmul.f32 %v714, %v723
      %v730 = vmul.f32 %v715, %v723
      %v731 = vmul.f32 %v716, %v723
      %v732 = vmul.f32 %v717, %v723
      %v733 = vld [vmem:[%s247] sm:$0x1]
      %v735 = vlaneseq
      %v736 = vshrl.u32 %v735, 7
      %v737 = vsub.s32 0, %v736
      %v738 = vrot.slane %v733, %v737
      %v740 = vadd.f32 %v725, %v738
      %v741 = vadd.f32 %v726, %v738
      %v742 = vadd.f32 %v727, %v738
      %v743 = vadd.f32 %v728, %v738
      %v744 = vadd.f32 %v729, %v738
      %v745 = vadd.f32 %v730, %v738
      %v746 = vadd.f32 %v731, %v738
      %v747 = vadd.f32 %v732, %v738
      %v748 = vmax.f32 %v740, 0.0
      %v749 = vmax.f32 %v741, 0.0
      %v750 = vmax.f32 %v742, 0.0
      %v751 = vmax.f32 %v743, 0.0
      %v752 = vmax.f32 %v744, 0.0
      %v753 = vmax.f32 %v745, 0.0
      %v754 = vmax.f32 %v746, 0.0
      %v755 = vmax.f32 %v747, 0.0
      %756 = vst [vmem:[%s252] sm:$0xff] %v748
      %757 = vst [vmem:[%s252 + $0x8] sm:$0xff] %v749
      %758 = vst [vmem:[%s252 + $0x10] sm:$0xff] %v750
      %759 = vst [vmem:[%s252 + $0x18] sm:$0xff] %v751
      %760 = vst [vmem:[%s252 + $0x20] sm:$0xff] %v752
      %761 = vst [vmem:[%s252 + $0x28] sm:$0xff] %v753
      %762 = vst [vmem:[%s252 + $0x30] sm:$0xff] %v754
      %763 = vst [vmem:[%s252 + $0x38] sm:$0xff] %v755
      %p764 = scmp.lt.s32.totalorder %s16, 1
      %s765 = scalar_select %p764, %s16, 1
      %s766 = smul.addr %s765, 8
      %s767 = smul.addr %s766, 8
      %s768 = scalar_lea.vmem %s5, %s767
      // Predicated region
      $region41: #{munit_trainer_forward.22} parent=39 // pred_check
        %p769 = pneg %p154
      $region42: #{munit_trainer_forward.22} parent=39 // pred_check_branch
        %771 = sbr.rel (%p769) target = $region44
      $region43: #{munit_trainer_forward.22} parent=39 // pred_region
        _
      $region44: #{munit_trainer_forward.22} parent=39 // pred_fallthru
        _
    $region40: #{munit_trainer_forward.22} parent=5 // pred_fallthru
      _
    %p772 = scmp.le.s32.totalorder 2, %s11
    // Predicated region
    $region45: #{munit_trainer_forward.22} parent=5 // pred_check
      %p773 = pneg %p772
    $region46: #{munit_trainer_forward.22} parent=5 // pred_check_branch
      %775 = sbr.rel (%p773) target = $region48
    $region47: #{munit_trainer_forward.22} parent=5 // pred_region
      %s776 = ssub.s32 %s11, 2
      // Predicated region
      $region49: #{munit_trainer_forward.22} parent=47 // pred_check
        %p777 = pneg %p160
      $region50: #{munit_trainer_forward.22} parent=47 // pred_check_branch
        %779 = sbr.rel (%p777) target = $region52
      $region51: #{munit_trainer_forward.22} parent=47 // pred_region
        %p780 = scmp.lt.s32.totalorder %s17, 1
        %s781 = scalar_select %p780, %s17, 1
        %s782 = smul.addr %s781, 8
        %s783 = smul.addr %s782, 8
        %s784 = scalar_lea.vmem %s5, %s783
      $region52: #{munit_trainer_forward.22} parent=47 // pred_fallthru
        _
    $region48: #{munit_trainer_forward.22} parent=5 // pred_fallthru
      _
  $region6: #{munit_trainer_forward.22} parent=0 // loop_footer
    %s15 = sadd.s32 1, %s11
  $region7: #{munit_trainer_forward.22} parent=0 // loop_footer_branch
    %10 = sbr.rel target = $region3
  $region8: #{munit_trainer_forward.22} parent=0 // loop_exit
    _

// kernel: munit_trainer_forward.23
$region0: #{munit_trainer_forward.23}
  #allocation0 [shape = 'u32[]', space=smem, size = 0x4, offset = 0x4, fixed_abs, tag = 'smem constant byte address 0x4 - core index']
  #allocation1 [shape = 'u32[144,128]{1,0:T(1,128)}', space=vmem, size = 0x12000, scoped, tag = 'internal scratch']
  %s0 = inlined_call_operand.vmem [shape: bf16[2,64,384], index: 0, kind: input, shape index: {}]
  %s1 = inlined_call_operand.vmem [shape: bf16[384,128], index: 1, kind: input, shape index: {}]
  %s2 = inlined_call_operand.vmem [shape: f32[1,128], index: 2, kind: input, shape index: {}]
  %s3 = inlined_call_operand.vmem [shape: f32[2,1,128], index: 3, kind: input, shape index: {}]
  %s4 = inlined_call_operand.vmem [shape: f32[2,1,128], index: 4, kind: input, shape index: {}]
  %s5 = inlined_call_operand.vmem [shape: f32[2,64,128], index: 5, kind: input, shape index: {}]
  %s6 = inlined_call_operand.vmem [shape: f32[2,64,128], index: 6, kind: output, shape index: {}]
  %s7 = sld [smem:[#allocation0]]
  $region57: #{munit_trainer_forward.23} parent=0
    _
  %s9 = ssub.s32 1, %s7
  %s10 = scalar_select 0, %s9, %s7
  loop: start=0, step=1, limit=4
  $region2: #{munit_trainer_forward.23} parent=0 // loop_pre_header
    _
  $region3: #{munit_trainer_forward.23} parent=0 // loop_header
    %s12 = sphi 0, %s16
    %p13 = scmp.ge.s32.totalorder %s12, 4
    %s22 = sphi 0, %s24
    %s25 = sphi 0, %s22
    %s26 = sphi 0, %s25
    %s42 = sphi 0, %s26
    %s46 = sphi 0, %s46
    %s48 = sphi 0, %s46
    %s49 = sphi 0, %s48
    %s63 = sphi 0, %s49
    %s67 = sphi 0, %s67
    %s69 = sphi 0, %s67
    %s70 = sphi 0, %s69
    %s84 = sphi 0, %s70
    %s90 = sphi 0, %s92
    %s93 = sphi 0, %s90
    %s94 = sphi 0, %s93
    %s110 = sphi 0, %s94
    %s116 = sphi 0, %s118
    %s119 = sphi 0, %s116
    %s120 = sphi 0, %s119
    %s136 = sphi 0, %s120
    %s142 = sphi 0, %s144
    %s145 = sphi 0, %s142
    %s146 = sphi 0, %s145
    %s162 = sphi 0, %s146
    %s168 = sphi 0, %s170
    %s171 = sphi 0, %s168
    %s172 = sphi 0, %s171
    %s188 = sphi 0, %s172
  $region4: #{munit_trainer_forward.23} parent=0 // loop_header_branch
    %15 = sbr.rel (%p13) target = $region8
  $region5: #{munit_trainer_forward.23} parent=0 // loop_body
    %s17 = ssub.s32 %s12, 1
    %s18 = ssub.s32 %s12, 2
    %s19 = sadd.s32 %s12, 1
    %s20 = ssub.s32 %s12, %s19
    %p21 = scmp.eq.s32.totalorder %s20, 0
    %s23 = sadd.s32 %s22, 1
    %s24 = scalar_select %p21, %s22, %s23
    %p27 = pneg %p21
    %p28 = scmp.eq.s32.totalorder %s12, 1
    %p29 = por %p27, %p28
    %p30 = scmp.ne.s32.totalorder %s22, %s25
    %p31 = scmp.eq.s32.totalorder %s12, 0
    %p32 = por %p30, %p31
    %p33 = scmp.ne.s32.totalorder %s22, %s25
    %p34 = scmp.eq.s32.totalorder %s17, 1
    %p35 = por %p33, %p34
    %p36 = scmp.ne.s32.totalorder %s25, %s26
    %p37 = scmp.eq.s32.totalorder %s17, 0
    %p38 = por %p36, %p37
    %p39 = scmp.ne.s32.totalorder %s25, %s26
    %p40 = scmp.eq.s32.totalorder %s18, 1
    %p41 = por %p39, %p40
    %p43 = scmp.ne.s32.totalorder %s26, %s42
    %p44 = scmp.eq.s32.totalorder %s18, 0
    %p45 = por %p43, %p44
    %s47 = sadd.s32 %s46, 1
    %p50 = scmp.eq.s32.totalorder %s12, 1
    %p51 = scmp.ne.s32.totalorder %s46, %s48
    %p52 = scmp.eq.s32.totalorder %s12, 0
    %p53 = por %p51, %p52
    %p54 = scmp.ne.s32.totalorder %s46, %s48
    %p55 = scmp.eq.s32.totalorder %s17, 1
    %p56 = por %p54, %p55
    %p57 = scmp.ne.s32.totalorder %s48, %s49
    %p58 = scmp.eq.s32.totalorder %s17, 0
    %p59 = por %p57, %p58
    %p60 = scmp.ne.s32.totalorder %s48, %s49
    %p61 = scmp.eq.s32.totalorder %s18, 1
    %p62 = por %p60, %p61
    %p64 = scmp.ne.s32.totalorder %s49, %s63
    %p65 = scmp.eq.s32.totalorder %s18, 0
    %p66 = por %p64, %p65
    %s68 = sadd.s32 %s67, 1
    %p71 = scmp.eq.s32.totalorder %s12, 1
    %p72 = scmp.ne.s32.totalorder %s67, %s69
    %p73 = scmp.eq.s32.totalorder %s12, 0
    %p74 = por %p72, %p73
    %p75 = scmp.ne.s32.totalorder %s67, %s69
    %p76 = scmp.eq.s32.totalorder %s17, 1
    %p77 = por %p75, %p76
    %p78 = scmp.ne.s32.totalorder %s69, %s70
    %p79 = scmp.eq.s32.totalorder %s17, 0
    %p80 = por %p78, %p79
    %p81 = scmp.ne.s32.totalorder %s69, %s70
    %p82 = scmp.eq.s32.totalorder %s18, 1
    %p83 = por %p81, %p82
    %p85 = scmp.ne.s32.totalorder %s70, %s84
    %p86 = scmp.eq.s32.totalorder %s18, 0
    %p87 = por %p85, %p86
    %s88 = ssub.s32 %s12, %s19
    %p89 = scmp.eq.s32.totalorder %s88, 0
    %s91 = sadd.s32 %s90, 1
    %s92 = scalar_select %p89, %s90, %s91
    %p95 = pneg %p89
    %p96 = scmp.eq.s32.totalorder %s12, 1
    %p97 = por %p95, %p96
    %p98 = scmp.ne.s32.totalorder %s90, %s93
    %p99 = scmp.eq.s32.totalorder %s12, 0
    %p100 = por %p98, %p99
    %p101 = scmp.ne.s32.totalorder %s90, %s93
    %p102 = scmp.eq.s32.totalorder %s17, 1
    %p103 = por %p101, %p102
    %p104 = scmp.ne.s32.totalorder %s93, %s94
    %p105 = scmp.eq.s32.totalorder %s17, 0
    %p106 = por %p104, %p105
    %p107 = scmp.ne.s32.totalorder %s93, %s94
    %p108 = scmp.eq.s32.totalorder %s18, 1
    %p109 = por %p107, %p108
    %p111 = scmp.ne.s32.totalorder %s94, %s110
    %p112 = scmp.eq.s32.totalorder %s18, 0
    %p113 = por %p111, %p112
    %s114 = ssub.s32 %s12, %s19
    %p115 = scmp.eq.s32.totalorder %s114, 0
    %s117 = sadd.s32 %s116, 1
    %s118 = scalar_select %p115, %s116, %s117
    %p121 = pneg %p115
    %p122 = scmp.eq.s32.totalorder %s12, 1
    %p123 = por %p121, %p122
    %p124 = scmp.ne.s32.totalorder %s116, %s119
    %p125 = scmp.eq.s32.totalorder %s12, 0
    %p126 = por %p124, %p125
    %p127 = scmp.ne.s32.totalorder %s116, %s119
    %p128 = scmp.eq.s32.totalorder %s17, 1
    %p129 = por %p127, %p128
    %p130 = scmp.ne.s32.totalorder %s119, %s120
    %p131 = scmp.eq.s32.totalorder %s17, 0
    %p132 = por %p130, %p131
    %p133 = scmp.ne.s32.totalorder %s119, %s120
    %p134 = scmp.eq.s32.totalorder %s18, 1
    %p135 = por %p133, %p134
    %p137 = scmp.ne.s32.totalorder %s120, %s136
    %p138 = scmp.eq.s32.totalorder %s18, 0
    %p139 = por %p137, %p138
    %s140 = ssub.s32 %s12, %s19
    %p141 = scmp.eq.s32.totalorder %s140, 0
    %s143 = sadd.s32 %s142, 1
    %s144 = scalar_select %p141, %s142, %s143
    %p147 = pneg %p141
    %p148 = scmp.eq.s32.totalorder %s12, 1
    %p149 = por %p147, %p148
    %p150 = scmp.ne.s32.totalorder %s142, %s145
    %p151 = scmp.eq.s32.totalorder %s12, 0
    %p152 = por %p150, %p151
    %p153 = scmp.ne.s32.totalorder %s142, %s145
    %p154 = scmp.eq.s32.totalorder %s17, 1
    %p155 = por %p153, %p154
    %p156 = scmp.ne.s32.totalorder %s145, %s146
    %p157 = scmp.eq.s32.totalorder %s17, 0
    %p158 = por %p156, %p157
    %p159 = scmp.ne.s32.totalorder %s145, %s146
    %p160 = scmp.eq.s32.totalorder %s18, 1
    %p161 = por %p159, %p160
    %p163 = scmp.ne.s32.totalorder %s146, %s162
    %p164 = scmp.eq.s32.totalorder %s18, 0
    %p165 = por %p163, %p164
    %s166 = ssub.s32 %s12, %s19
    %p167 = scmp.eq.s32.totalorder %s166, 0
    %s169 = sadd.s32 %s168, 1
    %s170 = scalar_select %p167, %s168, %s169
    %p173 = pneg %p167
    %p174 = scmp.eq.s32.totalorder %s12, 1
    %p175 = por %p173, %p174
    %p176 = scmp.ne.s32.totalorder %s168, %s171
    %p177 = scmp.eq.s32.totalorder %s12, 0
    %p178 = por %p176, %p177
    %p179 = scmp.ne.s32.totalorder %s168, %s171
    %p180 = scmp.eq.s32.totalorder %s17, 1
    %p181 = por %p179, %p180
    %p182 = scmp.ne.s32.totalorder %s171, %s172
    %p183 = scmp.eq.s32.totalorder %s17, 0
    %p184 = por %p182, %p183
    %p185 = scmp.ne.s32.totalorder %s171, %s172
    %p186 = scmp.eq.s32.totalorder %s18, 1
    %p187 = por %p185, %p186
    %p189 = scmp.ne.s32.totalorder %s172, %s188
    %p190 = scmp.eq.s32.totalorder %s18, 0
    %p191 = por %p189, %p190
    %p192 = scmp.le.s32.totalorder 1, %s12
    %p193 = scmp.lt.s32.totalorder %s12, 3
    %p194 = pnand %p192, %p193
    %p195 = pneg %p194
    // Predicated region
    $region9: #{munit_trainer_forward.23} parent=5 // pred_check
      _
    $region10: #{munit_trainer_forward.23} parent=5 // pred_check_branch
      %197 = sbr.rel (%p194) target = $region12
    $region11: #{munit_trainer_forward.23} parent=5 // pred_region
      %s198 = ssub.s32 %s12, 1
      // Predicated region
      $region13: #{munit_trainer_forward.23} parent=11 // pred_check
        %p199 = pneg %p59
      $region14: #{munit_trainer_forward.23} parent=11 // pred_check_branch
        %201 = sbr.rel (%p199) target = $region16
      $region15: #{munit_trainer_forward.23} parent=11 // pred_region
        _
      $region16: #{munit_trainer_forward.23} parent=11 // pred_fallthru
        _
      // Predicated region
      $region17: #{munit_trainer_forward.23} parent=11 // pred_check
        %p202 = pneg %p80
      $region18: #{munit_trainer_forward.23} parent=11 // pred_check_branch
        %204 = sbr.rel (%p202) target = $region20
      $region19: #{munit_trainer_forward.23} parent=11 // pred_region
        _
      $region20: #{munit_trainer_forward.23} parent=11 // pred_fallthru
        _
    $region12: #{munit_trainer_forward.23} parent=5 // pred_fallthru
      _
    %p205 = scmp.lt.s32.totalorder %s12, 2
    // Predicated region
    $region21: #{munit_trainer_forward.23} parent=5 // pred_check
      %p206 = pneg %p205
    $region22: #{munit_trainer_forward.23} parent=5 // pred_check_branch
      %208 = sbr.rel (%p206) target = $region24
    $region23: #{munit_trainer_forward.23} parent=5 // pred_region
      // Predicated region
      $region25: #{munit_trainer_forward.23} parent=23 // pred_check
        %p209 = pneg %p32
      $region26: #{munit_trainer_forward.23} parent=23 // pred_check_branch
        %211 = sbr.rel (%p209) target = $region28
      $region27: #{munit_trainer_forward.23} parent=23 // pred_region
        %p212 = scmp.lt.s32.totalorder %s12, 1
        %s213 = scalar_select %p212, %s12, 1
        %s214 = smul.addr %s213, 24
        %s215 = smul.addr %s214, 4
        %s216 = scalar_lea.vmem %s0, %s215
      $region28: #{munit_trainer_forward.23} parent=23 // pred_fallthru
        _
      // Predicated region
      $region29: #{munit_trainer_forward.23} parent=23 // pred_check
        %p217 = pneg %p100
      $region30: #{munit_trainer_forward.23} parent=23 // pred_check_branch
        %219 = sbr.rel (%p217) target = $region32
      $region31: #{munit_trainer_forward.23} parent=23 // pred_region
        %p220 = scmp.lt.s32.totalorder %s12, 1
        %s221 = scalar_select %p220, %s12, 1
        %s222 = scalar_lea.vmem %s3, %s221
      $region32: #{munit_trainer_forward.23} parent=23 // pred_fallthru
        _
      // Predicated region
      $region33: #{munit_trainer_forward.23} parent=23 // pred_check
        %p223 = pneg %p126
      $region34: #{munit_trainer_forward.23} parent=23 // pred_check_branch
        %225 = sbr.rel (%p223) target = $region36
      $region35: #{munit_trainer_forward.23} parent=23 // pred_region
        %p226 = scmp.lt.s32.totalorder %s12, 1
        %s227 = scalar_select %p226, %s12, 1
        %s228 = scalar_lea.vmem %s4, %s227
      $region36: #{munit_trainer_forward.23} parent=23 // pred_fallthru
        _
      // Predicated region
      $region37: #{munit_trainer_forward.23} parent=23 // pred_check
        %p229 = pneg %p152
      $region38: #{munit_trainer_forward.23} parent=23 // pred_check_branch
        %231 = sbr.rel (%p229) target = $region40
      $region39: #{munit_trainer_forward.23} parent=23 // pred_region
        %p232 = scmp.lt.s32.totalorder %s12, 1
        %s233 = scalar_select %p232, %s12, 1
        %s234 = smul.addr %s233, 8
        %s235 = smul.addr %s234, 8
        %s236 = scalar_lea.vmem %s5, %s235
      $region40: #{munit_trainer_forward.23} parent=23 // pred_fallthru
        _
    $region24: #{munit_trainer_forward.23} parent=5 // pred_fallthru
      _
    %p237 = scmp.le.s32.totalorder 1, %s12
    %p238 = scmp.lt.s32.totalorder %s12, 3
    %p239 = pnand %p237, %p238
    %p240 = pneg %p239
    // Predicated region
    $region41: #{munit_trainer_forward.23} parent=5 // pred_check
      _
    $region42: #{munit_trainer_forward.23} parent=5 // pred_check_branch
      %242 = sbr.rel (%p239) target = $region44
    $region43: #{munit_trainer_forward.23} parent=5 // pred_region
      %s243 = ssub.s32 %s12, 1
      %p244 = scmp.lt.s32.totalorder %s17, 1
      %s245 = scalar_select %p244, %s17, 1
      %s246 = smul.addr %s245, 24
      %s247 = smul.addr %s246, 4
      %s248 = scalar_lea.vmem %s0, %s247
      %p249 = pneg %p38
      %p250 = pneg %p35
      %p251 = pneg %p59
      %p252 = pneg %p56
      %p253 = pneg %p80
      %p254 = pneg %p77
      %p255 = scmp.lt.s32.totalorder %s17, 1
      %s256 = scalar_select %p255, %s17, 1
      %s257 = scalar_lea.vmem %s3, %s256
      %p258 = pneg %p106
      %p259 = pneg %p103
      %p260 = scmp.lt.s32.totalorder %s17, 1
      %s261 = scalar_select %p260, %s17, 1
      %s262 = scalar_lea.vmem %s4, %s261
      %p263 = pneg %p132
      %p264 = pneg %p129
      %p265 = scmp.lt.s32.totalorder %s17, 1
      %s266 = scalar_select %p265, %s17, 1
      %s267 = smul.addr %s266, 8
      %s268 = smul.addr %s267, 8
      %s269 = scalar_lea.vmem %s5, %s268
      %p270 = pneg %p158
      %p271 = pneg %p155
      %p272 = pneg %p184
      %p273 = pneg %p181
      %p274 = scmp.lt.s32.totalorder %s17, 1
      %s275 = scalar_select %p274, %s17, 1
      %s276 = smul.addr %s275, 8
      %s277 = smul.addr %s276, 8
      %s278 = scalar_lea.vmem %s6, %s277
      %p279 = scmp.lt.s32.totalorder %s17, 1
      %s280 = scalar_select %p279, %s17, 1
      %s281 = smul.addr %s280, 24
      %s282 = smul.addr %s281, 4
      %s283 = scalar_lea.vmem %s0, %s282
      %p284 = scmp.lt.s32.totalorder %s17, 1
      %s285 = scalar_select %p284, %s17, 1
      %s286 = scalar_lea.vmem %s3, %s285
      %p287 = scmp.lt.s32.totalorder %s17, 1
      %s288 = scalar_select %p287, %s17, 1
      %s289 = scalar_lea.vmem %s4, %s288
      %p290 = scmp.lt.s32.totalorder %s17, 1
      %s291 = scalar_select %p290, %s17, 1
      %s292 = smul.addr %s291, 8
      %s293 = smul.addr %s292, 8
      %s294 = scalar_lea.vmem %s5, %s293
      %p295 = scmp.lt.s32.totalorder %s17, 1
      %s296 = scalar_select %p295, %s17, 1
      %s297 = smul.addr %s296, 8
      %s298 = smul.addr %s297, 8
      %s299 = scalar_lea.vmem %s6, %s298
      %v301 = vld [vmem:[%s283] sm:$0xff]
      %v302 = vld [vmem:[%s283 + $0x8] sm:$0xf]
      %v303 = vld [vmem:[%s283 + $0xc] sm:$0xff]
      %v304 = vld [vmem:[%s283 + $0x14] sm:$0xf]
      %v305 = vld [vmem:[%s283 + $0x18] sm:$0xff]
      %v306 = vld [vmem:[%s283 + $0x20] sm:$0xf]
      %v307 = vld [vmem:[%s283 + $0x24] sm:$0xff]
      %v308 = vld [vmem:[%s283 + $0x2c] sm:$0xf]
      %v309 = vld [vmem:[%s283 + $0x30] sm:$0xff]
      %v310 = vld [vmem:[%s283 + $0x38] sm:$0xf]
      %v311 = vld [vmem:[%s283 + $0x3c] sm:$0xff]
      %v312 = vld [vmem:[%s283 + $0x44] sm:$0xf]
      %v313 = vld [vmem:[%s283 + $0x48] sm:$0xff]
      %v314 = vld [vmem:[%s283 + $0x50] sm:$0xf]
      %v315 = vld [vmem:[%s283 + $0x54] sm:$0xff]
      %v316 = vld [vmem:[%s283 + $0x5c] sm:$0xf]
      %v317 = vld [vmem:[%s1] sm:$0xf]
      %v318 = vld [vmem:[%s1 + $0x4] sm:$0xf]
      %v319 = vld [vmem:[%s1 + $0x8] sm:$0xf]
      %v320 = vld [vmem:[%s1 + $0xc] sm:$0xf]
      %v321 = vld [vmem:[%s1 + $0x10] sm:$0xf]
      %v322 = vld [vmem:[%s1 + $0x14] sm:$0xf]
      %v323 = vld [vmem:[%s1 + $0x18] sm:$0xf]
      %v324 = vld [vmem:[%s1 + $0x1c] sm:$0xf]
      %v325 = vld [vmem:[%s1 + $0x20] sm:$0xf]
      %v326 = vld [vmem:[%s1 + $0x24] sm:$0xf]
      %v327 = vld [vmem:[%s1 + $0x28] sm:$0xf]
      %v328 = vld [vmem:[%s1 + $0x2c] sm:$0xf]
      %v329 = vld [vmem:[%s1 + $0x30] sm:$0xf]
      %v330 = vld [vmem:[%s1 + $0x34] sm:$0xf]
      %v331 = vld [vmem:[%s1 + $0x38] sm:$0xf]
      %v332 = vld [vmem:[%s1 + $0x3c] sm:$0xf]
      %v333 = vld [vmem:[%s1 + $0x40] sm:$0xf]
      %v334 = vld [vmem:[%s1 + $0x44] sm:$0xf]
      %v335 = vld [vmem:[%s1 + $0x48] sm:$0xf]
      %v336 = vld [vmem:[%s1 + $0x4c] sm:$0xf]
      %v337 = vld [vmem:[%s1 + $0x50] sm:$0xf]
      %v338 = vld [vmem:[%s1 + $0x54] sm:$0xf]
      %v339 = vld [vmem:[%s1 + $0x58] sm:$0xf]
      %v340 = vld [vmem:[%s1 + $0x5c] sm:$0xf]
      %v341 = vld [vmem:[%s1 + $0x60] sm:$0xf]
      %v342 = vld [vmem:[%s1 + $0x64] sm:$0xf]
      %v343 = vld [vmem:[%s1 + $0x68] sm:$0xf]
      %v344 = vld [vmem:[%s1 + $0x6c] sm:$0xf]
      %v345 = vld [vmem:[%s1 + $0x70] sm:$0xf]
      %v346 = vld [vmem:[%s1 + $0x74] sm:$0xf]
      %v347 = vld [vmem:[%s1 + $0x78] sm:$0xf]
      %v348 = vld [vmem:[%s1 + $0x7c] sm:$0xf]
      %v349 = vld [vmem:[%s1 + $0x80] sm:$0xf]
      %v350 = vld [vmem:[%s1 + $0x84] sm:$0xf]
      %v351 = vld [vmem:[%s1 + $0x88] sm:$0xf]
      %v352 = vld [vmem:[%s1 + $0x8c] sm:$0xf]
      %v353 = vld [vmem:[%s1 + $0x90] sm:$0xf]
      %v354 = vld [vmem:[%s1 + $0x94] sm:$0xf]
      %v355 = vld [vmem:[%s1 + $0x98] sm:$0xf]
      %v356 = vld [vmem:[%s1 + $0x9c] sm:$0xf]
      %v357 = vld [vmem:[%s1 + $0xa0] sm:$0xf]
      %v358 = vld [vmem:[%s1 + $0xa4] sm:$0xf]
      %v359 = vld [vmem:[%s1 + $0xa8] sm:$0xf]
      %v360 = vld [vmem:[%s1 + $0xac] sm:$0xf]
      %v361 = vld [vmem:[%s1 + $0xb0] sm:$0xf]
      %v362 = vld [vmem:[%s1 + $0xb4] sm:$0xf]
      %v363 = vld [vmem:[%s1 + $0xb8] sm:$0xf]
      %v364 = vld [vmem:[%s1 + $0xbc] sm:$0xf]
      %v365 = vld [vmem:[%s2] sm:$0x1]
      %v367 = vlaneseq
      %v368 = vshrl.u32 %v367, 7
      %v369 = vsub.s32 0, %v368
      %v370 = vrot.slane %v365, %v369
      %v388 = vunpack.c.l.b16 %v301
      %v389 = vunpack.c.h.b16 %v301
      %v390 = vunpack.c.l.b16 %v302
      %v391 = vunpack.c.l.b16 %v303
      %v392 = vunpack.c.h.b16 %v303
      %v393 = vunpack.c.l.b16 %v304
      %v394 = vunpack.c.l.b16 %v305
      %v395 = vunpack.c.h.b16 %v305
      %v396 = vunpack.c.l.b16 %v306
      %v397 = vunpack.c.l.b16 %v307
      %v398 = vunpack.c.h.b16 %v307
      %v399 = vunpack.c.l.b16 %v308
      %v400 = vunpack.c.l.b16 %v309
      %v401 = vunpack.c.h.b16 %v309
      %v402 = vunpack.c.l.b16 %v310
      %v403 = vunpack.c.l.b16 %v311
      %v404 = vunpack.c.h.b16 %v311
      %v405 = vunpack.c.l.b16 %v312
      %v406 = vunpack.c.l.b16 %v313
      %v407 = vunpack.c.h.b16 %v313
      %v408 = vunpack.c.l.b16 %v314
      %v409 = vunpack.c.l.b16 %v315
      %v410 = vunpack.c.h.b16 %v315
      %v411 = vunpack.c.l.b16 %v316
      %v412 = vpack.c.b16 %v391, %v388
      %v413 = vpack.c.b16 %v392, %v389
      %v414 = vpack.c.b16 %v393, %v390
      %v415 = vpack.c.b16 %v397, %v394
      %v416 = vpack.c.b16 %v398, %v395
      %v417 = vpack.c.b16 %v399, %v396
      %v418 = vpack.c.b16 %v403, %v400
      %v419 = vpack.c.b16 %v404, %v401
      %v420 = vpack.c.b16 %v405, %v402
      %v421 = vpack.c.b16 %v409, %v406
      %v422 = vpack.c.b16 %v410, %v407
      %v423 = vpack.c.b16 %v411, %v408
      %v484 = vunpack.c.l.b16 %v317
      %v485 = vunpack.c.l.b16 %v318
      %v486 = vunpack.c.l.b16 %v319
      %v487 = vunpack.c.l.b16 %v320
      %v488 = vunpack.c.l.b16 %v321
      %v489 = vunpack.c.l.b16 %v322
      %v490 = vunpack.c.l.b16 %v323
      %v491 = vunpack.c.l.b16 %v324
      %v492 = vunpack.c.l.b16 %v325
      %v493 = vunpack.c.l.b16 %v326
      %v494 = vunpack.c.l.b16 %v327
      %v495 = vunpack.c.l.b16 %v328
      %v496 = vunpack.c.l.b16 %v329
      %v497 = vunpack.c.l.b16 %v330
      %v498 = vunpack.c.l.b16 %v331
      %v499 = vunpack.c.l.b16 %v332
      %v500 = vunpack.c.l.b16 %v333
      %v501 = vunpack.c.l.b16 %v334
      %v502 = vunpack.c.l.b16 %v335
      %v503 = vunpack.c.l.b16 %v336
      %v504 = vunpack.c.l.b16 %v337
      %v505 = vunpack.c.l.b16 %v338
      %v506 = vunpack.c.l.b16 %v339
      %v507 = vunpack.c.l.b16 %v340
      %v508 = vunpack.c.l.b16 %v341
      %v509 = vunpack.c.l.b16 %v342
      %v510 = vunpack.c.l.b16 %v343
      %v511 = vunpack.c.l.b16 %v344
      %v512 = vunpack.c.l.b16 %v345
      %v513 = vunpack.c.l.b16 %v346
      %v514 = vunpack.c.l.b16 %v347
      %v515 = vunpack.c.l.b16 %v348
      %v516 = vunpack.c.l.b16 %v349
      %v517 = vunpack.c.l.b16 %v350
      %v518 = vunpack.c.l.b16 %v351
      %v519 = vunpack.c.l.b16 %v352
      %v520 = vunpack.c.l.b16 %v353
      %v521 = vunpack.c.l.b16 %v354
      %v522 = vunpack.c.l.b16 %v355
      %v523 = vunpack.c.l.b16 %v356
      %v524 = vunpack.c.l.b16 %v357
      %v525 = vunpack.c.l.b16 %v358
      %v526 = vunpack.c.l.b16 %v359
      %v527 = vunpack.c.l.b16 %v360
      %v528 = vunpack.c.l.b16 %v361
      %v529 = vunpack.c.l.b16 %v362
      %v530 = vunpack.c.l.b16 %v363
      %v531 = vunpack.c.l.b16 %v364
      %v532 = vpack.c.b16 %v485, %v484
      %v533 = vpack.c.b16 %v487, %v486
      %v534 = vpack.c.b16 %v489, %v488
      %v535 = vpack.c.b16 %v491, %v490
      %v536 = vpack.c.b16 %v493, %v492
      %v537 = vpack.c.b16 %v495, %v494
      %v538 = vpack.c.b16 %v497, %v496
      %v539 = vpack.c.b16 %v499, %v498
      %v540 = vpack.c.b16 %v501, %v500
      %v541 = vpack.c.b16 %v503, %v502
      %v542 = vpack.c.b16 %v505, %v504
      %v543 = vpack.c.b16 %v507, %v506
      %v544 = vpack.c.b16 %v509, %v508
      %v545 = vpack.c.b16 %v511, %v510
      %v546 = vpack.c.b16 %v513, %v512
      %v547 = vpack.c.b16 %v515, %v514
      %v548 = vpack.c.b16 %v517, %v516
      %v549 = vpack.c.b16 %v519, %v518
      %v550 = vpack.c.b16 %v521, %v520
      %v551 = vpack.c.b16 %v523, %v522
      %v552 = vpack.c.b16 %v525, %v524
      %v553 = vpack.c.b16 %v527, %v526
      %v554 = vpack.c.b16 %v529, %v528
      %v555 = vpack.c.b16 %v531, %v530
      %580 = vmatprep.subr.bf16.mxu0 0
      %581 = vmatpush1.bf16.msra.mxu0 %v532
      %582 = vmatprep.subr.bf16.mxu0 0
      %583 = vmatpush1.bf16.msra.mxu0 %v533
      %584 = vmatprep.subr.bf16.mxu0 0
      %585 = vmatpush1.bf16.msra.mxu0 %v534
      %586 = vmatprep.subr.bf16.mxu0 0
      %587 = vmatpush1.bf16.msra.mxu0 %v535
      %588 = vmatprep.subr.bf16.mxu0 0
      %589 = vmatpush1.bf16.msra.mxu0 %v536
      %590 = vmatprep.subr.bf16.mxu0 0
      %591 = vmatpush1.bf16.msra.mxu0 %v537
      %592 = vmatprep.subr.bf16.mxu0 0
      %593 = vmatpush1.bf16.msra.mxu0 %v538
      %594 = vmatprep.subr.bf16.mxu0 0
      %595 = vmatpush1.bf16.msra.mxu0 %v539
      %596 = vmatprep.subr.bf16.mxu0 0
      %597 = vmatpush1.bf16.msra.mxu0 %v540
      %598 = vmatprep.subr.bf16.mxu0 0
      %599 = vmatpush1.bf16.msra.mxu0 %v541
      %600 = vmatprep.subr.bf16.mxu0 0
      %601 = vmatpush1.bf16.msra.mxu0 %v542
      %602 = vmatprep.subr.bf16.mxu0 0
      %603 = vmatpush1.bf16.msra.mxu0 %v543
      %604 = vmatprep.subr.bf16.mxu0 0
      %605 = vmatpush1.bf16.msra.mxu0 %v544
      %606 = vmatprep.subr.bf16.mxu0 0
      %607 = vmatpush1.bf16.msra.mxu0 %v545
      %608 = vmatprep.subr.bf16.mxu0 0
      %609 = vmatpush1.bf16.msra.mxu0 %v546
      %610 = vmatprep.subr.bf16.mxu0 0
      %611 = vmatpush1.bf16.msra.mxu0 %v547
      %612 = vmatprep.mubr.bf16.mxu0 %v413
      %613 = vmatmul.mubr.bf16.gmra.mrb[0].mxu0 %v412
      %v614 = vpop.f32.mrb[0].mxu0
      %v615 = vadd.f32 %v370, %v614
      %v616 = vpop.f32.mrb[0].mxu0
      %v617 = vpop.f32.mrb[0].mxu0
      %v618 = vadd.f32 %v370, %v617
      %v619 = vpop.f32.mrb[0].mxu0
      %620 = vmatprep.mubr.bf16.mxu0 %v416
      %621 = vmatmul.mubr.bf16.gmra.mrb[0].mxu0 %v415
      %v622 = vpop.f32.mrb[0].mxu0
      %v623 = vadd.f32 %v370, %v622
      %v624 = vpop.f32.mrb[0].mxu0
      %v625 = vpop.f32.mrb[0].mxu0
      %v626 = vadd.f32 %v370, %v625
      %v627 = vpop.f32.mrb[0].mxu0
      %628 = vmatprep.mubr.bf16.mxu0 %v419
      %629 = vmatmul.mubr.bf16.gmra.mrb[0].mxu0 %v418
      %v630 = vpop.f32.mrb[0].mxu0
      %v631 = vadd.f32 %v370, %v630
      %v632 = vpop.f32.mrb[0].mxu0
      %v633 = vpop.f32.mrb[0].mxu0
      %v634 = vadd.f32 %v370, %v633
      %v635 = vpop.f32.mrb[0].mxu0
      %636 = vmatprep.mubr.bf16.mxu0 %v422
      %637 = vmatmul.mubr.bf16.gmra.mrb[0].mxu0 %v421
      %v638 = vpop.f32.mrb[0].mxu0
      %v639 = vadd.f32 %v370, %v638
      %v640 = vpop.f32.mrb[0].mxu0
      %v641 = vpop.f32.mrb[0].mxu0
      %v642 = vadd.f32 %v370, %v641
      %v643 = vpop.f32.mrb[0].mxu0
      %644 = vdwg.mxu0
      %645 = vmatprep.subr.bf16.mxu0 0
      %646 = vmatpush1.bf16.msra.mxu0 %v548
      %647 = vmatprep.subr.bf16.mxu0 0
      %648 = vmatpush1.bf16.msra.mxu0 %v549
      %649 = vmatprep.subr.bf16.mxu0 0
      %650 = vmatpush1.bf16.msra.mxu0 %v550
      %651 = vmatprep.subr.bf16.mxu0 0
      %652 = vmatpush1.bf16.msra.mxu0 %v551
      %653 = vmatprep.subr.bf16.mxu0 0
      %654 = vmatpush1.bf16.msra.mxu0 %v552
      %655 = vmatprep.subr.bf16.mxu0 0
      %656 = vmatpush1.bf16.msra.mxu0 %v553
      %657 = vmatprep.subr.bf16.mxu0 0
      %658 = vmatpush1.bf16.msra.mxu0 %v554
      %659 = vmatprep.subr.bf16.mxu0 0
      %660 = vmatpush1.bf16.msra.mxu0 %v555
      %661 = vmatprep.subr.bf16.mxu0 0
      %662 = vmatpush1.bf16.msra.mxu0 0
      %663 = vmatprep.subr.bf16.mxu0 0
      %664 = vmatpush1.bf16.msra.mxu0 0
      %665 = vmatprep.subr.bf16.mxu0 0
      %666 = vmatpush1.bf16.msra.mxu0 0
      %667 = vmatprep.subr.bf16.mxu0 0
      %668 = vmatpush1.bf16.msra.mxu0 0
      %669 = vmatprep.subr.bf16.mxu0 0
      %670 = vmatpush1.bf16.msra.mxu0 0
      %671 = vmatprep.subr.bf16.mxu0 0
      %672 = vmatpush1.bf16.msra.mxu0 0
      %673 = vmatprep.subr.bf16.mxu0 0
      %674 = vmatpush1.bf16.msra.mxu0 0
      %675 = vmatprep.subr.bf16.mxu0 0
      %676 = vmatpush1.bf16.msra.mxu0 0
      %677 = vmatprep.mubr.bf16.mxu0 0
      %678 = vmatmul.mubr.bf16.gmra.mrb[0].mxu0 %v414
      %v679 = vpop.f32.mrb[0].mxu0
      %v680 = vadd.f32 %v615, %v679
      %v681 = vpop.f32.mrb[0].mxu0
      %v682 = vpop.f32.mrb[0].mxu0
      %v683 = vadd.f32 %v618, %v682
      %v684 = vpop.f32.mrb[0].mxu0
      %685 = vmatprep.mubr.bf16.mxu0 0
      %686 = vmatmul.mubr.bf16.gmra.mrb[0].mxu0 %v417
      %v687 = vpop.f32.mrb[0].mxu0
      %v688 = vadd.f32 %v623, %v687
      %v689 = vpop.f32.mrb[0].mxu0
      %v690 = vpop.f32.mrb[0].mxu0
      %v691 = vadd.f32 %v626, %v690
      %v692 = vpop.f32.mrb[0].mxu0
      %693 = vmatprep.mubr.bf16.mxu0 0
      %694 = vmatmul.mubr.bf16.gmra.mrb[0].mxu0 %v420
      %v695 = vpop.f32.mrb[0].mxu0
      %v696 = vadd.f32 %v631, %v695
      %v697 = vpop.f32.mrb[0].mxu0
      %v698 = vpop.f32.mrb[0].mxu0
      %v699 = vadd.f32 %v634, %v698
      %v700 = vpop.f32.mrb[0].mxu0
      %701 = vmatprep.mubr.bf16.mxu0 0
      %702 = vmatmul.mubr.bf16.gmra.mrb[0].mxu0 %v423
      %v703 = vpop.f32.mrb[0].mxu0
      %v704 = vadd.f32 %v639, %v703
      %v705 = vpop.f32.mrb[0].mxu0
      %v706 = vpop.f32.mrb[0].mxu0
      %v707 = vadd.f32 %v642, %v706
      %v708 = vpop.f32.mrb[0].mxu0
      %709 = vdwg.mxu0
      %v710 = vadd.f32 %v680, %v683
      %v711 = vadd.f32 %v710, %v688
      %v712 = vadd.f32 %v711, %v691
      %v713 = vadd.f32 %v712, %v696
      %v714 = vadd.f32 %v713, %v699
      %v715 = vadd.f32 %v714, %v704
      %v716 = vadd.f32 %v715, %v707
      %v717 = vrot.slane %v716, 4
      %v718 = vadd.f32 %v716, %v717
      %v719 = vrot.slane %v718, 2
      %v720 = vadd.f32 %v718, %v719
      %v721 = vrot.slane %v720, 1
      %v722 = vadd.f32 %v720, %v721
      %v723 = vrcp.pop 64.0
      %v724 = vmul.f32 %v722, %v723
      %v725 = vsub.f32 %v680, %v724
      %v726 = vsub.f32 %v683, %v724
      %v727 = vsub.f32 %v688, %v724
      %v728 = vsub.f32 %v691, %v724
      %v729 = vsub.f32 %v696, %v724
      %v730 = vsub.f32 %v699, %v724
      %v731 = vsub.f32 %v704, %v724
      %v732 = vsub.f32 %v707, %v724
      %v733 = vmul.f32 %v725, %v725
      %v734 = vmul.f32 %v726, %v726
      %v735 = vmul.f32 %v727, %v727
      %v736 = vmul.f32 %v728, %v728
      %v737 = vmul.f32 %v729, %v729
      %v738 = vmul.f32 %v730, %v730
      %v739 = vmul.f32 %v731, %v731
      %v740 = vmul.f32 %v732, %v732
      %v741 = vadd.f32 %v733, %v734
      %v742 = vadd.f32 %v741, %v735
      %v743 = vadd.f32 %v742, %v736
      %v744 = vadd.f32 %v743, %v737
      %v745 = vadd.f32 %v744, %v738
      %v746 = vadd.f32 %v745, %v739
      %v747 = vadd.f32 %v746, %v740
      %v748 = vrot.slane %v747, 4
      %v749 = vadd.f32 %v747, %v748
      %v750 = vrot.slane %v749, 2
      %v751 = vadd.f32 %v749, %v750
      %v752 = vrot.slane %v751, 1
      %v753 = vadd.f32 %v751, %v752
      %v754 = vmul.f32 %v753, %v723
      %v755 = vadd.f32 %v754, 1e-05
      %v756 = vrsqrt.pop %v755
      %v757 = vmul.f32 %v725, %v756
      %v758 = vmul.f32 %v726, %v756
      %v759 = vmul.f32 %v727, %v756
      %v760 = vmul.f32 %v728, %v756
      %v761 = vmul.f32 %v729, %v756
      %v762 = vmul.f32 %v730, %v756
      %v763 = vmul.f32 %v731, %v756
      %v764 = vmul.f32 %v732, %v756
      %v765 = vld [vmem:[%s286] sm:$0x1]
      %v767 = vlaneseq
      %v768 = vshrl.u32 %v767, 7
      %v769 = vsub.s32 0, %v768
      %v770 = vrot.slane %v765, %v769
      %v772 = vmul.f32 %v757, %v770
      %v773 = vmul.f32 %v758, %v770
      %v774 = vmul.f32 %v759, %v770
      %v775 = vmul.f32 %v760, %v770
      %v776 = vmul.f32 %v761, %v770
      %v777 = vmul.f32 %v762, %v770
      %v778 = vmul.f32 %v763, %v770
      %v779 = vmul.f32 %v764, %v770
      %v780 = vld [vmem:[%s289] sm:$0x1]
      %v782 = vlaneseq
      %v783 = vshrl.u32 %v782, 7
      %v784 = vsub.s32 0, %v783
      %v785 = vrot.slane %v780, %v784
      %v787 = vadd.f32 %v772, %v785
      %v788 = vadd.f32 %v773, %v785
      %v789 = vadd.f32 %v774, %v785
      %v790 = vadd.f32 %v775, %v785
      %v791 = vadd.f32 %v776, %v785
      %v792 = vadd.f32 %v777, %v785
      %v793 = vadd.f32 %v778, %v785
      %v794 = vadd.f32 %v779, %v785
      %v795 = vld [vmem:[%s294] sm:$0xff]
      %v796 = vld [vmem:[%s294 + $0x8] sm:$0xff]
      %v797 = vld [vmem:[%s294 + $0x10] sm:$0xff]
      %v798 = vld [vmem:[%s294 + $0x18] sm:$0xff]
      %v799 = vld [vmem:[%s294 + $0x20] sm:$0xff]
      %v800 = vld [vmem:[%s294 + $0x28] sm:$0xff]
      %v801 = vld [vmem:[%s294 + $0x30] sm:$0xff]
      %v802 = vld [vmem:[%s294 + $0x38] sm:$0xff]
      %v803 = vadd.f32 %v787, %v795
      %v804 = vadd.f32 %v788, %v796
      %v805 = vadd.f32 %v789, %v797
      %v806 = vadd.f32 %v790, %v798
      %v807 = vadd.f32 %v791, %v799
      %v808 = vadd.f32 %v792, %v800
      %v809 = vadd.f32 %v793, %v801
      %v810 = vadd.f32 %v794, %v802
      %811 = vst [vmem:[%s299] sm:$0xff] %v803
      %812 = vst [vmem:[%s299 + $0x8] sm:$0xff] %v804
      %813 = vst [vmem:[%s299 + $0x10] sm:$0xff] %v805
      %814 = vst [vmem:[%s299 + $0x18] sm:$0xff] %v806
      %815 = vst [vmem:[%s299 + $0x20] sm:$0xff] %v807
      %816 = vst [vmem:[%s299 + $0x28] sm:$0xff] %v808
      %817 = vst [vmem:[%s299 + $0x30] sm:$0xff] %v809
      %818 = vst [vmem:[%s299 + $0x38] sm:$0xff] %v810
      %p819 = scmp.lt.s32.totalorder %s17, 1
      %s820 = scalar_select %p819, %s17, 1
      %s821 = smul.addr %s820, 8
      %s822 = smul.addr %s821, 8
      %s823 = scalar_lea.vmem %s6, %s822
      // Predicated region
      $region45: #{munit_trainer_forward.23} parent=43 // pred_check
        %p824 = pneg %p181
      $region46: #{munit_trainer_forward.23} parent=43 // pred_check_branch
        %826 = sbr.rel (%p824) target = $region48
      $region47: #{munit_trainer_forward.23} parent=43 // pred_region
        _
      $region48: #{munit_trainer_forward.23} parent=43 // pred_fallthru
        _
    $region44: #{munit_trainer_forward.23} parent=5 // pred_fallthru
      _
    %p827 = scmp.le.s32.totalorder 2, %s12
    // Predicated region
    $region49: #{munit_trainer_forward.23} parent=5 // pred_check
      %p828 = pneg %p827
    $region50: #{munit_trainer_forward.23} parent=5 // pred_check_branch
      %830 = sbr.rel (%p828) target = $region52
    $region51: #{munit_trainer_forward.23} parent=5 // pred_region
      %s831 = ssub.s32 %s12, 2
      // Predicated region
      $region53: #{munit_trainer_forward.23} parent=51 // pred_check
        %p832 = pneg %p187
      $region54: #{munit_trainer_forward.23} parent=51 // pred_check_branch
        %834 = sbr.rel (%p832) target = $region56
      $region55: #{munit_trainer_forward.23} parent=51 // pred_region
        %p835 = scmp.lt.s32.totalorder %s18, 1
        %s836 = scalar_select %p835, %s18, 1
        %s837 = smul.addr %s836, 8
        %s838 = smul.addr %s837, 8
        %s839 = scalar_lea.vmem %s6, %s838
      $region56: #{munit_trainer_forward.23} parent=51 // pred_fallthru
        _
    $region52: #{munit_trainer_forward.23} parent=5 // pred_fallthru
      _
  $region6: #{munit_trainer_forward.23} parent=0 // loop_footer
    %s16 = sadd.s32 1, %s12
  $region7: #{munit_trainer_forward.23} parent=0 // loop_footer_branch
    %11 = sbr.rel target = $region3
  $region8: #{munit_trainer_forward.23} parent=0 // loop_exit
    _

// kernel: munit_trainer_forward.26
$region0: #{munit_trainer_forward.26}
  #allocation0 [shape = 'u32[]', space=smem, size = 0x4, offset = 0x4, fixed_abs, tag = 'smem constant byte address 0x4 - core index']
  #allocation1 [shape = 'u32[144,128]{1,0:T(1,128)}', space=vmem, size = 0x12000, scoped, tag = 'internal scratch']
  %s0 = inlined_call_operand.vmem [shape: bf16[2,256,896], index: 0, kind: input, shape index: {}]
  %s1 = inlined_call_operand.vmem [shape: bf16[896,128], index: 1, kind: input, shape index: {}]
  %s2 = inlined_call_operand.vmem [shape: f32[1,128], index: 2, kind: input, shape index: {}]
  %s3 = inlined_call_operand.vmem [shape: f32[2,1,128], index: 3, kind: input, shape index: {}]
  %s4 = inlined_call_operand.vmem [shape: f32[2,1,128], index: 4, kind: input, shape index: {}]
  %s5 = inlined_call_operand.vmem [shape: f32[2,256,128], index: 5, kind: output, shape index: {}]
  %s6 = sld [smem:[#allocation0]]
  $region53: #{munit_trainer_forward.26} parent=0
    _
  %s8 = ssub.s32 1, %s6
  %s9 = scalar_select 0, %s8, %s6
  loop: start=0, step=1, limit=4
  $region2: #{munit_trainer_forward.26} parent=0 // loop_pre_header
    _
  $region3: #{munit_trainer_forward.26} parent=0 // loop_header
    %s11 = sphi 0, %s15
    %p12 = scmp.ge.s32.totalorder %s11, 4
    %s21 = sphi 0, %s23
    %s24 = sphi 0, %s21
    %s25 = sphi 0, %s24
    %s41 = sphi 0, %s25
    %s45 = sphi 0, %s45
    %s47 = sphi 0, %s45
    %s48 = sphi 0, %s47
    %s62 = sphi 0, %s48
    %s66 = sphi 0, %s66
    %s68 = sphi 0, %s66
    %s69 = sphi 0, %s68
    %s83 = sphi 0, %s69
    %s89 = sphi 0, %s91
    %s92 = sphi 0, %s89
    %s93 = sphi 0, %s92
    %s109 = sphi 0, %s93
    %s115 = sphi 0, %s117
    %s118 = sphi 0, %s115
    %s119 = sphi 0, %s118
    %s135 = sphi 0, %s119
    %s141 = sphi 0, %s143
    %s144 = sphi 0, %s141
    %s145 = sphi 0, %s144
    %s161 = sphi 0, %s145
  $region4: #{munit_trainer_forward.26} parent=0 // loop_header_branch
    %14 = sbr.rel (%p12) target = $region8
  $region5: #{munit_trainer_forward.26} parent=0 // loop_body
    %s16 = ssub.s32 %s11, 1
    %s17 = ssub.s32 %s11, 2
    %s18 = sadd.s32 %s11, 1
    %s19 = ssub.s32 %s11, %s18
    %p20 = scmp.eq.s32.totalorder %s19, 0
    %s22 = sadd.s32 %s21, 1
    %s23 = scalar_select %p20, %s21, %s22
    %p26 = pneg %p20
    %p27 = scmp.eq.s32.totalorder %s11, 1
    %p28 = por %p26, %p27
    %p29 = scmp.ne.s32.totalorder %s21, %s24
    %p30 = scmp.eq.s32.totalorder %s11, 0
    %p31 = por %p29, %p30
    %p32 = scmp.ne.s32.totalorder %s21, %s24
    %p33 = scmp.eq.s32.totalorder %s16, 1
    %p34 = por %p32, %p33
    %p35 = scmp.ne.s32.totalorder %s24, %s25
    %p36 = scmp.eq.s32.totalorder %s16, 0
    %p37 = por %p35, %p36
    %p38 = scmp.ne.s32.totalorder %s24, %s25
    %p39 = scmp.eq.s32.totalorder %s17, 1
    %p40 = por %p38, %p39
    %p42 = scmp.ne.s32.totalorder %s25, %s41
    %p43 = scmp.eq.s32.totalorder %s17, 0
    %p44 = por %p42, %p43
    %s46 = sadd.s32 %s45, 1
    %p49 = scmp.eq.s32.totalorder %s11, 1
    %p50 = scmp.ne.s32.totalorder %s45, %s47
    %p51 = scmp.eq.s32.totalorder %s11, 0
    %p52 = por %p50, %p51
    %p53 = scmp.ne.s32.totalorder %s45, %s47
    %p54 = scmp.eq.s32.totalorder %s16, 1
    %p55 = por %p53, %p54
    %p56 = scmp.ne.s32.totalorder %s47, %s48
    %p57 = scmp.eq.s32.totalorder %s16, 0
    %p58 = por %p56, %p57
    %p59 = scmp.ne.s32.totalorder %s47, %s48
    %p60 = scmp.eq.s32.totalorder %s17, 1
    %p61 = por %p59, %p60
    %p63 = scmp.ne.s32.totalorder %s48, %s62
    %p64 = scmp.eq.s32.totalorder %s17, 0
    %p65 = por %p63, %p64
    %s67 = sadd.s32 %s66, 1
    %p70 = scmp.eq.s32.totalorder %s11, 1
    %p71 = scmp.ne.s32.totalorder %s66, %s68
    %p72 = scmp.eq.s32.totalorder %s11, 0
    %p73 = por %p71, %p72
    %p74 = scmp.ne.s32.totalorder %s66, %s68
    %p75 = scmp.eq.s32.totalorder %s16, 1
    %p76 = por %p74, %p75
    %p77 = scmp.ne.s32.totalorder %s68, %s69
    %p78 = scmp.eq.s32.totalorder %s16, 0
    %p79 = por %p77, %p78
    %p80 = scmp.ne.s32.totalorder %s68, %s69
    %p81 = scmp.eq.s32.totalorder %s17, 1
    %p82 = por %p80, %p81
    %p84 = scmp.ne.s32.totalorder %s69, %s83
    %p85 = scmp.eq.s32.totalorder %s17, 0
    %p86 = por %p84, %p85
    %s87 = ssub.s32 %s11, %s18
    %p88 = scmp.eq.s32.totalorder %s87, 0
    %s90 = sadd.s32 %s89, 1
    %s91 = scalar_select %p88, %s89, %s90
    %p94 = pneg %p88
    %p95 = scmp.eq.s32.totalorder %s11, 1
    %p96 = por %p94, %p95
    %p97 = scmp.ne.s32.totalorder %s89, %s92
    %p98 = scmp.eq.s32.totalorder %s11, 0
    %p99 = por %p97, %p98
    %p100 = scmp.ne.s32.totalorder %s89, %s92
    %p101 = scmp.eq.s32.totalorder %s16, 1
    %p102 = por %p100, %p101
    %p103 = scmp.ne.s32.totalorder %s92, %s93
    %p104 = scmp.eq.s32.totalorder %s16, 0
    %p105 = por %p103, %p104
    %p106 = scmp.ne.s32.totalorder %s92, %s93
    %p107 = scmp.eq.s32.totalorder %s17, 1
    %p108 = por %p106, %p107
    %p110 = scmp.ne.s32.totalorder %s93, %s109
    %p111 = scmp.eq.s32.totalorder %s17, 0
    %p112 = por %p110, %p111
    %s113 = ssub.s32 %s11, %s18
    %p114 = scmp.eq.s32.totalorder %s113, 0
    %s116 = sadd.s32 %s115, 1
    %s117 = scalar_select %p114, %s115, %s116
    %p120 = pneg %p114
    %p121 = scmp.eq.s32.totalorder %s11, 1
    %p122 = por %p120, %p121
    %p123 = scmp.ne.s32.totalorder %s115, %s118
    %p124 = scmp.eq.s32.totalorder %s11, 0
    %p125 = por %p123, %p124
    %p126 = scmp.ne.s32.totalorder %s115, %s118
    %p127 = scmp.eq.s32.totalorder %s16, 1
    %p128 = por %p126, %p127
    %p129 = scmp.ne.s32.totalorder %s118, %s119
    %p130 = scmp.eq.s32.totalorder %s16, 0
    %p131 = por %p129, %p130
    %p132 = scmp.ne.s32.totalorder %s118, %s119
    %p133 = scmp.eq.s32.totalorder %s17, 1
    %p134 = por %p132, %p133
    %p136 = scmp.ne.s32.totalorder %s119, %s135
    %p137 = scmp.eq.s32.totalorder %s17, 0
    %p138 = por %p136, %p137
    %s139 = ssub.s32 %s11, %s18
    %p140 = scmp.eq.s32.totalorder %s139, 0
    %s142 = sadd.s32 %s141, 1
    %s143 = scalar_select %p140, %s141, %s142
    %p146 = pneg %p140
    %p147 = scmp.eq.s32.totalorder %s11, 1
    %p148 = por %p146, %p147
    %p149 = scmp.ne.s32.totalorder %s141, %s144
    %p150 = scmp.eq.s32.totalorder %s11, 0
    %p151 = por %p149, %p150
    %p152 = scmp.ne.s32.totalorder %s141, %s144
    %p153 = scmp.eq.s32.totalorder %s16, 1
    %p154 = por %p152, %p153
    %p155 = scmp.ne.s32.totalorder %s144, %s145
    %p156 = scmp.eq.s32.totalorder %s16, 0
    %p157 = por %p155, %p156
    %p158 = scmp.ne.s32.totalorder %s144, %s145
    %p159 = scmp.eq.s32.totalorder %s17, 1
    %p160 = por %p158, %p159
    %p162 = scmp.ne.s32.totalorder %s145, %s161
    %p163 = scmp.eq.s32.totalorder %s17, 0
    %p164 = por %p162, %p163
    %p165 = scmp.le.s32.totalorder 1, %s11
    %p166 = scmp.lt.s32.totalorder %s11, 3
    %p167 = pnand %p165, %p166
    %p168 = pneg %p167
    // Predicated region
    $region9: #{munit_trainer_forward.26} parent=5 // pred_check
      _
    $region10: #{munit_trainer_forward.26} parent=5 // pred_check_branch
      %170 = sbr.rel (%p167) target = $region12
    $region11: #{munit_trainer_forward.26} parent=5 // pred_region
      %s171 = ssub.s32 %s11, 1
      // Predicated region
      $region13: #{munit_trainer_forward.26} parent=11 // pred_check
        %p172 = pneg %p58
      $region14: #{munit_trainer_forward.26} parent=11 // pred_check_branch
        %174 = sbr.rel (%p172) target = $region16
      $region15: #{munit_trainer_forward.26} parent=11 // pred_region
        _
      $region16: #{munit_trainer_forward.26} parent=11 // pred_fallthru
        _
      // Predicated region
      $region17: #{munit_trainer_forward.26} parent=11 // pred_check
        %p175 = pneg %p79
      $region18: #{munit_trainer_forward.26} parent=11 // pred_check_branch
        %177 = sbr.rel (%p175) target = $region20
      $region19: #{munit_trainer_forward.26} parent=11 // pred_region
        _
      $region20: #{munit_trainer_forward.26} parent=11 // pred_fallthru
        _
    $region12: #{munit_trainer_forward.26} parent=5 // pred_fallthru
      _
    %p178 = scmp.lt.s32.totalorder %s11, 2
    // Predicated region
    $region21: #{munit_trainer_forward.26} parent=5 // pred_check
      %p179 = pneg %p178
    $region22: #{munit_trainer_forward.26} parent=5 // pred_check_branch
      %181 = sbr.rel (%p179) target = $region24
    $region23: #{munit_trainer_forward.26} parent=5 // pred_region
      // Predicated region
      $region25: #{munit_trainer_forward.26} parent=23 // pred_check
        %p182 = pneg %p31
      $region26: #{munit_trainer_forward.26} parent=23 // pred_check_branch
        %184 = sbr.rel (%p182) target = $region28
      $region27: #{munit_trainer_forward.26} parent=23 // pred_region
        %p185 = scmp.lt.s32.totalorder %s11, 1
        %s186 = scalar_select %p185, %s11, 1
        %s187 = smul.addr %s186, 224
        %s188 = smul.addr %s187, 4
        %s189 = scalar_lea.vmem %s0, %s188
      $region28: #{munit_trainer_forward.26} parent=23 // pred_fallthru
        _
      // Predicated region
      $region29: #{munit_trainer_forward.26} parent=23 // pred_check
        %p190 = pneg %p99
      $region30: #{munit_trainer_forward.26} parent=23 // pred_check_branch
        %192 = sbr.rel (%p190) target = $region32
      $region31: #{munit_trainer_forward.26} parent=23 // pred_region
        %p193 = scmp.lt.s32.totalorder %s11, 1
        %s194 = scalar_select %p193, %s11, 1
        %s195 = scalar_lea.vmem %s3, %s194
      $region32: #{munit_trainer_forward.26} parent=23 // pred_fallthru
        _
      // Predicated region
      $region33: #{munit_trainer_forward.26} parent=23 // pred_check
        %p196 = pneg %p125
      $region34: #{munit_trainer_forward.26} parent=23 // pred_check_branch
        %198 = sbr.rel (%p196) target = $region36
      $region35: #{munit_trainer_forward.26} parent=23 // pred_region
        %p199 = scmp.lt.s32.totalorder %s11, 1
        %s200 = scalar_select %p199, %s11, 1
        %s201 = scalar_lea.vmem %s4, %s200
      $region36: #{munit_trainer_forward.26} parent=23 // pred_fallthru
        _
    $region24: #{munit_trainer_forward.26} parent=5 // pred_fallthru
      _
    %p202 = scmp.le.s32.totalorder 1, %s11
    %p203 = scmp.lt.s32.totalorder %s11, 3
    %p204 = pnand %p202, %p203
    %p205 = pneg %p204
    // Predicated region
    $region37: #{munit_trainer_forward.26} parent=5 // pred_check
      _
    $region38: #{munit_trainer_forward.26} parent=5 // pred_check_branch
      %207 = sbr.rel (%p204) target = $region40
    $region39: #{munit_trainer_forward.26} parent=5 // pred_region
      %s208 = ssub.s32 %s11, 1
      %p209 = scmp.lt.s32.totalorder %s16, 1
      %s210 = scalar_select %p209, %s16, 1
      %s211 = smul.addr %s210, 224
      %s212 = smul.addr %s211, 4
      %s213 = scalar_lea.vmem %s0, %s212
      %p214 = pneg %p37
      %p215 = pneg %p34
      %p216 = pneg %p58
      %p217 = pneg %p55
      %p218 = pneg %p79
      %p219 = pneg %p76
      %p220 = scmp.lt.s32.totalorder %s16, 1
      %s221 = scalar_select %p220, %s16, 1
      %s222 = scalar_lea.vmem %s3, %s221
      %p223 = pneg %p105
      %p224 = pneg %p102
      %p225 = scmp.lt.s32.totalorder %s16, 1
      %s226 = scalar_select %p225, %s16, 1
      %s227 = scalar_lea.vmem %s4, %s226
      %p228 = pneg %p131
      %p229 = pneg %p128
      %p230 = pneg %p157
      %p231 = pneg %p154
      %p232 = scmp.lt.s32.totalorder %s16, 1
      %s233 = scalar_select %p232, %s16, 1
      %s234 = smul.addr %s233, 32
      %s235 = smul.addr %s234, 8
      %s236 = scalar_lea.vmem %s5, %s235
      %p237 = scmp.lt.s32.totalorder %s16, 1
      %s238 = scalar_select %p237, %s16, 1
      %s239 = smul.addr %s238, 224
      %s240 = smul.addr %s239, 4
      %s241 = scalar_lea.vmem %s0, %s240
      %p242 = scmp.lt.s32.totalorder %s16, 1
      %s243 = scalar_select %p242, %s16, 1
      %s244 = scalar_lea.vmem %s3, %s243
      %p245 = scmp.lt.s32.totalorder %s16, 1
      %s246 = scalar_select %p245, %s16, 1
      %s247 = scalar_lea.vmem %s4, %s246
      %p248 = scmp.lt.s32.totalorder %s16, 1
      %s249 = scalar_select %p248, %s16, 1
      %s250 = smul.addr %s249, 32
      %s251 = smul.addr %s250, 8
      %s252 = scalar_lea.vmem %s5, %s251
      %v254 = vld [vmem:[%s241] sm:$0xff]
      %v255 = vld [vmem:[%s241 + $0x8] sm:$0xff]
      %v256 = vld [vmem:[%s241 + $0x10] sm:$0xff]
      %v257 = vld [vmem:[%s241 + $0x18] sm:$0xf]
      %v258 = vld [vmem:[%s241 + $0x1c] sm:$0xff]
      %v259 = vld [vmem:[%s241 + $0x24] sm:$0xff]
      %v260 = vld [vmem:[%s241 + $0x2c] sm:$0xff]
      %v261 = vld [vmem:[%s241 + $0x34] sm:$0xf]
      %v262 = vld [vmem:[%s241 + $0x38] sm:$0xff]
      %v263 = vld [vmem:[%s241 + $0x40] sm:$0xff]
      %v264 = vld [vmem:[%s241 + $0x48] sm:$0xff]
      %v265 = vld [vmem:[%s241 + $0x50] sm:$0xf]
      %v266 = vld [vmem:[%s241 + $0x54] sm:$0xff]
      %v267 = vld [vmem:[%s241 + $0x5c] sm:$0xff]
      %v268 = vld [vmem:[%s241 + $0x64] sm:$0xff]
      %v269 = vld [vmem:[%s241 + $0x6c] sm:$0xf]
      %v270 = vld [vmem:[%s241 + $0x70] sm:$0xff]
      %v271 = vld [vmem:[%s241 + $0x78] sm:$0xff]
      %v272 = vld [vmem:[%s241 + $0x80] sm:$0xff]
      %v273 = vld [vmem:[%s241 + $0x88] sm:$0xf]
      %v274 = vld [vmem:[%s241 + $0x8c] sm:$0xff]
      %v275 = vld [vmem:[%s241 + $0x94] sm:$0xff]
      %v276 = vld [vmem:[%s241 + $0x9c] sm:$0xff]
      %v277 = vld [vmem:[%s241 + $0xa4] sm:$0xf]
      %v278 = vld [vmem:[%s241 + $0xa8] sm:$0xff]
      %v279 = vld [vmem:[%s241 + $0xb0] sm:$0xff]
      %v280 = vld [vmem:[%s241 + $0xb8] sm:$0xff]
      %v281 = vld [vmem:[%s241 + $0xc0] sm:$0xf]
      %v282 = vld [vmem:[%s241 + $0xc4] sm:$0xff]
      %v283 = vld [vmem:[%s241 + $0xcc] sm:$0xff]
      %v284 = vld [vmem:[%s241 + $0xd4] sm:$0xff]
      %v285 = vld [vmem:[%s241 + $0xdc] sm:$0xf]
      %v286 = vld [vmem:[%s241 + $0xe0] sm:$0xff]
      %v287 = vld [vmem:[%s241 + $0xe8] sm:$0xff]
      %v288 = vld [vmem:[%s241 + $0xf0] sm:$0xff]
      %v289 = vld [vmem:[%s241 + $0xf8] sm:$0xf]
      %v290 = vld [vmem:[%s241 + $0xfc] sm:$0xff]
      %v291 = vld [vmem:[%s241 + $0x104] sm:$0xff]
      %v292 = vld [vmem:[%s241 + $0x10c] sm:$0xff]
      %v293 = vld [vmem:[%s241 + $0x114] sm:$0xf]
      %v294 = vld [vmem:[%s241 + $0x118] sm:$0xff]
      %v295 = vld [vmem:[%s241 + $0x120] sm:$0xff]
      %v296 = vld [vmem:[%s241 + $0x128] sm:$0xff]
      %v297 = vld [vmem:[%s241 + $0x130] sm:$0xf]
      %v298 = vld [vmem:[%s241 + $0x134] sm:$0xff]
      %v299 = vld [vmem:[%s241 + $0x13c] sm:$0xff]
      %v300 = vld [vmem:[%s241 + $0x144] sm:$0xff]
      %v301 = vld [vmem:[%s241 + $0x14c] sm:$0xf]
      %v302 = vld [vmem:[%s241 + $0x150] sm:$0xff]
      %v303 = vld [vmem:[%s241 + $0x158] sm:$0xff]
      %v304 = vld [vmem:[%s241 + $0x160] sm:$0xff]
      %v305 = vld [vmem:[%s241 + $0x168] sm:$0xf]
      %v306 = vld [vmem:[%s241 + $0x16c] sm:$0xff]
      %v307 = vld [vmem:[%s241 + $0x174] sm:$0xff]
      %v308 = vld [vmem:[%s241 + $0x17c] sm:$0xff]
      %v309 = vld [vmem:[%s241 + $0x184] sm:$0xf]
      %v310 = vld [vmem:[%s241 + $0x188] sm:$0xff]
      %v311 = vld [vmem:[%s241 + $0x190] sm:$0xff]
      %v312 = vld [vmem:[%s241 + $0x198] sm:$0xff]
      %v313 = vld [vmem:[%s241 + $0x1a0] sm:$0xf]
      %v314 = vld [vmem:[%s241 + $0x1a4] sm:$0xff]
      %v315 = vld [vmem:[%s241 + $0x1ac] sm:$0xff]
      %v316 = vld [vmem:[%s241 + $0x1b4] sm:$0xff]
      %v317 = vld [vmem:[%s241 + $0x1bc] sm:$0xf]
      %v318 = vld [vmem:[%s241 + $0x1c0] sm:$0xff]
      %v319 = vld [vmem:[%s241 + $0x1c8] sm:$0xff]
      %v320 = vld [vmem:[%s241 + $0x1d0] sm:$0xff]
      %v321 = vld [vmem:[%s241 + $0x1d8] sm:$0xf]
      %v322 = vld [vmem:[%s241 + $0x1dc] sm:$0xff]
      %v323 = vld [vmem:[%s241 + $0x1e4] sm:$0xff]
      %v324 = vld [vmem:[%s241 + $0x1ec] sm:$0xff]
      %v325 = vld [vmem:[%s241 + $0x1f4] sm:$0xf]
      %v326 = vld [vmem:[%s241 + $0x1f8] sm:$0xff]
      %v327 = vld [vmem:[%s241 + $0x200] sm:$0xff]
      %v328 = vld [vmem:[%s241 + $0x208] sm:$0xff]
      %v329 = vld [vmem:[%s241 + $0x210] sm:$0xf]
      %v330 = vld [vmem:[%s241 + $0x214] sm:$0xff]
      %v331 = vld [vmem:[%s241 + $0x21c] sm:$0xff]
      %v332 = vld [vmem:[%s241 + $0x224] sm:$0xff]
      %v333 = vld [vmem:[%s241 + $0x22c] sm:$0xf]
      %v334 = vld [vmem:[%s241 + $0x230] sm:$0xff]
      %v335 = vld [vmem:[%s241 + $0x238] sm:$0xff]
      %v336 = vld [vmem:[%s241 + $0x240] sm:$0xff]
      %v337 = vld [vmem:[%s241 + $0x248] sm:$0xf]
      %v338 = vld [vmem:[%s241 + $0x24c] sm:$0xff]
      %v339 = vld [vmem:[%s241 + $0x254] sm:$0xff]
      %v340 = vld [vmem:[%s241 + $0x25c] sm:$0xff]
      %v341 = vld [vmem:[%s241 + $0x264] sm:$0xf]
      %v342 = vld [vmem:[%s241 + $0x268] sm:$0xff]
      %v343 = vld [vmem:[%s241 + $0x270] sm:$0xff]
      %v344 = vld [vmem:[%s241 + $0x278] sm:$0xff]
      %v345 = vld [vmem:[%s241 + $0x280] sm:$0xf]
      %v346 = vld [vmem:[%s241 + $0x284] sm:$0xff]
      %v347 = vld [vmem:[%s241 + $0x28c] sm:$0xff]
      %v348 = vld [vmem:[%s241 + $0x294] sm:$0xff]
      %v349 = vld [vmem:[%s241 + $0x29c] sm:$0xf]
      %v350 = vld [vmem:[%s241 + $0x2a0] sm:$0xff]
      %v351 = vld [vmem:[%s241 + $0x2a8] sm:$0xff]
      %v352 = vld [vmem:[%s241 + $0x2b0] sm:$0xff]
      %v353 = vld [vmem:[%s241 + $0x2b8] sm:$0xf]
      %v354 = vld [vmem:[%s241 + $0x2bc] sm:$0xff]
      %v355 = vld [vmem:[%s241 + $0x2c4] sm:$0xff]
      %v356 = vld [vmem:[%s241 + $0x2cc] sm:$0xff]
      %v357 = vld [vmem:[%s241 + $0x2d4] sm:$0xf]
      %v358 = vld [vmem:[%s241 + $0x2d8] sm:$0xff]
      %v359 = vld [vmem:[%s241 + $0x2e0] sm:$0xff]
      %v360 = vld [vmem:[%s241 + $0x2e8] sm:$0xff]
      %v361 = vld [vmem:[%s241 + $0x2f0] sm:$0xf]
      %v362 = vld [vmem:[%s241 + $0x2f4] sm:$0xff]
      %v363 = vld [vmem:[%s241 + $0x2fc] sm:$0xff]
      %v364 = vld [vmem:[%s241 + $0x304] sm:$0xff]
      %v365 = vld [vmem:[%s241 + $0x30c] sm:$0xf]
      %v366 = vld [vmem:[%s241 + $0x310] sm:$0xff]
      %v367 = vld [vmem:[%s241 + $0x318] sm:$0xff]
      %v368 = vld [vmem:[%s241 + $0x320] sm:$0xff]
      %v369 = vld [vmem:[%s241 + $0x328] sm:$0xf]
      %v370 = vld [vmem:[%s241 + $0x32c] sm:$0xff]
      %v371 = vld [vmem:[%s241 + $0x334] sm:$0xff]
      %v372 = vld [vmem:[%s241 + $0x33c] sm:$0xff]
      %v373 = vld [vmem:[%s241 + $0x344] sm:$0xf]
      %v374 = vld [vmem:[%s241 + $0x348] sm:$0xff]
      %v375 = vld [vmem:[%s241 + $0x350] sm:$0xff]
      %v376 = vld [vmem:[%s241 + $0x358] sm:$0xff]
      %v377 = vld [vmem:[%s241 + $0x360] sm:$0xf]
      %v378 = vld [vmem:[%s241 + $0x364] sm:$0xff]
      %v379 = vld [vmem:[%s241 + $0x36c] sm:$0xff]
      %v380 = vld [vmem:[%s241 + $0x374] sm:$0xff]
      %v381 = vld [vmem:[%s241 + $0x37c] sm:$0xf]
      %v382 = vld [vmem:[%s1] sm:$0xf]
      %v383 = vld [vmem:[%s1 + $0x4] sm:$0xf]
      %v384 = vld [vmem:[%s1 + $0x8] sm:$0xf]
      %v385 = vld [vmem:[%s1 + $0xc] sm:$0xf]
      %v386 = vld [vmem:[%s1 + $0x10] sm:$0xf]
      %v387 = vld [vmem:[%s1 + $0x14] sm:$0xf]
      %v388 = vld [vmem:[%s1 + $0x18] sm:$0xf]
      %v389 = vld [vmem:[%s1 + $0x1c] sm:$0xf]
      %v390 = vld [vmem:[%s1 + $0x20] sm:$0xf]
      %v391 = vld [vmem:[%s1 + $0x24] sm:$0xf]
      %v392 = vld [vmem:[%s1 + $0x28] sm:$0xf]
      %v393 = vld [vmem:[%s1 + $0x2c] sm:$0xf]
      %v394 = vld [vmem:[%s1 + $0x30] sm:$0xf]
      %v395 = vld [vmem:[%s1 + $0x34] sm:$0xf]
      %v396 = vld [vmem:[%s1 + $0x38] sm:$0xf]
      %v397 = vld [vmem:[%s1 + $0x3c] sm:$0xf]
      %v398 = vld [vmem:[%s1 + $0x40] sm:$0xf]
      %v399 = vld [vmem:[%s1 + $0x44] sm:$0xf]
      %v400 = vld [vmem:[%s1 + $0x48] sm:$0xf]
      %v401 = vld [vmem:[%s1 + $0x4c] sm:$0xf]
      %v402 = vld [vmem:[%s1 + $0x50] sm:$0xf]
      %v403 = vld [vmem:[%s1 + $0x54] sm:$0xf]
      %v404 = vld [vmem:[%s1 + $0x58] sm:$0xf]
      %v405 = vld [vmem:[%s1 + $0x5c] sm:$0xf]
      %v406 = vld [vmem:[%s1 + $0x60] sm:$0xf]
      %v407 = vld [vmem:[%s1 + $0x64] sm:$0xf]
      %v408 = vld [vmem:[%s1 + $0x68] sm:$0xf]
      %v409 = vld [vmem:[%s1 + $0x6c] sm:$0xf]
      %v410 = vld [vmem:[%s1 + $0x70] sm:$0xf]
      %v411 = vld [vmem:[%s1 + $0x74] sm:$0xf]
      %v412 = vld [vmem:[%s1 + $0x78] sm:$0xf]
      %v413 = vld [vmem:[%s1 + $0x7c] sm:$0xf]
      %v414 = vld [vmem:[%s1 + $0x80] sm:$0xf]
      %v415 = vld [vmem:[%s1 + $0x84] sm:$0xf]
      %v416 = vld [vmem:[%s1 + $0x88] sm:$0xf]
      %v417 = vld [vmem:[%s1 + $0x8c] sm:$0xf]
      %v418 = vld [vmem:[%s1 + $0x90] sm:$0xf]
      %v419 = vld [vmem:[%s1 + $0x94] sm:$0xf]
      %v420 = vld [vmem:[%s1 + $0x98] sm:$0xf]
      %v421 = vld [vmem:[%s1 + $0x9c] sm:$0xf]
      %v422 = vld [vmem:[%s1 + $0xa0] sm:$0xf]
      %v423 = vld [vmem:[%s1 + $0xa4] sm:$0xf]
      %v424 = vld [vmem:[%s1 + $0xa8] sm:$0xf]
      %v425 = vld [vmem:[%s1 + $0xac] sm:$0xf]
      %v426 = vld [vmem:[%s1 + $0xb0] sm:$0xf]
      %v427 = vld [vmem:[%s1 + $0xb4] sm:$0xf]
      %v428 = vld [vmem:[%s1 + $0xb8] sm:$0xf]
      %v429 = vld [vmem:[%s1 + $0xbc] sm:$0xf]
      %v430 = vld [vmem:[%s1 + $0xc0] sm:$0xf]
      %v431 = vld [vmem:[%s1 + $0xc4] sm:$0xf]
      %v432 = vld [vmem:[%s1 + $0xc8] sm:$0xf]
      %v433 = vld [vmem:[%s1 + $0xcc] sm:$0xf]
      %v434 = vld [vmem:[%s1 + $0xd0] sm:$0xf]
      %v435 = vld [vmem:[%s1 + $0xd4] sm:$0xf]
      %v436 = vld [vmem:[%s1 + $0xd8] sm:$0xf]
      %v437 = vld [vmem:[%s1 + $0xdc] sm:$0xf]
      %v438 = vld [vmem:[%s1 + $0xe0] sm:$0xf]
      %v439 = vld [vmem:[%s1 + $0xe4] sm:$0xf]
      %v440 = vld [vmem:[%s1 + $0xe8] sm:$0xf]
      %v441 = vld [vmem:[%s1 + $0xec] sm:$0xf]
      %v442 = vld [vmem:[%s1 + $0xf0] sm:$0xf]
      %v443 = vld [vmem:[%s1 + $0xf4] sm:$0xf]
      %v444 = vld [vmem:[%s1 + $0xf8] sm:$0xf]
      %v445 = vld [vmem:[%s1 + $0xfc] sm:$0xf]
      %v446 = vld [vmem:[%s1 + $0x100] sm:$0xf]
      %v447 = vld [vmem:[%s1 + $0x104] sm:$0xf]
      %v448 = vld [vmem:[%s1 + $0x108] sm:$0xf]
      %v449 = vld [vmem:[%s1 + $0x10c] sm:$0xf]
      %v450 = vld [vmem:[%s1 + $0x110] sm:$0xf]
      %v451 = vld [vmem:[%s1 + $0x114] sm:$0xf]
      %v452 = vld [vmem:[%s1 + $0x118] sm:$0xf]
      %v453 = vld [vmem:[%s1 + $0x11c] sm:$0xf]
      %v454 = vld [vmem:[%s1 + $0x120] sm:$0xf]
      %v455 = vld [vmem:[%s1 + $0x124] sm:$0xf]
      %v456 = vld [vmem:[%s1 + $0x128] sm:$0xf]
      %v457 = vld [vmem:[%s1 + $0x12c] sm:$0xf]
      %v458 = vld [vmem:[%s1 + $0x130] sm:$0xf]
      %v459 = vld [vmem:[%s1 + $0x134] sm:$0xf]
      %v460 = vld [vmem:[%s1 + $0x138] sm:$0xf]
      %v461 = vld [vmem:[%s1 + $0x13c] sm:$0xf]
      %v462 = vld [vmem:[%s1 + $0x140] sm:$0xf]
      %v463 = vld [vmem:[%s1 + $0x144] sm:$0xf]
      %v464 = vld [vmem:[%s1 + $0x148] sm:$0xf]
      %v465 = vld [vmem:[%s1 + $0x14c] sm:$0xf]
      %v466 = vld [vmem:[%s1 + $0x150] sm:$0xf]
      %v467 = vld [vmem:[%s1 + $0x154] sm:$0xf]
      %v468 = vld [vmem:[%s1 + $0x158] sm:$0xf]
      %v469 = vld [vmem:[%s1 + $0x15c] sm:$0xf]
      %v470 = vld [vmem:[%s1 + $0x160] sm:$0xf]
      %v471 = vld [vmem:[%s1 + $0x164] sm:$0xf]
      %v472 = vld [vmem:[%s1 + $0x168] sm:$0xf]
      %v473 = vld [vmem:[%s1 + $0x16c] sm:$0xf]
      %v474 = vld [vmem:[%s1 + $0x170] sm:$0xf]
      %v475 = vld [vmem:[%s1 + $0x174] sm:$0xf]
      %v476 = vld [vmem:[%s1 + $0x178] sm:$0xf]
      %v477 = vld [vmem:[%s1 + $0x17c] sm:$0xf]
      %v478 = vld [vmem:[%s1 + $0x180] sm:$0xf]
      %v479 = vld [vmem:[%s1 + $0x184] sm:$0xf]
      %v480 = vld [vmem:[%s1 + $0x188] sm:$0xf]
      %v481 = vld [vmem:[%s1 + $0x18c] sm:$0xf]
      %v482 = vld [vmem:[%s1 + $0x190] sm:$0xf]
      %v483 = vld [vmem:[%s1 + $0x194] sm:$0xf]
      %v484 = vld [vmem:[%s1 + $0x198] sm:$0xf]
      %v485 = vld [vmem:[%s1 + $0x19c] sm:$0xf]
      %v486 = vld [vmem:[%s1 + $0x1a0] sm:$0xf]
      %v487 = vld [vmem:[%s1 + $0x1a4] sm:$0xf]
      %v488 = vld [vmem:[%s1 + $0x1a8] sm:$0xf]
      %v489 = vld [vmem:[%s1 + $0x1ac] sm:$0xf]
      %v490 = vld [vmem:[%s1 + $0x1b0] sm:$0xf]
      %v491 = vld [vmem:[%s1 + $0x1b4] sm:$0xf]
      %v492 = vld [vmem:[%s1 + $0x1b8] sm:$0xf]
      %v493 = vld [vmem:[%s1 + $0x1bc] sm:$0xf]
      %v494 = vld [vmem:[%s2] sm:$0x1]
      %v496 = vlaneseq
      %v497 = vshrl.u32 %v496, 7
      %v498 = vsub.s32 0, %v497
      %v499 = vrot.slane %v494, %v498
      %v629 = vunpack.c.l.b16 %v254
      %v630 = vunpack.c.h.b16 %v254
      %v631 = vunpack.c.l.b16 %v255
      %v632 = vunpack.c.h.b16 %v255
      %v633 = vunpack.c.l.b16 %v256
      %v634 = vunpack.c.h.b16 %v256
      %v635 = vunpack.c.l.b16 %v257
      %v636 = vunpack.c.l.b16 %v258
      %v637 = vunpack.c.h.b16 %v258
      %v638 = vunpack.c.l.b16 %v259
      %v639 = vunpack.c.h.b16 %v259
      %v640 = vunpack.c.l.b16 %v260
      %v641 = vunpack.c.h.b16 %v260
      %v642 = vunpack.c.l.b16 %v261
      %v643 = vunpack.c.l.b16 %v262
      %v644 = vunpack.c.h.b16 %v262
      %v645 = vunpack.c.l.b16 %v263
      %v646 = vunpack.c.h.b16 %v263
      %v647 = vunpack.c.l.b16 %v264
      %v648 = vunpack.c.h.b16 %v264
      %v649 = vunpack.c.l.b16 %v265
      %v650 = vunpack.c.l.b16 %v266
      %v651 = vunpack.c.h.b16 %v266
      %v652 = vunpack.c.l.b16 %v267
      %v653 = vunpack.c.h.b16 %v267
      %v654 = vunpack.c.l.b16 %v268
      %v655 = vunpack.c.h.b16 %v268
      %v656 = vunpack.c.l.b16 %v269
      %v657 = vunpack.c.l.b16 %v270
      %v658 = vunpack.c.h.b16 %v270
      %v659 = vunpack.c.l.b16 %v271
      %v660 = vunpack.c.h.b16 %v271
      %v661 = vunpack.c.l.b16 %v272
      %v662 = vunpack.c.h.b16 %v272
      %v663 = vunpack.c.l.b16 %v273
      %v664 = vunpack.c.l.b16 %v274
      %v665 = vunpack.c.h.b16 %v274
      %v666 = vunpack.c.l.b16 %v275
      %v667 = vunpack.c.h.b16 %v275
      %v668 = vunpack.c.l.b16 %v276
      %v669 = vunpack.c.h.b16 %v276
      %v670 = vunpack.c.l.b16 %v277
      %v671 = vunpack.c.l.b16 %v278
      %v672 = vunpack.c.h.b16 %v278
      %v673 = vunpack.c.l.b16 %v279
      %v674 = vunpack.c.h.b16 %v279
      %v675 = vunpack.c.l.b16 %v280
      %v676 = vunpack.c.h.b16 %v280
      %v677 = vunpack.c.l.b16 %v281
      %v678 = vunpack.c.l.b16 %v282
      %v679 = vunpack.c.h.b16 %v282
      %v680 = vunpack.c.l.b16 %v283
      %v681 = vunpack.c.h.b16 %v283
      %v682 = vunpack.c.l.b16 %v284
      %v683 = vunpack.c.h.b16 %v284
      %v684 = vunpack.c.l.b16 %v285
      %v685 = vunpack.c.l.b16 %v286
      %v686 = vunpack.c.h.b16 %v286
      %v687 = vunpack.c.l.b16 %v287
      %v688 = vunpack.c.h.b16 %v287
      %v689 = vunpack.c.l.b16 %v288
      %v690 = vunpack.c.h.b16 %v288
      %v691 = vunpack.c.l.b16 %v289
      %v692 = vunpack.c.l.b16 %v290
      %v693 = vunpack.c.h.b16 %v290
      %v694 = vunpack.c.l.b16 %v291
      %v695 = vunpack.c.h.b16 %v291
      %v696 = vunpack.c.l.b16 %v292
      %v697 = vunpack.c.h.b16 %v292
      %v698 = vunpack.c.l.b16 %v293
      %v699 = vunpack.c.l.b16 %v294
      %v700 = vunpack.c.h.b16 %v294
      %v701 = vunpack.c.l.b16 %v295
      %v702 = vunpack.c.h.b16 %v295
      %v703 = vunpack.c.l.b16 %v296
      %v704 = vunpack.c.h.b16 %v296
      %v705 = vunpack.c.l.b16 %v297
      %v706 = vunpack.c.l.b16 %v298
      %v707 = vunpack.c.h.b16 %v298
      %v708 = vunpack.c.l.b16 %v299
      %v709 = vunpack.c.h.b16 %v299
      %v710 = vunpack.c.l.b16 %v300
      %v711 = vunpack.c.h.b16 %v300
      %v712 = vunpack.c.l.b16 %v301
      %v713 = vunpack.c.l.b16 %v302
      %v714 = vunpack.c.h.b16 %v302
      %v715 = vunpack.c.l.b16 %v303
      %v716 = vunpack.c.h.b16 %v303
      %v717 = vunpack.c.l.b16 %v304
      %v718 = vunpack.c.h.b16 %v304
      %v719 = vunpack.c.l.b16 %v305
      %v720 = vunpack.c.l.b16 %v306
      %v721 = vunpack.c.h.b16 %v306
      %v722 = vunpack.c.l.b16 %v307
      %v723 = vunpack.c.h.b16 %v307
      %v724 = vunpack.c.l.b16 %v308
      %v725 = vunpack.c.h.b16 %v308
      %v726 = vunpack.c.l.b16 %v309
      %v727 = vunpack.c.l.b16 %v310
      %v728 = vunpack.c.h.b16 %v310
      %v729 = vunpack.c.l.b16 %v311
      %v730 = vunpack.c.h.b16 %v311
      %v731 = vunpack.c.l.b16 %v312
      %v732 = vunpack.c.h.b16 %v312
      %v733 = vunpack.c.l.b16 %v313
      %v734 = vunpack.c.l.b16 %v314
      %v735 = vunpack.c.h.b16 %v314
      %v736 = vunpack.c.l.b16 %v315
      %v737 = vunpack.c.h.b16 %v315
      %v738 = vunpack.c.l.b16 %v316
      %v739 = vunpack.c.h.b16 %v316
      %v740 = vunpack.c.l.b16 %v317
      %v741 = vunpack.c.l.b16 %v318
      %v742 = vunpack.c.h.b16 %v318
      %v743 = vunpack.c.l.b16 %v319
      %v744 = vunpack.c.h.b16 %v319
      %v745 = vunpack.c.l.b16 %v320
      %v746 = vunpack.c.h.b16 %v320
      %v747 = vunpack.c.l.b16 %v321
      %v748 = vunpack.c.l.b16 %v322
      %v749 = vunpack.c.h.b16 %v322
      %v750 = vunpack.c.l.b16 %v323
      %v751 = vunpack.c.h.b16 %v323
      %v752 = vunpack.c.l.b16 %v324
      %v753 = vunpack.c.h.b16 %v324
      %v754 = vunpack.c.l.b16 %v325
      %v755 = vunpack.c.l.b16 %v326
      %v756 = vunpack.c.h.b16 %v326
      %v757 = vunpack.c.l.b16 %v327
      %v758 = vunpack.c.h.b16 %v327
      %v759 = vunpack.c.l.b16 %v328
      %v760 = vunpack.c.h.b16 %v328
      %v761 = vunpack.c.l.b16 %v329
      %v762 = vunpack.c.l.b16 %v330
      %v763 = vunpack.c.h.b16 %v330
      %v764 = vunpack.c.l.b16 %v331
      %v765 = vunpack.c.h.b16 %v331
      %v766 = vunpack.c.l.b16 %v332
      %v767 = vunpack.c.h.b16 %v332
      %v768 = vunpack.c.l.b16 %v333
      %v769 = vunpack.c.l.b16 %v334
      %v770 = vunpack.c.h.b16 %v334
      %v771 = vunpack.c.l.b16 %v335
      %v772 = vunpack.c.h.b16 %v335
      %v773 = vunpack.c.l.b16 %v336
      %v774 = vunpack.c.h.b16 %v336
      %v775 = vunpack.c.l.b16 %v337
      %v776 = vunpack.c.l.b16 %v338
      %v777 = vunpack.c.h.b16 %v338
      %v778 = vunpack.c.l.b16 %v339
      %v779 = vunpack.c.h.b16 %v339
      %v780 = vunpack.c.l.b16 %v340
      %v781 = vunpack.c.h.b16 %v340
      %v782 = vunpack.c.l.b16 %v341
      %v783 = vunpack.c.l.b16 %v342
      %v784 = vunpack.c.h.b16 %v342
      %v785 = vunpack.c.l.b16 %v343
      %v786 = vunpack.c.h.b16 %v343
      %v787 = vunpack.c.l.b16 %v344
      %v788 = vunpack.c.h.b16 %v344
      %v789 = vunpack.c.l.b16 %v345
      %v790 = vunpack.c.l.b16 %v346
      %v791 = vunpack.c.h.b16 %v346
      %v792 = vunpack.c.l.b16 %v347
      %v793 = vunpack.c.h.b16 %v347
      %v794 = vunpack.c.l.b16 %v348
      %v795 = vunpack.c.h.b16 %v348
      %v796 = vunpack.c.l.b16 %v349
      %v797 = vunpack.c.l.b16 %v350
      %v798 = vunpack.c.h.b16 %v350
      %v799 = vunpack.c.l.b16 %v351
      %v800 = vunpack.c.h.b16 %v351
      %v801 = vunpack.c.l.b16 %v352
      %v802 = vunpack.c.h.b16 %v352
      %v803 = vunpack.c.l.b16 %v353
      %v804 = vunpack.c.l.b16 %v354
      %v805 = vunpack.c.h.b16 %v354
      %v806 = vunpack.c.l.b16 %v355
      %v807 = vunpack.c.h.b16 %v355
      %v808 = vunpack.c.l.b16 %v356
      %v809 = vunpack.c.h.b16 %v356
      %v810 = vunpack.c.l.b16 %v357
      %v811 = vunpack.c.l.b16 %v358
      %v812 = vunpack.c.h.b16 %v358
      %v813 = vunpack.c.l.b16 %v359
      %v814 = vunpack.c.h.b16 %v359
      %v815 = vunpack.c.l.b16 %v360
      %v816 = vunpack.c.h.b16 %v360
      %v817 = vunpack.c.l.b16 %v361
      %v818 = vunpack.c.l.b16 %v362
      %v819 = vunpack.c.h.b16 %v362
      %v820 = vunpack.c.l.b16 %v363
      %v821 = vunpack.c.h.b16 %v363
      %v822 = vunpack.c.l.b16 %v364
      %v823 = vunpack.c.h.b16 %v364
      %v824 = vunpack.c.l.b16 %v365
      %v825 = vunpack.c.l.b16 %v366
      %v826 = vunpack.c.h.b16 %v366
      %v827 = vunpack.c.l.b16 %v367
      %v828 = vunpack.c.h.b16 %v367
      %v829 = vunpack.c.l.b16 %v368
      %v830 = vunpack.c.h.b16 %v368
      %v831 = vunpack.c.l.b16 %v369
      %v832 = vunpack.c.l.b16 %v370
      %v833 = vunpack.c.h.b16 %v370
      %v834 = vunpack.c.l.b16 %v371
      %v835 = vunpack.c.h.b16 %v371
      %v836 = vunpack.c.l.b16 %v372
      %v837 = vunpack.c.h.b16 %v372
      %v838 = vunpack.c.l.b16 %v373
      %v839 = vunpack.c.l.b16 %v374
      %v840 = vunpack.c.h.b16 %v374
      %v841 = vunpack.c.l.b16 %v375
      %v842 = vunpack.c.h.b16 %v375
      %v843 = vunpack.c.l.b16 %v376
      %v844 = vunpack.c.h.b16 %v376
      %v845 = vunpack.c.l.b16 %v377
      %v846 = vunpack.c.l.b16 %v378
      %v847 = vunpack.c.h.b16 %v378
      %v848 = vunpack.c.l.b16 %v379
      %v849 = vunpack.c.h.b16 %v379
      %v850 = vunpack.c.l.b16 %v380
      %v851 = vunpack.c.h.b16 %v380
      %v852 = vunpack.c.l.b16 %v381
      %v853 = vpack.c.b16 %v636, %v629
      %v854 = vpack.c.b16 %v637, %v630
      %v855 = vpack.c.b16 %v638, %v631
      %v856 = vpack.c.b16 %v639, %v632
      %v857 = vpack.c.b16 %v640, %v633
      %v858 = vpack.c.b16 %v641, %v634
      %v859 = vpack.c.b16 %v642, %v635
      %v860 = vpack.c.b16 %v650, %v643
      %v861 = vpack.c.b16 %v651, %v644
      %v862 = vpack.c.b16 %v652, %v645
      %v863 = vpack.c.b16 %v653, %v646
      %v864 = vpack.c.b16 %v654, %v647
      %v865 = vpack.c.b16 %v655, %v648
      %v866 = vpack.c.b16 %v656, %v649
      %v867 = vpack.c.b16 %v664, %v657
      %v868 = vpack.c.b16 %v665, %v658
      %v869 = vpack.c.b16 %v666, %v659
      %v870 = vpack.c.b16 %v667, %v660
      %v871 = vpack.c.b16 %v668, %v661
      %v872 = vpack.c.b16 %v669, %v662
      %v873 = vpack.c.b16 %v670, %v663
      %v874 = vpack.c.b16 %v678, %v671
      %v875 = vpack.c.b16 %v679, %v672
      %v876 = vpack.c.b16 %v680, %v673
      %v877 = vpack.c.b16 %v681, %v674
      %v878 = vpack.c.b16 %v682, %v675
      %v879 = vpack.c.b16 %v683, %v676
      %v880 = vpack.c.b16 %v684, %v677
      %v881 = vpack.c.b16 %v692, %v685
      %v882 = vpack.c.b16 %v693, %v686
      %v883 = vpack.c.b16 %v694, %v687
      %v884 = vpack.c.b16 %v695, %v688
      %v885 = vpack.c.b16 %v696, %v689
      %v886 = vpack.c.b16 %v697, %v690
      %v887 = vpack.c.b16 %v698, %v691
      %v888 = vpack.c.b16 %v706, %v699
      %v889 = vpack.c.b16 %v707, %v700
      %v890 = vpack.c.b16 %v708, %v701
      %v891 = vpack.c.b16 %v709, %v702
      %v892 = vpack.c.b16 %v710, %v703
      %v893 = vpack.c.b16 %v711, %v704
      %v894 = vpack.c.b16 %v712, %v705
      %v895 = vpack.c.b16 %v720, %v713
      %v896 = vpack.c.b16 %v721, %v714
      %v897 = vpack.c.b16 %v722, %v715
      %v898 = vpack.c.b16 %v723, %v716
      %v899 = vpack.c.b16 %v724, %v717
      %v900 = vpack.c.b16 %v725, %v718
      %v901 = vpack.c.b16 %v726, %v719
      %v902 = vpack.c.b16 %v734, %v727
      %v903 = vpack.c.b16 %v735, %v728
      %v904 = vpack.c.b16 %v736, %v729
      %v905 = vpack.c.b16 %v737, %v730
      %v906 = vpack.c.b16 %v738, %v731
      %v907 = vpack.c.b16 %v739, %v732
      %v908 = vpack.c.b16 %v740, %v733
      %v909 = vpack.c.b16 %v748, %v741
      %v910 = vpack.c.b16 %v749, %v742
      %v911 = vpack.c.b16 %v750, %v743
      %v912 = vpack.c.b16 %v751, %v744
      %v913 = vpack.c.b16 %v752, %v745
      %v914 = vpack.c.b16 %v753, %v746
      %v915 = vpack.c.b16 %v754, %v747
      %v916 = vpack.c.b16 %v762, %v755
      %v917 = vpack.c.b16 %v763, %v756
      %v918 = vpack.c.b16 %v764, %v757
      %v919 = vpack.c.b16 %v765, %v758
      %v920 = vpack.c.b16 %v766, %v759
      %v921 = vpack.c.b16 %v767, %v760
      %v922 = vpack.c.b16 %v768, %v761
      %v923 = vpack.c.b16 %v776, %v769
      %v924 = vpack.c.b16 %v777, %v770
      %v925 = vpack.c.b16 %v778, %v771
      %v926 = vpack.c.b16 %v779, %v772
      %v927 = vpack.c.b16 %v780, %v773
      %v928 = vpack.c.b16 %v781, %v774
      %v929 = vpack.c.b16 %v782, %v775
      %v930 = vpack.c.b16 %v790, %v783
      %v931 = vpack.c.b16 %v791, %v784
      %v932 = vpack.c.b16 %v792, %v785
      %v933 = vpack.c.b16 %v793, %v786
      %v934 = vpack.c.b16 %v794, %v787
      %v935 = vpack.c.b16 %v795, %v788
      %v936 = vpack.c.b16 %v796, %v789
      %v937 = vpack.c.b16 %v804, %v797
      %v938 = vpack.c.b16 %v805, %v798
      %v939 = vpack.c.b16 %v806, %v799
      %v940 = vpack.c.b16 %v807, %v800
      %v941 = vpack.c.b16 %v808, %v801
      %v942 = vpack.c.b16 %v809, %v802
      %v943 = vpack.c.b16 %v810, %v803
      %v944 = vpack.c.b16 %v818, %v811
      %v945 = vpack.c.b16 %v819, %v812
      %v946 = vpack.c.b16 %v820, %v813
      %v947 = vpack.c.b16 %v821, %v814
      %v948 = vpack.c.b16 %v822, %v815
      %v949 = vpack.c.b16 %v823, %v816
      %v950 = vpack.c.b16 %v824, %v817
      %v951 = vpack.c.b16 %v832, %v825
      %v952 = vpack.c.b16 %v833, %v826
      %v953 = vpack.c.b16 %v834, %v827
      %v954 = vpack.c.b16 %v835, %v828
      %v955 = vpack.c.b16 %v836, %v829
      %v956 = vpack.c.b16 %v837, %v830
      %v957 = vpack.c.b16 %v838, %v831
      %v958 = vpack.c.b16 %v846, %v839
      %v959 = vpack.c.b16 %v847, %v840
      %v960 = vpack.c.b16 %v848, %v841
      %v961 = vpack.c.b16 %v849, %v842
      %v962 = vpack.c.b16 %v850, %v843
      %v963 = vpack.c.b16 %v851, %v844
      %v964 = vpack.c.b16 %v852, %v845
      %v1189 = vunpack.c.l.b16 %v382
      %v1190 = vunpack.c.l.b16 %v383
      %v1191 = vunpack.c.l.b16 %v384
      %v1192 = vunpack.c.l.b16 %v385
      %v1193 = vunpack.c.l.b16 %v386
      %v1194 = vunpack.c.l.b16 %v387
      %v1195 = vunpack.c.l.b16 %v388
      %v1196 = vunpack.c.l.b16 %v389
      %v1197 = vunpack.c.l.b16 %v390
      %v1198 = vunpack.c.l.b16 %v391
      %v1199 = vunpack.c.l.b16 %v392
      %v1200 = vunpack.c.l.b16 %v393
      %v1201 = vunpack.c.l.b16 %v394
      %v1202 = vunpack.c.l.b16 %v395
      %v1203 = vunpack.c.l.b16 %v396
      %v1204 = vunpack.c.l.b16 %v397
      %v1205 = vunpack.c.l.b16 %v398
      %v1206 = vunpack.c.l.b16 %v399
      %v1207 = vunpack.c.l.b16 %v400
      %v1208 = vunpack.c.l.b16 %v401
      %v1209 = vunpack.c.l.b16 %v402
      %v1210 = vunpack.c.l.b16 %v403
      %v1211 = vunpack.c.l.b16 %v404
      %v1212 = vunpack.c.l.b16 %v405
      %v1213 = vunpack.c.l.b16 %v406
      %v1214 = vunpack.c.l.b16 %v407
      %v1215 = vunpack.c.l.b16 %v408
      %v1216 = vunpack.c.l.b16 %v409
      %v1217 = vunpack.c.l.b16 %v410
      %v1218 = vunpack.c.l.b16 %v411
      %v1219 = vunpack.c.l.b16 %v412
      %v1220 = vunpack.c.l.b16 %v413
      %v1221 = vunpack.c.l.b16 %v414
      %v1222 = vunpack.c.l.b16 %v415
      %v1223 = vunpack.c.l.b16 %v416
      %v1224 = vunpack.c.l.b16 %v417
      %v1225 = vunpack.c.l.b16 %v418
      %v1226 = vunpack.c.l.b16 %v419
      %v1227 = vunpack.c.l.b16 %v420
      %v1228 = vunpack.c.l.b16 %v421
      %v1229 = vunpack.c.l.b16 %v422
      %v1230 = vunpack.c.l.b16 %v423
      %v1231 = vunpack.c.l.b16 %v424
      %v1232 = vunpack.c.l.b16 %v425
      %v1233 = vunpack.c.l.b16 %v426
      %v1234 = vunpack.c.l.b16 %v427
      %v1235 = vunpack.c.l.b16 %v428
      %v1236 = vunpack.c.l.b16 %v429
      %v1237 = vunpack.c.l.b16 %v430
      %v1238 = vunpack.c.l.b16 %v431
      %v1239 = vunpack.c.l.b16 %v432
      %v1240 = vunpack.c.l.b16 %v433
      %v1241 = vunpack.c.l.b16 %v434
      %v1242 = vunpack.c.l.b16 %v435
      %v1243 = vunpack.c.l.b16 %v436
      %v1244 = vunpack.c.l.b16 %v437
      %v1245 = vunpack.c.l.b16 %v438
      %v1246 = vunpack.c.l.b16 %v439
      %v1247 = vunpack.c.l.b16 %v440
      %v1248 = vunpack.c.l.b16 %v441
      %v1249 = vunpack.c.l.b16 %v442
      %v1250 = vunpack.c.l.b16 %v443
      %v1251 = vunpack.c.l.b16 %v444
      %v1252 = vunpack.c.l.b16 %v445
      %v1253 = vunpack.c.l.b16 %v446
      %v1254 = vunpack.c.l.b16 %v447
      %v1255 = vunpack.c.l.b16 %v448
      %v1256 = vunpack.c.l.b16 %v449
      %v1257 = vunpack.c.l.b16 %v450
      %v1258 = vunpack.c.l.b16 %v451
      %v1259 = vunpack.c.l.b16 %v452
      %v1260 = vunpack.c.l.b16 %v453
      %v1261 = vunpack.c.l.b16 %v454
      %v1262 = vunpack.c.l.b16 %v455
      %v1263 = vunpack.c.l.b16 %v456
      %v1264 = vunpack.c.l.b16 %v457
      %v1265 = vunpack.c.l.b16 %v458
      %v1266 = vunpack.c.l.b16 %v459
      %v1267 = vunpack.c.l.b16 %v460
      %v1268 = vunpack.c.l.b16 %v461
      %v1269 = vunpack.c.l.b16 %v462
      %v1270 = vunpack.c.l.b16 %v463
      %v1271 = vunpack.c.l.b16 %v464
      %v1272 = vunpack.c.l.b16 %v465
      %v1273 = vunpack.c.l.b16 %v466
      %v1274 = vunpack.c.l.b16 %v467
      %v1275 = vunpack.c.l.b16 %v468
      %v1276 = vunpack.c.l.b16 %v469
      %v1277 = vunpack.c.l.b16 %v470
      %v1278 = vunpack.c.l.b16 %v471
      %v1279 = vunpack.c.l.b16 %v472
      %v1280 = vunpack.c.l.b16 %v473
      %v1281 = vunpack.c.l.b16 %v474
      %v1282 = vunpack.c.l.b16 %v475
      %v1283 = vunpack.c.l.b16 %v476
      %v1284 = vunpack.c.l.b16 %v477
      %v1285 = vunpack.c.l.b16 %v478
      %v1286 = vunpack.c.l.b16 %v479
      %v1287 = vunpack.c.l.b16 %v480
      %v1288 = vunpack.c.l.b16 %v481
      %v1289 = vunpack.c.l.b16 %v482
      %v1290 = vunpack.c.l.b16 %v483
      %v1291 = vunpack.c.l.b16 %v484
      %v1292 = vunpack.c.l.b16 %v485
      %v1293 = vunpack.c.l.b16 %v486
      %v1294 = vunpack.c.l.b16 %v487
      %v1295 = vunpack.c.l.b16 %v488
      %v1296 = vunpack.c.l.b16 %v489
      %v1297 = vunpack.c.l.b16 %v490
      %v1298 = vunpack.c.l.b16 %v491
      %v1299 = vunpack.c.l.b16 %v492
      %v1300 = vunpack.c.l.b16 %v493
      %v1301 = vpack.c.b16 %v1190, %v1189
      %v1302 = vpack.c.b16 %v1192, %v1191
      %v1303 = vpack.c.b16 %v1194, %v1193
      %v1304 = vpack.c.b16 %v1196, %v1195
      %v1305 = vpack.c.b16 %v1198, %v1197
      %v1306 = vpack.c.b16 %v1200, %v1199
      %v1307 = vpack.c.b16 %v1202, %v1201
      %v1308 = vpack.c.b16 %v1204, %v1203
      %v1309 = vpack.c.b16 %v1206, %v1205
      %v1310 = vpack.c.b16 %v1208, %v1207
      %v1311 = vpack.c.b16 %v1210, %v1209
      %v1312 = vpack.c.b16 %v1212, %v1211
      %v1313 = vpack.c.b16 %v1214, %v1213
      %v1314 = vpack.c.b16 %v1216, %v1215
      %v1315 = vpack.c.b16 %v1218, %v1217
      %v1316 = vpack.c.b16 %v1220, %v1219
      %v1317 = vpack.c.b16 %v1222, %v1221
      %v1318 = vpack.c.b16 %v1224, %v1223
      %v1319 = vpack.c.b16 %v1226, %v1225
      %v1320 = vpack.c.b16 %v1228, %v1227
      %v1321 = vpack.c.b16 %v1230, %v1229
      %v1322 = vpack.c.b16 %v1232, %v1231
      %v1323 = vpack.c.b16 %v1234, %v1233
      %v1324 = vpack.c.b16 %v1236, %v1235
      %v1325 = vpack.c.b16 %v1238, %v1237
      %v1326 = vpack.c.b16 %v1240, %v1239
      %v1327 = vpack.c.b16 %v1242, %v1241
      %v1328 = vpack.c.b16 %v1244, %v1243
      %v1329 = vpack.c.b16 %v1246, %v1245
      %v1330 = vpack.c.b16 %v1248, %v1247
      %v1331 = vpack.c.b16 %v1250, %v1249
      %v1332 = vpack.c.b16 %v1252, %v1251
      %v1333 = vpack.c.b16 %v1254, %v1253
      %v1334 = vpack.c.b16 %v1256, %v1255
      %v1335 = vpack.c.b16 %v1258, %v1257
      %v1336 = vpack.c.b16 %v1260, %v1259
      %v1337 = vpack.c.b16 %v1262, %v1261
      %v1338 = vpack.c.b16 %v1264, %v1263
      %v1339 = vpack.c.b16 %v1266, %v1265
      %v1340 = vpack.c.b16 %v1268, %v1267
      %v1341 = vpack.c.b16 %v1270, %v1269
      %v1342 = vpack.c.b16 %v1272, %v1271
      %v1343 = vpack.c.b16 %v1274, %v1273
      %v1344 = vpack.c.b16 %v1276, %v1275
      %v1345 = vpack.c.b16 %v1278, %v1277
      %v1346 = vpack.c.b16 %v1280, %v1279
      %v1347 = vpack.c.b16 %v1282, %v1281
      %v1348 = vpack.c.b16 %v1284, %v1283
      %v1349 = vpack.c.b16 %v1286, %v1285
      %v1350 = vpack.c.b16 %v1288, %v1287
      %v1351 = vpack.c.b16 %v1290, %v1289
      %v1352 = vpack.c.b16 %v1292, %v1291
      %v1353 = vpack.c.b16 %v1294, %v1293
      %v1354 = vpack.c.b16 %v1296, %v1295
      %v1355 = vpack.c.b16 %v1298, %v1297
      %v1356 = vpack.c.b16 %v1300, %v1299
      %1413 = vmatprep.subr.bf16.mxu0 0
      %1414 = vmatpush1.bf16.msra.mxu0 %v1301
      %1415 = vmatprep.subr.bf16.mxu0 0
      %1416 = vmatpush1.bf16.msra.mxu0 %v1302
      %1417 = vmatprep.subr.bf16.mxu0 0
      %1418 = vmatpush1.bf16.msra.mxu0 %v1303
      %1419 = vmatprep.subr.bf16.mxu0 0
      %1420 = vmatpush1.bf16.msra.mxu0 %v1304
      %1421 = vmatprep.subr.bf16.mxu0 0
      %1422 = vmatpush1.bf16.msra.mxu0 %v1305
      %1423 = vmatprep.subr.bf16.mxu0 0
      %1424 = vmatpush1.bf16.msra.mxu0 %v1306
      %1425 = vmatprep.subr.bf16.mxu0 0
      %1426 = vmatpush1.bf16.msra.mxu0 %v1307
      %1427 = vmatprep.subr.bf16.mxu0 0
      %1428 = vmatpush1.bf16.msra.mxu0 %v1308
      %1429 = vmatprep.subr.bf16.mxu0 0
      %1430 = vmatpush1.bf16.msra.mxu0 %v1309
      %1431 = vmatprep.subr.bf16.mxu0 0
      %1432 = vmatpush1.bf16.msra.mxu0 %v1310
      %1433 = vmatprep.subr.bf16.mxu0 0
      %1434 = vmatpush1.bf16.msra.mxu0 %v1311
      %1435 = vmatprep.subr.bf16.mxu0 0
      %1436 = vmatpush1.bf16.msra.mxu0 %v1312
      %1437 = vmatprep.subr.bf16.mxu0 0
      %1438 = vmatpush1.bf16.msra.mxu0 %v1313
      %1439 = vmatprep.subr.bf16.mxu0 0
      %1440 = vmatpush1.bf16.msra.mxu0 %v1314
      %1441 = vmatprep.subr.bf16.mxu0 0
      %1442 = vmatpush1.bf16.msra.mxu0 %v1315
      %1443 = vmatprep.subr.bf16.mxu0 0
      %1444 = vmatpush1.bf16.msra.mxu0 %v1316
      %1445 = vmatprep.mubr.bf16.mxu0 %v854
      %1446 = vmatmul.mubr.bf16.gmra.mrb[0].mxu0 %v853
      %v1447 = vpop.f32.mrb[0].mxu0
      %v1448 = vadd.f32 %v499, %v1447
      %v1449 = vpop.f32.mrb[0].mxu0
      %v1450 = vpop.f32.mrb[0].mxu0
      %v1451 = vadd.f32 %v499, %v1450
      %v1452 = vpop.f32.mrb[0].mxu0
      %1453 = vmatprep.mubr.bf16.mxu0 %v861
      %1454 = vmatmul.mubr.bf16.gmra.mrb[0].mxu0 %v860
      %v1455 = vpop.f32.mrb[0].mxu0
      %v1456 = vadd.f32 %v499, %v1455
      %v1457 = vpop.f32.mrb[0].mxu0
      %v1458 = vpop.f32.mrb[0].mxu0
      %v1459 = vadd.f32 %v499, %v1458
      %v1460 = vpop.f32.mrb[0].mxu0
      %1461 = vmatprep.mubr.bf16.mxu0 %v868
      %1462 = vmatmul.mubr.bf16.gmra.mrb[0].mxu0 %v867
      %v1463 = vpop.f32.mrb[0].mxu0
      %v1464 = vadd.f32 %v499, %v1463
      %v1465 = vpop.f32.mrb[0].mxu0
      %v1466 = vpop.f32.mrb[0].mxu0
      %v1467 = vadd.f32 %v499, %v1466
      %v1468 = vpop.f32.mrb[0].mxu0
      %1469 = vmatprep.mubr.bf16.mxu0 %v875
      %1470 = vmatmul.mubr.bf16.gmra.mrb[0].mxu0 %v874
      %v1471 = vpop.f32.mrb[0].mxu0
      %v1472 = vadd.f32 %v499, %v1471
      %v1473 = vpop.f32.mrb[0].mxu0
      %v1474 = vpop.f32.mrb[0].mxu0
      %v1475 = vadd.f32 %v499, %v1474
      %v1476 = vpop.f32.mrb[0].mxu0
      %1477 = vmatprep.mubr.bf16.mxu0 %v882
      %1478 = vmatmul.mubr.bf16.gmra.mrb[0].mxu0 %v881
      %v1479 = vpop.f32.mrb[0].mxu0
      %v1480 = vadd.f32 %v499, %v1479
      %v1481 = vpop.f32.mrb[0].mxu0
      %v1482 = vpop.f32.mrb[0].mxu0
      %v1483 = vadd.f32 %v499, %v1482
      %v1484 = vpop.f32.mrb[0].mxu0
      %1485 = vmatprep.mubr.bf16.mxu0 %v889
      %1486 = vmatmul.mubr.bf16.gmra.mrb[0].mxu0 %v888
      %v1487 = vpop.f32.mrb[0].mxu0
      %v1488 = vadd.f32 %v499, %v1487
      %v1489 = vpop.f32.mrb[0].mxu0
      %v1490 = vpop.f32.mrb[0].mxu0
      %v1491 = vadd.f32 %v499, %v1490
      %v1492 = vpop.f32.mrb[0].mxu0
      %1493 = vmatprep.mubr.bf16.mxu0 %v896
      %1494 = vmatmul.mubr.bf16.gmra.mrb[0].mxu0 %v895
      %v1495 = vpop.f32.mrb[0].mxu0
      %v1496 = vadd.f32 %v499, %v1495
      %v1497 = vpop.f32.mrb[0].mxu0
      %v1498 = vpop.f32.mrb[0].mxu0
      %v1499 = vadd.f32 %v499, %v1498
      %v1500 = vpop.f32.mrb[0].mxu0
      %1501 = vmatprep.mubr.bf16.mxu0 %v903
      %1502 = vmatmul.mubr.bf16.gmra.mrb[0].mxu0 %v902
      %v1503 = vpop.f32.mrb[0].mxu0
      %v1504 = vadd.f32 %v499, %v1503
      %v1505 = vpop.f32.mrb[0].mxu0
      %v1506 = vpop.f32.mrb[0].mxu0
      %v1507 = vadd.f32 %v499, %v1506
      %v1508 = vpop.f32.mrb[0].mxu0
      %1509 = vmatprep.mubr.bf16.mxu0 %v910
      %1510 = vmatmul.mubr.bf16.gmra.mrb[0].mxu0 %v909
      %v1511 = vpop.f32.mrb[0].mxu0
      %v1512 = vadd.f32 %v499, %v1511
      %v1513 = vpop.f32.mrb[0].mxu0
      %v1514 = vpop.f32.mrb[0].mxu0
      %v1515 = vadd.f32 %v499, %v1514
      %v1516 = vpop.f32.mrb[0].mxu0
      %1517 = vmatprep.mubr.bf16.mxu0 %v917
      %1518 = vmatmul.mubr.bf16.gmra.mrb[0].mxu0 %v916
      %v1519 = vpop.f32.mrb[0].mxu0
      %v1520 = vadd.f32 %v499, %v1519
      %v1521 = vpop.f32.mrb[0].mxu0
      %v1522 = vpop.f32.mrb[0].mxu0
      %v1523 = vadd.f32 %v499, %v1522
      %v1524 = vpop.f32.mrb[0].mxu0
      %1525 = vmatprep.mubr.bf16.mxu0 %v924
      %1526 = vmatmul.mubr.bf16.gmra.mrb[0].mxu0 %v923
      %v1527 = vpop.f32.mrb[0].mxu0
      %v1528 = vadd.f32 %v499, %v1527
      %v1529 = vpop.f32.mrb[0].mxu0
      %v1530 = vpop.f32.mrb[0].mxu0
      %v1531 = vadd.f32 %v499, %v1530
      %v1532 = vpop.f32.mrb[0].mxu0
      %1533 = vmatprep.mubr.bf16.mxu0 %v931
      %1534 = vmatmul.mubr.bf16.gmra.mrb[0].mxu0 %v930
      %v1535 = vpop.f32.mrb[0].mxu0
      %v1536 = vadd.f32 %v499, %v1535
      %v1537 = vpop.f32.mrb[0].mxu0
      %v1538 = vpop.f32.mrb[0].mxu0
      %v1539 = vadd.f32 %v499, %v1538
      %v1540 = vpop.f32.mrb[0].mxu0
      %1541 = vmatprep.mubr.bf16.mxu0 %v938
      %1542 = vmatmul.mubr.bf16.gmra.mrb[0].mxu0 %v937
      %v1543 = vpop.f32.mrb[0].mxu0
      %v1544 = vadd.f32 %v499, %v1543
      %v1545 = vpop.f32.mrb[0].mxu0
      %v1546 = vpop.f32.mrb[0].mxu0
      %v1547 = vadd.f32 %v499, %v1546
      %v1548 = vpop.f32.mrb[0].mxu0
      %1549 = vmatprep.mubr.bf16.mxu0 %v945
      %1550 = vmatmul.mubr.bf16.gmra.mrb[0].mxu0 %v944
      %v1551 = vpop.f32.mrb[0].mxu0
      %v1552 = vadd.f32 %v499, %v1551
      %v1553 = vpop.f32.mrb[0].mxu0
      %v1554 = vpop.f32.mrb[0].mxu0
      %v1555 = vadd.f32 %v499, %v1554
      %v1556 = vpop.f32.mrb[0].mxu0
      %1557 = vmatprep.mubr.bf16.mxu0 %v952
      %1558 = vmatmul.mubr.bf16.gmra.mrb[0].mxu0 %v951
      %v1559 = vpop.f32.mrb[0].mxu0
      %v1560 = vadd.f32 %v499, %v1559
      %v1561 = vpop.f32.mrb[0].mxu0
      %v1562 = vpop.f32.mrb[0].mxu0
      %v1563 = vadd.f32 %v499, %v1562
      %v1564 = vpop.f32.mrb[0].mxu0
      %1565 = vmatprep.mubr.bf16.mxu0 %v959
      %1566 = vmatmul.mubr.bf16.gmra.mrb[0].mxu0 %v958
      %v1567 = vpop.f32.mrb[0].mxu0
      %v1568 = vadd.f32 %v499, %v1567
      %v1569 = vpop.f32.mrb[0].mxu0
      %v1570 = vpop.f32.mrb[0].mxu0
      %v1571 = vadd.f32 %v499, %v1570
      %v1572 = vpop.f32.mrb[0].mxu0
      %1573 = vdwg.mxu0
      %1574 = vmatprep.subr.bf16.mxu0 0
      %1575 = vmatpush1.bf16.msra.mxu0 %v1317
      %1576 = vmatprep.subr.bf16.mxu0 0
      %1577 = vmatpush1.bf16.msra.mxu0 %v1318
      %1578 = vmatprep.subr.bf16.mxu0 0
      %1579 = vmatpush1.bf16.msra.mxu0 %v1319
      %1580 = vmatprep.subr.bf16.mxu0 0
      %1581 = vmatpush1.bf16.msra.mxu0 %v1320
      %1582 = vmatprep.subr.bf16.mxu0 0
      %1583 = vmatpush1.bf16.msra.mxu0 %v1321
      %1584 = vmatprep.subr.bf16.mxu0 0
      %1585 = vmatpush1.bf16.msra.mxu0 %v1322
      %1586 = vmatprep.subr.bf16.mxu0 0
      %1587 = vmatpush1.bf16.msra.mxu0 %v1323
      %1588 = vmatprep.subr.bf16.mxu0 0
      %1589 = vmatpush1.bf16.msra.mxu0 %v1324
      %1590 = vmatprep.subr.bf16.mxu0 0
      %1591 = vmatpush1.bf16.msra.mxu0 %v1325
      %1592 = vmatprep.subr.bf16.mxu0 0
      %1593 = vmatpush1.bf16.msra.mxu0 %v1326
      %1594 = vmatprep.subr.bf16.mxu0 0
      %1595 = vmatpush1.bf16.msra.mxu0 %v1327
      %1596 = vmatprep.subr.bf16.mxu0 0
      %1597 = vmatpush1.bf16.msra.mxu0 %v1328
      %1598 = vmatprep.subr.bf16.mxu0 0
      %1599 = vmatpush1.bf16.msra.mxu0 %v1329
      %1600 = vmatprep.subr.bf16.mxu0 0
      %1601 = vmatpush1.bf16.msra.mxu0 %v1330
      %1602 = vmatprep.subr.bf16.mxu0 0
      %1603 = vmatpush1.bf16.msra.mxu0 %v1331
      %1604 = vmatprep.subr.bf16.mxu0 0
      %1605 = vmatpush1.bf16.msra.mxu0 %v1332
      %1606 = vmatprep.mubr.bf16.mxu0 %v856
      %1607 = vmatmul.mubr.bf16.gmra.mrb[0].mxu0 %v855
      %v1608 = vpop.f32.mrb[0].mxu0
      %v1609 = vadd.f32 %v1448, %v1608
      %v1610 = vpop.f32.mrb[0].mxu0
      %v1611 = vpop.f32.mrb[0].mxu0
      %v1612 = vadd.f32 %v1451, %v1611
      %v1613 = vpop.f32.mrb[0].mxu0
      %1614 = vmatprep.mubr.bf16.mxu0 %v863
      %1615 = vmatmul.mubr.bf16.gmra.mrb[0].mxu0 %v862
      %v1616 = vpop.f32.mrb[0].mxu0
      %v1617 = vadd.f32 %v1456, %v1616
      %v1618 = vpop.f32.mrb[0].mxu0
      %v1619 = vpop.f32.mrb[0].mxu0
      %v1620 = vadd.f32 %v1459, %v1619
      %v1621 = vpop.f32.mrb[0].mxu0
      %1622 = vmatprep.mubr.bf16.mxu0 %v870
      %1623 = vmatmul.mubr.bf16.gmra.mrb[0].mxu0 %v869
      %v1624 = vpop.f32.mrb[0].mxu0
      %v1625 = vadd.f32 %v1464, %v1624
      %v1626 = vpop.f32.mrb[0].mxu0
      %v1627 = vpop.f32.mrb[0].mxu0
      %v1628 = vadd.f32 %v1467, %v1627
      %v1629 = vpop.f32.mrb[0].mxu0
      %1630 = vmatprep.mubr.bf16.mxu0 %v877
      %1631 = vmatmul.mubr.bf16.gmra.mrb[0].mxu0 %v876
      %v1632 = vpop.f32.mrb[0].mxu0
      %v1633 = vadd.f32 %v1472, %v1632
      %v1634 = vpop.f32.mrb[0].mxu0
      %v1635 = vpop.f32.mrb[0].mxu0
      %v1636 = vadd.f32 %v1475, %v1635
      %v1637 = vpop.f32.mrb[0].mxu0
      %1638 = vmatprep.mubr.bf16.mxu0 %v884
      %1639 = vmatmul.mubr.bf16.gmra.mrb[0].mxu0 %v883
      %v1640 = vpop.f32.mrb[0].mxu0
      %v1641 = vadd.f32 %v1480, %v1640
      %v1642 = vpop.f32.mrb[0].mxu0
      %v1643 = vpop.f32.mrb[0].mxu0
      %v1644 = vadd.f32 %v1483, %v1643
      %v1645 = vpop.f32.mrb[0].mxu0
      %1646 = vmatprep.mubr.bf16.mxu0 %v891
      %1647 = vmatmul.mubr.bf16.gmra.mrb[0].mxu0 %v890
      %v1648 = vpop.f32.mrb[0].mxu0
      %v1649 = vadd.f32 %v1488, %v1648
      %v1650 = vpop.f32.mrb[0].mxu0
      %v1651 = vpop.f32.mrb[0].mxu0
      %v1652 = vadd.f32 %v1491, %v1651
      %v1653 = vpop.f32.mrb[0].mxu0
      %1654 = vmatprep.mubr.bf16.mxu0 %v898
      %1655 = vmatmul.mubr.bf16.gmra.mrb[0].mxu0 %v897
      %v1656 = vpop.f32.mrb[0].mxu0
      %v1657 = vadd.f32 %v1496, %v1656
      %v1658 = vpop.f32.mrb[0].mxu0
      %v1659 = vpop.f32.mrb[0].mxu0
      %v1660 = vadd.f32 %v1499, %v1659
      %v1661 = vpop.f32.mrb[0].mxu0
      %1662 = vmatprep.mubr.bf16.mxu0 %v905
      %1663 = vmatmul.mubr.bf16.gmra.mrb[0].mxu0 %v904
      %v1664 = vpop.f32.mrb[0].mxu0
      %v1665 = vadd.f32 %v1504, %v1664
      %v1666 = vpop.f32.mrb[0].mxu0
      %v1667 = vpop.f32.mrb[0].mxu0
      %v1668 = vadd.f32 %v1507, %v1667
      %v1669 = vpop.f32.mrb[0].mxu0
      %1670 = vmatprep.mubr.bf16.mxu0 %v912
      %1671 = vmatmul.mubr.bf16.gmra.mrb[0].mxu0 %v911
      %v1672 = vpop.f32.mrb[0].mxu0
      %v1673 = vadd.f32 %v1512, %v1672
      %v1674 = vpop.f32.mrb[0].mxu0
      %v1675 = vpop.f32.mrb[0].mxu0
      %v1676 = vadd.f32 %v1515, %v1675
      %v1677 = vpop.f32.mrb[0].mxu0
      %1678 = vmatprep.mubr.bf16.mxu0 %v919
      %1679 = vmatmul.mubr.bf16.gmra.mrb[0].mxu0 %v918
      %v1680 = vpop.f32.mrb[0].mxu0
      %v1681 = vadd.f32 %v1520, %v1680
      %v1682 = vpop.f32.mrb[0].mxu0
      %v1683 = vpop.f32.mrb[0].mxu0
      %v1684 = vadd.f32 %v1523, %v1683
      %v1685 = vpop.f32.mrb[0].mxu0
      %1686 = vmatprep.mubr.bf16.mxu0 %v926
      %1687 = vmatmul.mubr.bf16.gmra.mrb[0].mxu0 %v925
      %v1688 = vpop.f32.mrb[0].mxu0
      %v1689 = vadd.f32 %v1528, %v1688
      %v1690 = vpop.f32.mrb[0].mxu0
      %v1691 = vpop.f32.mrb[0].mxu0
      %v1692 = vadd.f32 %v1531, %v1691
      %v1693 = vpop.f32.mrb[0].mxu0
      %1694 = vmatprep.mubr.bf16.mxu0 %v933
      %1695 = vmatmul.mubr.bf16.gmra.mrb[0].mxu0 %v932
      %v1696 = vpop.f32.mrb[0].mxu0
      %v1697 = vadd.f32 %v1536, %v1696
      %v1698 = vpop.f32.mrb[0].mxu0
      %v1699 = vpop.f32.mrb[0].mxu0
      %v1700 = vadd.f32 %v1539, %v1699
      %v1701 = vpop.f32.mrb[0].mxu0
      %1702 = vmatprep.mubr.bf16.mxu0 %v940
      %1703 = vmatmul.mubr.bf16.gmra.mrb[0].mxu0 %v939
      %v1704 = vpop.f32.mrb[0].mxu0
      %v1705 = vadd.f32 %v1544, %v1704
      %v1706 = vpop.f32.mrb[0].mxu0
      %v1707 = vpop.f32.mrb[0].mxu0
      %v1708 = vadd.f32 %v1547, %v1707
      %v1709 = vpop.f32.mrb[0].mxu0
      %1710 = vmatprep.mubr.bf16.mxu0 %v947
      %1711 = vmatmul.mubr.bf16.gmra.mrb[0].mxu0 %v946
      %v1712 = vpop.f32.mrb[0].mxu0
      %v1713 = vadd.f32 %v1552, %v1712
      %v1714 = vpop.f32.mrb[0].mxu0
      %v1715 = vpop.f32.mrb[0].mxu0
      %v1716 = vadd.f32 %v1555, %v1715
      %v1717 = vpop.f32.mrb[0].mxu0
      %1718 = vmatprep.mubr.bf16.mxu0 %v954
      %1719 = vmatmul.mubr.bf16.gmra.mrb[0].mxu0 %v953
      %v1720 = vpop.f32.mrb[0].mxu0
      %v1721 = vadd.f32 %v1560, %v1720
      %v1722 = vpop.f32.mrb[0].mxu0
      %v1723 = vpop.f32.mrb[0].mxu0
      %v1724 = vadd.f32 %v1563, %v1723
      %v1725 = vpop.f32.mrb[0].mxu0
      %1726 = vmatprep.mubr.bf16.mxu0 %v961
      %1727 = vmatmul.mubr.bf16.gmra.mrb[0].mxu0 %v960
      %v1728 = vpop.f32.mrb[0].mxu0
      %v1729 = vadd.f32 %v1568, %v1728
      %v1730 = vpop.f32.mrb[0].mxu0
      %v1731 = vpop.f32.mrb[0].mxu0
      %v1732 = vadd.f32 %v1571, %v1731
      %v1733 = vpop.f32.mrb[0].mxu0
      %1734 = vdwg.mxu0
      %1735 = vmatprep.subr.bf16.mxu0 0
      %1736 = vmatpush1.bf16.msra.mxu0 %v1333
      %1737 = vmatprep.subr.bf16.mxu0 0
      %1738 = vmatpush1.bf16.msra.mxu0 %v1334
      %1739 = vmatprep.subr.bf16.mxu0 0
      %1740 = vmatpush1.bf16.msra.mxu0 %v1335
      %1741 = vmatprep.subr.bf16.mxu0 0
      %1742 = vmatpush1.bf16.msra.mxu0 %v1336
      %1743 = vmatprep.subr.bf16.mxu0 0
      %1744 = vmatpush1.bf16.msra.mxu0 %v1337
      %1745 = vmatprep.subr.bf16.mxu0 0
      %1746 = vmatpush1.bf16.msra.mxu0 %v1338
      %1747 = vmatprep.subr.bf16.mxu0 0
      %1748 = vmatpush1.bf16.msra.mxu0 %v1339
      %1749 = vmatprep.subr.bf16.mxu0 0
      %1750 = vmatpush1.bf16.msra.mxu0 %v1340
      %1751 = vmatprep.subr.bf16.mxu0 0
      %1752 = vmatpush1.bf16.msra.mxu0 %v1341
      %1753 = vmatprep.subr.bf16.mxu0 0
      %1754 = vmatpush1.bf16.msra.mxu0 %v1342
      %1755 = vmatprep.subr.bf16.mxu0 0
      %1756 = vmatpush1.bf16.msra.mxu0 %v1343
      %1757 = vmatprep.subr.bf16.mxu0 0
      %1758 = vmatpush1.bf16.msra.mxu0 %v1344
      %1759 = vmatprep.subr.bf16.mxu0 0
      %1760 = vmatpush1.bf16.msra.mxu0 %v1345
      %1761 = vmatprep.subr.bf16.mxu0 0
      %1762 = vmatpush1.bf16.msra.mxu0 %v1346
      %1763 = vmatprep.subr.bf16.mxu0 0
      %1764 = vmatpush1.bf16.msra.mxu0 %v1347
      %1765 = vmatprep.subr.bf16.mxu0 0
      %1766 = vmatpush1.bf16.msra.mxu0 %v1348
      %1767 = vmatprep.mubr.bf16.mxu0 %v858
      %1768 = vmatmul.mubr.bf16.gmra.mrb[0].mxu0 %v857
      %v1769 = vpop.f32.mrb[0].mxu0
      %v1770 = vadd.f32 %v1609, %v1769
      %v1771 = vpop.f32.mrb[0].mxu0
      %v1772 = vpop.f32.mrb[0].mxu0
      %v1773 = vadd.f32 %v1612, %v1772
      %v1774 = vpop.f32.mrb[0].mxu0
      %1775 = vmatprep.mubr.bf16.mxu0 %v865
      %1776 = vmatmul.mubr.bf16.gmra.mrb[0].mxu0 %v864
      %v1777 = vpop.f32.mrb[0].mxu0
      %v1778 = vadd.f32 %v1617, %v1777
      %v1779 = vpop.f32.mrb[0].mxu0
      %v1780 = vpop.f32.mrb[0].mxu0
      %v1781 = vadd.f32 %v1620, %v1780
      %v1782 = vpop.f32.mrb[0].mxu0
      %1783 = vmatprep.mubr.bf16.mxu0 %v872
      %1784 = vmatmul.mubr.bf16.gmra.mrb[0].mxu0 %v871
      %v1785 = vpop.f32.mrb[0].mxu0
      %v1786 = vadd.f32 %v1625, %v1785
      %v1787 = vpop.f32.mrb[0].mxu0
      %v1788 = vpop.f32.mrb[0].mxu0
      %v1789 = vadd.f32 %v1628, %v1788
      %v1790 = vpop.f32.mrb[0].mxu0
      %1791 = vmatprep.mubr.bf16.mxu0 %v879
      %1792 = vmatmul.mubr.bf16.gmra.mrb[0].mxu0 %v878
      %v1793 = vpop.f32.mrb[0].mxu0
      %v1794 = vadd.f32 %v1633, %v1793
      %v1795 = vpop.f32.mrb[0].mxu0
      %v1796 = vpop.f32.mrb[0].mxu0
      %v1797 = vadd.f32 %v1636, %v1796
      %v1798 = vpop.f32.mrb[0].mxu0
      %1799 = vmatprep.mubr.bf16.mxu0 %v886
      %1800 = vmatmul.mubr.bf16.gmra.mrb[0].mxu0 %v885
      %v1801 = vpop.f32.mrb[0].mxu0
      %v1802 = vadd.f32 %v1641, %v1801
      %v1803 = vpop.f32.mrb[0].mxu0
      %v1804 = vpop.f32.mrb[0].mxu0
      %v1805 = vadd.f32 %v1644, %v1804
      %v1806 = vpop.f32.mrb[0].mxu0
      %1807 = vmatprep.mubr.bf16.mxu0 %v893
      %1808 = vmatmul.mubr.bf16.gmra.mrb[0].mxu0 %v892
      %v1809 = vpop.f32.mrb[0].mxu0
      %v1810 = vadd.f32 %v1649, %v1809
      %v1811 = vpop.f32.mrb[0].mxu0
      %v1812 = vpop.f32.mrb[0].mxu0
      %v1813 = vadd.f32 %v1652, %v1812
      %v1814 = vpop.f32.mrb[0].mxu0
      %1815 = vmatprep.mubr.bf16.mxu0 %v900
      %1816 = vmatmul.mubr.bf16.gmra.mrb[0].mxu0 %v899
      %v1817 = vpop.f32.mrb[0].mxu0
      %v1818 = vadd.f32 %v1657, %v1817
      %v1819 = vpop.f32.mrb[0].mxu0
      %v1820 = vpop.f32.mrb[0].mxu0
      %v1821 = vadd.f32 %v1660, %v1820
      %v1822 = vpop.f32.mrb[0].mxu0
      %1823 = vmatprep.mubr.bf16.mxu0 %v907
      %1824 = vmatmul.mubr.bf16.gmra.mrb[0].mxu0 %v906
      %v1825 = vpop.f32.mrb[0].mxu0
      %v1826 = vadd.f32 %v1665, %v1825
      %v1827 = vpop.f32.mrb[0].mxu0
      %v1828 = vpop.f32.mrb[0].mxu0
      %v1829 = vadd.f32 %v1668, %v1828
      %v1830 = vpop.f32.mrb[0].mxu0
      %1831 = vmatprep.mubr.bf16.mxu0 %v914
      %1832 = vmatmul.mubr.bf16.gmra.mrb[0].mxu0 %v913
      %v1833 = vpop.f32.mrb[0].mxu0
      %v1834 = vadd.f32 %v1673, %v1833
      %v1835 = vpop.f32.mrb[0].mxu0
      %v1836 = vpop.f32.mrb[0].mxu0
      %v1837 = vadd.f32 %v1676, %v1836
      %v1838 = vpop.f32.mrb[0].mxu0
      %1839 = vmatprep.mubr.bf16.mxu0 %v921
      %1840 = vmatmul.mubr.bf16.gmra.mrb[0].mxu0 %v920
      %v1841 = vpop.f32.mrb[0].mxu0
      %v1842 = vadd.f32 %v1681, %v1841
      %v1843 = vpop.f32.mrb[0].mxu0
      %v1844 = vpop.f32.mrb[0].mxu0
      %v1845 = vadd.f32 %v1684, %v1844
      %v1846 = vpop.f32.mrb[0].mxu0
      %1847 = vmatprep.mubr.bf16.mxu0 %v928
      %1848 = vmatmul.mubr.bf16.gmra.mrb[0].mxu0 %v927
      %v1849 = vpop.f32.mrb[0].mxu0
      %v1850 = vadd.f32 %v1689, %v1849
      %v1851 = vpop.f32.mrb[0].mxu0
      %v1852 = vpop.f32.mrb[0].mxu0
      %v1853 = vadd.f32 %v1692, %v1852
      %v1854 = vpop.f32.mrb[0].mxu0
      %1855 = vmatprep.mubr.bf16.mxu0 %v935
      %1856 = vmatmul.mubr.bf16.gmra.mrb[0].mxu0 %v934
      %v1857 = vpop.f32.mrb[0].mxu0
      %v1858 = vadd.f32 %v1697, %v1857
      %v1859 = vpop.f32.mrb[0].mxu0
      %v1860 = vpop.f32.mrb[0].mxu0
      %v1861 = vadd.f32 %v1700, %v1860
      %v1862 = vpop.f32.mrb[0].mxu0
      %1863 = vmatprep.mubr.bf16.mxu0 %v942
      %1864 = vmatmul.mubr.bf16.gmra.mrb[0].mxu0 %v941
      %v1865 = vpop.f32.mrb[0].mxu0
      %v1866 = vadd.f32 %v1705, %v1865
      %v1867 = vpop.f32.mrb[0].mxu0
      %v1868 = vpop.f32.mrb[0].mxu0
      %v1869 = vadd.f32 %v1708, %v1868
      %v1870 = vpop.f32.mrb[0].mxu0
      %1871 = vmatprep.mubr.bf16.mxu0 %v949
      %1872 = vmatmul.mubr.bf16.gmra.mrb[0].mxu0 %v948
      %v1873 = vpop.f32.mrb[0].mxu0
      %v1874 = vadd.f32 %v1713, %v1873
      %v1875 = vpop.f32.mrb[0].mxu0
      %v1876 = vpop.f32.mrb[0].mxu0
      %v1877 = vadd.f32 %v1716, %v1876
      %v1878 = vpop.f32.mrb[0].mxu0
      %1879 = vmatprep.mubr.bf16.mxu0 %v956
      %1880 = vmatmul.mubr.bf16.gmra.mrb[0].mxu0 %v955
      %v1881 = vpop.f32.mrb[0].mxu0
      %v1882 = vadd.f32 %v1721, %v1881
      %v1883 = vpop.f32.mrb[0].mxu0
      %v1884 = vpop.f32.mrb[0].mxu0
      %v1885 = vadd.f32 %v1724, %v1884
      %v1886 = vpop.f32.mrb[0].mxu0
      %1887 = vmatprep.mubr.bf16.mxu0 %v963
      %1888 = vmatmul.mubr.bf16.gmra.mrb[0].mxu0 %v962
      %v1889 = vpop.f32.mrb[0].mxu0
      %v1890 = vadd.f32 %v1729, %v1889
      %v1891 = vpop.f32.mrb[0].mxu0
      %v1892 = vpop.f32.mrb[0].mxu0
      %v1893 = vadd.f32 %v1732, %v1892
      %v1894 = vpop.f32.mrb[0].mxu0
      %1895 = vdwg.mxu0
      %1896 = vmatprep.subr.bf16.mxu0 0
      %1897 = vmatpush1.bf16.msra.mxu0 %v1349
      %1898 = vmatprep.subr.bf16.mxu0 0
      %1899 = vmatpush1.bf16.msra.mxu0 %v1350
      %1900 = vmatprep.subr.bf16.mxu0 0
      %1901 = vmatpush1.bf16.msra.mxu0 %v1351
      %1902 = vmatprep.subr.bf16.mxu0 0
      %1903 = vmatpush1.bf16.msra.mxu0 %v1352
      %1904 = vmatprep.subr.bf16.mxu0 0
      %1905 = vmatpush1.bf16.msra.mxu0 %v1353
      %1906 = vmatprep.subr.bf16.mxu0 0
      %1907 = vmatpush1.bf16.msra.mxu0 %v1354
      %1908 = vmatprep.subr.bf16.mxu0 0
      %1909 = vmatpush1.bf16.msra.mxu0 %v1355
      %1910 = vmatprep.subr.bf16.mxu0 0
      %1911 = vmatpush1.bf16.msra.mxu0 %v1356
      %1912 = vmatprep.subr.bf16.mxu0 0
      %1913 = vmatpush1.bf16.msra.mxu0 0
      %1914 = vmatprep.subr.bf16.mxu0 0
      %1915 = vmatpush1.bf16.msra.mxu0 0
      %1916 = vmatprep.subr.bf16.mxu0 0
      %1917 = vmatpush1.bf16.msra.mxu0 0
      %1918 = vmatprep.subr.bf16.mxu0 0
      %1919 = vmatpush1.bf16.msra.mxu0 0
      %1920 = vmatprep.subr.bf16.mxu0 0
      %1921 = vmatpush1.bf16.msra.mxu0 0
      %1922 = vmatprep.subr.bf16.mxu0 0
      %1923 = vmatpush1.bf16.msra.mxu0 0
      %1924 = vmatprep.subr.bf16.mxu0 0
      %1925 = vmatpush1.bf16.msra.mxu0 0
      %1926 = vmatprep.subr.bf16.mxu0 0
      %1927 = vmatpush1.bf16.msra.mxu0 0
      %1928 = vmatprep.mubr.bf16.mxu0 0
      %1929 = vmatmul.mubr.bf16.gmra.mrb[0].mxu0 %v859
      %v1930 = vpop.f32.mrb[0].mxu0
      %v1931 = vadd.f32 %v1770, %v1930
      %v1932 = vpop.f32.mrb[0].mxu0
      %v1933 = vpop.f32.mrb[0].mxu0
      %v1934 = vadd.f32 %v1773, %v1933
      %v1935 = vpop.f32.mrb[0].mxu0
      %1936 = vmatprep.mubr.bf16.mxu0 0
      %1937 = vmatmul.mubr.bf16.gmra.mrb[0].mxu0 %v866
      %v1938 = vpop.f32.mrb[0].mxu0
      %v1939 = vadd.f32 %v1778, %v1938
      %v1940 = vpop.f32.mrb[0].mxu0
      %v1941 = vpop.f32.mrb[0].mxu0
      %v1942 = vadd.f32 %v1781, %v1941
      %v1943 = vpop.f32.mrb[0].mxu0
      %1944 = vmatprep.mubr.bf16.mxu0 0
      %1945 = vmatmul.mubr.bf16.gmra.mrb[0].mxu0 %v873
      %v1946 = vpop.f32.mrb[0].mxu0
      %v1947 = vadd.f32 %v1786, %v1946
      %v1948 = vpop.f32.mrb[0].mxu0
      %v1949 = vpop.f32.mrb[0].mxu0
      %v1950 = vadd.f32 %v1789, %v1949
      %v1951 = vpop.f32.mrb[0].mxu0
      %1952 = vmatprep.mubr.bf16.mxu0 0
      %1953 = vmatmul.mubr.bf16.gmra.mrb[0].mxu0 %v880
      %v1954 = vpop.f32.mrb[0].mxu0
      %v1955 = vadd.f32 %v1794, %v1954
      %v1956 = vpop.f32.mrb[0].mxu0
      %v1957 = vpop.f32.mrb[0].mxu0
      %v1958 = vadd.f32 %v1797, %v1957
      %v1959 = vpop.f32.mrb[0].mxu0
      %1960 = vmatprep.mubr.bf16.mxu0 0
      %1961 = vmatmul.mubr.bf16.gmra.mrb[0].mxu0 %v887
      %v1962 = vpop.f32.mrb[0].mxu0
      %v1963 = vadd.f32 %v1802, %v1962
      %v1964 = vpop.f32.mrb[0].mxu0
      %v1965 = vpop.f32.mrb[0].mxu0
      %v1966 = vadd.f32 %v1805, %v1965
      %v1967 = vpop.f32.mrb[0].mxu0
      %1968 = vmatprep.mubr.bf16.mxu0 0
      %1969 = vmatmul.mubr.bf16.gmra.mrb[0].mxu0 %v894
      %v1970 = vpop.f32.mrb[0].mxu0
      %v1971 = vadd.f32 %v1810, %v1970
      %v1972 = vpop.f32.mrb[0].mxu0
      %v1973 = vpop.f32.mrb[0].mxu0
      %v1974 = vadd.f32 %v1813, %v1973
      %v1975 = vpop.f32.mrb[0].mxu0
      %1976 = vmatprep.mubr.bf16.mxu0 0
      %1977 = vmatmul.mubr.bf16.gmra.mrb[0].mxu0 %v901
      %v1978 = vpop.f32.mrb[0].mxu0
      %v1979 = vadd.f32 %v1818, %v1978
      %v1980 = vpop.f32.mrb[0].mxu0
      %v1981 = vpop.f32.mrb[0].mxu0
      %v1982 = vadd.f32 %v1821, %v1981
      %v1983 = vpop.f32.mrb[0].mxu0
      %1984 = vmatprep.mubr.bf16.mxu0 0
      %1985 = vmatmul.mubr.bf16.gmra.mrb[0].mxu0 %v908
      %v1986 = vpop.f32.mrb[0].mxu0
      %v1987 = vadd.f32 %v1826, %v1986
      %v1988 = vpop.f32.mrb[0].mxu0
      %v1989 = vpop.f32.mrb[0].mxu0
      %v1990 = vadd.f32 %v1829, %v1989
      %v1991 = vpop.f32.mrb[0].mxu0
      %1992 = vmatprep.mubr.bf16.mxu0 0
      %1993 = vmatmul.mubr.bf16.gmra.mrb[0].mxu0 %v915
      %v1994 = vpop.f32.mrb[0].mxu0
      %v1995 = vadd.f32 %v1834, %v1994
      %v1996 = vpop.f32.mrb[0].mxu0
      %v1997 = vpop.f32.mrb[0].mxu0
      %v1998 = vadd.f32 %v1837, %v1997
      %v1999 = vpop.f32.mrb[0].mxu0
      %2000 = vmatprep.mubr.bf16.mxu0 0
      %2001 = vmatmul.mubr.bf16.gmra.mrb[0].mxu0 %v922
      %v2002 = vpop.f32.mrb[0].mxu0
      %v2003 = vadd.f32 %v1842, %v2002
      %v2004 = vpop.f32.mrb[0].mxu0
      %v2005 = vpop.f32.mrb[0].mxu0
      %v2006 = vadd.f32 %v1845, %v2005
      %v2007 = vpop.f32.mrb[0].mxu0
      %2008 = vmatprep.mubr.bf16.mxu0 0
      %2009 = vmatmul.mubr.bf16.gmra.mrb[0].mxu0 %v929
      %v2010 = vpop.f32.mrb[0].mxu0
      %v2011 = vadd.f32 %v1850, %v2010
      %v2012 = vpop.f32.mrb[0].mxu0
      %v2013 = vpop.f32.mrb[0].mxu0
      %v2014 = vadd.f32 %v1853, %v2013
      %v2015 = vpop.f32.mrb[0].mxu0
      %2016 = vmatprep.mubr.bf16.mxu0 0
      %2017 = vmatmul.mubr.bf16.gmra.mrb[0].mxu0 %v936
      %v2018 = vpop.f32.mrb[0].mxu0
      %v2019 = vadd.f32 %v1858, %v2018
      %v2020 = vpop.f32.mrb[0].mxu0
      %v2021 = vpop.f32.mrb[0].mxu0
      %v2022 = vadd.f32 %v1861, %v2021
      %v2023 = vpop.f32.mrb[0].mxu0
      %2024 = vmatprep.mubr.bf16.mxu0 0
      %2025 = vmatmul.mubr.bf16.gmra.mrb[0].mxu0 %v943
      %v2026 = vpop.f32.mrb[0].mxu0
      %v2027 = vadd.f32 %v1866, %v2026
      %v2028 = vpop.f32.mrb[0].mxu0
      %v2029 = vpop.f32.mrb[0].mxu0
      %v2030 = vadd.f32 %v1869, %v2029
      %v2031 = vpop.f32.mrb[0].mxu0
      %2032 = vmatprep.mubr.bf16.mxu0 0
      %2033 = vmatmul.mubr.bf16.gmra.mrb[0].mxu0 %v950
      %v2034 = vpop.f32.mrb[0].mxu0
      %v2035 = vadd.f32 %v1874, %v2034
      %v2036 = vpop.f32.mrb[0].mxu0
      %v2037 = vpop.f32.mrb[0].mxu0
      %v2038 = vadd.f32 %v1877, %v2037
      %v2039 = vpop.f32.mrb[0].mxu0
      %2040 = vmatprep.mubr.bf16.mxu0 0
      %2041 = vmatmul.mubr.bf16.gmra.mrb[0].mxu0 %v957
      %v2042 = vpop.f32.mrb[0].mxu0
      %v2043 = vadd.f32 %v1882, %v2042
      %v2044 = vpop.f32.mrb[0].mxu0
      %v2045 = vpop.f32.mrb[0].mxu0
      %v2046 = vadd.f32 %v1885, %v2045
      %v2047 = vpop.f32.mrb[0].mxu0
      %2048 = vmatprep.mubr.bf16.mxu0 0
      %2049 = vmatmul.mubr.bf16.gmra.mrb[0].mxu0 %v964
      %v2050 = vpop.f32.mrb[0].mxu0
      %v2051 = vadd.f32 %v1890, %v2050
      %v2052 = vpop.f32.mrb[0].mxu0
      %v2053 = vpop.f32.mrb[0].mxu0
      %v2054 = vadd.f32 %v1893, %v2053
      %v2055 = vpop.f32.mrb[0].mxu0
      %2056 = vdwg.mxu0
      %v2057 = vadd.f32 %v1931, %v1934
      %v2058 = vadd.f32 %v2057, %v1939
      %v2059 = vadd.f32 %v2058, %v1942
      %v2060 = vadd.f32 %v2059, %v1947
      %v2061 = vadd.f32 %v2060, %v1950
      %v2062 = vadd.f32 %v2061, %v1955
      %v2063 = vadd.f32 %v2062, %v1958
      %v2064 = vadd.f32 %v2063, %v1963
      %v2065 = vadd.f32 %v2064, %v1966
      %v2066 = vadd.f32 %v2065, %v1971
      %v2067 = vadd.f32 %v2066, %v1974
      %v2068 = vadd.f32 %v2067, %v1979
      %v2069 = vadd.f32 %v2068, %v1982
      %v2070 = vadd.f32 %v2069, %v1987
      %v2071 = vadd.f32 %v2070, %v1990
      %v2072 = vadd.f32 %v2071, %v1995
      %v2073 = vadd.f32 %v2072, %v1998
      %v2074 = vadd.f32 %v2073, %v2003
      %v2075 = vadd.f32 %v2074, %v2006
      %v2076 = vadd.f32 %v2075, %v2011
      %v2077 = vadd.f32 %v2076, %v2014
      %v2078 = vadd.f32 %v2077, %v2019
      %v2079 = vadd.f32 %v2078, %v2022
      %v2080 = vadd.f32 %v2079, %v2027
      %v2081 = vadd.f32 %v2080, %v2030
      %v2082 = vadd.f32 %v2081, %v2035
      %v2083 = vadd.f32 %v2082, %v2038
      %v2084 = vadd.f32 %v2083, %v2043
      %v2085 = vadd.f32 %v2084, %v2046
      %v2086 = vadd.f32 %v2085, %v2051
      %v2087 = vadd.f32 %v2086, %v2054
      %2088 = vadd.xlane.f32.xlu0 %v2087
      %v2089 = vpop.xlane.xlu0 %2088
      %v2090 = vrot.slane %v2089, 4
      %v2091 = vadd.f32 %v2089, %v2090
      %v2092 = vrot.slane %v2091, 2
      %v2093 = vadd.f32 %v2091, %v2092
      %v2094 = vrot.slane %v2093, 1
      %v2095 = vadd.f32 %v2093, %v2094
      %s2096 = vtos %v2095
      %v2097 = vmul.f32 %v1931, %v1931
      %v2098 = vmul.f32 %v1934, %v1934
      %v2099 = vmul.f32 %v1939, %v1939
      %v2100 = vmul.f32 %v1942, %v1942
      %v2101 = vmul.f32 %v1947, %v1947
      %v2102 = vmul.f32 %v1950, %v1950
      %v2103 = vmul.f32 %v1955, %v1955
      %v2104 = vmul.f32 %v1958, %v1958
      %v2105 = vmul.f32 %v1963, %v1963
      %v2106 = vmul.f32 %v1966, %v1966
      %v2107 = vmul.f32 %v1971, %v1971
      %v2108 = vmul.f32 %v1974, %v1974
      %v2109 = vmul.f32 %v1979, %v1979
      %v2110 = vmul.f32 %v1982, %v1982
      %v2111 = vmul.f32 %v1987, %v1987
      %v2112 = vmul.f32 %v1990, %v1990
      %v2113 = vmul.f32 %v1995, %v1995
      %v2114 = vmul.f32 %v1998, %v1998
      %v2115 = vmul.f32 %v2003, %v2003
      %v2116 = vmul.f32 %v2006, %v2006
      %v2117 = vmul.f32 %v2011, %v2011
      %v2118 = vmul.f32 %v2014, %v2014
      %v2119 = vmul.f32 %v2019, %v2019
      %v2120 = vmul.f32 %v2022, %v2022
      %v2121 = vmul.f32 %v2027, %v2027
      %v2122 = vmul.f32 %v2030, %v2030
      %v2123 = vmul.f32 %v2035, %v2035
      %v2124 = vmul.f32 %v2038, %v2038
      %v2125 = vmul.f32 %v2043, %v2043
      %v2126 = vmul.f32 %v2046, %v2046
      %v2127 = vmul.f32 %v2051, %v2051
      %v2128 = vmul.f32 %v2054, %v2054
      %v2129 = vadd.f32 %v2097, %v2098
      %v2130 = vadd.f32 %v2129, %v2099
      %v2131 = vadd.f32 %v2130, %v2100
      %v2132 = vadd.f32 %v2131, %v2101
      %v2133 = vadd.f32 %v2132, %v2102
      %v2134 = vadd.f32 %v2133, %v2103
      %v2135 = vadd.f32 %v2134, %v2104
      %v2136 = vadd.f32 %v2135, %v2105
      %v2137 = vadd.f32 %v2136, %v2106
      %v2138 = vadd.f32 %v2137, %v2107
      %v2139 = vadd.f32 %v2138, %v2108
      %v2140 = vadd.f32 %v2139, %v2109
      %v2141 = vadd.f32 %v2140, %v2110
      %v2142 = vadd.f32 %v2141, %v2111
      %v2143 = vadd.f32 %v2142, %v2112
      %v2144 = vadd.f32 %v2143, %v2113
      %v2145 = vadd.f32 %v2144, %v2114
      %v2146 = vadd.f32 %v2145, %v2115
      %v2147 = vadd.f32 %v2146, %v2116
      %v2148 = vadd.f32 %v2147, %v2117
      %v2149 = vadd.f32 %v2148, %v2118
      %v2150 = vadd.f32 %v2149, %v2119
      %v2151 = vadd.f32 %v2150, %v2120
      %v2152 = vadd.f32 %v2151, %v2121
      %v2153 = vadd.f32 %v2152, %v2122
      %v2154 = vadd.f32 %v2153, %v2123
      %v2155 = vadd.f32 %v2154, %v2124
      %v2156 = vadd.f32 %v2155, %v2125
      %v2157 = vadd.f32 %v2156, %v2126
      %v2158 = vadd.f32 %v2157, %v2127
      %v2159 = vadd.f32 %v2158, %v2128
      %2160 = vadd.xlane.f32.xlu0 %v2159
      %v2161 = vpop.xlane.xlu0 %2160
      %v2162 = vrot.slane %v2161, 4
      %v2163 = vadd.f32 %v2161, %v2162
      %v2164 = vrot.slane %v2163, 2
      %v2165 = vadd.f32 %v2163, %v2164
      %v2166 = vrot.slane %v2165, 1
      %v2167 = vadd.f32 %v2165, %v2166
      %s2168 = vtos %v2167
      %v2169 = vrcp.pop 4096.0
      %s2170 = vtos %v2169
      %s2171 = smul.f32 %s2096, %s2170
      %v2172 = vrcp.pop 4096.0
      %s2173 = vtos %v2172
      %s2174 = smul.f32 %s2168, %s2173
      %s2175 = smul.f32 %s2171, %s2171
      %s2176 = ssub.f32 %s2174, %s2175
      %s2177 = smax.f32 %s2176, 0.0
      %v2178 = vstv %s2171
      %v2179 = vsub.f32 %v1931, %v2178
      %v2180 = vsub.f32 %v1934, %v2178
      %v2181 = vsub.f32 %v1939, %v2178
      %v2182 = vsub.f32 %v1942, %v2178
      %v2183 = vsub.f32 %v1947, %v2178
      %v2184 = vsub.f32 %v1950, %v2178
      %v2185 = vsub.f32 %v1955, %v2178
      %v2186 = vsub.f32 %v1958, %v2178
      %v2187 = vsub.f32 %v1963, %v2178
      %v2188 = vsub.f32 %v1966, %v2178
      %v2189 = vsub.f32 %v1971, %v2178
      %v2190 = vsub.f32 %v1974, %v2178
      %v2191 = vsub.f32 %v1979, %v2178
      %v2192 = vsub.f32 %v1982, %v2178
      %v2193 = vsub.f32 %v1987, %v2178
      %v2194 = vsub.f32 %v1990, %v2178
      %v2195 = vsub.f32 %v1995, %v2178
      %v2196 = vsub.f32 %v1998, %v2178
      %v2197 = vsub.f32 %v2003, %v2178
      %v2198 = vsub.f32 %v2006, %v2178
      %v2199 = vsub.f32 %v2011, %v2178
      %v2200 = vsub.f32 %v2014, %v2178
      %v2201 = vsub.f32 %v2019, %v2178
      %v2202 = vsub.f32 %v2022, %v2178
      %v2203 = vsub.f32 %v2027, %v2178
      %v2204 = vsub.f32 %v2030, %v2178
      %v2205 = vsub.f32 %v2035, %v2178
      %v2206 = vsub.f32 %v2038, %v2178
      %v2207 = vsub.f32 %v2043, %v2178
      %v2208 = vsub.f32 %v2046, %v2178
      %v2209 = vsub.f32 %v2051, %v2178
      %v2210 = vsub.f32 %v2054, %v2178
      %s2211 = sadd.f32 %s2177, 1e-05
      %v2212 = vstv %s2211
      %v2213 = vrsqrt.pop %v2212
      %s2214 = vtos %v2213
      %v2215 = vstv %s2214
      %v2216 = vmul.f32 %v2179, %v2215
      %v2217 = vmul.f32 %v2180, %v2215
      %v2218 = vmul.f32 %v2181, %v2215
      %v2219 = vmul.f32 %v2182, %v2215
      %v2220 = vmul.f32 %v2183, %v2215
      %v2221 = vmul.f32 %v2184, %v2215
      %v2222 = vmul.f32 %v2185, %v2215
      %v2223 = vmul.f32 %v2186, %v2215
      %v2224 = vmul.f32 %v2187, %v2215
      %v2225 = vmul.f32 %v2188, %v2215
      %v2226 = vmul.f32 %v2189, %v2215
      %v2227 = vmul.f32 %v2190, %v2215
      %v2228 = vmul.f32 %v2191, %v2215
      %v2229 = vmul.f32 %v2192, %v2215
      %v2230 = vmul.f32 %v2193, %v2215
      %v2231 = vmul.f32 %v2194, %v2215
      %v2232 = vmul.f32 %v2195, %v2215
      %v2233 = vmul.f32 %v2196, %v2215
      %v2234 = vmul.f32 %v2197, %v2215
      %v2235 = vmul.f32 %v2198, %v2215
      %v2236 = vmul.f32 %v2199, %v2215
      %v2237 = vmul.f32 %v2200, %v2215
      %v2238 = vmul.f32 %v2201, %v2215
      %v2239 = vmul.f32 %v2202, %v2215
      %v2240 = vmul.f32 %v2203, %v2215
      %v2241 = vmul.f32 %v2204, %v2215
      %v2242 = vmul.f32 %v2205, %v2215
      %v2243 = vmul.f32 %v2206, %v2215
      %v2244 = vmul.f32 %v2207, %v2215
      %v2245 = vmul.f32 %v2208, %v2215
      %v2246 = vmul.f32 %v2209, %v2215
      %v2247 = vmul.f32 %v2210, %v2215
      %v2248 = vld [vmem:[%s244] sm:$0x1]
      %v2250 = vlaneseq
      %v2251 = vshrl.u32 %v2250, 7
      %v2252 = vsub.s32 0, %v2251
      %v2253 = vrot.slane %v2248, %v2252
      %v2255 = vmul.f32 %v2216, %v2253
      %v2256 = vmul.f32 %v2217, %v2253
      %v2257 = vmul.f32 %v2218, %v2253
      %v2258 = vmul.f32 %v2219, %v2253
      %v2259 = vmul.f32 %v2220, %v2253
      %v2260 = vmul.f32 %v2221, %v2253
      %v2261 = vmul.f32 %v2222, %v2253
      %v2262 = vmul.f32 %v2223, %v2253
      %v2263 = vmul.f32 %v2224, %v2253
      %v2264 = vmul.f32 %v2225, %v2253
      %v2265 = vmul.f32 %v2226, %v2253
      %v2266 = vmul.f32 %v2227, %v2253
      %v2267 = vmul.f32 %v2228, %v2253
      %v2268 = vmul.f32 %v2229, %v2253
      %v2269 = vmul.f32 %v2230, %v2253
      %v2270 = vmul.f32 %v2231, %v2253
      %v2271 = vmul.f32 %v2232, %v2253
      %v2272 = vmul.f32 %v2233, %v2253
      %v2273 = vmul.f32 %v2234, %v2253
      %v2274 = vmul.f32 %v2235, %v2253
      %v2275 = vmul.f32 %v2236, %v2253
      %v2276 = vmul.f32 %v2237, %v2253
      %v2277 = vmul.f32 %v2238, %v2253
      %v2278 = vmul.f32 %v2239, %v2253
      %v2279 = vmul.f32 %v2240, %v2253
      %v2280 = vmul.f32 %v2241, %v2253
      %v2281 = vmul.f32 %v2242, %v2253
      %v2282 = vmul.f32 %v2243, %v2253
      %v2283 = vmul.f32 %v2244, %v2253
      %v2284 = vmul.f32 %v2245, %v2253
      %v2285 = vmul.f32 %v2246, %v2253
      %v2286 = vmul.f32 %v2247, %v2253
      %v2287 = vld [vmem:[%s247] sm:$0x1]
      %v2289 = vlaneseq
      %v2290 = vshrl.u32 %v2289, 7
      %v2291 = vsub.s32 0, %v2290
      %v2292 = vrot.slane %v2287, %v2291
      %v2294 = vadd.f32 %v2255, %v2292
      %v2295 = vadd.f32 %v2256, %v2292
      %v2296 = vadd.f32 %v2257, %v2292
      %v2297 = vadd.f32 %v2258, %v2292
      %v2298 = vadd.f32 %v2259, %v2292
      %v2299 = vadd.f32 %v2260, %v2292
      %v2300 = vadd.f32 %v2261, %v2292
      %v2301 = vadd.f32 %v2262, %v2292
      %v2302 = vadd.f32 %v2263, %v2292
      %v2303 = vadd.f32 %v2264, %v2292
      %v2304 = vadd.f32 %v2265, %v2292
      %v2305 = vadd.f32 %v2266, %v2292
      %v2306 = vadd.f32 %v2267, %v2292
      %v2307 = vadd.f32 %v2268, %v2292
      %v2308 = vadd.f32 %v2269, %v2292
      %v2309 = vadd.f32 %v2270, %v2292
      %v2310 = vadd.f32 %v2271, %v2292
      %v2311 = vadd.f32 %v2272, %v2292
      %v2312 = vadd.f32 %v2273, %v2292
      %v2313 = vadd.f32 %v2274, %v2292
      %v2314 = vadd.f32 %v2275, %v2292
      %v2315 = vadd.f32 %v2276, %v2292
      %v2316 = vadd.f32 %v2277, %v2292
      %v2317 = vadd.f32 %v2278, %v2292
      %v2318 = vadd.f32 %v2279, %v2292
      %v2319 = vadd.f32 %v2280, %v2292
      %v2320 = vadd.f32 %v2281, %v2292
      %v2321 = vadd.f32 %v2282, %v2292
      %v2322 = vadd.f32 %v2283, %v2292
      %v2323 = vadd.f32 %v2284, %v2292
      %v2324 = vadd.f32 %v2285, %v2292
      %v2325 = vadd.f32 %v2286, %v2292
      %v2326 = vmax.f32 %v2294, 0.0
      %v2327 = vmax.f32 %v2295, 0.0
      %v2328 = vmax.f32 %v2296, 0.0
      %v2329 = vmax.f32 %v2297, 0.0
      %v2330 = vmax.f32 %v2298, 0.0
      %v2331 = vmax.f32 %v2299, 0.0
      %v2332 = vmax.f32 %v2300, 0.0
      %v2333 = vmax.f32 %v2301, 0.0
      %v2334 = vmax.f32 %v2302, 0.0
      %v2335 = vmax.f32 %v2303, 0.0
      %v2336 = vmax.f32 %v2304, 0.0
      %v2337 = vmax.f32 %v2305, 0.0
      %v2338 = vmax.f32 %v2306, 0.0
      %v2339 = vmax.f32 %v2307, 0.0
      %v2340 = vmax.f32 %v2308, 0.0
      %v2341 = vmax.f32 %v2309, 0.0
      %v2342 = vmax.f32 %v2310, 0.0
      %v2343 = vmax.f32 %v2311, 0.0
      %v2344 = vmax.f32 %v2312, 0.0
      %v2345 = vmax.f32 %v2313, 0.0
      %v2346 = vmax.f32 %v2314, 0.0
      %v2347 = vmax.f32 %v2315, 0.0
      %v2348 = vmax.f32 %v2316, 0.0
      %v2349 = vmax.f32 %v2317, 0.0
      %v2350 = vmax.f32 %v2318, 0.0
      %v2351 = vmax.f32 %v2319, 0.0
      %v2352 = vmax.f32 %v2320, 0.0
      %v2353 = vmax.f32 %v2321, 0.0
      %v2354 = vmax.f32 %v2322, 0.0
      %v2355 = vmax.f32 %v2323, 0.0
      %v2356 = vmax.f32 %v2324, 0.0
      %v2357 = vmax.f32 %v2325, 0.0
      %2358 = vst [vmem:[%s252] sm:$0xff] %v2326
      %2359 = vst [vmem:[%s252 + $0x8] sm:$0xff] %v2327
      %2360 = vst [vmem:[%s252 + $0x10] sm:$0xff] %v2328
      %2361 = vst [vmem:[%s252 + $0x18] sm:$0xff] %v2329
      %2362 = vst [vmem:[%s252 + $0x20] sm:$0xff] %v2330
      %2363 = vst [vmem:[%s252 + $0x28] sm:$0xff] %v2331
      %2364 = vst [vmem:[%s252 + $0x30] sm:$0xff] %v2332
      %2365 = vst [vmem:[%s252 + $0x38] sm:$0xff] %v2333
      %2366 = vst [vmem:[%s252 + $0x40] sm:$0xff] %v2334
      %2367 = vst [vmem:[%s252 + $0x48] sm:$0xff] %v2335
      %2368 = vst [vmem:[%s252 + $0x50] sm:$0xff] %v2336
      %2369 = vst [vmem:[%s252 + $0x58] sm:$0xff] %v2337
      %2370 = vst [vmem:[%s252 + $0x60] sm:$0xff] %v2338
      %2371 = vst [vmem:[%s252 + $0x68] sm:$0xff] %v2339
      %2372 = vst [vmem:[%s252 + $0x70] sm:$0xff] %v2340
      %2373 = vst [vmem:[%s252 + $0x78] sm:$0xff] %v2341
      %2374 = vst [vmem:[%s252 + $0x80] sm:$0xff] %v2342
      %2375 = vst [vmem:[%s252 + $0x88] sm:$0xff] %v2343
      %2376 = vst [vmem:[%s252 + $0x90] sm:$0xff] %v2344
      %2377 = vst [vmem:[%s252 + $0x98] sm:$0xff] %v2345
      %2378 = vst [vmem:[%s252 + $0xa0] sm:$0xff] %v2346
      %2379 = vst [vmem:[%s252 + $0xa8] sm:$0xff] %v2347
      %2380 = vst [vmem:[%s252 + $0xb0] sm:$0xff] %v2348
      %2381 = vst [vmem:[%s252 + $0xb8] sm:$0xff] %v2349
      %2382 = vst [vmem:[%s252 + $0xc0] sm:$0xff] %v2350
      %2383 = vst [vmem:[%s252 + $0xc8] sm:$0xff] %v2351
      %2384 = vst [vmem:[%s252 + $0xd0] sm:$0xff] %v2352
      %2385 = vst [vmem:[%s252 + $0xd8] sm:$0xff] %v2353
      %2386 = vst [vmem:[%s252 + $0xe0] sm:$0xff] %v2354
      %2387 = vst [vmem:[%s252 + $0xe8] sm:$0xff] %v2355
      %2388 = vst [vmem:[%s252 + $0xf0] sm:$0xff] %v2356
      %2389 = vst [vmem:[%s252 + $0xf8] sm:$0xff] %v2357
      %p2390 = scmp.lt.s32.totalorder %s16, 1
      %s2391 = scalar_select %p2390, %s16, 1
      %s2392 = smul.addr %s2391, 32
      %s2393 = smul.addr %s2392, 8
      %s2394 = scalar_lea.vmem %s5, %s2393
      // Predicated region
      $region41: #{munit_trainer_forward.26} parent=39 // pred_check
        %p2395 = pneg %p154
      $region42: #{munit_trainer_forward.26} parent=39 // pred_check_branch
        %2397 = sbr.rel (%p2395) target = $region44
      $region43: #{munit_trainer_forward.26} parent=39 // pred_region
        _
      $region44: #{munit_trainer_forward.26} parent=39 // pred_fallthru
        _
    $region40: #{munit_trainer_forward.26} parent=5 // pred_fallthru
      _
    %p2398 = scmp.le.s32.totalorder 2, %s11
    // Predicated region
    $region45: #{munit_trainer_forward.26} parent=5 // pred_check
      %p2399 = pneg %p2398
    $region46: #{munit_trainer_forward.26} parent=5 // pred_check_branch
      %2401 = sbr.rel (%p2399) target = $region48
    $region47: #{munit_trainer_forward.26} parent=5 // pred_region
      %s2402 = ssub.s32 %s11, 2
      // Predicated region
      $region49: #{munit_trainer_forward.26} parent=47 // pred_check
        %p2403 = pneg %p160
      $region50: #{munit_trainer_forward.26} parent=47 // pred_check_branch
        %2405 = sbr.rel (%p2403) target = $region52
      $region51: #{munit_trainer_forward.26} parent=47 // pred_region
        %p2406 = scmp.lt.s32.totalorder %s17, 1
        %s2407 = scalar_select %p2406, %s17, 1
        %s2408 = smul.addr %s2407, 32
        %s2409 = smul.addr %s2408, 8
        %s2410 = scalar_lea.vmem %s5, %s2409
      $region52: #{munit_trainer_forward.26} parent=47 // pred_fallthru
        _
    $region48: #{munit_trainer_forward.26} parent=5 // pred_fallthru
      _
  $region6: #{munit_trainer_forward.26} parent=0 // loop_footer
    %s15 = sadd.s32 1, %s11
  $region7: #{munit_trainer_forward.26} parent=0 // loop_footer_branch
    %10 = sbr.rel target = $region3
  $region8: #{munit_trainer_forward.26} parent=0 // loop_exit
    _

// kernel: munit_trainer_forward.27
$region0: #{munit_trainer_forward.27}
  #allocation0 [shape = 'u32[]', space=smem, size = 0x4, offset = 0x4, fixed_abs, tag = 'smem constant byte address 0x4 - core index']
  #allocation1 [shape = 'u32[144,128]{1,0:T(1,128)}', space=vmem, size = 0x12000, scoped, tag = 'internal scratch']
  %s0 = inlined_call_operand.vmem [shape: bf16[2,256,896], index: 0, kind: input, shape index: {}]
  %s1 = inlined_call_operand.vmem [shape: bf16[896,128], index: 1, kind: input, shape index: {}]
  %s2 = inlined_call_operand.vmem [shape: f32[1,128], index: 2, kind: input, shape index: {}]
  %s3 = inlined_call_operand.vmem [shape: f32[2,256,128], index: 3, kind: output, shape index: {}]
  %s4 = sld [smem:[#allocation0]]
  $region45: #{munit_trainer_forward.27} parent=0
    _
  %s6 = ssub.s32 1, %s4
  %s7 = scalar_select 0, %s6, %s4
  loop: start=0, step=1, limit=4
  $region2: #{munit_trainer_forward.27} parent=0 // loop_pre_header
    _
  $region3: #{munit_trainer_forward.27} parent=0 // loop_header
    %s9 = sphi 0, %s13
    %p10 = scmp.ge.s32.totalorder %s9, 4
    %s19 = sphi 0, %s21
    %s22 = sphi 0, %s19
    %s23 = sphi 0, %s22
    %s39 = sphi 0, %s23
    %s43 = sphi 0, %s43
    %s45 = sphi 0, %s43
    %s46 = sphi 0, %s45
    %s60 = sphi 0, %s46
    %s64 = sphi 0, %s64
    %s66 = sphi 0, %s64
    %s67 = sphi 0, %s66
    %s81 = sphi 0, %s67
    %s87 = sphi 0, %s89
    %s90 = sphi 0, %s87
    %s91 = sphi 0, %s90
    %s107 = sphi 0, %s91
  $region4: #{munit_trainer_forward.27} parent=0 // loop_header_branch
    %12 = sbr.rel (%p10) target = $region8
  $region5: #{munit_trainer_forward.27} parent=0 // loop_body
    %s14 = ssub.s32 %s9, 1
    %s15 = ssub.s32 %s9, 2
    %s16 = sadd.s32 %s9, 1
    %s17 = ssub.s32 %s9, %s16
    %p18 = scmp.eq.s32.totalorder %s17, 0
    %s20 = sadd.s32 %s19, 1
    %s21 = scalar_select %p18, %s19, %s20
    %p24 = pneg %p18
    %p25 = scmp.eq.s32.totalorder %s9, 1
    %p26 = por %p24, %p25
    %p27 = scmp.ne.s32.totalorder %s19, %s22
    %p28 = scmp.eq.s32.totalorder %s9, 0
    %p29 = por %p27, %p28
    %p30 = scmp.ne.s32.totalorder %s19, %s22
    %p31 = scmp.eq.s32.totalorder %s14, 1
    %p32 = por %p30, %p31
    %p33 = scmp.ne.s32.totalorder %s22, %s23
    %p34 = scmp.eq.s32.totalorder %s14, 0
    %p35 = por %p33, %p34
    %p36 = scmp.ne.s32.totalorder %s22, %s23
    %p37 = scmp.eq.s32.totalorder %s15, 1
    %p38 = por %p36, %p37
    %p40 = scmp.ne.s32.totalorder %s23, %s39
    %p41 = scmp.eq.s32.totalorder %s15, 0
    %p42 = por %p40, %p41
    %s44 = sadd.s32 %s43, 1
    %p47 = scmp.eq.s32.totalorder %s9, 1
    %p48 = scmp.ne.s32.totalorder %s43, %s45
    %p49 = scmp.eq.s32.totalorder %s9, 0
    %p50 = por %p48, %p49
    %p51 = scmp.ne.s32.totalorder %s43, %s45
    %p52 = scmp.eq.s32.totalorder %s14, 1
    %p53 = por %p51, %p52
    %p54 = scmp.ne.s32.totalorder %s45, %s46
    %p55 = scmp.eq.s32.totalorder %s14, 0
    %p56 = por %p54, %p55
    %p57 = scmp.ne.s32.totalorder %s45, %s46
    %p58 = scmp.eq.s32.totalorder %s15, 1
    %p59 = por %p57, %p58
    %p61 = scmp.ne.s32.totalorder %s46, %s60
    %p62 = scmp.eq.s32.totalorder %s15, 0
    %p63 = por %p61, %p62
    %s65 = sadd.s32 %s64, 1
    %p68 = scmp.eq.s32.totalorder %s9, 1
    %p69 = scmp.ne.s32.totalorder %s64, %s66
    %p70 = scmp.eq.s32.totalorder %s9, 0
    %p71 = por %p69, %p70
    %p72 = scmp.ne.s32.totalorder %s64, %s66
    %p73 = scmp.eq.s32.totalorder %s14, 1
    %p74 = por %p72, %p73
    %p75 = scmp.ne.s32.totalorder %s66, %s67
    %p76 = scmp.eq.s32.totalorder %s14, 0
    %p77 = por %p75, %p76
    %p78 = scmp.ne.s32.totalorder %s66, %s67
    %p79 = scmp.eq.s32.totalorder %s15, 1
    %p80 = por %p78, %p79
    %p82 = scmp.ne.s32.totalorder %s67, %s81
    %p83 = scmp.eq.s32.totalorder %s15, 0
    %p84 = por %p82, %p83
    %s85 = ssub.s32 %s9, %s16
    %p86 = scmp.eq.s32.totalorder %s85, 0
    %s88 = sadd.s32 %s87, 1
    %s89 = scalar_select %p86, %s87, %s88
    %p92 = pneg %p86
    %p93 = scmp.eq.s32.totalorder %s9, 1
    %p94 = por %p92, %p93
    %p95 = scmp.ne.s32.totalorder %s87, %s90
    %p96 = scmp.eq.s32.totalorder %s9, 0
    %p97 = por %p95, %p96
    %p98 = scmp.ne.s32.totalorder %s87, %s90
    %p99 = scmp.eq.s32.totalorder %s14, 1
    %p100 = por %p98, %p99
    %p101 = scmp.ne.s32.totalorder %s90, %s91
    %p102 = scmp.eq.s32.totalorder %s14, 0
    %p103 = por %p101, %p102
    %p104 = scmp.ne.s32.totalorder %s90, %s91
    %p105 = scmp.eq.s32.totalorder %s15, 1
    %p106 = por %p104, %p105
    %p108 = scmp.ne.s32.totalorder %s91, %s107
    %p109 = scmp.eq.s32.totalorder %s15, 0
    %p110 = por %p108, %p109
    %p111 = scmp.le.s32.totalorder 1, %s9
    %p112 = scmp.lt.s32.totalorder %s9, 3
    %p113 = pnand %p111, %p112
    %p114 = pneg %p113
    // Predicated region
    $region9: #{munit_trainer_forward.27} parent=5 // pred_check
      _
    $region10: #{munit_trainer_forward.27} parent=5 // pred_check_branch
      %116 = sbr.rel (%p113) target = $region12
    $region11: #{munit_trainer_forward.27} parent=5 // pred_region
      %s117 = ssub.s32 %s9, 1
      // Predicated region
      $region13: #{munit_trainer_forward.27} parent=11 // pred_check
        %p118 = pneg %p56
      $region14: #{munit_trainer_forward.27} parent=11 // pred_check_branch
        %120 = sbr.rel (%p118) target = $region16
      $region15: #{munit_trainer_forward.27} parent=11 // pred_region
        _
      $region16: #{munit_trainer_forward.27} parent=11 // pred_fallthru
        _
      // Predicated region
      $region17: #{munit_trainer_forward.27} parent=11 // pred_check
        %p121 = pneg %p77
      $region18: #{munit_trainer_forward.27} parent=11 // pred_check_branch
        %123 = sbr.rel (%p121) target = $region20
      $region19: #{munit_trainer_forward.27} parent=11 // pred_region
        _
      $region20: #{munit_trainer_forward.27} parent=11 // pred_fallthru
        _
    $region12: #{munit_trainer_forward.27} parent=5 // pred_fallthru
      _
    %p124 = scmp.lt.s32.totalorder %s9, 2
    // Predicated region
    $region21: #{munit_trainer_forward.27} parent=5 // pred_check
      %p125 = pneg %p124
    $region22: #{munit_trainer_forward.27} parent=5 // pred_check_branch
      %127 = sbr.rel (%p125) target = $region24
    $region23: #{munit_trainer_forward.27} parent=5 // pred_region
      // Predicated region
      $region25: #{munit_trainer_forward.27} parent=23 // pred_check
        %p128 = pneg %p29
      $region26: #{munit_trainer_forward.27} parent=23 // pred_check_branch
        %130 = sbr.rel (%p128) target = $region28
      $region27: #{munit_trainer_forward.27} parent=23 // pred_region
        %p131 = scmp.lt.s32.totalorder %s9, 1
        %s132 = scalar_select %p131, %s9, 1
        %s133 = smul.addr %s132, 224
        %s134 = smul.addr %s133, 4
        %s135 = scalar_lea.vmem %s0, %s134
      $region28: #{munit_trainer_forward.27} parent=23 // pred_fallthru
        _
    $region24: #{munit_trainer_forward.27} parent=5 // pred_fallthru
      _
    %p136 = scmp.le.s32.totalorder 1, %s9
    %p137 = scmp.lt.s32.totalorder %s9, 3
    %p138 = pnand %p136, %p137
    %p139 = pneg %p138
    // Predicated region
    $region29: #{munit_trainer_forward.27} parent=5 // pred_check
      _
    $region30: #{munit_trainer_forward.27} parent=5 // pred_check_branch
      %141 = sbr.rel (%p138) target = $region32
    $region31: #{munit_trainer_forward.27} parent=5 // pred_region
      %s142 = ssub.s32 %s9, 1
      %p143 = scmp.lt.s32.totalorder %s14, 1
      %s144 = scalar_select %p143, %s14, 1
      %s145 = smul.addr %s144, 224
      %s146 = smul.addr %s145, 4
      %s147 = scalar_lea.vmem %s0, %s146
      %p148 = pneg %p35
      %p149 = pneg %p32
      %p150 = pneg %p56
      %p151 = pneg %p53
      %p152 = pneg %p77
      %p153 = pneg %p74
      %p154 = pneg %p103
      %p155 = pneg %p100
      %p156 = scmp.lt.s32.totalorder %s14, 1
      %s157 = scalar_select %p156, %s14, 1
      %s158 = smul.addr %s157, 32
      %s159 = smul.addr %s158, 8
      %s160 = scalar_lea.vmem %s3, %s159
      %p161 = scmp.lt.s32.totalorder %s14, 1
      %s162 = scalar_select %p161, %s14, 1
      %s163 = smul.addr %s162, 224
      %s164 = smul.addr %s163, 4
      %s165 = scalar_lea.vmem %s0, %s164
      %p166 = scmp.lt.s32.totalorder %s14, 1
      %s167 = scalar_select %p166, %s14, 1
      %s168 = smul.addr %s167, 32
      %s169 = smul.addr %s168, 8
      %s170 = scalar_lea.vmem %s3, %s169
      %v172 = vld [vmem:[%s165] sm:$0xff]
      %v173 = vld [vmem:[%s165 + $0x8] sm:$0xff]
      %v174 = vld [vmem:[%s165 + $0x10] sm:$0xff]
      %v175 = vld [vmem:[%s165 + $0x18] sm:$0xf]
      %v176 = vld [vmem:[%s165 + $0x1c] sm:$0xff]
      %v177 = vld [vmem:[%s165 + $0x24] sm:$0xff]
      %v178 = vld [vmem:[%s165 + $0x2c] sm:$0xff]
      %v179 = vld [vmem:[%s165 + $0x34] sm:$0xf]
      %v180 = vld [vmem:[%s165 + $0x38] sm:$0xff]
      %v181 = vld [vmem:[%s165 + $0x40] sm:$0xff]
      %v182 = vld [vmem:[%s165 + $0x48] sm:$0xff]
      %v183 = vld [vmem:[%s165 + $0x50] sm:$0xf]
      %v184 = vld [vmem:[%s165 + $0x54] sm:$0xff]
      %v185 = vld [vmem:[%s165 + $0x5c] sm:$0xff]
      %v186 = vld [vmem:[%s165 + $0x64] sm:$0xff]
      %v187 = vld [vmem:[%s165 + $0x6c] sm:$0xf]
      %v188 = vld [vmem:[%s165 + $0x70] sm:$0xff]
      %v189 = vld [vmem:[%s165 + $0x78] sm:$0xff]
      %v190 = vld [vmem:[%s165 + $0x80] sm:$0xff]
      %v191 = vld [vmem:[%s165 + $0x88] sm:$0xf]
      %v192 = vld [vmem:[%s165 + $0x8c] sm:$0xff]
      %v193 = vld [vmem:[%s165 + $0x94] sm:$0xff]
      %v194 = vld [vmem:[%s165 + $0x9c] sm:$0xff]
      %v195 = vld [vmem:[%s165 + $0xa4] sm:$0xf]
      %v196 = vld [vmem:[%s165 + $0xa8] sm:$0xff]
      %v197 = vld [vmem:[%s165 + $0xb0] sm:$0xff]
      %v198 = vld [vmem:[%s165 + $0xb8] sm:$0xff]
      %v199 = vld [vmem:[%s165 + $0xc0] sm:$0xf]
      %v200 = vld [vmem:[%s165 + $0xc4] sm:$0xff]
      %v201 = vld [vmem:[%s165 + $0xcc] sm:$0xff]
      %v202 = vld [vmem:[%s165 + $0xd4] sm:$0xff]
      %v203 = vld [vmem:[%s165 + $0xdc] sm:$0xf]
      %v204 = vld [vmem:[%s165 + $0xe0] sm:$0xff]
      %v205 = vld [vmem:[%s165 + $0xe8] sm:$0xff]
      %v206 = vld [vmem:[%s165 + $0xf0] sm:$0xff]
      %v207 = vld [vmem:[%s165 + $0xf8] sm:$0xf]
      %v208 = vld [vmem:[%s165 + $0xfc] sm:$0xff]
      %v209 = vld [vmem:[%s165 + $0x104] sm:$0xff]
      %v210 = vld [vmem:[%s165 + $0x10c] sm:$0xff]
      %v211 = vld [vmem:[%s165 + $0x114] sm:$0xf]
      %v212 = vld [vmem:[%s165 + $0x118] sm:$0xff]
      %v213 = vld [vmem:[%s165 + $0x120] sm:$0xff]
      %v214 = vld [vmem:[%s165 + $0x128] sm:$0xff]
      %v215 = vld [vmem:[%s165 + $0x130] sm:$0xf]
      %v216 = vld [vmem:[%s165 + $0x134] sm:$0xff]
      %v217 = vld [vmem:[%s165 + $0x13c] sm:$0xff]
      %v218 = vld [vmem:[%s165 + $0x144] sm:$0xff]
      %v219 = vld [vmem:[%s165 + $0x14c] sm:$0xf]
      %v220 = vld [vmem:[%s165 + $0x150] sm:$0xff]
      %v221 = vld [vmem:[%s165 + $0x158] sm:$0xff]
      %v222 = vld [vmem:[%s165 + $0x160] sm:$0xff]
      %v223 = vld [vmem:[%s165 + $0x168] sm:$0xf]
      %v224 = vld [vmem:[%s165 + $0x16c] sm:$0xff]
      %v225 = vld [vmem:[%s165 + $0x174] sm:$0xff]
      %v226 = vld [vmem:[%s165 + $0x17c] sm:$0xff]
      %v227 = vld [vmem:[%s165 + $0x184] sm:$0xf]
      %v228 = vld [vmem:[%s165 + $0x188] sm:$0xff]
      %v229 = vld [vmem:[%s165 + $0x190] sm:$0xff]
      %v230 = vld [vmem:[%s165 + $0x198] sm:$0xff]
      %v231 = vld [vmem:[%s165 + $0x1a0] sm:$0xf]
      %v232 = vld [vmem:[%s165 + $0x1a4] sm:$0xff]
      %v233 = vld [vmem:[%s165 + $0x1ac] sm:$0xff]
      %v234 = vld [vmem:[%s165 + $0x1b4] sm:$0xff]
      %v235 = vld [vmem:[%s165 + $0x1bc] sm:$0xf]
      %v236 = vld [vmem:[%s165 + $0x1c0] sm:$0xff]
      %v237 = vld [vmem:[%s165 + $0x1c8] sm:$0xff]
      %v238 = vld [vmem:[%s165 + $0x1d0] sm:$0xff]
      %v239 = vld [vmem:[%s165 + $0x1d8] sm:$0xf]
      %v240 = vld [vmem:[%s165 + $0x1dc] sm:$0xff]
      %v241 = vld [vmem:[%s165 + $0x1e4] sm:$0xff]
      %v242 = vld [vmem:[%s165 + $0x1ec] sm:$0xff]
      %v243 = vld [vmem:[%s165 + $0x1f4] sm:$0xf]
      %v244 = vld [vmem:[%s165 + $0x1f8] sm:$0xff]
      %v245 = vld [vmem:[%s165 + $0x200] sm:$0xff]
      %v246 = vld [vmem:[%s165 + $0x208] sm:$0xff]
      %v247 = vld [vmem:[%s165 + $0x210] sm:$0xf]
      %v248 = vld [vmem:[%s165 + $0x214] sm:$0xff]
      %v249 = vld [vmem:[%s165 + $0x21c] sm:$0xff]
      %v250 = vld [vmem:[%s165 + $0x224] sm:$0xff]
      %v251 = vld [vmem:[%s165 + $0x22c] sm:$0xf]
      %v252 = vld [vmem:[%s165 + $0x230] sm:$0xff]
      %v253 = vld [vmem:[%s165 + $0x238] sm:$0xff]
      %v254 = vld [vmem:[%s165 + $0x240] sm:$0xff]
      %v255 = vld [vmem:[%s165 + $0x248] sm:$0xf]
      %v256 = vld [vmem:[%s165 + $0x24c] sm:$0xff]
      %v257 = vld [vmem:[%s165 + $0x254] sm:$0xff]
      %v258 = vld [vmem:[%s165 + $0x25c] sm:$0xff]
      %v259 = vld [vmem:[%s165 + $0x264] sm:$0xf]
      %v260 = vld [vmem:[%s165 + $0x268] sm:$0xff]
      %v261 = vld [vmem:[%s165 + $0x270] sm:$0xff]
      %v262 = vld [vmem:[%s165 + $0x278] sm:$0xff]
      %v263 = vld [vmem:[%s165 + $0x280] sm:$0xf]
      %v264 = vld [vmem:[%s165 + $0x284] sm:$0xff]
      %v265 = vld [vmem:[%s165 + $0x28c] sm:$0xff]
      %v266 = vld [vmem:[%s165 + $0x294] sm:$0xff]
      %v267 = vld [vmem:[%s165 + $0x29c] sm:$0xf]
      %v268 = vld [vmem:[%s165 + $0x2a0] sm:$0xff]
      %v269 = vld [vmem:[%s165 + $0x2a8] sm:$0xff]
      %v270 = vld [vmem:[%s165 + $0x2b0] sm:$0xff]
      %v271 = vld [vmem:[%s165 + $0x2b8] sm:$0xf]
      %v272 = vld [vmem:[%s165 + $0x2bc] sm:$0xff]
      %v273 = vld [vmem:[%s165 + $0x2c4] sm:$0xff]
      %v274 = vld [vmem:[%s165 + $0x2cc] sm:$0xff]
      %v275 = vld [vmem:[%s165 + $0x2d4] sm:$0xf]
      %v276 = vld [vmem:[%s165 + $0x2d8] sm:$0xff]
      %v277 = vld [vmem:[%s165 + $0x2e0] sm:$0xff]
      %v278 = vld [vmem:[%s165 + $0x2e8] sm:$0xff]
      %v279 = vld [vmem:[%s165 + $0x2f0] sm:$0xf]
      %v280 = vld [vmem:[%s165 + $0x2f4] sm:$0xff]
      %v281 = vld [vmem:[%s165 + $0x2fc] sm:$0xff]
      %v282 = vld [vmem:[%s165 + $0x304] sm:$0xff]
      %v283 = vld [vmem:[%s165 + $0x30c] sm:$0xf]
      %v284 = vld [vmem:[%s165 + $0x310] sm:$0xff]
      %v285 = vld [vmem:[%s165 + $0x318] sm:$0xff]
      %v286 = vld [vmem:[%s165 + $0x320] sm:$0xff]
      %v287 = vld [vmem:[%s165 + $0x328] sm:$0xf]
      %v288 = vld [vmem:[%s165 + $0x32c] sm:$0xff]
      %v289 = vld [vmem:[%s165 + $0x334] sm:$0xff]
      %v290 = vld [vmem:[%s165 + $0x33c] sm:$0xff]
      %v291 = vld [vmem:[%s165 + $0x344] sm:$0xf]
      %v292 = vld [vmem:[%s165 + $0x348] sm:$0xff]
      %v293 = vld [vmem:[%s165 + $0x350] sm:$0xff]
      %v294 = vld [vmem:[%s165 + $0x358] sm:$0xff]
      %v295 = vld [vmem:[%s165 + $0x360] sm:$0xf]
      %v296 = vld [vmem:[%s165 + $0x364] sm:$0xff]
      %v297 = vld [vmem:[%s165 + $0x36c] sm:$0xff]
      %v298 = vld [vmem:[%s165 + $0x374] sm:$0xff]
      %v299 = vld [vmem:[%s165 + $0x37c] sm:$0xf]
      %v300 = vld [vmem:[%s1] sm:$0xf]
      %v301 = vld [vmem:[%s1 + $0x4] sm:$0xf]
      %v302 = vld [vmem:[%s1 + $0x8] sm:$0xf]
      %v303 = vld [vmem:[%s1 + $0xc] sm:$0xf]
      %v304 = vld [vmem:[%s1 + $0x10] sm:$0xf]
      %v305 = vld [vmem:[%s1 + $0x14] sm:$0xf]
      %v306 = vld [vmem:[%s1 + $0x18] sm:$0xf]
      %v307 = vld [vmem:[%s1 + $0x1c] sm:$0xf]
      %v308 = vld [vmem:[%s1 + $0x20] sm:$0xf]
      %v309 = vld [vmem:[%s1 + $0x24] sm:$0xf]
      %v310 = vld [vmem:[%s1 + $0x28] sm:$0xf]
      %v311 = vld [vmem:[%s1 + $0x2c] sm:$0xf]
      %v312 = vld [vmem:[%s1 + $0x30] sm:$0xf]
      %v313 = vld [vmem:[%s1 + $0x34] sm:$0xf]
      %v314 = vld [vmem:[%s1 + $0x38] sm:$0xf]
      %v315 = vld [vmem:[%s1 + $0x3c] sm:$0xf]
      %v316 = vld [vmem:[%s1 + $0x40] sm:$0xf]
      %v317 = vld [vmem:[%s1 + $0x44] sm:$0xf]
      %v318 = vld [vmem:[%s1 + $0x48] sm:$0xf]
      %v319 = vld [vmem:[%s1 + $0x4c] sm:$0xf]
      %v320 = vld [vmem:[%s1 + $0x50] sm:$0xf]
      %v321 = vld [vmem:[%s1 + $0x54] sm:$0xf]
      %v322 = vld [vmem:[%s1 + $0x58] sm:$0xf]
      %v323 = vld [vmem:[%s1 + $0x5c] sm:$0xf]
      %v324 = vld [vmem:[%s1 + $0x60] sm:$0xf]
      %v325 = vld [vmem:[%s1 + $0x64] sm:$0xf]
      %v326 = vld [vmem:[%s1 + $0x68] sm:$0xf]
      %v327 = vld [vmem:[%s1 + $0x6c] sm:$0xf]
      %v328 = vld [vmem:[%s1 + $0x70] sm:$0xf]
      %v329 = vld [vmem:[%s1 + $0x74] sm:$0xf]
      %v330 = vld [vmem:[%s1 + $0x78] sm:$0xf]
      %v331 = vld [vmem:[%s1 + $0x7c] sm:$0xf]
      %v332 = vld [vmem:[%s1 + $0x80] sm:$0xf]
      %v333 = vld [vmem:[%s1 + $0x84] sm:$0xf]
      %v334 = vld [vmem:[%s1 + $0x88] sm:$0xf]
      %v335 = vld [vmem:[%s1 + $0x8c] sm:$0xf]
      %v336 = vld [vmem:[%s1 + $0x90] sm:$0xf]
      %v337 = vld [vmem:[%s1 + $0x94] sm:$0xf]
      %v338 = vld [vmem:[%s1 + $0x98] sm:$0xf]
      %v339 = vld [vmem:[%s1 + $0x9c] sm:$0xf]
      %v340 = vld [vmem:[%s1 + $0xa0] sm:$0xf]
      %v341 = vld [vmem:[%s1 + $0xa4] sm:$0xf]
      %v342 = vld [vmem:[%s1 + $0xa8] sm:$0xf]
      %v343 = vld [vmem:[%s1 + $0xac] sm:$0xf]
      %v344 = vld [vmem:[%s1 + $0xb0] sm:$0xf]
      %v345 = vld [vmem:[%s1 + $0xb4] sm:$0xf]
      %v346 = vld [vmem:[%s1 + $0xb8] sm:$0xf]
      %v347 = vld [vmem:[%s1 + $0xbc] sm:$0xf]
      %v348 = vld [vmem:[%s1 + $0xc0] sm:$0xf]
      %v349 = vld [vmem:[%s1 + $0xc4] sm:$0xf]
      %v350 = vld [vmem:[%s1 + $0xc8] sm:$0xf]
      %v351 = vld [vmem:[%s1 + $0xcc] sm:$0xf]
      %v352 = vld [vmem:[%s1 + $0xd0] sm:$0xf]
      %v353 = vld [vmem:[%s1 + $0xd4] sm:$0xf]
      %v354 = vld [vmem:[%s1 + $0xd8] sm:$0xf]
      %v355 = vld [vmem:[%s1 + $0xdc] sm:$0xf]
      %v356 = vld [vmem:[%s1 + $0xe0] sm:$0xf]
      %v357 = vld [vmem:[%s1 + $0xe4] sm:$0xf]
      %v358 = vld [vmem:[%s1 + $0xe8] sm:$0xf]
      %v359 = vld [vmem:[%s1 + $0xec] sm:$0xf]
      %v360 = vld [vmem:[%s1 + $0xf0] sm:$0xf]
      %v361 = vld [vmem:[%s1 + $0xf4] sm:$0xf]
      %v362 = vld [vmem:[%s1 + $0xf8] sm:$0xf]
      %v363 = vld [vmem:[%s1 + $0xfc] sm:$0xf]
      %v364 = vld [vmem:[%s1 + $0x100] sm:$0xf]
      %v365 = vld [vmem:[%s1 + $0x104] sm:$0xf]
      %v366 = vld [vmem:[%s1 + $0x108] sm:$0xf]
      %v367 = vld [vmem:[%s1 + $0x10c] sm:$0xf]
      %v368 = vld [vmem:[%s1 + $0x110] sm:$0xf]
      %v369 = vld [vmem:[%s1 + $0x114] sm:$0xf]
      %v370 = vld [vmem:[%s1 + $0x118] sm:$0xf]
      %v371 = vld [vmem:[%s1 + $0x11c] sm:$0xf]
      %v372 = vld [vmem:[%s1 + $0x120] sm:$0xf]
      %v373 = vld [vmem:[%s1 + $0x124] sm:$0xf]
      %v374 = vld [vmem:[%s1 + $0x128] sm:$0xf]
      %v375 = vld [vmem:[%s1 + $0x12c] sm:$0xf]
      %v376 = vld [vmem:[%s1 + $0x130] sm:$0xf]
      %v377 = vld [vmem:[%s1 + $0x134] sm:$0xf]
      %v378 = vld [vmem:[%s1 + $0x138] sm:$0xf]
      %v379 = vld [vmem:[%s1 + $0x13c] sm:$0xf]
      %v380 = vld [vmem:[%s1 + $0x140] sm:$0xf]
      %v381 = vld [vmem:[%s1 + $0x144] sm:$0xf]
      %v382 = vld [vmem:[%s1 + $0x148] sm:$0xf]
      %v383 = vld [vmem:[%s1 + $0x14c] sm:$0xf]
      %v384 = vld [vmem:[%s1 + $0x150] sm:$0xf]
      %v385 = vld [vmem:[%s1 + $0x154] sm:$0xf]
      %v386 = vld [vmem:[%s1 + $0x158] sm:$0xf]
      %v387 = vld [vmem:[%s1 + $0x15c] sm:$0xf]
      %v388 = vld [vmem:[%s1 + $0x160] sm:$0xf]
      %v389 = vld [vmem:[%s1 + $0x164] sm:$0xf]
      %v390 = vld [vmem:[%s1 + $0x168] sm:$0xf]
      %v391 = vld [vmem:[%s1 + $0x16c] sm:$0xf]
      %v392 = vld [vmem:[%s1 + $0x170] sm:$0xf]
      %v393 = vld [vmem:[%s1 + $0x174] sm:$0xf]
      %v394 = vld [vmem:[%s1 + $0x178] sm:$0xf]
      %v395 = vld [vmem:[%s1 + $0x17c] sm:$0xf]
      %v396 = vld [vmem:[%s1 + $0x180] sm:$0xf]
      %v397 = vld [vmem:[%s1 + $0x184] sm:$0xf]
      %v398 = vld [vmem:[%s1 + $0x188] sm:$0xf]
      %v399 = vld [vmem:[%s1 + $0x18c] sm:$0xf]
      %v400 = vld [vmem:[%s1 + $0x190] sm:$0xf]
      %v401 = vld [vmem:[%s1 + $0x194] sm:$0xf]
      %v402 = vld [vmem:[%s1 + $0x198] sm:$0xf]
      %v403 = vld [vmem:[%s1 + $0x19c] sm:$0xf]
      %v404 = vld [vmem:[%s1 + $0x1a0] sm:$0xf]
      %v405 = vld [vmem:[%s1 + $0x1a4] sm:$0xf]
      %v406 = vld [vmem:[%s1 + $0x1a8] sm:$0xf]
      %v407 = vld [vmem:[%s1 + $0x1ac] sm:$0xf]
      %v408 = vld [vmem:[%s1 + $0x1b0] sm:$0xf]
      %v409 = vld [vmem:[%s1 + $0x1b4] sm:$0xf]
      %v410 = vld [vmem:[%s1 + $0x1b8] sm:$0xf]
      %v411 = vld [vmem:[%s1 + $0x1bc] sm:$0xf]
      %v412 = vld [vmem:[%s2] sm:$0x1]
      %v414 = vlaneseq
      %v415 = vshrl.u32 %v414, 7
      %v416 = vsub.s32 0, %v415
      %v417 = vrot.slane %v412, %v416
      %v547 = vunpack.c.l.b16 %v172
      %v548 = vunpack.c.h.b16 %v172
      %v549 = vunpack.c.l.b16 %v173
      %v550 = vunpack.c.h.b16 %v173
      %v551 = vunpack.c.l.b16 %v174
      %v552 = vunpack.c.h.b16 %v174
      %v553 = vunpack.c.l.b16 %v175
      %v554 = vunpack.c.l.b16 %v176
      %v555 = vunpack.c.h.b16 %v176
      %v556 = vunpack.c.l.b16 %v177
      %v557 = vunpack.c.h.b16 %v177
      %v558 = vunpack.c.l.b16 %v178
      %v559 = vunpack.c.h.b16 %v178
      %v560 = vunpack.c.l.b16 %v179
      %v561 = vunpack.c.l.b16 %v180
      %v562 = vunpack.c.h.b16 %v180
      %v563 = vunpack.c.l.b16 %v181
      %v564 = vunpack.c.h.b16 %v181
      %v565 = vunpack.c.l.b16 %v182
      %v566 = vunpack.c.h.b16 %v182
      %v567 = vunpack.c.l.b16 %v183
      %v568 = vunpack.c.l.b16 %v184
      %v569 = vunpack.c.h.b16 %v184
      %v570 = vunpack.c.l.b16 %v185
      %v571 = vunpack.c.h.b16 %v185
      %v572 = vunpack.c.l.b16 %v186
      %v573 = vunpack.c.h.b16 %v186
      %v574 = vunpack.c.l.b16 %v187
      %v575 = vunpack.c.l.b16 %v188
      %v576 = vunpack.c.h.b16 %v188
      %v577 = vunpack.c.l.b16 %v189
      %v578 = vunpack.c.h.b16 %v189
      %v579 = vunpack.c.l.b16 %v190
      %v580 = vunpack.c.h.b16 %v190
      %v581 = vunpack.c.l.b16 %v191
      %v582 = vunpack.c.l.b16 %v192
      %v583 = vunpack.c.h.b16 %v192
      %v584 = vunpack.c.l.b16 %v193
      %v585 = vunpack.c.h.b16 %v193
      %v586 = vunpack.c.l.b16 %v194
      %v587 = vunpack.c.h.b16 %v194
      %v588 = vunpack.c.l.b16 %v195
      %v589 = vunpack.c.l.b16 %v196
      %v590 = vunpack.c.h.b16 %v196
      %v591 = vunpack.c.l.b16 %v197
      %v592 = vunpack.c.h.b16 %v197
      %v593 = vunpack.c.l.b16 %v198
      %v594 = vunpack.c.h.b16 %v198
      %v595 = vunpack.c.l.b16 %v199
      %v596 = vunpack.c.l.b16 %v200
      %v597 = vunpack.c.h.b16 %v200
      %v598 = vunpack.c.l.b16 %v201
      %v599 = vunpack.c.h.b16 %v201
      %v600 = vunpack.c.l.b16 %v202
      %v601 = vunpack.c.h.b16 %v202
      %v602 = vunpack.c.l.b16 %v203
      %v603 = vunpack.c.l.b16 %v204
      %v604 = vunpack.c.h.b16 %v204
      %v605 = vunpack.c.l.b16 %v205
      %v606 = vunpack.c.h.b16 %v205
      %v607 = vunpack.c.l.b16 %v206
      %v608 = vunpack.c.h.b16 %v206
      %v609 = vunpack.c.l.b16 %v207
      %v610 = vunpack.c.l.b16 %v208
      %v611 = vunpack.c.h.b16 %v208
      %v612 = vunpack.c.l.b16 %v209
      %v613 = vunpack.c.h.b16 %v209
      %v614 = vunpack.c.l.b16 %v210
      %v615 = vunpack.c.h.b16 %v210
      %v616 = vunpack.c.l.b16 %v211
      %v617 = vunpack.c.l.b16 %v212
      %v618 = vunpack.c.h.b16 %v212
      %v619 = vunpack.c.l.b16 %v213
      %v620 = vunpack.c.h.b16 %v213
      %v621 = vunpack.c.l.b16 %v214
      %v622 = vunpack.c.h.b16 %v214
      %v623 = vunpack.c.l.b16 %v215
      %v624 = vunpack.c.l.b16 %v216
      %v625 = vunpack.c.h.b16 %v216
      %v626 = vunpack.c.l.b16 %v217
      %v627 = vunpack.c.h.b16 %v217
      %v628 = vunpack.c.l.b16 %v218
      %v629 = vunpack.c.h.b16 %v218
      %v630 = vunpack.c.l.b16 %v219
      %v631 = vunpack.c.l.b16 %v220
      %v632 = vunpack.c.h.b16 %v220
      %v633 = vunpack.c.l.b16 %v221
      %v634 = vunpack.c.h.b16 %v221
      %v635 = vunpack.c.l.b16 %v222
      %v636 = vunpack.c.h.b16 %v222
      %v637 = vunpack.c.l.b16 %v223
      %v638 = vunpack.c.l.b16 %v224
      %v639 = vunpack.c.h.b16 %v224
      %v640 = vunpack.c.l.b16 %v225
      %v641 = vunpack.c.h.b16 %v225
      %v642 = vunpack.c.l.b16 %v226
      %v643 = vunpack.c.h.b16 %v226
      %v644 = vunpack.c.l.b16 %v227
      %v645 = vunpack.c.l.b16 %v228
      %v646 = vunpack.c.h.b16 %v228
      %v647 = vunpack.c.l.b16 %v229
      %v648 = vunpack.c.h.b16 %v229
      %v649 = vunpack.c.l.b16 %v230
      %v650 = vunpack.c.h.b16 %v230
      %v651 = vunpack.c.l.b16 %v231
      %v652 = vunpack.c.l.b16 %v232
      %v653 = vunpack.c.h.b16 %v232
      %v654 = vunpack.c.l.b16 %v233
      %v655 = vunpack.c.h.b16 %v233
      %v656 = vunpack.c.l.b16 %v234
      %v657 = vunpack.c.h.b16 %v234
      %v658 = vunpack.c.l.b16 %v235
      %v659 = vunpack.c.l.b16 %v236
      %v660 = vunpack.c.h.b16 %v236
      %v661 = vunpack.c.l.b16 %v237
      %v662 = vunpack.c.h.b16 %v237
      %v663 = vunpack.c.l.b16 %v238
      %v664 = vunpack.c.h.b16 %v238
      %v665 = vunpack.c.l.b16 %v239
      %v666 = vunpack.c.l.b16 %v240
      %v667 = vunpack.c.h.b16 %v240
      %v668 = vunpack.c.l.b16 %v241
      %v669 = vunpack.c.h.b16 %v241
      %v670 = vunpack.c.l.b16 %v242
      %v671 = vunpack.c.h.b16 %v242
      %v672 = vunpack.c.l.b16 %v243
      %v673 = vunpack.c.l.b16 %v244
      %v674 = vunpack.c.h.b16 %v244
      %v675 = vunpack.c.l.b16 %v245
      %v676 = vunpack.c.h.b16 %v245
      %v677 = vunpack.c.l.b16 %v246
      %v678 = vunpack.c.h.b16 %v246
      %v679 = vunpack.c.l.b16 %v247
      %v680 = vunpack.c.l.b16 %v248
      %v681 = vunpack.c.h.b16 %v248
      %v682 = vunpack.c.l.b16 %v249
      %v683 = vunpack.c.h.b16 %v249
      %v684 = vunpack.c.l.b16 %v250
      %v685 = vunpack.c.h.b16 %v250
      %v686 = vunpack.c.l.b16 %v251
      %v687 = vunpack.c.l.b16 %v252
      %v688 = vunpack.c.h.b16 %v252
      %v689 = vunpack.c.l.b16 %v253
      %v690 = vunpack.c.h.b16 %v253
      %v691 = vunpack.c.l.b16 %v254
      %v692 = vunpack.c.h.b16 %v254
      %v693 = vunpack.c.l.b16 %v255
      %v694 = vunpack.c.l.b16 %v256
      %v695 = vunpack.c.h.b16 %v256
      %v696 = vunpack.c.l.b16 %v257
      %v697 = vunpack.c.h.b16 %v257
      %v698 = vunpack.c.l.b16 %v258
      %v699 = vunpack.c.h.b16 %v258
      %v700 = vunpack.c.l.b16 %v259
      %v701 = vunpack.c.l.b16 %v260
      %v702 = vunpack.c.h.b16 %v260
      %v703 = vunpack.c.l.b16 %v261
      %v704 = vunpack.c.h.b16 %v261
      %v705 = vunpack.c.l.b16 %v262
      %v706 = vunpack.c.h.b16 %v262
      %v707 = vunpack.c.l.b16 %v263
      %v708 = vunpack.c.l.b16 %v264
      %v709 = vunpack.c.h.b16 %v264
      %v710 = vunpack.c.l.b16 %v265
      %v711 = vunpack.c.h.b16 %v265
      %v712 = vunpack.c.l.b16 %v266
      %v713 = vunpack.c.h.b16 %v266
      %v714 = vunpack.c.l.b16 %v267
      %v715 = vunpack.c.l.b16 %v268
      %v716 = vunpack.c.h.b16 %v268
      %v717 = vunpack.c.l.b16 %v269
      %v718 = vunpack.c.h.b16 %v269
      %v719 = vunpack.c.l.b16 %v270
      %v720 = vunpack.c.h.b16 %v270
      %v721 = vunpack.c.l.b16 %v271
      %v722 = vunpack.c.l.b16 %v272
      %v723 = vunpack.c.h.b16 %v272
      %v724 = vunpack.c.l.b16 %v273
      %v725 = vunpack.c.h.b16 %v273
      %v726 = vunpack.c.l.b16 %v274
      %v727 = vunpack.c.h.b16 %v274
      %v728 = vunpack.c.l.b16 %v275
      %v729 = vunpack.c.l.b16 %v276
      %v730 = vunpack.c.h.b16 %v276
      %v731 = vunpack.c.l.b16 %v277
      %v732 = vunpack.c.h.b16 %v277
      %v733 = vunpack.c.l.b16 %v278
      %v734 = vunpack.c.h.b16 %v278
      %v735 = vunpack.c.l.b16 %v279
      %v736 = vunpack.c.l.b16 %v280
      %v737 = vunpack.c.h.b16 %v280
      %v738 = vunpack.c.l.b16 %v281
      %v739 = vunpack.c.h.b16 %v281
      %v740 = vunpack.c.l.b16 %v282
      %v741 = vunpack.c.h.b16 %v282
      %v742 = vunpack.c.l.b16 %v283
      %v743 = vunpack.c.l.b16 %v284
      %v744 = vunpack.c.h.b16 %v284
      %v745 = vunpack.c.l.b16 %v285
      %v746 = vunpack.c.h.b16 %v285
      %v747 = vunpack.c.l.b16 %v286
      %v748 = vunpack.c.h.b16 %v286
      %v749 = vunpack.c.l.b16 %v287
      %v750 = vunpack.c.l.b16 %v288
      %v751 = vunpack.c.h.b16 %v288
      %v752 = vunpack.c.l.b16 %v289
      %v753 = vunpack.c.h.b16 %v289
      %v754 = vunpack.c.l.b16 %v290
      %v755 = vunpack.c.h.b16 %v290
      %v756 = vunpack.c.l.b16 %v291
      %v757 = vunpack.c.l.b16 %v292
      %v758 = vunpack.c.h.b16 %v292
      %v759 = vunpack.c.l.b16 %v293
      %v760 = vunpack.c.h.b16 %v293
      %v761 = vunpack.c.l.b16 %v294
      %v762 = vunpack.c.h.b16 %v294
      %v763 = vunpack.c.l.b16 %v295
      %v764 = vunpack.c.l.b16 %v296
      %v765 = vunpack.c.h.b16 %v296
      %v766 = vunpack.c.l.b16 %v297
      %v767 = vunpack.c.h.b16 %v297
      %v768 = vunpack.c.l.b16 %v298
      %v769 = vunpack.c.h.b16 %v298
      %v770 = vunpack.c.l.b16 %v299
      %v771 = vpack.c.b16 %v554, %v547
      %v772 = vpack.c.b16 %v555, %v548
      %v773 = vpack.c.b16 %v556, %v549
      %v774 = vpack.c.b16 %v557, %v550
      %v775 = vpack.c.b16 %v558, %v551
      %v776 = vpack.c.b16 %v559, %v552
      %v777 = vpack.c.b16 %v560, %v553
      %v778 = vpack.c.b16 %v568, %v561
      %v779 = vpack.c.b16 %v569, %v562
      %v780 = vpack.c.b16 %v570, %v563
      %v781 = vpack.c.b16 %v571, %v564
      %v782 = vpack.c.b16 %v572, %v565
      %v783 = vpack.c.b16 %v573, %v566
      %v784 = vpack.c.b16 %v574, %v567
      %v785 = vpack.c.b16 %v582, %v575
      %v786 = vpack.c.b16 %v583, %v576
      %v787 = vpack.c.b16 %v584, %v577
      %v788 = vpack.c.b16 %v585, %v578
      %v789 = vpack.c.b16 %v586, %v579
      %v790 = vpack.c.b16 %v587, %v580
      %v791 = vpack.c.b16 %v588, %v581
      %v792 = vpack.c.b16 %v596, %v589
      %v793 = vpack.c.b16 %v597, %v590
      %v794 = vpack.c.b16 %v598, %v591
      %v795 = vpack.c.b16 %v599, %v592
      %v796 = vpack.c.b16 %v600, %v593
      %v797 = vpack.c.b16 %v601, %v594
      %v798 = vpack.c.b16 %v602, %v595
      %v799 = vpack.c.b16 %v610, %v603
      %v800 = vpack.c.b16 %v611, %v604
      %v801 = vpack.c.b16 %v612, %v605
      %v802 = vpack.c.b16 %v613, %v606
      %v803 = vpack.c.b16 %v614, %v607
      %v804 = vpack.c.b16 %v615, %v608
      %v805 = vpack.c.b16 %v616, %v609
      %v806 = vpack.c.b16 %v624, %v617
      %v807 = vpack.c.b16 %v625, %v618
      %v808 = vpack.c.b16 %v626, %v619
      %v809 = vpack.c.b16 %v627, %v620
      %v810 = vpack.c.b16 %v628, %v621
      %v811 = vpack.c.b16 %v629, %v622
      %v812 = vpack.c.b16 %v630, %v623
      %v813 = vpack.c.b16 %v638, %v631
      %v814 = vpack.c.b16 %v639, %v632
      %v815 = vpack.c.b16 %v640, %v633
      %v816 = vpack.c.b16 %v641, %v634
      %v817 = vpack.c.b16 %v642, %v635
      %v818 = vpack.c.b16 %v643, %v636
      %v819 = vpack.c.b16 %v644, %v637
      %v820 = vpack.c.b16 %v652, %v645
      %v821 = vpack.c.b16 %v653, %v646
      %v822 = vpack.c.b16 %v654, %v647
      %v823 = vpack.c.b16 %v655, %v648
      %v824 = vpack.c.b16 %v656, %v649
      %v825 = vpack.c.b16 %v657, %v650
      %v826 = vpack.c.b16 %v658, %v651
      %v827 = vpack.c.b16 %v666, %v659
      %v828 = vpack.c.b16 %v667, %v660
      %v829 = vpack.c.b16 %v668, %v661
      %v830 = vpack.c.b16 %v669, %v662
      %v831 = vpack.c.b16 %v670, %v663
      %v832 = vpack.c.b16 %v671, %v664
      %v833 = vpack.c.b16 %v672, %v665
      %v834 = vpack.c.b16 %v680, %v673
      %v835 = vpack.c.b16 %v681, %v674
      %v836 = vpack.c.b16 %v682, %v675
      %v837 = vpack.c.b16 %v683, %v676
      %v838 = vpack.c.b16 %v684, %v677
      %v839 = vpack.c.b16 %v685, %v678
      %v840 = vpack.c.b16 %v686, %v679
      %v841 = vpack.c.b16 %v694, %v687
      %v842 = vpack.c.b16 %v695, %v688
      %v843 = vpack.c.b16 %v696, %v689
      %v844 = vpack.c.b16 %v697, %v690
      %v845 = vpack.c.b16 %v698, %v691
      %v846 = vpack.c.b16 %v699, %v692
      %v847 = vpack.c.b16 %v700, %v693
      %v848 = vpack.c.b16 %v708, %v701
      %v849 = vpack.c.b16 %v709, %v702
      %v850 = vpack.c.b16 %v710, %v703
      %v851 = vpack.c.b16 %v711, %v704
      %v852 = vpack.c.b16 %v712, %v705
      %v853 = vpack.c.b16 %v713, %v706
      %v854 = vpack.c.b16 %v714, %v707
      %v855 = vpack.c.b16 %v722, %v715
      %v856 = vpack.c.b16 %v723, %v716
      %v857 = vpack.c.b16 %v724, %v717
      %v858 = vpack.c.b16 %v725, %v718
      %v859 = vpack.c.b16 %v726, %v719
      %v860 = vpack.c.b16 %v727, %v720
      %v861 = vpack.c.b16 %v728, %v721
      %v862 = vpack.c.b16 %v736, %v729
      %v863 = vpack.c.b16 %v737, %v730
      %v864 = vpack.c.b16 %v738, %v731
      %v865 = vpack.c.b16 %v739, %v732
      %v866 = vpack.c.b16 %v740, %v733
      %v867 = vpack.c.b16 %v741, %v734
      %v868 = vpack.c.b16 %v742, %v735
      %v869 = vpack.c.b16 %v750, %v743
      %v870 = vpack.c.b16 %v751, %v744
      %v871 = vpack.c.b16 %v752, %v745
      %v872 = vpack.c.b16 %v753, %v746
      %v873 = vpack.c.b16 %v754, %v747
      %v874 = vpack.c.b16 %v755, %v748
      %v875 = vpack.c.b16 %v756, %v749
      %v876 = vpack.c.b16 %v764, %v757
      %v877 = vpack.c.b16 %v765, %v758
      %v878 = vpack.c.b16 %v766, %v759
      %v879 = vpack.c.b16 %v767, %v760
      %v880 = vpack.c.b16 %v768, %v761
      %v881 = vpack.c.b16 %v769, %v762
      %v882 = vpack.c.b16 %v770, %v763
      %v1107 = vunpack.c.l.b16 %v300
      %v1108 = vunpack.c.l.b16 %v301
      %v1109 = vunpack.c.l.b16 %v302
      %v1110 = vunpack.c.l.b16 %v303
      %v1111 = vunpack.c.l.b16 %v304
      %v1112 = vunpack.c.l.b16 %v305
      %v1113 = vunpack.c.l.b16 %v306
      %v1114 = vunpack.c.l.b16 %v307
      %v1115 = vunpack.c.l.b16 %v308
      %v1116 = vunpack.c.l.b16 %v309
      %v1117 = vunpack.c.l.b16 %v310
      %v1118 = vunpack.c.l.b16 %v311
      %v1119 = vunpack.c.l.b16 %v312
      %v1120 = vunpack.c.l.b16 %v313
      %v1121 = vunpack.c.l.b16 %v314
      %v1122 = vunpack.c.l.b16 %v315
      %v1123 = vunpack.c.l.b16 %v316
      %v1124 = vunpack.c.l.b16 %v317
      %v1125 = vunpack.c.l.b16 %v318
      %v1126 = vunpack.c.l.b16 %v319
      %v1127 = vunpack.c.l.b16 %v320
      %v1128 = vunpack.c.l.b16 %v321
      %v1129 = vunpack.c.l.b16 %v322
      %v1130 = vunpack.c.l.b16 %v323
      %v1131 = vunpack.c.l.b16 %v324
      %v1132 = vunpack.c.l.b16 %v325
      %v1133 = vunpack.c.l.b16 %v326
      %v1134 = vunpack.c.l.b16 %v327
      %v1135 = vunpack.c.l.b16 %v328
      %v1136 = vunpack.c.l.b16 %v329
      %v1137 = vunpack.c.l.b16 %v330
      %v1138 = vunpack.c.l.b16 %v331
      %v1139 = vunpack.c.l.b16 %v332
      %v1140 = vunpack.c.l.b16 %v333
      %v1141 = vunpack.c.l.b16 %v334
      %v1142 = vunpack.c.l.b16 %v335
      %v1143 = vunpack.c.l.b16 %v336
      %v1144 = vunpack.c.l.b16 %v337
      %v1145 = vunpack.c.l.b16 %v338
      %v1146 = vunpack.c.l.b16 %v339
      %v1147 = vunpack.c.l.b16 %v340
      %v1148 = vunpack.c.l.b16 %v341
      %v1149 = vunpack.c.l.b16 %v342
      %v1150 = vunpack.c.l.b16 %v343
      %v1151 = vunpack.c.l.b16 %v344
      %v1152 = vunpack.c.l.b16 %v345
      %v1153 = vunpack.c.l.b16 %v346
      %v1154 = vunpack.c.l.b16 %v347
      %v1155 = vunpack.c.l.b16 %v348
      %v1156 = vunpack.c.l.b16 %v349
      %v1157 = vunpack.c.l.b16 %v350
      %v1158 = vunpack.c.l.b16 %v351
      %v1159 = vunpack.c.l.b16 %v352
      %v1160 = vunpack.c.l.b16 %v353
      %v1161 = vunpack.c.l.b16 %v354
      %v1162 = vunpack.c.l.b16 %v355
      %v1163 = vunpack.c.l.b16 %v356
      %v1164 = vunpack.c.l.b16 %v357
      %v1165 = vunpack.c.l.b16 %v358
      %v1166 = vunpack.c.l.b16 %v359
      %v1167 = vunpack.c.l.b16 %v360
      %v1168 = vunpack.c.l.b16 %v361
      %v1169 = vunpack.c.l.b16 %v362
      %v1170 = vunpack.c.l.b16 %v363
      %v1171 = vunpack.c.l.b16 %v364
      %v1172 = vunpack.c.l.b16 %v365
      %v1173 = vunpack.c.l.b16 %v366
      %v1174 = vunpack.c.l.b16 %v367
      %v1175 = vunpack.c.l.b16 %v368
      %v1176 = vunpack.c.l.b16 %v369
      %v1177 = vunpack.c.l.b16 %v370
      %v1178 = vunpack.c.l.b16 %v371
      %v1179 = vunpack.c.l.b16 %v372
      %v1180 = vunpack.c.l.b16 %v373
      %v1181 = vunpack.c.l.b16 %v374
      %v1182 = vunpack.c.l.b16 %v375
      %v1183 = vunpack.c.l.b16 %v376
      %v1184 = vunpack.c.l.b16 %v377
      %v1185 = vunpack.c.l.b16 %v378
      %v1186 = vunpack.c.l.b16 %v379
      %v1187 = vunpack.c.l.b16 %v380
      %v1188 = vunpack.c.l.b16 %v381
      %v1189 = vunpack.c.l.b16 %v382
      %v1190 = vunpack.c.l.b16 %v383
      %v1191 = vunpack.c.l.b16 %v384
      %v1192 = vunpack.c.l.b16 %v385
      %v1193 = vunpack.c.l.b16 %v386
      %v1194 = vunpack.c.l.b16 %v387
      %v1195 = vunpack.c.l.b16 %v388
      %v1196 = vunpack.c.l.b16 %v389
      %v1197 = vunpack.c.l.b16 %v390
      %v1198 = vunpack.c.l.b16 %v391
      %v1199 = vunpack.c.l.b16 %v392
      %v1200 = vunpack.c.l.b16 %v393
      %v1201 = vunpack.c.l.b16 %v394
      %v1202 = vunpack.c.l.b16 %v395
      %v1203 = vunpack.c.l.b16 %v396
      %v1204 = vunpack.c.l.b16 %v397
      %v1205 = vunpack.c.l.b16 %v398
      %v1206 = vunpack.c.l.b16 %v399
      %v1207 = vunpack.c.l.b16 %v400
      %v1208 = vunpack.c.l.b16 %v401
      %v1209 = vunpack.c.l.b16 %v402
      %v1210 = vunpack.c.l.b16 %v403
      %v1211 = vunpack.c.l.b16 %v404
      %v1212 = vunpack.c.l.b16 %v405
      %v1213 = vunpack.c.l.b16 %v406
      %v1214 = vunpack.c.l.b16 %v407
      %v1215 = vunpack.c.l.b16 %v408
      %v1216 = vunpack.c.l.b16 %v409
      %v1217 = vunpack.c.l.b16 %v410
      %v1218 = vunpack.c.l.b16 %v411
      %v1219 = vpack.c.b16 %v1108, %v1107
      %v1220 = vpack.c.b16 %v1110, %v1109
      %v1221 = vpack.c.b16 %v1112, %v1111
      %v1222 = vpack.c.b16 %v1114, %v1113
      %v1223 = vpack.c.b16 %v1116, %v1115
      %v1224 = vpack.c.b16 %v1118, %v1117
      %v1225 = vpack.c.b16 %v1120, %v1119
      %v1226 = vpack.c.b16 %v1122, %v1121
      %v1227 = vpack.c.b16 %v1124, %v1123
      %v1228 = vpack.c.b16 %v1126, %v1125
      %v1229 = vpack.c.b16 %v1128, %v1127
      %v1230 = vpack.c.b16 %v1130, %v1129
      %v1231 = vpack.c.b16 %v1132, %v1131
      %v1232 = vpack.c.b16 %v1134, %v1133
      %v1233 = vpack.c.b16 %v1136, %v1135
      %v1234 = vpack.c.b16 %v1138, %v1137
      %v1235 = vpack.c.b16 %v1140, %v1139
      %v1236 = vpack.c.b16 %v1142, %v1141
      %v1237 = vpack.c.b16 %v1144, %v1143
      %v1238 = vpack.c.b16 %v1146, %v1145
      %v1239 = vpack.c.b16 %v1148, %v1147
      %v1240 = vpack.c.b16 %v1150, %v1149
      %v1241 = vpack.c.b16 %v1152, %v1151
      %v1242 = vpack.c.b16 %v1154, %v1153
      %v1243 = vpack.c.b16 %v1156, %v1155
      %v1244 = vpack.c.b16 %v1158, %v1157
      %v1245 = vpack.c.b16 %v1160, %v1159
      %v1246 = vpack.c.b16 %v1162, %v1161
      %v1247 = vpack.c.b16 %v1164, %v1163
      %v1248 = vpack.c.b16 %v1166, %v1165
      %v1249 = vpack.c.b16 %v1168, %v1167
      %v1250 = vpack.c.b16 %v1170, %v1169
      %v1251 = vpack.c.b16 %v1172, %v1171
      %v1252 = vpack.c.b16 %v1174, %v1173
      %v1253 = vpack.c.b16 %v1176, %v1175
      %v1254 = vpack.c.b16 %v1178, %v1177
      %v1255 = vpack.c.b16 %v1180, %v1179
      %v1256 = vpack.c.b16 %v1182, %v1181
      %v1257 = vpack.c.b16 %v1184, %v1183
      %v1258 = vpack.c.b16 %v1186, %v1185
      %v1259 = vpack.c.b16 %v1188, %v1187
      %v1260 = vpack.c.b16 %v1190, %v1189
      %v1261 = vpack.c.b16 %v1192, %v1191
      %v1262 = vpack.c.b16 %v1194, %v1193
      %v1263 = vpack.c.b16 %v1196, %v1195
      %v1264 = vpack.c.b16 %v1198, %v1197
      %v1265 = vpack.c.b16 %v1200, %v1199
      %v1266 = vpack.c.b16 %v1202, %v1201
      %v1267 = vpack.c.b16 %v1204, %v1203
      %v1268 = vpack.c.b16 %v1206, %v1205
      %v1269 = vpack.c.b16 %v1208, %v1207
      %v1270 = vpack.c.b16 %v1210, %v1209
      %v1271 = vpack.c.b16 %v1212, %v1211
      %v1272 = vpack.c.b16 %v1214, %v1213
      %v1273 = vpack.c.b16 %v1216, %v1215
      %v1274 = vpack.c.b16 %v1218, %v1217
      %1331 = vmatprep.subr.bf16.mxu0 0
      %1332 = vmatpush1.bf16.msra.mxu0 %v1219
      %1333 = vmatprep.subr.bf16.mxu0 0
      %1334 = vmatpush1.bf16.msra.mxu0 %v1220
      %1335 = vmatprep.subr.bf16.mxu0 0
      %1336 = vmatpush1.bf16.msra.mxu0 %v1221
      %1337 = vmatprep.subr.bf16.mxu0 0
      %1338 = vmatpush1.bf16.msra.mxu0 %v1222
      %1339 = vmatprep.subr.bf16.mxu0 0
      %1340 = vmatpush1.bf16.msra.mxu0 %v1223
      %1341 = vmatprep.subr.bf16.mxu0 0
      %1342 = vmatpush1.bf16.msra.mxu0 %v1224
      %1343 = vmatprep.subr.bf16.mxu0 0
      %1344 = vmatpush1.bf16.msra.mxu0 %v1225
      %1345 = vmatprep.subr.bf16.mxu0 0
      %1346 = vmatpush1.bf16.msra.mxu0 %v1226
      %1347 = vmatprep.subr.bf16.mxu0 0
      %1348 = vmatpush1.bf16.msra.mxu0 %v1227
      %1349 = vmatprep.subr.bf16.mxu0 0
      %1350 = vmatpush1.bf16.msra.mxu0 %v1228
      %1351 = vmatprep.subr.bf16.mxu0 0
      %1352 = vmatpush1.bf16.msra.mxu0 %v1229
      %1353 = vmatprep.subr.bf16.mxu0 0
      %1354 = vmatpush1.bf16.msra.mxu0 %v1230
      %1355 = vmatprep.subr.bf16.mxu0 0
      %1356 = vmatpush1.bf16.msra.mxu0 %v1231
      %1357 = vmatprep.subr.bf16.mxu0 0
      %1358 = vmatpush1.bf16.msra.mxu0 %v1232
      %1359 = vmatprep.subr.bf16.mxu0 0
      %1360 = vmatpush1.bf16.msra.mxu0 %v1233
      %1361 = vmatprep.subr.bf16.mxu0 0
      %1362 = vmatpush1.bf16.msra.mxu0 %v1234
      %1363 = vmatprep.mubr.bf16.mxu0 %v772
      %1364 = vmatmul.mubr.bf16.gmra.mrb[0].mxu0 %v771
      %v1365 = vpop.f32.mrb[0].mxu0
      %v1366 = vadd.f32 %v417, %v1365
      %v1367 = vpop.f32.mrb[0].mxu0
      %v1368 = vpop.f32.mrb[0].mxu0
      %v1369 = vadd.f32 %v417, %v1368
      %v1370 = vpop.f32.mrb[0].mxu0
      %1371 = vmatprep.mubr.bf16.mxu0 %v779
      %1372 = vmatmul.mubr.bf16.gmra.mrb[0].mxu0 %v778
      %v1373 = vpop.f32.mrb[0].mxu0
      %v1374 = vadd.f32 %v417, %v1373
      %v1375 = vpop.f32.mrb[0].mxu0
      %v1376 = vpop.f32.mrb[0].mxu0
      %v1377 = vadd.f32 %v417, %v1376
      %v1378 = vpop.f32.mrb[0].mxu0
      %1379 = vmatprep.mubr.bf16.mxu0 %v786
      %1380 = vmatmul.mubr.bf16.gmra.mrb[0].mxu0 %v785
      %v1381 = vpop.f32.mrb[0].mxu0
      %v1382 = vadd.f32 %v417, %v1381
      %v1383 = vpop.f32.mrb[0].mxu0
      %v1384 = vpop.f32.mrb[0].mxu0
      %v1385 = vadd.f32 %v417, %v1384
      %v1386 = vpop.f32.mrb[0].mxu0
      %1387 = vmatprep.mubr.bf16.mxu0 %v793
      %1388 = vmatmul.mubr.bf16.gmra.mrb[0].mxu0 %v792
      %v1389 = vpop.f32.mrb[0].mxu0
      %v1390 = vadd.f32 %v417, %v1389
      %v1391 = vpop.f32.mrb[0].mxu0
      %v1392 = vpop.f32.mrb[0].mxu0
      %v1393 = vadd.f32 %v417, %v1392
      %v1394 = vpop.f32.mrb[0].mxu0
      %1395 = vmatprep.mubr.bf16.mxu0 %v800
      %1396 = vmatmul.mubr.bf16.gmra.mrb[0].mxu0 %v799
      %v1397 = vpop.f32.mrb[0].mxu0
      %v1398 = vadd.f32 %v417, %v1397
      %v1399 = vpop.f32.mrb[0].mxu0
      %v1400 = vpop.f32.mrb[0].mxu0
      %v1401 = vadd.f32 %v417, %v1400
      %v1402 = vpop.f32.mrb[0].mxu0
      %1403 = vmatprep.mubr.bf16.mxu0 %v807
      %1404 = vmatmul.mubr.bf16.gmra.mrb[0].mxu0 %v806
      %v1405 = vpop.f32.mrb[0].mxu0
      %v1406 = vadd.f32 %v417, %v1405
      %v1407 = vpop.f32.mrb[0].mxu0
      %v1408 = vpop.f32.mrb[0].mxu0
      %v1409 = vadd.f32 %v417, %v1408
      %v1410 = vpop.f32.mrb[0].mxu0
      %1411 = vmatprep.mubr.bf16.mxu0 %v814
      %1412 = vmatmul.mubr.bf16.gmra.mrb[0].mxu0 %v813
      %v1413 = vpop.f32.mrb[0].mxu0
      %v1414 = vadd.f32 %v417, %v1413
      %v1415 = vpop.f32.mrb[0].mxu0
      %v1416 = vpop.f32.mrb[0].mxu0
      %v1417 = vadd.f32 %v417, %v1416
      %v1418 = vpop.f32.mrb[0].mxu0
      %1419 = vmatprep.mubr.bf16.mxu0 %v821
      %1420 = vmatmul.mubr.bf16.gmra.mrb[0].mxu0 %v820
      %v1421 = vpop.f32.mrb[0].mxu0
      %v1422 = vadd.f32 %v417, %v1421
      %v1423 = vpop.f32.mrb[0].mxu0
      %v1424 = vpop.f32.mrb[0].mxu0
      %v1425 = vadd.f32 %v417, %v1424
      %v1426 = vpop.f32.mrb[0].mxu0
      %1427 = vmatprep.mubr.bf16.mxu0 %v828
      %1428 = vmatmul.mubr.bf16.gmra.mrb[0].mxu0 %v827
      %v1429 = vpop.f32.mrb[0].mxu0
      %v1430 = vadd.f32 %v417, %v1429
      %v1431 = vpop.f32.mrb[0].mxu0
      %v1432 = vpop.f32.mrb[0].mxu0
      %v1433 = vadd.f32 %v417, %v1432
      %v1434 = vpop.f32.mrb[0].mxu0
      %1435 = vmatprep.mubr.bf16.mxu0 %v835
      %1436 = vmatmul.mubr.bf16.gmra.mrb[0].mxu0 %v834
      %v1437 = vpop.f32.mrb[0].mxu0
      %v1438 = vadd.f32 %v417, %v1437
      %v1439 = vpop.f32.mrb[0].mxu0
      %v1440 = vpop.f32.mrb[0].mxu0
      %v1441 = vadd.f32 %v417, %v1440
      %v1442 = vpop.f32.mrb[0].mxu0
      %1443 = vmatprep.mubr.bf16.mxu0 %v842
      %1444 = vmatmul.mubr.bf16.gmra.mrb[0].mxu0 %v841
      %v1445 = vpop.f32.mrb[0].mxu0
      %v1446 = vadd.f32 %v417, %v1445
      %v1447 = vpop.f32.mrb[0].mxu0
      %v1448 = vpop.f32.mrb[0].mxu0
      %v1449 = vadd.f32 %v417, %v1448
      %v1450 = vpop.f32.mrb[0].mxu0
      %1451 = vmatprep.mubr.bf16.mxu0 %v849
      %1452 = vmatmul.mubr.bf16.gmra.mrb[0].mxu0 %v848
      %v1453 = vpop.f32.mrb[0].mxu0
      %v1454 = vadd.f32 %v417, %v1453
      %v1455 = vpop.f32.mrb[0].mxu0
      %v1456 = vpop.f32.mrb[0].mxu0
      %v1457 = vadd.f32 %v417, %v1456
      %v1458 = vpop.f32.mrb[0].mxu0
      %1459 = vmatprep.mubr.bf16.mxu0 %v856
      %1460 = vmatmul.mubr.bf16.gmra.mrb[0].mxu0 %v855
      %v1461 = vpop.f32.mrb[0].mxu0
      %v1462 = vadd.f32 %v417, %v1461
      %v1463 = vpop.f32.mrb[0].mxu0
      %v1464 = vpop.f32.mrb[0].mxu0
      %v1465 = vadd.f32 %v417, %v1464
      %v1466 = vpop.f32.mrb[0].mxu0
      %1467 = vmatprep.mubr.bf16.mxu0 %v863
      %1468 = vmatmul.mubr.bf16.gmra.mrb[0].mxu0 %v862
      %v1469 = vpop.f32.mrb[0].mxu0
      %v1470 = vadd.f32 %v417, %v1469
      %v1471 = vpop.f32.mrb[0].mxu0
      %v1472 = vpop.f32.mrb[0].mxu0
      %v1473 = vadd.f32 %v417, %v1472
      %v1474 = vpop.f32.mrb[0].mxu0
      %1475 = vmatprep.mubr.bf16.mxu0 %v870
      %1476 = vmatmul.mubr.bf16.gmra.mrb[0].mxu0 %v869
      %v1477 = vpop.f32.mrb[0].mxu0
      %v1478 = vadd.f32 %v417, %v1477
      %v1479 = vpop.f32.mrb[0].mxu0
      %v1480 = vpop.f32.mrb[0].mxu0
      %v1481 = vadd.f32 %v417, %v1480
      %v1482 = vpop.f32.mrb[0].mxu0
      %1483 = vmatprep.mubr.bf16.mxu0 %v877
      %1484 = vmatmul.mubr.bf16.gmra.mrb[0].mxu0 %v876
      %v1485 = vpop.f32.mrb[0].mxu0
      %v1486 = vadd.f32 %v417, %v1485
      %v1487 = vpop.f32.mrb[0].mxu0
      %v1488 = vpop.f32.mrb[0].mxu0
      %v1489 = vadd.f32 %v417, %v1488
      %v1490 = vpop.f32.mrb[0].mxu0
      %1491 = vdwg.mxu0
      %1492 = vmatprep.subr.bf16.mxu0 0
      %1493 = vmatpush1.bf16.msra.mxu0 %v1235
      %1494 = vmatprep.subr.bf16.mxu0 0
      %1495 = vmatpush1.bf16.msra.mxu0 %v1236
      %1496 = vmatprep.subr.bf16.mxu0 0
      %1497 = vmatpush1.bf16.msra.mxu0 %v1237
      %1498 = vmatprep.subr.bf16.mxu0 0
      %1499 = vmatpush1.bf16.msra.mxu0 %v1238
      %1500 = vmatprep.subr.bf16.mxu0 0
      %1501 = vmatpush1.bf16.msra.mxu0 %v1239
      %1502 = vmatprep.subr.bf16.mxu0 0
      %1503 = vmatpush1.bf16.msra.mxu0 %v1240
      %1504 = vmatprep.subr.bf16.mxu0 0
      %1505 = vmatpush1.bf16.msra.mxu0 %v1241
      %1506 = vmatprep.subr.bf16.mxu0 0
      %1507 = vmatpush1.bf16.msra.mxu0 %v1242
      %1508 = vmatprep.subr.bf16.mxu0 0
      %1509 = vmatpush1.bf16.msra.mxu0 %v1243
      %1510 = vmatprep.subr.bf16.mxu0 0
      %1511 = vmatpush1.bf16.msra.mxu0 %v1244
      %1512 = vmatprep.subr.bf16.mxu0 0
      %1513 = vmatpush1.bf16.msra.mxu0 %v1245
      %1514 = vmatprep.subr.bf16.mxu0 0
      %1515 = vmatpush1.bf16.msra.mxu0 %v1246
      %1516 = vmatprep.subr.bf16.mxu0 0
      %1517 = vmatpush1.bf16.msra.mxu0 %v1247
      %1518 = vmatprep.subr.bf16.mxu0 0
      %1519 = vmatpush1.bf16.msra.mxu0 %v1248
      %1520 = vmatprep.subr.bf16.mxu0 0
      %1521 = vmatpush1.bf16.msra.mxu0 %v1249
      %1522 = vmatprep.subr.bf16.mxu0 0
      %1523 = vmatpush1.bf16.msra.mxu0 %v1250
      %1524 = vmatprep.mubr.bf16.mxu0 %v774
      %1525 = vmatmul.mubr.bf16.gmra.mrb[0].mxu0 %v773
      %v1526 = vpop.f32.mrb[0].mxu0
      %v1527 = vadd.f32 %v1366, %v1526
      %v1528 = vpop.f32.mrb[0].mxu0
      %v1529 = vpop.f32.mrb[0].mxu0
      %v1530 = vadd.f32 %v1369, %v1529
      %v1531 = vpop.f32.mrb[0].mxu0
      %1532 = vmatprep.mubr.bf16.mxu0 %v781
      %1533 = vmatmul.mubr.bf16.gmra.mrb[0].mxu0 %v780
      %v1534 = vpop.f32.mrb[0].mxu0
      %v1535 = vadd.f32 %v1374, %v1534
      %v1536 = vpop.f32.mrb[0].mxu0
      %v1537 = vpop.f32.mrb[0].mxu0
      %v1538 = vadd.f32 %v1377, %v1537
      %v1539 = vpop.f32.mrb[0].mxu0
      %1540 = vmatprep.mubr.bf16.mxu0 %v788
      %1541 = vmatmul.mubr.bf16.gmra.mrb[0].mxu0 %v787
      %v1542 = vpop.f32.mrb[0].mxu0
      %v1543 = vadd.f32 %v1382, %v1542
      %v1544 = vpop.f32.mrb[0].mxu0
      %v1545 = vpop.f32.mrb[0].mxu0
      %v1546 = vadd.f32 %v1385, %v1545
      %v1547 = vpop.f32.mrb[0].mxu0
      %1548 = vmatprep.mubr.bf16.mxu0 %v795
      %1549 = vmatmul.mubr.bf16.gmra.mrb[0].mxu0 %v794
      %v1550 = vpop.f32.mrb[0].mxu0
      %v1551 = vadd.f32 %v1390, %v1550
      %v1552 = vpop.f32.mrb[0].mxu0
      %v1553 = vpop.f32.mrb[0].mxu0
      %v1554 = vadd.f32 %v1393, %v1553
      %v1555 = vpop.f32.mrb[0].mxu0
      %1556 = vmatprep.mubr.bf16.mxu0 %v802
      %1557 = vmatmul.mubr.bf16.gmra.mrb[0].mxu0 %v801
      %v1558 = vpop.f32.mrb[0].mxu0
      %v1559 = vadd.f32 %v1398, %v1558
      %v1560 = vpop.f32.mrb[0].mxu0
      %v1561 = vpop.f32.mrb[0].mxu0
      %v1562 = vadd.f32 %v1401, %v1561
      %v1563 = vpop.f32.mrb[0].mxu0
      %1564 = vmatprep.mubr.bf16.mxu0 %v809
      %1565 = vmatmul.mubr.bf16.gmra.mrb[0].mxu0 %v808
      %v1566 = vpop.f32.mrb[0].mxu0
      %v1567 = vadd.f32 %v1406, %v1566
      %v1568 = vpop.f32.mrb[0].mxu0
      %v1569 = vpop.f32.mrb[0].mxu0
      %v1570 = vadd.f32 %v1409, %v1569
      %v1571 = vpop.f32.mrb[0].mxu0
      %1572 = vmatprep.mubr.bf16.mxu0 %v816
      %1573 = vmatmul.mubr.bf16.gmra.mrb[0].mxu0 %v815
      %v1574 = vpop.f32.mrb[0].mxu0
      %v1575 = vadd.f32 %v1414, %v1574
      %v1576 = vpop.f32.mrb[0].mxu0
      %v1577 = vpop.f32.mrb[0].mxu0
      %v1578 = vadd.f32 %v1417, %v1577
      %v1579 = vpop.f32.mrb[0].mxu0
      %1580 = vmatprep.mubr.bf16.mxu0 %v823
      %1581 = vmatmul.mubr.bf16.gmra.mrb[0].mxu0 %v822
      %v1582 = vpop.f32.mrb[0].mxu0
      %v1583 = vadd.f32 %v1422, %v1582
      %v1584 = vpop.f32.mrb[0].mxu0
      %v1585 = vpop.f32.mrb[0].mxu0
      %v1586 = vadd.f32 %v1425, %v1585
      %v1587 = vpop.f32.mrb[0].mxu0
      %1588 = vmatprep.mubr.bf16.mxu0 %v830
      %1589 = vmatmul.mubr.bf16.gmra.mrb[0].mxu0 %v829
      %v1590 = vpop.f32.mrb[0].mxu0
      %v1591 = vadd.f32 %v1430, %v1590
      %v1592 = vpop.f32.mrb[0].mxu0
      %v1593 = vpop.f32.mrb[0].mxu0
      %v1594 = vadd.f32 %v1433, %v1593
      %v1595 = vpop.f32.mrb[0].mxu0
      %1596 = vmatprep.mubr.bf16.mxu0 %v837
      %1597 = vmatmul.mubr.bf16.gmra.mrb[0].mxu0 %v836
      %v1598 = vpop.f32.mrb[0].mxu0
      %v1599 = vadd.f32 %v1438, %v1598
      %v1600 = vpop.f32.mrb[0].mxu0
      %v1601 = vpop.f32.mrb[0].mxu0
      %v1602 = vadd.f32 %v1441, %v1601
      %v1603 = vpop.f32.mrb[0].mxu0
      %1604 = vmatprep.mubr.bf16.mxu0 %v844
      %1605 = vmatmul.mubr.bf16.gmra.mrb[0].mxu0 %v843
      %v1606 = vpop.f32.mrb[0].mxu0
      %v1607 = vadd.f32 %v1446, %v1606
      %v1608 = vpop.f32.mrb[0].mxu0
      %v1609 = vpop.f32.mrb[0].mxu0
      %v1610 = vadd.f32 %v1449, %v1609
      %v1611 = vpop.f32.mrb[0].mxu0
      %1612 = vmatprep.mubr.bf16.mxu0 %v851
      %1613 = vmatmul.mubr.bf16.gmra.mrb[0].mxu0 %v850
      %v1614 = vpop.f32.mrb[0].mxu0
      %v1615 = vadd.f32 %v1454, %v1614
      %v1616 = vpop.f32.mrb[0].mxu0
      %v1617 = vpop.f32.mrb[0].mxu0
      %v1618 = vadd.f32 %v1457, %v1617
      %v1619 = vpop.f32.mrb[0].mxu0
      %1620 = vmatprep.mubr.bf16.mxu0 %v858
      %1621 = vmatmul.mubr.bf16.gmra.mrb[0].mxu0 %v857
      %v1622 = vpop.f32.mrb[0].mxu0
      %v1623 = vadd.f32 %v1462, %v1622
      %v1624 = vpop.f32.mrb[0].mxu0
      %v1625 = vpop.f32.mrb[0].mxu0
      %v1626 = vadd.f32 %v1465, %v1625
      %v1627 = vpop.f32.mrb[0].mxu0
      %1628 = vmatprep.mubr.bf16.mxu0 %v865
      %1629 = vmatmul.mubr.bf16.gmra.mrb[0].mxu0 %v864
      %v1630 = vpop.f32.mrb[0].mxu0
      %v1631 = vadd.f32 %v1470, %v1630
      %v1632 = vpop.f32.mrb[0].mxu0
      %v1633 = vpop.f32.mrb[0].mxu0
      %v1634 = vadd.f32 %v1473, %v1633
      %v1635 = vpop.f32.mrb[0].mxu0
      %1636 = vmatprep.mubr.bf16.mxu0 %v872
      %1637 = vmatmul.mubr.bf16.gmra.mrb[0].mxu0 %v871
      %v1638 = vpop.f32.mrb[0].mxu0
      %v1639 = vadd.f32 %v1478, %v1638
      %v1640 = vpop.f32.mrb[0].mxu0
      %v1641 = vpop.f32.mrb[0].mxu0
      %v1642 = vadd.f32 %v1481, %v1641
      %v1643 = vpop.f32.mrb[0].mxu0
      %1644 = vmatprep.mubr.bf16.mxu0 %v879
      %1645 = vmatmul.mubr.bf16.gmra.mrb[0].mxu0 %v878
      %v1646 = vpop.f32.mrb[0].mxu0
      %v1647 = vadd.f32 %v1486, %v1646
      %v1648 = vpop.f32.mrb[0].mxu0
      %v1649 = vpop.f32.mrb[0].mxu0
      %v1650 = vadd.f32 %v1489, %v1649
      %v1651 = vpop.f32.mrb[0].mxu0
      %1652 = vdwg.mxu0
      %1653 = vmatprep.subr.bf16.mxu0 0
      %1654 = vmatpush1.bf16.msra.mxu0 %v1251
      %1655 = vmatprep.subr.bf16.mxu0 0
      %1656 = vmatpush1.bf16.msra.mxu0 %v1252
      %1657 = vmatprep.subr.bf16.mxu0 0
      %1658 = vmatpush1.bf16.msra.mxu0 %v1253
      %1659 = vmatprep.subr.bf16.mxu0 0
      %1660 = vmatpush1.bf16.msra.mxu0 %v1254
      %1661 = vmatprep.subr.bf16.mxu0 0
      %1662 = vmatpush1.bf16.msra.mxu0 %v1255
      %1663 = vmatprep.subr.bf16.mxu0 0
      %1664 = vmatpush1.bf16.msra.mxu0 %v1256
      %1665 = vmatprep.subr.bf16.mxu0 0
      %1666 = vmatpush1.bf16.msra.mxu0 %v1257
      %1667 = vmatprep.subr.bf16.mxu0 0
      %1668 = vmatpush1.bf16.msra.mxu0 %v1258
      %1669 = vmatprep.subr.bf16.mxu0 0
      %1670 = vmatpush1.bf16.msra.mxu0 %v1259
      %1671 = vmatprep.subr.bf16.mxu0 0
      %1672 = vmatpush1.bf16.msra.mxu0 %v1260
      %1673 = vmatprep.subr.bf16.mxu0 0
      %1674 = vmatpush1.bf16.msra.mxu0 %v1261
      %1675 = vmatprep.subr.bf16.mxu0 0
      %1676 = vmatpush1.bf16.msra.mxu0 %v1262
      %1677 = vmatprep.subr.bf16.mxu0 0
      %1678 = vmatpush1.bf16.msra.mxu0 %v1263
      %1679 = vmatprep.subr.bf16.mxu0 0
      %1680 = vmatpush1.bf16.msra.mxu0 %v1264
      %1681 = vmatprep.subr.bf16.mxu0 0
      %1682 = vmatpush1.bf16.msra.mxu0 %v1265
      %1683 = vmatprep.subr.bf16.mxu0 0
      %1684 = vmatpush1.bf16.msra.mxu0 %v1266
      %1685 = vmatprep.mubr.bf16.mxu0 %v776
      %1686 = vmatmul.mubr.bf16.gmra.mrb[0].mxu0 %v775
      %v1687 = vpop.f32.mrb[0].mxu0
      %v1688 = vadd.f32 %v1527, %v1687
      %v1689 = vpop.f32.mrb[0].mxu0
      %v1690 = vpop.f32.mrb[0].mxu0
      %v1691 = vadd.f32 %v1530, %v1690
      %v1692 = vpop.f32.mrb[0].mxu0
      %1693 = vmatprep.mubr.bf16.mxu0 %v783
      %1694 = vmatmul.mubr.bf16.gmra.mrb[0].mxu0 %v782
      %v1695 = vpop.f32.mrb[0].mxu0
      %v1696 = vadd.f32 %v1535, %v1695
      %v1697 = vpop.f32.mrb[0].mxu0
      %v1698 = vpop.f32.mrb[0].mxu0
      %v1699 = vadd.f32 %v1538, %v1698
      %v1700 = vpop.f32.mrb[0].mxu0
      %1701 = vmatprep.mubr.bf16.mxu0 %v790
      %1702 = vmatmul.mubr.bf16.gmra.mrb[0].mxu0 %v789
      %v1703 = vpop.f32.mrb[0].mxu0
      %v1704 = vadd.f32 %v1543, %v1703
      %v1705 = vpop.f32.mrb[0].mxu0
      %v1706 = vpop.f32.mrb[0].mxu0
      %v1707 = vadd.f32 %v1546, %v1706
      %v1708 = vpop.f32.mrb[0].mxu0
      %1709 = vmatprep.mubr.bf16.mxu0 %v797
      %1710 = vmatmul.mubr.bf16.gmra.mrb[0].mxu0 %v796
      %v1711 = vpop.f32.mrb[0].mxu0
      %v1712 = vadd.f32 %v1551, %v1711
      %v1713 = vpop.f32.mrb[0].mxu0
      %v1714 = vpop.f32.mrb[0].mxu0
      %v1715 = vadd.f32 %v1554, %v1714
      %v1716 = vpop.f32.mrb[0].mxu0
      %1717 = vmatprep.mubr.bf16.mxu0 %v804
      %1718 = vmatmul.mubr.bf16.gmra.mrb[0].mxu0 %v803
      %v1719 = vpop.f32.mrb[0].mxu0
      %v1720 = vadd.f32 %v1559, %v1719
      %v1721 = vpop.f32.mrb[0].mxu0
      %v1722 = vpop.f32.mrb[0].mxu0
      %v1723 = vadd.f32 %v1562, %v1722
      %v1724 = vpop.f32.mrb[0].mxu0
      %1725 = vmatprep.mubr.bf16.mxu0 %v811
      %1726 = vmatmul.mubr.bf16.gmra.mrb[0].mxu0 %v810
      %v1727 = vpop.f32.mrb[0].mxu0
      %v1728 = vadd.f32 %v1567, %v1727
      %v1729 = vpop.f32.mrb[0].mxu0
      %v1730 = vpop.f32.mrb[0].mxu0
      %v1731 = vadd.f32 %v1570, %v1730
      %v1732 = vpop.f32.mrb[0].mxu0
      %1733 = vmatprep.mubr.bf16.mxu0 %v818
      %1734 = vmatmul.mubr.bf16.gmra.mrb[0].mxu0 %v817
      %v1735 = vpop.f32.mrb[0].mxu0
      %v1736 = vadd.f32 %v1575, %v1735
      %v1737 = vpop.f32.mrb[0].mxu0
      %v1738 = vpop.f32.mrb[0].mxu0
      %v1739 = vadd.f32 %v1578, %v1738
      %v1740 = vpop.f32.mrb[0].mxu0
      %1741 = vmatprep.mubr.bf16.mxu0 %v825
      %1742 = vmatmul.mubr.bf16.gmra.mrb[0].mxu0 %v824
      %v1743 = vpop.f32.mrb[0].mxu0
      %v1744 = vadd.f32 %v1583, %v1743
      %v1745 = vpop.f32.mrb[0].mxu0
      %v1746 = vpop.f32.mrb[0].mxu0
      %v1747 = vadd.f32 %v1586, %v1746
      %v1748 = vpop.f32.mrb[0].mxu0
      %1749 = vmatprep.mubr.bf16.mxu0 %v832
      %1750 = vmatmul.mubr.bf16.gmra.mrb[0].mxu0 %v831
      %v1751 = vpop.f32.mrb[0].mxu0
      %v1752 = vadd.f32 %v1591, %v1751
      %v1753 = vpop.f32.mrb[0].mxu0
      %v1754 = vpop.f32.mrb[0].mxu0
      %v1755 = vadd.f32 %v1594, %v1754
      %v1756 = vpop.f32.mrb[0].mxu0
      %1757 = vmatprep.mubr.bf16.mxu0 %v839
      %1758 = vmatmul.mubr.bf16.gmra.mrb[0].mxu0 %v838
      %v1759 = vpop.f32.mrb[0].mxu0
      %v1760 = vadd.f32 %v1599, %v1759
      %v1761 = vpop.f32.mrb[0].mxu0
      %v1762 = vpop.f32.mrb[0].mxu0
      %v1763 = vadd.f32 %v1602, %v1762
      %v1764 = vpop.f32.mrb[0].mxu0
      %1765 = vmatprep.mubr.bf16.mxu0 %v846
      %1766 = vmatmul.mubr.bf16.gmra.mrb[0].mxu0 %v845
      %v1767 = vpop.f32.mrb[0].mxu0
      %v1768 = vadd.f32 %v1607, %v1767
      %v1769 = vpop.f32.mrb[0].mxu0
      %v1770 = vpop.f32.mrb[0].mxu0
      %v1771 = vadd.f32 %v1610, %v1770
      %v1772 = vpop.f32.mrb[0].mxu0
      %1773 = vmatprep.mubr.bf16.mxu0 %v853
      %1774 = vmatmul.mubr.bf16.gmra.mrb[0].mxu0 %v852
      %v1775 = vpop.f32.mrb[0].mxu0
      %v1776 = vadd.f32 %v1615, %v1775
      %v1777 = vpop.f32.mrb[0].mxu0
      %v1778 = vpop.f32.mrb[0].mxu0
      %v1779 = vadd.f32 %v1618, %v1778
      %v1780 = vpop.f32.mrb[0].mxu0
      %1781 = vmatprep.mubr.bf16.mxu0 %v860
      %1782 = vmatmul.mubr.bf16.gmra.mrb[0].mxu0 %v859
      %v1783 = vpop.f32.mrb[0].mxu0
      %v1784 = vadd.f32 %v1623, %v1783
      %v1785 = vpop.f32.mrb[0].mxu0
      %v1786 = vpop.f32.mrb[0].mxu0
      %v1787 = vadd.f32 %v1626, %v1786
      %v1788 = vpop.f32.mrb[0].mxu0
      %1789 = vmatprep.mubr.bf16.mxu0 %v867
      %1790 = vmatmul.mubr.bf16.gmra.mrb[0].mxu0 %v866
      %v1791 = vpop.f32.mrb[0].mxu0
      %v1792 = vadd.f32 %v1631, %v1791
      %v1793 = vpop.f32.mrb[0].mxu0
      %v1794 = vpop.f32.mrb[0].mxu0
      %v1795 = vadd.f32 %v1634, %v1794
      %v1796 = vpop.f32.mrb[0].mxu0
      %1797 = vmatprep.mubr.bf16.mxu0 %v874
      %1798 = vmatmul.mubr.bf16.gmra.mrb[0].mxu0 %v873
      %v1799 = vpop.f32.mrb[0].mxu0
      %v1800 = vadd.f32 %v1639, %v1799
      %v1801 = vpop.f32.mrb[0].mxu0
      %v1802 = vpop.f32.mrb[0].mxu0
      %v1803 = vadd.f32 %v1642, %v1802
      %v1804 = vpop.f32.mrb[0].mxu0
      %1805 = vmatprep.mubr.bf16.mxu0 %v881
      %1806 = vmatmul.mubr.bf16.gmra.mrb[0].mxu0 %v880
      %v1807 = vpop.f32.mrb[0].mxu0
      %v1808 = vadd.f32 %v1647, %v1807
      %v1809 = vpop.f32.mrb[0].mxu0
      %v1810 = vpop.f32.mrb[0].mxu0
      %v1811 = vadd.f32 %v1650, %v1810
      %v1812 = vpop.f32.mrb[0].mxu0
      %1813 = vdwg.mxu0
      %1814 = vmatprep.subr.bf16.mxu0 0
      %1815 = vmatpush1.bf16.msra.mxu0 %v1267
      %1816 = vmatprep.subr.bf16.mxu0 0
      %1817 = vmatpush1.bf16.msra.mxu0 %v1268
      %1818 = vmatprep.subr.bf16.mxu0 0
      %1819 = vmatpush1.bf16.msra.mxu0 %v1269
      %1820 = vmatprep.subr.bf16.mxu0 0
      %1821 = vmatpush1.bf16.msra.mxu0 %v1270
      %1822 = vmatprep.subr.bf16.mxu0 0
      %1823 = vmatpush1.bf16.msra.mxu0 %v1271
      %1824 = vmatprep.subr.bf16.mxu0 0
      %1825 = vmatpush1.bf16.msra.mxu0 %v1272
      %1826 = vmatprep.subr.bf16.mxu0 0
      %1827 = vmatpush1.bf16.msra.mxu0 %v1273
      %1828 = vmatprep.subr.bf16.mxu0 0
      %1829 = vmatpush1.bf16.msra.mxu0 %v1274
      %1830 = vmatprep.subr.bf16.mxu0 0
      %1831 = vmatpush1.bf16.msra.mxu0 0
      %1832 = vmatprep.subr.bf16.mxu0 0
      %1833 = vmatpush1.bf16.msra.mxu0 0
      %1834 = vmatprep.subr.bf16.mxu0 0
      %1835 = vmatpush1.bf16.msra.mxu0 0
      %1836 = vmatprep.subr.bf16.mxu0 0
      %1837 = vmatpush1.bf16.msra.mxu0 0
      %1838 = vmatprep.subr.bf16.mxu0 0
      %1839 = vmatpush1.bf16.msra.mxu0 0
      %1840 = vmatprep.subr.bf16.mxu0 0
      %1841 = vmatpush1.bf16.msra.mxu0 0
      %1842 = vmatprep.subr.bf16.mxu0 0
      %1843 = vmatpush1.bf16.msra.mxu0 0
      %1844 = vmatprep.subr.bf16.mxu0 0
      %1845 = vmatpush1.bf16.msra.mxu0 0
      %1846 = vmatprep.mubr.bf16.mxu0 0
      %1847 = vmatmul.mubr.bf16.gmra.mrb[0].mxu0 %v777
      %v1848 = vpop.f32.mrb[0].mxu0
      %v1849 = vadd.f32 %v1688, %v1848
      %v1850 = vpop.f32.mrb[0].mxu0
      %v1851 = vpop.f32.mrb[0].mxu0
      %v1852 = vadd.f32 %v1691, %v1851
      %v1853 = vpop.f32.mrb[0].mxu0
      %1854 = vmatprep.mubr.bf16.mxu0 0
      %1855 = vmatmul.mubr.bf16.gmra.mrb[0].mxu0 %v784
      %v1856 = vpop.f32.mrb[0].mxu0
      %v1857 = vadd.f32 %v1696, %v1856
      %v1858 = vpop.f32.mrb[0].mxu0
      %v1859 = vpop.f32.mrb[0].mxu0
      %v1860 = vadd.f32 %v1699, %v1859
      %v1861 = vpop.f32.mrb[0].mxu0
      %1862 = vmatprep.mubr.bf16.mxu0 0
      %1863 = vmatmul.mubr.bf16.gmra.mrb[0].mxu0 %v791
      %v1864 = vpop.f32.mrb[0].mxu0
      %v1865 = vadd.f32 %v1704, %v1864
      %v1866 = vpop.f32.mrb[0].mxu0
      %v1867 = vpop.f32.mrb[0].mxu0
      %v1868 = vadd.f32 %v1707, %v1867
      %v1869 = vpop.f32.mrb[0].mxu0
      %1870 = vmatprep.mubr.bf16.mxu0 0
      %1871 = vmatmul.mubr.bf16.gmra.mrb[0].mxu0 %v798
      %v1872 = vpop.f32.mrb[0].mxu0
      %v1873 = vadd.f32 %v1712, %v1872
      %v1874 = vpop.f32.mrb[0].mxu0
      %v1875 = vpop.f32.mrb[0].mxu0
      %v1876 = vadd.f32 %v1715, %v1875
      %v1877 = vpop.f32.mrb[0].mxu0
      %1878 = vmatprep.mubr.bf16.mxu0 0
      %1879 = vmatmul.mubr.bf16.gmra.mrb[0].mxu0 %v805
      %v1880 = vpop.f32.mrb[0].mxu0
      %v1881 = vadd.f32 %v1720, %v1880
      %v1882 = vpop.f32.mrb[0].mxu0
      %v1883 = vpop.f32.mrb[0].mxu0
      %v1884 = vadd.f32 %v1723, %v1883
      %v1885 = vpop.f32.mrb[0].mxu0
      %1886 = vmatprep.mubr.bf16.mxu0 0
      %1887 = vmatmul.mubr.bf16.gmra.mrb[0].mxu0 %v812
      %v1888 = vpop.f32.mrb[0].mxu0
      %v1889 = vadd.f32 %v1728, %v1888
      %v1890 = vpop.f32.mrb[0].mxu0
      %v1891 = vpop.f32.mrb[0].mxu0
      %v1892 = vadd.f32 %v1731, %v1891
      %v1893 = vpop.f32.mrb[0].mxu0
      %1894 = vmatprep.mubr.bf16.mxu0 0
      %1895 = vmatmul.mubr.bf16.gmra.mrb[0].mxu0 %v819
      %v1896 = vpop.f32.mrb[0].mxu0
      %v1897 = vadd.f32 %v1736, %v1896
      %v1898 = vpop.f32.mrb[0].mxu0
      %v1899 = vpop.f32.mrb[0].mxu0
      %v1900 = vadd.f32 %v1739, %v1899
      %v1901 = vpop.f32.mrb[0].mxu0
      %1902 = vmatprep.mubr.bf16.mxu0 0
      %1903 = vmatmul.mubr.bf16.gmra.mrb[0].mxu0 %v826
      %v1904 = vpop.f32.mrb[0].mxu0
      %v1905 = vadd.f32 %v1744, %v1904
      %v1906 = vpop.f32.mrb[0].mxu0
      %v1907 = vpop.f32.mrb[0].mxu0
      %v1908 = vadd.f32 %v1747, %v1907
      %v1909 = vpop.f32.mrb[0].mxu0
      %1910 = vmatprep.mubr.bf16.mxu0 0
      %1911 = vmatmul.mubr.bf16.gmra.mrb[0].mxu0 %v833
      %v1912 = vpop.f32.mrb[0].mxu0
      %v1913 = vadd.f32 %v1752, %v1912
      %v1914 = vpop.f32.mrb[0].mxu0
      %v1915 = vpop.f32.mrb[0].mxu0
      %v1916 = vadd.f32 %v1755, %v1915
      %v1917 = vpop.f32.mrb[0].mxu0
      %1918 = vmatprep.mubr.bf16.mxu0 0
      %1919 = vmatmul.mubr.bf16.gmra.mrb[0].mxu0 %v840
      %v1920 = vpop.f32.mrb[0].mxu0
      %v1921 = vadd.f32 %v1760, %v1920
      %v1922 = vpop.f32.mrb[0].mxu0
      %v1923 = vpop.f32.mrb[0].mxu0
      %v1924 = vadd.f32 %v1763, %v1923
      %v1925 = vpop.f32.mrb[0].mxu0
      %1926 = vmatprep.mubr.bf16.mxu0 0
      %1927 = vmatmul.mubr.bf16.gmra.mrb[0].mxu0 %v847
      %v1928 = vpop.f32.mrb[0].mxu0
      %v1929 = vadd.f32 %v1768, %v1928
      %v1930 = vpop.f32.mrb[0].mxu0
      %v1931 = vpop.f32.mrb[0].mxu0
      %v1932 = vadd.f32 %v1771, %v1931
      %v1933 = vpop.f32.mrb[0].mxu0
      %1934 = vmatprep.mubr.bf16.mxu0 0
      %1935 = vmatmul.mubr.bf16.gmra.mrb[0].mxu0 %v854
      %v1936 = vpop.f32.mrb[0].mxu0
      %v1937 = vadd.f32 %v1776, %v1936
      %v1938 = vpop.f32.mrb[0].mxu0
      %v1939 = vpop.f32.mrb[0].mxu0
      %v1940 = vadd.f32 %v1779, %v1939
      %v1941 = vpop.f32.mrb[0].mxu0
      %1942 = vmatprep.mubr.bf16.mxu0 0
      %1943 = vmatmul.mubr.bf16.gmra.mrb[0].mxu0 %v861
      %v1944 = vpop.f32.mrb[0].mxu0
      %v1945 = vadd.f32 %v1784, %v1944
      %v1946 = vpop.f32.mrb[0].mxu0
      %v1947 = vpop.f32.mrb[0].mxu0
      %v1948 = vadd.f32 %v1787, %v1947
      %v1949 = vpop.f32.mrb[0].mxu0
      %1950 = vmatprep.mubr.bf16.mxu0 0
      %1951 = vmatmul.mubr.bf16.gmra.mrb[0].mxu0 %v868
      %v1952 = vpop.f32.mrb[0].mxu0
      %v1953 = vadd.f32 %v1792, %v1952
      %v1954 = vpop.f32.mrb[0].mxu0
      %v1955 = vpop.f32.mrb[0].mxu0
      %v1956 = vadd.f32 %v1795, %v1955
      %v1957 = vpop.f32.mrb[0].mxu0
      %1958 = vmatprep.mubr.bf16.mxu0 0
      %1959 = vmatmul.mubr.bf16.gmra.mrb[0].mxu0 %v875
      %v1960 = vpop.f32.mrb[0].mxu0
      %v1961 = vadd.f32 %v1800, %v1960
      %v1962 = vpop.f32.mrb[0].mxu0
      %v1963 = vpop.f32.mrb[0].mxu0
      %v1964 = vadd.f32 %v1803, %v1963
      %v1965 = vpop.f32.mrb[0].mxu0
      %1966 = vmatprep.mubr.bf16.mxu0 0
      %1967 = vmatmul.mubr.bf16.gmra.mrb[0].mxu0 %v882
      %v1968 = vpop.f32.mrb[0].mxu0
      %v1969 = vadd.f32 %v1808, %v1968
      %v1970 = vpop.f32.mrb[0].mxu0
      %v1971 = vpop.f32.mrb[0].mxu0
      %v1972 = vadd.f32 %v1811, %v1971
      %v1973 = vpop.f32.mrb[0].mxu0
      %1974 = vdwg.mxu0
      %v1975 = vtanh.pop %v1849
      %v1976 = vtanh.pop %v1852
      %v1977 = vtanh.pop %v1857
      %v1978 = vtanh.pop %v1860
      %v1979 = vtanh.pop %v1865
      %v1980 = vtanh.pop %v1868
      %v1981 = vtanh.pop %v1873
      %v1982 = vtanh.pop %v1876
      %v1983 = vtanh.pop %v1881
      %v1984 = vtanh.pop %v1884
      %v1985 = vtanh.pop %v1889
      %v1986 = vtanh.pop %v1892
      %v1987 = vtanh.pop %v1897
      %v1988 = vtanh.pop %v1900
      %v1989 = vtanh.pop %v1905
      %v1990 = vtanh.pop %v1908
      %v1991 = vtanh.pop %v1913
      %v1992 = vtanh.pop %v1916
      %v1993 = vtanh.pop %v1921
      %v1994 = vtanh.pop %v1924
      %v1995 = vtanh.pop %v1929
      %v1996 = vtanh.pop %v1932
      %v1997 = vtanh.pop %v1937
      %v1998 = vtanh.pop %v1940
      %v1999 = vtanh.pop %v1945
      %v2000 = vtanh.pop %v1948
      %v2001 = vtanh.pop %v1953
      %v2002 = vtanh.pop %v1956
      %v2003 = vtanh.pop %v1961
      %v2004 = vtanh.pop %v1964
      %v2005 = vtanh.pop %v1969
      %v2006 = vtanh.pop %v1972
      %2007 = vst [vmem:[%s170] sm:$0xff] %v1975
      %2008 = vst [vmem:[%s170 + $0x8] sm:$0xff] %v1976
      %2009 = vst [vmem:[%s170 + $0x10] sm:$0xff] %v1977
      %2010 = vst [vmem:[%s170 + $0x18] sm:$0xff] %v1978
      %2011 = vst [vmem:[%s170 + $0x20] sm:$0xff] %v1979
      %2012 = vst [vmem:[%s170 + $0x28] sm:$0xff] %v1980
      %2013 = vst [vmem:[%s170 + $0x30] sm:$0xff] %v1981
      %2014 = vst [vmem:[%s170 + $0x38] sm:$0xff] %v1982
      %2015 = vst [vmem:[%s170 + $0x40] sm:$0xff] %v1983
      %2016 = vst [vmem:[%s170 + $0x48] sm:$0xff] %v1984
      %2017 = vst [vmem:[%s170 + $0x50] sm:$0xff] %v1985
      %2018 = vst [vmem:[%s170 + $0x58] sm:$0xff] %v1986
      %2019 = vst [vmem:[%s170 + $0x60] sm:$0xff] %v1987
      %2020 = vst [vmem:[%s170 + $0x68] sm:$0xff] %v1988
      %2021 = vst [vmem:[%s170 + $0x70] sm:$0xff] %v1989
      %2022 = vst [vmem:[%s170 + $0x78] sm:$0xff] %v1990
      %2023 = vst [vmem:[%s170 + $0x80] sm:$0xff] %v1991
      %2024 = vst [vmem:[%s170 + $0x88] sm:$0xff] %v1992
      %2025 = vst [vmem:[%s170 + $0x90] sm:$0xff] %v1993
      %2026 = vst [vmem:[%s170 + $0x98] sm:$0xff] %v1994
      %2027 = vst [vmem:[%s170 + $0xa0] sm:$0xff] %v1995
      %2028 = vst [vmem:[%s170 + $0xa8] sm:$0xff] %v1996
      %2029 = vst [vmem:[%s170 + $0xb0] sm:$0xff] %v1997
      %2030 = vst [vmem:[%s170 + $0xb8] sm:$0xff] %v1998
      %2031 = vst [vmem:[%s170 + $0xc0] sm:$0xff] %v1999
      %2032 = vst [vmem:[%s170 + $0xc8] sm:$0xff] %v2000
      %2033 = vst [vmem:[%s170 + $0xd0] sm:$0xff] %v2001
      %2034 = vst [vmem:[%s170 + $0xd8] sm:$0xff] %v2002
      %2035 = vst [vmem:[%s170 + $0xe0] sm:$0xff] %v2003
      %2036 = vst [vmem:[%s170 + $0xe8] sm:$0xff] %v2004
      %2037 = vst [vmem:[%s170 + $0xf0] sm:$0xff] %v2005
      %2038 = vst [vmem:[%s170 + $0xf8] sm:$0xff] %v2006
      %p2039 = scmp.lt.s32.totalorder %s14, 1
      %s2040 = scalar_select %p2039, %s14, 1
      %s2041 = smul.addr %s2040, 32
      %s2042 = smul.addr %s2041, 8
      %s2043 = scalar_lea.vmem %s3, %s2042
      // Predicated region
      $region33: #{munit_trainer_forward.27} parent=31 // pred_check
        %p2044 = pneg %p100
      $region34: #{munit_trainer_forward.27} parent=31 // pred_check_branch
        %2046 = sbr.rel (%p2044) target = $region36
      $region35: #{munit_trainer_forward.27} parent=31 // pred_region
        _
      $region36: #{munit_trainer_forward.27} parent=31 // pred_fallthru
        _
    $region32: #{munit_trainer_forward.27} parent=5 // pred_fallthru
      _
    %p2047 = scmp.le.s32.totalorder 2, %s9
    // Predicated region
    $region37: #{munit_trainer_forward.27} parent=5 // pred_check
      %p2048 = pneg %p2047
    $region38: #{munit_trainer_forward.27} parent=5 // pred_check_branch
      %2050 = sbr.rel (%p2048) target = $region40
    $region39: #{munit_trainer_forward.27} parent=5 // pred_region
      %s2051 = ssub.s32 %s9, 2
      // Predicated region
      $region41: #{munit_trainer_forward.27} parent=39 // pred_check
        %p2052 = pneg %p106
      $region42: #{munit_trainer_forward.27} parent=39 // pred_check_branch
        %2054 = sbr.rel (%p2052) target = $region44
      $region43: #{munit_trainer_forward.27} parent=39 // pred_region
        %p2055 = scmp.lt.s32.totalorder %s15, 1
        %s2056 = scalar_select %p2055, %s15, 1
        %s2057 = smul.addr %s2056, 32
        %s2058 = smul.addr %s2057, 8
        %s2059 = scalar_lea.vmem %s3, %s2058
      $region44: #{munit_trainer_forward.27} parent=39 // pred_fallthru
        _
    $region40: #{munit_trainer_forward.27} parent=5 // pred_fallthru
      _
  $region6: #{munit_trainer_forward.27} parent=0 // loop_footer
    %s13 = sadd.s32 1, %s9
  $region7: #{munit_trainer_forward.27} parent=0 // loop_footer_branch
    %8 = sbr.rel target = $region3
  $region8: #{munit_trainer_forward.27} parent=0 // loop_exit
    _

</llo_original>
